<compile_context>
chip_gen: v7x
topology: tpu7x:2x2x1
jax: 0.10.0
libtpu: 0.0.40
codegen_flags: <defaults>
</compile_context>

<pallas_src>
import functools

import jax
import jax.numpy as jnp
from jax.experimental import pallas as pl
from jax.experimental.pallas import tpu as pltpu

BN_EPS = 1e-5
LANE = 128


def _round_up(x, m):
    return (x + m - 1) // m * m


def _vmem_limit_bytes():
    cap = None
    try:
        info = pltpu.get_tpu_info()
        cap = int(getattr(info, "vmem_capacity_bytes", 0)) or None
    except Exception:
        cap = None
    if cap is None:
        # Unknown part: 48 MiB is safe headroom on every generation (v7x: 64 MiB).
        return 48 * 1024 * 1024
    return int(min(112 * 1024 * 1024, (cap * 3) // 4))


_VMEM_LIMIT = _vmem_limit_bytes()


def _compiler_params():
    return pltpu.CompilerParams(
        dimension_semantics=("parallel",),     # grid over batch: independent steps
        vmem_limit_bytes=_VMEM_LIMIT,
    )


def _spatial_geometry(H, W, k, pad, stride):
    """Output extent + in-kernel plane geometry for a kxk conv / pool.

    The padded plane scratch is (Hs, Wp, C):
      * input lives at rows [top, top+H), cols [0, W)  (aligned stores only;
        `top` = 2 gives one implicit zero top-pad row plus slack so no combine
        offset is ever negative),
      * Wp is a multiple of 16 (bf16 sublane tile) and >= W+1 for k==3 so the
        right zero column doubles as the left zero pad via flat-index wrap.
    """
    Ho = (H + 2 * pad - k) // stride + 1
    Wo = (W + 2 * pad - k) // stride + 1
    He = 2 * Ho if stride == 2 else Ho          # stride-1 rows computed in-kernel
    Wp = _round_up(W + 1, 16) if k == 3 else _round_up(W, 16)
    Hs = He + 4 if k == 3 else He
    return Ho, Wo, He, Wp, Hs


# ---------------------------------------------------------------------------
# In-kernel helpers
# ---------------------------------------------------------------------------
def _fill_plane(s_ref, x_ref, top):
    """Zero-fill the padded plane scratch and write the input interior.

    Only aligned stores: `top` offsets the untiled major dim, the column offset
    is 0.  Returns the flattened (Hs*Wp, C) bf16 view (tile-aligned collapse,
    Wp % 16 == 0)."""
    H, W = x_ref.shape[1], x_ref.shape[2]
    s_ref[...] = jnp.zeros_like(s_ref)
    s_ref[top:top + H, 0:W, :] = x_ref[0]
    Hs, Wp, C = s_ref.shape
    return s_ref[...].reshape(Hs * Wp, C)


def _store_output(o_ref, acc, He, Wp, stride, stage_ref):
    """Write only the valid (and stride-decimated) rows/cols; bf16 lane-dense."""
    Ho, Wo, Co = o_ref.shape[1], o_ref.shape[2], o_ref.shape[3]
    out3 = acc.reshape(He, Wp, Co)
    if stride == 1:
        o_ref[0] = out3[:, 0:Wo, :].astype(o_ref.dtype)
    else:
        # Rows: pair-group the major dim and keep the even member (free).
        # Cols: stage to VMEM and read back with a strided pl.ds (in-kernel
        # decimation -> no 4x HBM writeback, no XLA gather afterwards).
        stage_ref[...] = out3.reshape(Ho, 2, Wp, Co)[:, 0]
        o_ref[0] = stage_ref[:, pl.ds(0, Wo, stride=2), :].astype(o_ref.dtype)


# ---------------------------------------------------------------------------
# Pallas kernels
# ---------------------------------------------------------------------------
def _conv_kernel(x_ref, w_ref, b_ref, o_ref, s_ref, *stage, k, stride, apply_relu):
    """Dense kxk conv + folded BN (+ReLU), one MXU matmul.

    k == 3: A = [tap dy=0 | dy=1 | dy=2] along K (aligned bf16 slices),
            W2 is (3*Cip, 3*Cop) with dx along N; the dx +/-1 column shifts are
            applied to the f32 partial outputs (2 VPU adds, proven-safe
            unaligned f32 slices).  k == 1: plain (Cip, Cop) matmul.
    """
    Ho, Wo, Co = o_ref.shape[1], o_ref.shape[2], o_ref.shape[3]
    Hs, Wp, _ = s_ref.shape
    He = 2 * Ho if stride == 2 else Ho
    Rm = He * Wp

    xflat = _fill_plane(s_ref, x_ref, top=2 if k == 3 else 0)

    if k == 1:
        acc = jnp.dot(xflat[0:Rm], w_ref[...], preferred_element_type=jnp.float32)
    else:
        Rq = (He + 1) * Wp + 8
        a = jnp.concatenate(
            [xflat[0:Rq], xflat[Wp:Wp + Rq], xflat[2 * Wp:2 * Wp + Rq]], axis=1)
        q = jnp.dot(a, w_ref[...], preferred_element_type=jnp.float32)
        acc = (q[Wp - 1:Wp - 1 + Rm, 0:Co]
               + q[Wp:Wp + Rm, Co:2 * Co]
               + q[Wp + 1:Wp + 1 + Rm, 2 * Co:3 * Co])

    acc = acc + b_ref[...]
    if apply_relu:
        acc = jnp.maximum(acc, 0.0)
    _store_output(o_ref, acc, He, Wp, stride, stage[0] if stride == 2 else None)


def _dw_conv_kernel(x_ref, w_ref, b_ref, o_ref, s_ref, *stage, stride, apply_relu):
    """Depthwise 3x3 conv + folded BN: per-channel tap sums on the VPU (f32)."""
    Ho, Wo, C = o_ref.shape[1], o_ref.shape[2], o_ref.shape[3]
    Hs, Wp, _ = s_ref.shape
    He = 2 * Ho if stride == 2 else Ho
    Rm = He * Wp
    Rq = (He + 1) * Wp + 8

    xflat = _fill_plane(s_ref, x_ref, top=2)
    rows = [xflat[0:Rq], xflat[Wp:Wp + Rq], xflat[2 * Wp:2 * Wp + Rq]]
    shifted = []
    for dx in range(3):
        p = None
        for dy in range(3):
            t = dy * 3 + dx
            v = rows[dy] * w_ref[t:t + 1, :]        # bf16 * f32 -> f32
            p = v if p is None else p + v
        shifted.append(p)
    acc = (shifted[0][Wp - 1:Wp - 1 + Rm, :]
           + shifted[1][Wp:Wp + Rm, :]
           + shifted[2][Wp + 1:Wp + 1 + Rm, :]) + b_ref[...]
    if apply_relu:
        acc = jnp.maximum(acc, 0.0)
    _store_output(o_ref, acc, He, Wp, stride, stage[0] if stride == 2 else None)


def _avgpool_kernel(x_ref, o_ref, s_ref, stage_ref, *, stride):
    """AvgPool2d(3, stride=2, pad=1), count_include_pad=True: 8 adds + 1 mul."""
    Ho, Wo, C = o_ref.shape[1], o_ref.shape[2], o_ref.shape[3]
    Hs, Wp, _ = s_ref.shape
    He = 2 * Ho if stride == 2 else Ho
    Rm = He * Wp
    Rq = (He + 1) * Wp + 8

    xflat = _fill_plane(s_ref, x_ref, top=2)
    cs = (xflat[0:Rq].astype(jnp.float32)
          + xflat[Wp:Wp + Rq].astype(jnp.float32)
          + xflat[2 * Wp:2 * Wp + Rq].astype(jnp.float32))
    acc = (cs[Wp - 1:Wp - 1 + Rm, :] + cs[Wp:Wp + Rm, :]
           + cs[Wp + 1:Wp + 1 + Rm, :]) * (1.0 / 9.0)
    _store_output(o_ref, acc, He, Wp, stride, stage_ref)


# ---------------------------------------------------------------------------
# pallas_call wrappers (no wrapper-side pad / reshape / strided slice)
# ---------------------------------------------------------------------------
def conv_bn_act(x, params, stride, apply_relu=True):
    w2, b, k, pad = params["w2"], params["b"], params["k"], params["padding"]
    assert (k, pad) in ((1, 0), (3, 1)), (k, pad)
    n, H, W, Cip = x.shape
    assert k * Cip == w2.shape[0], (x.shape, w2.shape)
    Cop = b.shape[1]
    Ho, Wo, He, Wp, Hs = _spatial_geometry(H, W, k, pad, stride)

    scratch = [pltpu.VMEM((Hs, Wp, Cip), jnp.bfloat16)]
    if stride == 2:
        scratch.append(pltpu.VMEM((Ho, Wp, Cop), jnp.float32))

    return pl.pallas_call(
        functools.partial(_conv_kernel, k=k, stride=stride, apply_relu=apply_relu),
        out_shape=jax.ShapeDtypeStruct((n, Ho, Wo, Cop), jnp.bfloat16),
        grid=(n,),
        in_specs=[
            pl.BlockSpec((1, H, W, Cip), lambda i: (i, 0, 0, 0)),
            pl.BlockSpec(w2.shape, lambda i: (0, 0)),     # weights resident across steps
            pl.BlockSpec(b.shape, lambda i: (0, 0)),
        ],
        out_specs=pl.BlockSpec((1, Ho, Wo, Cop), lambda i: (i, 0, 0, 0)),
        scratch_shapes=scratch,
        compiler_params=_compiler_params(),
    )(x, w2, b)


def dw_conv_bn(x, params, stride, apply_relu=False):
    w, b = params["w"], params["b"]
    n, H, W, Cip = x.shape
    Ho, Wo, He, Wp, Hs = _spatial_geometry(H, W, 3, 1, stride)

    scratch = [pltpu.VMEM((Hs, Wp, Cip), jnp.bfloat16)]
    if stride == 2:
        scratch.append(pltpu.VMEM((Ho, Wp, Cip), jnp.float32))

    return pl.pallas_call(
        functools.partial(_dw_conv_kernel, stride=stride, apply_relu=apply_relu),
        out_shape=jax.ShapeDtypeStruct((n, Ho, Wo, Cip), jnp.bfloat16),
        grid=(n,),
        in_specs=[
            pl.BlockSpec((1, H, W, Cip), lambda i: (i, 0, 0, 0)),
            pl.BlockSpec(w.shape, lambda i: (0, 0)),
            pl.BlockSpec(b.shape, lambda i: (0, 0)),
        ],
        out_specs=pl.BlockSpec((1, Ho, Wo, Cip), lambda i: (i, 0, 0, 0)),
        scratch_shapes=scratch,
        compiler_params=_compiler_params(),
    )(x, w, b)


def avg_pool_3x3_s2(x):
    n, H, W, Cip = x.shape
    Ho, Wo, He, Wp, Hs = _spatial_geometry(H, W, 3, 1, 2)
    return pl.pallas_call(
        functools.partial(_avgpool_kernel, stride=2),
        out_shape=jax.ShapeDtypeStruct((n, Ho, Wo, Cip), jnp.bfloat16),
        grid=(n,),
        in_specs=[pl.BlockSpec((1, H, W, Cip), lambda i: (i, 0, 0, 0))],
        out_specs=pl.BlockSpec((1, Ho, Wo, Cip), lambda i: (i, 0, 0, 0)),
        scratch_shapes=[pltpu.VMEM((Hs, Wp, Cip), jnp.bfloat16),
                        pltpu.VMEM((Ho, Wp, Cip), jnp.float32)],
        compiler_params=_compiler_params(),
    )(x)


# ---------------------------------------------------------------------------
# Deterministic parameter init (BN folded into conv at build time)
# ---------------------------------------------------------------------------
def _bn_params(key, ch):
    k1, k2, k3, k4 = jax.random.split(key, 4)
    gamma = 1.0 + 0.1 * jax.random.normal(k1, (ch,), jnp.float32)
    beta = 0.1 * jax.random.normal(k2, (ch,), jnp.float32)
    mean = 0.1 * jax.random.normal(k3, (ch,), jnp.float32)
    var = 0.5 + 0.1 * jnp.abs(jax.random.normal(k4, (ch,), jnp.float32))
    return gamma, beta, mean, var


def init_dense_convbn(key, in_ch, out_ch, k, padding):
    kw, kb = jax.random.split(key)
    w = 0.1 * jax.random.normal(kw, (out_ch, in_ch, k, k), jnp.float32)   # PyTorch OIHW
    gamma, beta, mean, var = _bn_params(kb, out_ch)
    scale = gamma / jnp.sqrt(var + BN_EPS)
    w_f = w * scale[:, None, None, None]
    bias = beta - mean * scale
    cip, cop = _round_up(in_ch, LANE), _round_up(out_ch, LANE)
    # (O,I,kh,kw) -> (kh, I, kw, O); pad I->cip, O->cop; collapse to the
    # fat-K / fat-N block layout W2[dy*cip + ci, dx*cop + co] = w[co, ci, dy, dx].
    w_t = jnp.transpose(w_f, (2, 1, 3, 0))
    w_t = jnp.pad(w_t, ((0, 0), (0, cip - in_ch), (0, 0), (0, cop - out_ch)))
    w2 = w_t.reshape(k * cip, k * cop).astype(jnp.bfloat16)
    b_p = jnp.pad(bias, (0, cop - out_ch)).reshape(1, cop).astype(jnp.float32)
    return {"w2": w2, "b": b_p, "k": k, "padding": padding, "cout": out_ch}


def init_dw_convbn(key, ch):
    kw, kb = jax.random.split(key)
    w = 0.1 * jax.random.normal(kw, (ch, 1, 3, 3), jnp.float32)   # groups == ch
    gamma, beta, mean, var = _bn_params(kb, ch)
    scale = gamma / jnp.sqrt(var + BN_EPS)
    w_f = w * scale[:, None, None, None]
    bias = beta - mean * scale
    w_tc = jnp.transpose(w_f[:, 0], (1, 2, 0)).reshape(9, ch)     # (tap, C), t = dy*3+dx
    cp = _round_up(ch, LANE)
    w_p = jnp.pad(w_tc, ((0, 0), (0, cp - ch))).astype(jnp.float32)   # VPU path stays f32
    b_p = jnp.pad(bias, (0, cp - ch)).reshape(1, cp).astype(jnp.float32)
    return {"w": w_p, "b": b_p, "cout": ch}


def init_stdc_block(key, in_ch, out_ch, steps, stride):
    assert steps in (2, 3, 4)
    keys = jax.random.split(key, steps + 2)
    half = out_ch // 2
    params = {"stride": stride, "out_channels": out_ch}
    params["conv0"] = init_dense_convbn(keys[0], in_ch, half, 1, 0)   # 1x1 ConvBNReLU
    if stride == 2:
        params["down_dw"] = init_dw_convbn(keys[1], half)             # dw 3x3 s2, no act
    convs = []
    cur, mid = half, half
    for idx in range(1, steps):
        if idx < steps - 1:
            mid //= 2
        convs.append(init_dense_convbn(keys[1 + idx], cur, mid, 3, 1))
        cur = mid
    params["convs"] = convs
    return params


def build_backbone(key, block_types, ch_widths, num_blocks, stdc_steps,
                   in_channels, out_down_ratios):
    stages, out_stage_keys = [], []
    down_ratio = 2
    for block_type, width, blocks in zip(block_types, ch_widths, num_blocks):
        name = f"block_s{down_ratio}"
        stage_blocks = []
        cur_in = in_channels
        for bi in range(blocks):
            stride = 2 if bi == 0 else 1
            key, sub = jax.random.split(key)
            if block_type == "conv":
                stage_blocks.append(("conv", init_dense_convbn(sub, cur_in, width, 3, 1), stride))
            elif block_type == "stdc":
                stage_blocks.append(("stdc", init_stdc_block(sub, cur_in, width, stdc_steps, stride), stride))
            else:
                raise ValueError(block_type)
            cur_in = width
        stages.append((name, stage_blocks))
        if down_ratio in out_down_ratios:
            out_stage_keys.append(name)
        in_channels = width
        down_ratio *= 2
    return stages, out_stage_keys


# ---------------------------------------------------------------------------
# Forward pass
# ---------------------------------------------------------------------------
def _pad_lanes(x, cp):
    c = x.shape[-1]
    if c == cp:
        return x
    return jnp.pad(x, ((0, 0), (0, 0), (0, 0), (0, cp - c)))


def stdc_block_forward(x, p):
    parts = []                                       # (lane-padded tensor, valid channels)
    x = conv_bn_act(x, p["conv0"], stride=1, apply_relu=True)
    half = p["conv0"]["cout"]
    if p["stride"] == 1:
        parts.append((x, half))                      # Residual() == identity
    else:
        parts.append((avg_pool_3x3_s2(x), half))     # avg_pool downsample mode
    for idx, cparams in enumerate(p["convs"]):
        if idx == 0 and p["stride"] == 2:
            x = dw_conv_bn(x, p["down_dw"], stride=2, apply_relu=False)
        x = conv_bn_act(x, cparams, stride=1, apply_relu=True)
        parts.append((x, cparams["cout"]))
    # TODO(synk): fuse this concat into the consumers; kept in XLA for now.
    cat = jnp.concatenate([t[..., :c] for t, c in parts], axis=-1)
    return _pad_lanes(cat, _round_up(cat.shape[-1], LANE)), p["out_channels"]


def backbone_forward(x_nchw, stages, out_stage_keys):
    x = jnp.transpose(x_nchw, (0, 2, 3, 1))                       # NCHW -> NHWC
    c = x.shape[-1]
    x = _pad_lanes(x, _round_up(c, LANE)).astype(jnp.bfloat16)    # pad lanes + bf16 ONCE
    outputs = []
    for name, blocks in stages:
        for kind, bp, stride in blocks:
            if kind == "conv":
                x = conv_bn_act(x, bp, stride=stride, apply_relu=True)
                c = bp["cout"]
            else:
                x, c = stdc_block_forward(x, bp)
        if name in out_stage_keys:
            out = x[..., :c]                                      # slice once, at the output
            outputs.append(jnp.transpose(out, (0, 3, 1, 2)).astype(jnp.float32))
    return tuple(outputs)


# ---------------------------------------------------------------------------
if __name__ == "__main__":
    key = jax.random.PRNGKey(0)
    k_x, k_p = jax.random.split(key)

    # Small STDCBackbone config:
    #   block_types=["conv","conv","stdc"], ch_widths=[8,16,32], num_blocks=[1,1,2],
    #   stdc_steps=4, stdc_downsample_mode="avg_pool", in_channels=4,
    #   out_down_ratios=(2,4,8)
    block_types = ["conv", "conv", "stdc"]
    ch_widths = [8, 16, 32]
    num_blocks = [1, 1, 2]
    stdc_steps = 4
    in_channels = 4
    out_down_ratios = (2, 4, 8)

    stages, out_keys = build_backbone(k_p, block_types, ch_widths, num_blocks,
                                      stdc_steps, in_channels, out_down_ratios)

    x = jax.random.normal(k_x, (2, in_channels, 16, 16), jnp.float32)  # NCHW input

    fwd = jax.jit(lambda inp: backbone_forward(inp, stages, out_keys))
    outs = fwd(x)
    for o in outs:
        jax.block_until_ready(o)

    # Expected shapes: (2,8,8,8), (2,16,4,4), (2,32,2,2)
    assert outs[0].shape == (2, 8, 8, 8), outs[0].shape
    assert outs[1].shape == (2, 16, 4, 4), outs[1].shape
    assert outs[2].shape == (2, 32, 2, 2), outs[2].shape
    assert all(bool(jnp.all(jnp.isfinite(o))) for o in outs)

    print("KERNEL_OK")
</pallas_src>

<mosaic_0001>
module attributes {stable_mosaic.version = 11 : i64} {
  func.func @_conv_kernel(%arg0: i32, %arg1: memref<1x4x4x128xbf16, #tpu.memory_space<vmem>>, %arg2: memref<128x128xbf16, #tpu.memory_space<vmem>>, %arg3: memref<1x128xf32, #tpu.memory_space<vmem>>, %arg4: memref<1x4x4x128xbf16, #tpu.memory_space<vmem>>, %arg5: memref<4x16x128xbf16, #tpu.memory_space<vmem>>) attributes {dimension_semantics = [#tpu.dimension_semantics<parallel>], iteration_bounds = array<i64: 2>, scalar_prefetch = 0 : i64, scratch_operands = 1 : i64, tpu.core_type = #tpu.core_type<tc>, window_params = [{transform_indices = @transform_0, window_bounds = array<i64: 1, 4, 4, 128>}, {pipeline_mode = #tpu.pipeline_mode<synchronous>, transform_indices = @transform_1, window_bounds = array<i64: 128, 128>}, {pipeline_mode = #tpu.pipeline_mode<synchronous>, transform_indices = @transform_2, window_bounds = array<i64: 1, 128>}, {transform_indices = @transform_3, window_bounds = array<i64: 1, 4, 4, 128>}]} {
    %cst = arith.constant 0.000000e+00 : bf16
    %0 = vector.broadcast %cst : bf16 to vector<4x16x128xbf16>
    %c0 = arith.constant 0 : index
    %c0_0 = arith.constant 0 : index
    %c0_1 = arith.constant 0 : index
    %1 = vector.load %arg5[%c0, %c0_0, %c0_1] : memref<4x16x128xbf16, #tpu.memory_space<vmem>>, vector<4x16x128xbf16>
    tpu.vector_store %arg5[%c0, %c0_0, %c0_1], %0 {strides = array<i32>} : memref<4x16x128xbf16, #tpu.memory_space<vmem>>, vector<4x16x128xbf16>,
    %c0_2 = arith.constant 0 : index
    %c0_3 = arith.constant 0 : index
    %c0_4 = arith.constant 0 : index
    %c0_5 = arith.constant 0 : index
    %2 = vector.load %arg1[%c0_2, %c0_3, %c0_4, %c0_5] : memref<1x4x4x128xbf16, #tpu.memory_space<vmem>>, vector<1x4x4x128xbf16>
    %3 = vector.shape_cast %2 : vector<1x4x4x128xbf16> to vector<4x4x128xbf16>
    %c0_6 = arith.constant 0 : index
    %c0_7 = arith.constant 0 : index
    %c0_8 = arith.constant 0 : index
    %4 = vector.load %arg5[%c0_6, %c0_7, %c0_8] : memref<4x16x128xbf16, #tpu.memory_space<vmem>>, vector<4x4x128xbf16>
    tpu.vector_store %arg5[%c0_6, %c0_7, %c0_8], %3 {strides = array<i32>} : memref<4x16x128xbf16, #tpu.memory_space<vmem>>, vector<4x4x128xbf16>,
    %c0_9 = arith.constant 0 : index
    %c0_10 = arith.constant 0 : index
    %c0_11 = arith.constant 0 : index
    %5 = vector.load %arg5[%c0_9, %c0_10, %c0_11] : memref<4x16x128xbf16, #tpu.memory_space<vmem>>, vector<4x16x128xbf16>
    %6 = vector.shape_cast %5 : vector<4x16x128xbf16> to vector<64x128xbf16>
    %c0_12 = arith.constant 0 : index
    %c0_13 = arith.constant 0 : index
    %7 = vector.load %arg2[%c0_12, %c0_13] : memref<128x128xbf16, #tpu.memory_space<vmem>>, vector<128x128xbf16>
    %cst_14 = arith.constant dense<0.000000e+00> : vector<64x128xf32>
    %8 = tpu.matmul %6, %7, %cst_14 {dimension_numbers = #tpu.dot_dimension_numbers<[1], [0], [0], [1], [0, 0, 1, 1], [], []>} : vector<64x128xbf16>, vector<128x128xbf16>, vector<64x128xf32> -> vector<64x128xf32>
    %c0_15 = arith.constant 0 : index
    %c0_16 = arith.constant 0 : index
    %9 = vector.load %arg3[%c0_15, %c0_16] : memref<1x128xf32, #tpu.memory_space<vmem>>, vector<1x128xf32>
    %10 = vector.broadcast %9 : vector<1x128xf32> to vector<64x128xf32>
    %11 = arith.addf %8, %10 : vector<64x128xf32>
    %cst_17 = arith.constant 0.000000e+00 : f32
    %12 = vector.broadcast %cst_17 : f32 to vector<64x128xf32>
    %13 = arith.maximumf %11, %12 : vector<64x128xf32>
    %14 = vector.shape_cast %13 : vector<64x128xf32> to vector<4x16x128xf32>
    %15 = vector.extract_strided_slice %14 {offsets = [0, 0, 0], sizes = [4, 4, 128], strides = [1, 1, 1]} : vector<4x16x128xf32> to vector<4x4x128xf32>
    %16 = arith.truncf %15 : vector<4x4x128xf32> to vector<4x4x128xbf16>
    %c0_18 = arith.constant 0 : index
    %c0_19 = arith.constant 0 : index
    %c0_20 = arith.constant 0 : index
    %c0_21 = arith.constant 0 : index
    %17 = vector.load %arg4[%c0_18, %c0_19, %c0_20, %c0_21] : memref<1x4x4x128xbf16, #tpu.memory_space<vmem>>, vector<1x4x4x128xbf16>
    %18 = vector.shape_cast %17 : vector<1x4x4x128xbf16> to vector<4x4x128xbf16>
    %19 = vector.shape_cast %16 : vector<4x4x128xbf16> to vector<1x4x4x128xbf16>
    tpu.vector_store %arg4[%c0_18, %c0_19, %c0_20, %c0_21], %19 {strides = array<i32>} : memref<1x4x4x128xbf16, #tpu.memory_space<vmem>>, vector<1x4x4x128xbf16>,
    return
  }
  func.func @transform_0(%arg0: i32) -> (i32, i32, i32, i32) {
    %c0_i32 = arith.constant 0 : i32
    %c0_i32_0 = arith.constant 0 : i32
    %c0_i32_1 = arith.constant 0 : i32
    %c0_i32_2 = arith.constant 0 : i32
    return %arg0, %c0_i32, %c0_i32_0, %c0_i32_1 : i32, i32, i32, i32
  }
  func.func @transform_1(%arg0: i32) -> (i32, i32) {
    %c0_i32 = arith.constant 0 : i32
    %c0_i32_0 = arith.constant 0 : i32
    %c0_i32_1 = arith.constant 0 : i32
    return %c0_i32, %c0_i32_0 : i32, i32
  }
  func.func @transform_2(%arg0: i32) -> (i32, i32) {
    %c0_i32 = arith.constant 0 : i32
    %c0_i32_0 = arith.constant 0 : i32
    %c0_i32_1 = arith.constant 0 : i32
    return %c0_i32, %c0_i32_0 : i32, i32
  }
  func.func @transform_3(%arg0: i32) -> (i32, i32, i32, i32) {
    %c0_i32 = arith.constant 0 : i32
    %c0_i32_0 = arith.constant 0 : i32
    %c0_i32_1 = arith.constant 0 : i32
    %c0_i32_2 = arith.constant 0 : i32
    return %arg0, %c0_i32, %c0_i32_0, %c0_i32_1 : i32, i32, i32, i32
  }
}

module attributes {stable_mosaic.version = 11 : i64} {
  func.func @_conv_kernel(%arg0: i32, %arg1: memref<1x8x8x128xbf16, #tpu.memory_space<vmem>>, %arg2: memref<384x384xbf16, #tpu.memory_space<vmem>>, %arg3: memref<1x128xf32, #tpu.memory_space<vmem>>, %arg4: memref<1x4x4x128xbf16, #tpu.memory_space<vmem>>, %arg5: memref<12x16x128xbf16, #tpu.memory_space<vmem>>, %arg6: memref<4x16x128xf32, #tpu.memory_space<vmem>>) attributes {dimension_semantics = [#tpu.dimension_semantics<parallel>], iteration_bounds = array<i64: 2>, scalar_prefetch = 0 : i64, scratch_operands = 2 : i64, tpu.core_type = #tpu.core_type<tc>, window_params = [{transform_indices = @transform_0, window_bounds = array<i64: 1, 8, 8, 128>}, {pipeline_mode = #tpu.pipeline_mode<synchronous>, transform_indices = @transform_1, window_bounds = array<i64: 384, 384>}, {pipeline_mode = #tpu.pipeline_mode<synchronous>, transform_indices = @transform_2, window_bounds = array<i64: 1, 128>}, {transform_indices = @transform_3, window_bounds = array<i64: 1, 4, 4, 128>}]} {
    %cst = arith.constant 0.000000e+00 : bf16
    %0 = vector.broadcast %cst : bf16 to vector<12x16x128xbf16>
    %c0 = arith.constant 0 : index
    %c0_0 = arith.constant 0 : index
    %c0_1 = arith.constant 0 : index
    %1 = vector.load %arg5[%c0, %c0_0, %c0_1] : memref<12x16x128xbf16, #tpu.memory_space<vmem>>, vector<12x16x128xbf16>
    tpu.vector_store %arg5[%c0, %c0_0, %c0_1], %0 {strides = array<i32>} : memref<12x16x128xbf16, #tpu.memory_space<vmem>>, vector<12x16x128xbf16>,
    %c0_2 = arith.constant 0 : index
    %c0_3 = arith.constant 0 : index
    %c0_4 = arith.constant 0 : index
    %c0_5 = arith.constant 0 : index
    %2 = vector.load %arg1[%c0_2, %c0_3, %c0_4, %c0_5] : memref<1x8x8x128xbf16, #tpu.memory_space<vmem>>, vector<1x8x8x128xbf16>
    %3 = vector.shape_cast %2 : vector<1x8x8x128xbf16> to vector<8x8x128xbf16>
    %c2 = arith.constant 2 : index
    %c0_6 = arith.constant 0 : index
    %c0_7 = arith.constant 0 : index
    %4 = vector.load %arg5[%c2, %c0_6, %c0_7] : memref<12x16x128xbf16, #tpu.memory_space<vmem>>, vector<8x8x128xbf16>
    tpu.vector_store %arg5[%c2, %c0_6, %c0_7], %3 {strides = array<i32>} : memref<12x16x128xbf16, #tpu.memory_space<vmem>>, vector<8x8x128xbf16>,
    %c0_8 = arith.constant 0 : index
    %c0_9 = arith.constant 0 : index
    %c0_10 = arith.constant 0 : index
    %5 = vector.load %arg5[%c0_8, %c0_9, %c0_10] : memref<12x16x128xbf16, #tpu.memory_space<vmem>>, vector<12x16x128xbf16>
    %6 = vector.shape_cast %5 : vector<12x16x128xbf16> to vector<192x128xbf16>
    %7 = vector.extract_strided_slice %6 {offsets = [0, 0], sizes = [152, 128], strides = [1, 1]} : vector<192x128xbf16> to vector<152x128xbf16>
    %8 = vector.extract_strided_slice %6 {offsets = [16, 0], sizes = [152, 128], strides = [1, 1]} : vector<192x128xbf16> to vector<152x128xbf16>
    %9 = vector.extract_strided_slice %6 {offsets = [32, 0], sizes = [152, 128], strides = [1, 1]} : vector<192x128xbf16> to vector<152x128xbf16>
    %10 = tpu.concatenate %7, %8, %9 in 1 : vector<152x128xbf16>, vector<152x128xbf16>, vector<152x128xbf16> -> vector<152x384xbf16>
    %c0_11 = arith.constant 0 : index
    %c0_12 = arith.constant 0 : index
    %11 = vector.load %arg2[%c0_11, %c0_12] : memref<384x384xbf16, #tpu.memory_space<vmem>>, vector<384x384xbf16>
    %cst_13 = arith.constant dense<0.000000e+00> : vector<152x384xf32>
    %12 = tpu.matmul %10, %11, %cst_13 {dimension_numbers = #tpu.dot_dimension_numbers<[1], [0], [0], [1], [0, 0, 1, 1], [], []>} : vector<152x384xbf16>, vector<384x384xbf16>, vector<152x384xf32> -> vector<152x384xf32>
    %13 = vector.extract_strided_slice %12 {offsets = [15, 0], sizes = [128, 128], strides = [1, 1]} : vector<152x384xf32> to vector<128x128xf32>
    %14 = vector.extract_strided_slice %12 {offsets = [16, 128], sizes = [128, 128], strides = [1, 1]} : vector<152x384xf32> to vector<128x128xf32>
    %15 = arith.addf %13, %14 : vector<128x128xf32>
    %16 = vector.extract_strided_slice %12 {offsets = [17, 256], sizes = [128, 128], strides = [1, 1]} : vector<152x384xf32> to vector<128x128xf32>
    %17 = arith.addf %15, %16 : vector<128x128xf32>
    %c0_14 = arith.constant 0 : index
    %c0_15 = arith.constant 0 : index
    %18 = vector.load %arg3[%c0_14, %c0_15] : memref<1x128xf32, #tpu.memory_space<vmem>>, vector<1x128xf32>
    %19 = vector.broadcast %18 : vector<1x128xf32> to vector<128x128xf32>
    %20 = arith.addf %17, %19 : vector<128x128xf32>
    %cst_16 = arith.constant 0.000000e+00 : f32
    %21 = vector.broadcast %cst_16 : f32 to vector<128x128xf32>
    %22 = arith.maximumf %20, %21 : vector<128x128xf32>
    %23 = vector.shape_cast %22 : vector<128x128xf32> to vector<8x16x128xf32>
    %24 = vector.shape_cast %23 : vector<8x16x128xf32> to vector<4x2x16x128xf32>
    %25 = vector.extract_strided_slice %24 {offsets = [0, 0, 0, 0], sizes = [4, 1, 16, 128], strides = [1, 1, 1, 1]} : vector<4x2x16x128xf32> to vector<4x1x16x128xf32>
    %26 = vector.shape_cast %25 : vector<4x1x16x128xf32> to vector<4x16x128xf32>
    %c0_17 = arith.constant 0 : index
    %c0_18 = arith.constant 0 : index
    %c0_19 = arith.constant 0 : index
    %27 = vector.load %arg6[%c0_17, %c0_18, %c0_19] : memref<4x16x128xf32, #tpu.memory_space<vmem>>, vector<4x16x128xf32>
    tpu.vector_store %arg6[%c0_17, %c0_18, %c0_19], %26 {strides = array<i32>} : memref<4x16x128xf32, #tpu.memory_space<vmem>>, vector<4x16x128xf32>,
    %c0_20 = arith.constant 0 : index
    %c0_21 = arith.constant 0 : index
    %c0_22 = arith.constant 0 : index
    %28 = tpu.strided_load %arg6[%c0_20, %c0_21, %c0_22] {strides = array<i32: 1, 2, 1>} : memref<4x16x128xf32, #tpu.memory_space<vmem>>, vector<4x4x128xf32>
    %29 = arith.truncf %28 : vector<4x4x128xf32> to vector<4x4x128xbf16>
    %c0_23 = arith.constant 0 : index
    %c0_24 = arith.constant 0 : index
    %c0_25 = arith.constant 0 : index
    %c0_26 = arith.constant 0 : index
    %30 = vector.load %arg4[%c0_23, %c0_24, %c0_25, %c0_26] : memref<1x4x4x128xbf16, #tpu.memory_space<vmem>>, vector<1x4x4x128xbf16>
    %31 = vector.shape_cast %30 : vector<1x4x4x128xbf16> to vector<4x4x128xbf16>
    %32 = vector.shape_cast %29 : vector<4x4x128xbf16> to vector<1x4x4x128xbf16>
    tpu.vector_store %arg4[%c0_23, %c0_24, %c0_25, %c0_26], %32 {strides = array<i32>} : memref<1x4x4x128xbf16, #tpu.memory_space<vmem>>, vector<1x4x4x128xbf16>,
    return
  }
  func.func @transform_0(%arg0: i32) -> (i32, i32, i32, i32) {
    %c0_i32 = arith.constant 0 : i32
    %c0_i32_0 = arith.constant 0 : i32
    %c0_i32_1 = arith.constant 0 : i32
    %c0_i32_2 = arith.constant 0 : i32
    return %arg0, %c0_i32, %c0_i32_0, %c0_i32_1 : i32, i32, i32, i32
  }
  func.func @transform_1(%arg0: i32) -> (i32, i32) {
    %c0_i32 = arith.constant 0 : i32
    %c0_i32_0 = arith.constant 0 : i32
    %c0_i32_1 = arith.constant 0 : i32
    return %c0_i32, %c0_i32_0 : i32, i32
  }
  func.func @transform_2(%arg0: i32) -> (i32, i32) {
    %c0_i32 = arith.constant 0 : i32
    %c0_i32_0 = arith.constant 0 : i32
    %c0_i32_1 = arith.constant 0 : i32
    return %c0_i32, %c0_i32_0 : i32, i32
  }
  func.func @transform_3(%arg0: i32) -> (i32, i32, i32, i32) {
    %c0_i32 = arith.constant 0 : i32
    %c0_i32_0 = arith.constant 0 : i32
    %c0_i32_1 = arith.constant 0 : i32
    %c0_i32_2 = arith.constant 0 : i32
    return %arg0, %c0_i32, %c0_i32_0, %c0_i32_1 : i32, i32, i32, i32
  }
}

module attributes {stable_mosaic.version = 11 : i64} {
  func.func @_conv_kernel(%arg0: i32, %arg1: memref<1x16x16x128xbf16, #tpu.memory_space<vmem>>, %arg2: memref<384x384xbf16, #tpu.memory_space<vmem>>, %arg3: memref<1x128xf32, #tpu.memory_space<vmem>>, %arg4: memref<1x8x8x128xbf16, #tpu.memory_space<vmem>>, %arg5: memref<20x32x128xbf16, #tpu.memory_space<vmem>>, %arg6: memref<8x32x128xf32, #tpu.memory_space<vmem>>) attributes {dimension_semantics = [#tpu.dimension_semantics<parallel>], iteration_bounds = array<i64: 2>, scalar_prefetch = 0 : i64, scratch_operands = 2 : i64, tpu.core_type = #tpu.core_type<tc>, window_params = [{transform_indices = @transform_0, window_bounds = array<i64: 1, 16, 16, 128>}, {pipeline_mode = #tpu.pipeline_mode<synchronous>, transform_indices = @transform_1, window_bounds = array<i64: 384, 384>}, {pipeline_mode = #tpu.pipeline_mode<synchronous>, transform_indices = @transform_2, window_bounds = array<i64: 1, 128>}, {transform_indices = @transform_3, window_bounds = array<i64: 1, 8, 8, 128>}]} {
    %cst = arith.constant 0.000000e+00 : bf16
    %0 = vector.broadcast %cst : bf16 to vector<20x32x128xbf16>
    %c0 = arith.constant 0 : index
    %c0_0 = arith.constant 0 : index
    %c0_1 = arith.constant 0 : index
    %1 = vector.load %arg5[%c0, %c0_0, %c0_1] : memref<20x32x128xbf16, #tpu.memory_space<vmem>>, vector<20x32x128xbf16>
    tpu.vector_store %arg5[%c0, %c0_0, %c0_1], %0 {strides = array<i32>} : memref<20x32x128xbf16, #tpu.memory_space<vmem>>, vector<20x32x128xbf16>,
    %c0_2 = arith.constant 0 : index
    %c0_3 = arith.constant 0 : index
    %c0_4 = arith.constant 0 : index
    %c0_5 = arith.constant 0 : index
    %2 = vector.load %arg1[%c0_2, %c0_3, %c0_4, %c0_5] : memref<1x16x16x128xbf16, #tpu.memory_space<vmem>>, vector<1x16x16x128xbf16>
    %3 = vector.shape_cast %2 : vector<1x16x16x128xbf16> to vector<16x16x128xbf16>
    %c2 = arith.constant 2 : index
    %c0_6 = arith.constant 0 : index
    %c0_7 = arith.constant 0 : index
    %4 = vector.load %arg5[%c2, %c0_6, %c0_7] : memref<20x32x128xbf16, #tpu.memory_space<vmem>>, vector<16x16x128xbf16>
    tpu.vector_store %arg5[%c2, %c0_6, %c0_7], %3 {strides = array<i32>} : memref<20x32x128xbf16, #tpu.memory_space<vmem>>, vector<16x16x128xbf16>,
    %c0_8 = arith.constant 0 : index
    %c0_9 = arith.constant 0 : index
    %c0_10 = arith.constant 0 : index
    %5 = vector.load %arg5[%c0_8, %c0_9, %c0_10] : memref<20x32x128xbf16, #tpu.memory_space<vmem>>, vector<20x32x128xbf16>
    %6 = vector.shape_cast %5 : vector<20x32x128xbf16> to vector<640x128xbf16>
    %7 = vector.extract_strided_slice %6 {offsets = [0, 0], sizes = [552, 128], strides = [1, 1]} : vector<640x128xbf16> to vector<552x128xbf16>
    %8 = vector.extract_strided_slice %6 {offsets = [32, 0], sizes = [552, 128], strides = [1, 1]} : vector<640x128xbf16> to vector<552x128xbf16>
    %9 = vector.extract_strided_slice %6 {offsets = [64, 0], sizes = [552, 128], strides = [1, 1]} : vector<640x128xbf16> to vector<552x128xbf16>
    %10 = tpu.concatenate %7, %8, %9 in 1 : vector<552x128xbf16>, vector<552x128xbf16>, vector<552x128xbf16> -> vector<552x384xbf16>
    %c0_11 = arith.constant 0 : index
    %c0_12 = arith.constant 0 : index
    %11 = vector.load %arg2[%c0_11, %c0_12] : memref<384x384xbf16, #tpu.memory_space<vmem>>, vector<384x384xbf16>
    %cst_13 = arith.constant dense<0.000000e+00> : vector<552x384xf32>
    %12 = tpu.matmul %10, %11, %cst_13 {dimension_numbers = #tpu.dot_dimension_numbers<[1], [0], [0], [1], [0, 0, 1, 1], [], []>} : vector<552x384xbf16>, vector<384x384xbf16>, vector<552x384xf32> -> vector<552x384xf32>
    %13 = vector.extract_strided_slice %12 {offsets = [31, 0], sizes = [512, 128], strides = [1, 1]} : vector<552x384xf32> to vector<512x128xf32>
    %14 = vector.extract_strided_slice %12 {offsets = [32, 128], sizes = [512, 128], strides = [1, 1]} : vector<552x384xf32> to vector<512x128xf32>
    %15 = arith.addf %13, %14 : vector<512x128xf32>
    %16 = vector.extract_strided_slice %12 {offsets = [33, 256], sizes = [512, 128], strides = [1, 1]} : vector<552x384xf32> to vector<512x128xf32>
    %17 = arith.addf %15, %16 : vector<512x128xf32>
    %c0_14 = arith.constant 0 : index
    %c0_15 = arith.constant 0 : index
    %18 = vector.load %arg3[%c0_14, %c0_15] : memref<1x128xf32, #tpu.memory_space<vmem>>, vector<1x128xf32>
    %19 = vector.broadcast %18 : vector<1x128xf32> to vector<512x128xf32>
    %20 = arith.addf %17, %19 : vector<512x128xf32>
    %cst_16 = arith.constant 0.000000e+00 : f32
    %21 = vector.broadcast %cst_16 : f32 to vector<512x128xf32>
    %22 = arith.maximumf %20, %21 : vector<512x128xf32>
    %23 = vector.shape_cast %22 : vector<512x128xf32> to vector<16x32x128xf32>
    %24 = vector.shape_cast %23 : vector<16x32x128xf32> to vector<8x2x32x128xf32>
    %25 = vector.extract_strided_slice %24 {offsets = [0, 0, 0, 0], sizes = [8, 1, 32, 128], strides = [1, 1, 1, 1]} : vector<8x2x32x128xf32> to vector<8x1x32x128xf32>
    %26 = vector.shape_cast %25 : vector<8x1x32x128xf32> to vector<8x32x128xf32>
    %c0_17 = arith.constant 0 : index
    %c0_18 = arith.constant 0 : index
    %c0_19 = arith.constant 0 : index
    %27 = vector.load %arg6[%c0_17, %c0_18, %c0_19] : memref<8x32x128xf32, #tpu.memory_space<vmem>>, vector<8x32x128xf32>
    tpu.vector_store %arg6[%c0_17, %c0_18, %c0_19], %26 {strides = array<i32>} : memref<8x32x128xf32, #tpu.memory_space<vmem>>, vector<8x32x128xf32>,
    %c0_20 = arith.constant 0 : index
    %c0_21 = arith.constant 0 : index
    %c0_22 = arith.constant 0 : index
    %28 = tpu.strided_load %arg6[%c0_20, %c0_21, %c0_22] {strides = array<i32: 1, 2, 1>} : memref<8x32x128xf32, #tpu.memory_space<vmem>>, vector<8x8x128xf32>
    %29 = arith.truncf %28 : vector<8x8x128xf32> to vector<8x8x128xbf16>
    %c0_23 = arith.constant 0 : index
    %c0_24 = arith.constant 0 : index
    %c0_25 = arith.constant 0 : index
    %c0_26 = arith.constant 0 : index
    %30 = vector.load %arg4[%c0_23, %c0_24, %c0_25, %c0_26] : memref<1x8x8x128xbf16, #tpu.memory_space<vmem>>, vector<1x8x8x128xbf16>
    %31 = vector.shape_cast %30 : vector<1x8x8x128xbf16> to vector<8x8x128xbf16>
    %32 = vector.shape_cast %29 : vector<8x8x128xbf16> to vector<1x8x8x128xbf16>
    tpu.vector_store %arg4[%c0_23, %c0_24, %c0_25, %c0_26], %32 {strides = array<i32>} : memref<1x8x8x128xbf16, #tpu.memory_space<vmem>>, vector<1x8x8x128xbf16>,
    return
  }
  func.func @transform_0(%arg0: i32) -> (i32, i32, i32, i32) {
    %c0_i32 = arith.constant 0 : i32
    %c0_i32_0 = arith.constant 0 : i32
    %c0_i32_1 = arith.constant 0 : i32
    %c0_i32_2 = arith.constant 0 : i32
    return %arg0, %c0_i32, %c0_i32_0, %c0_i32_1 : i32, i32, i32, i32
  }
  func.func @transform_1(%arg0: i32) -> (i32, i32) {
    %c0_i32 = arith.constant 0 : i32
    %c0_i32_0 = arith.constant 0 : i32
    %c0_i32_1 = arith.constant 0 : i32
    return %c0_i32, %c0_i32_0 : i32, i32
  }
  func.func @transform_2(%arg0: i32) -> (i32, i32) {
    %c0_i32 = arith.constant 0 : i32
    %c0_i32_0 = arith.constant 0 : i32
    %c0_i32_1 = arith.constant 0 : i32
    return %c0_i32, %c0_i32_0 : i32, i32
  }
  func.func @transform_3(%arg0: i32) -> (i32, i32, i32, i32) {
    %c0_i32 = arith.constant 0 : i32
    %c0_i32_0 = arith.constant 0 : i32
    %c0_i32_1 = arith.constant 0 : i32
    %c0_i32_2 = arith.constant 0 : i32
    return %arg0, %c0_i32, %c0_i32_0, %c0_i32_1 : i32, i32, i32, i32
  }
}

module attributes {stable_mosaic.version = 11 : i64} {
  func.func @_dw_conv_kernel(%arg0: i32, %arg1: memref<1x4x4x128xbf16, #tpu.memory_space<vmem>>, %arg2: memref<9x128xf32, #tpu.memory_space<vmem>>, %arg3: memref<1x128xf32, #tpu.memory_space<vmem>>, %arg4: memref<1x2x2x128xbf16, #tpu.memory_space<vmem>>, %arg5: memref<8x16x128xbf16, #tpu.memory_space<vmem>>, %arg6: memref<2x16x128xf32, #tpu.memory_space<vmem>>) attributes {dimension_semantics = [#tpu.dimension_semantics<parallel>], iteration_bounds = array<i64: 2>, scalar_prefetch = 0 : i64, scratch_operands = 2 : i64, tpu.core_type = #tpu.core_type<tc>, window_params = [{transform_indices = @transform_0, window_bounds = array<i64: 1, 4, 4, 128>}, {pipeline_mode = #tpu.pipeline_mode<synchronous>, transform_indices = @transform_1, window_bounds = array<i64: 9, 128>}, {pipeline_mode = #tpu.pipeline_mode<synchronous>, transform_indices = @transform_2, window_bounds = array<i64: 1, 128>}, {transform_indices = @transform_3, window_bounds = array<i64: 1, 2, 2, 128>}]} {
    %cst = arith.constant 0.000000e+00 : bf16
    %0 = vector.broadcast %cst : bf16 to vector<8x16x128xbf16>
    %c0 = arith.constant 0 : index
    %c0_0 = arith.constant 0 : index
    %c0_1 = arith.constant 0 : index
    %1 = vector.load %arg5[%c0, %c0_0, %c0_1] : memref<8x16x128xbf16, #tpu.memory_space<vmem>>, vector<8x16x128xbf16>
    tpu.vector_store %arg5[%c0, %c0_0, %c0_1], %0 {strides = array<i32>} : memref<8x16x128xbf16, #tpu.memory_space<vmem>>, vector<8x16x128xbf16>,
    %c0_2 = arith.constant 0 : index
    %c0_3 = arith.constant 0 : index
    %c0_4 = arith.constant 0 : index
    %c0_5 = arith.constant 0 : index
    %2 = vector.load %arg1[%c0_2, %c0_3, %c0_4, %c0_5] : memref<1x4x4x128xbf16, #tpu.memory_space<vmem>>, vector<1x4x4x128xbf16>
    %3 = vector.shape_cast %2 : vector<1x4x4x128xbf16> to vector<4x4x128xbf16>
    %c2 = arith.constant 2 : index
    %c0_6 = arith.constant 0 : index
    %c0_7 = arith.constant 0 : index
    %4 = vector.load %arg5[%c2, %c0_6, %c0_7] : memref<8x16x128xbf16, #tpu.memory_space<vmem>>, vector<4x4x128xbf16>
    tpu.vector_store %arg5[%c2, %c0_6, %c0_7], %3 {strides = array<i32>} : memref<8x16x128xbf16, #tpu.memory_space<vmem>>, vector<4x4x128xbf16>,
    %c0_8 = arith.constant 0 : index
    %c0_9 = arith.constant 0 : index
    %c0_10 = arith.constant 0 : index
    %5 = vector.load %arg5[%c0_8, %c0_9, %c0_10] : memref<8x16x128xbf16, #tpu.memory_space<vmem>>, vector<8x16x128xbf16>
    %6 = vector.shape_cast %5 : vector<8x16x128xbf16> to vector<128x128xbf16>
    %7 = vector.extract_strided_slice %6 {offsets = [0, 0], sizes = [88, 128], strides = [1, 1]} : vector<128x128xbf16> to vector<88x128xbf16>
    %8 = vector.extract_strided_slice %6 {offsets = [16, 0], sizes = [88, 128], strides = [1, 1]} : vector<128x128xbf16> to vector<88x128xbf16>
    %9 = vector.extract_strided_slice %6 {offsets = [32, 0], sizes = [88, 128], strides = [1, 1]} : vector<128x128xbf16> to vector<88x128xbf16>
    %c0_11 = arith.constant 0 : index
    %c0_12 = arith.constant 0 : index
    %10 = vector.load %arg2[%c0_11, %c0_12] : memref<9x128xf32, #tpu.memory_space<vmem>>, vector<1x128xf32>
    %11 = arith.extf %7 : vector<88x128xbf16> to vector<88x128xf32>
    %12 = vector.broadcast %10 : vector<1x128xf32> to vector<88x128xf32>
    %13 = arith.mulf %11, %12 : vector<88x128xf32>
    %c3 = arith.constant 3 : index
    %c0_13 = arith.constant 0 : index
    %14 = vector.load %arg2[%c3, %c0_13] : memref<9x128xf32, #tpu.memory_space<vmem>>, vector<1x128xf32>
    %15 = arith.extf %8 : vector<88x128xbf16> to vector<88x128xf32>
    %16 = vector.broadcast %14 : vector<1x128xf32> to vector<88x128xf32>
    %17 = arith.mulf %15, %16 : vector<88x128xf32>
    %18 = arith.addf %13, %17 : vector<88x128xf32>
    %c6 = arith.constant 6 : index
    %c0_14 = arith.constant 0 : index
    %19 = vector.load %arg2[%c6, %c0_14] : memref<9x128xf32, #tpu.memory_space<vmem>>, vector<1x128xf32>
    %20 = arith.extf %9 : vector<88x128xbf16> to vector<88x128xf32>
    %21 = vector.broadcast %19 : vector<1x128xf32> to vector<88x128xf32>
    %22 = arith.mulf %20, %21 : vector<88x128xf32>
    %23 = arith.addf %18, %22 : vector<88x128xf32>
    %c1 = arith.constant 1 : index
    %c0_15 = arith.constant 0 : index
    %24 = vector.load %arg2[%c1, %c0_15] : memref<9x128xf32, #tpu.memory_space<vmem>>, vector<1x128xf32>
    %25 = arith.extf %7 : vector<88x128xbf16> to vector<88x128xf32>
    %26 = vector.broadcast %24 : vector<1x128xf32> to vector<88x128xf32>
    %27 = arith.mulf %25, %26 : vector<88x128xf32>
    %c4 = arith.constant 4 : index
    %c0_16 = arith.constant 0 : index
    %28 = vector.load %arg2[%c4, %c0_16] : memref<9x128xf32, #tpu.memory_space<vmem>>, vector<1x128xf32>
    %29 = arith.extf %8 : vector<88x128xbf16> to vector<88x128xf32>
    %30 = vector.broadcast %28 : vector<1x128xf32> to vector<88x128xf32>
    %31 = arith.mulf %29, %30 : vector<88x128xf32>
    %32 = arith.addf %27, %31 : vector<88x128xf32>
    %c7 = arith.constant 7 : index
    %c0_17 = arith.constant 0 : index
    %33 = vector.load %arg2[%c7, %c0_17] : memref<9x128xf32, #tpu.memory_space<vmem>>, vector<1x128xf32>
    %34 = arith.extf %9 : vector<88x128xbf16> to vector<88x128xf32>
    %35 = vector.broadcast %33 : vector<1x128xf32> to vector<88x128xf32>
    %36 = arith.mulf %34, %35 : vector<88x128xf32>
    %37 = arith.addf %32, %36 : vector<88x128xf32>
    %c2_18 = arith.constant 2 : index
    %c0_19 = arith.constant 0 : index
    %38 = vector.load %arg2[%c2_18, %c0_19] : memref<9x128xf32, #tpu.memory_space<vmem>>, vector<1x128xf32>
    %39 = arith.extf %7 : vector<88x128xbf16> to vector<88x128xf32>
    %40 = vector.broadcast %38 : vector<1x128xf32> to vector<88x128xf32>
    %41 = arith.mulf %39, %40 : vector<88x128xf32>
    %c5 = arith.constant 5 : index
    %c0_20 = arith.constant 0 : index
    %42 = vector.load %arg2[%c5, %c0_20] : memref<9x128xf32, #tpu.memory_space<vmem>>, vector<1x128xf32>
    %43 = arith.extf %8 : vector<88x128xbf16> to vector<88x128xf32>
    %44 = vector.broadcast %42 : vector<1x128xf32> to vector<88x128xf32>
    %45 = arith.mulf %43, %44 : vector<88x128xf32>
    %46 = arith.addf %41, %45 : vector<88x128xf32>
    %c8 = arith.constant 8 : index
    %c0_21 = arith.constant 0 : index
    %47 = vector.load %arg2[%c8, %c0_21] : memref<9x128xf32, #tpu.memory_space<vmem>>, vector<1x128xf32>
    %48 = arith.extf %9 : vector<88x128xbf16> to vector<88x128xf32>
    %49 = vector.broadcast %47 : vector<1x128xf32> to vector<88x128xf32>
    %50 = arith.mulf %48, %49 : vector<88x128xf32>
    %51 = arith.addf %46, %50 : vector<88x128xf32>
    %52 = vector.extract_strided_slice %23 {offsets = [15, 0], sizes = [64, 128], strides = [1, 1]} : vector<88x128xf32> to vector<64x128xf32>
    %53 = vector.extract_strided_slice %37 {offsets = [16, 0], sizes = [64, 128], strides = [1, 1]} : vector<88x128xf32> to vector<64x128xf32>
    %54 = arith.addf %52, %53 : vector<64x128xf32>
    %55 = vector.extract_strided_slice %51 {offsets = [17, 0], sizes = [64, 128], strides = [1, 1]} : vector<88x128xf32> to vector<64x128xf32>
    %56 = arith.addf %54, %55 : vector<64x128xf32>
    %c0_22 = arith.constant 0 : index
    %c0_23 = arith.constant 0 : index
    %57 = vector.load %arg3[%c0_22, %c0_23] : memref<1x128xf32, #tpu.memory_space<vmem>>, vector<1x128xf32>
    %58 = vector.broadcast %57 : vector<1x128xf32> to vector<64x128xf32>
    %59 = arith.addf %56, %58 : vector<64x128xf32>
    %60 = vector.shape_cast %59 : vector<64x128xf32> to vector<4x16x128xf32>
    %61 = vector.shape_cast %60 : vector<4x16x128xf32> to vector<2x2x16x128xf32>
    %62 = vector.extract_strided_slice %61 {offsets = [0, 0, 0, 0], sizes = [2, 1, 16, 128], strides = [1, 1, 1, 1]} : vector<2x2x16x128xf32> to vector<2x1x16x128xf32>
    %63 = vector.shape_cast %62 : vector<2x1x16x128xf32> to vector<2x16x128xf32>
    %c0_24 = arith.constant 0 : index
    %c0_25 = arith.constant 0 : index
    %c0_26 = arith.constant 0 : index
    %64 = vector.load %arg6[%c0_24, %c0_25, %c0_26] : memref<2x16x128xf32, #tpu.memory_space<vmem>>, vector<2x16x128xf32>
    tpu.vector_store %arg6[%c0_24, %c0_25, %c0_26], %63 {strides = array<i32>} : memref<2x16x128xf32, #tpu.memory_space<vmem>>, vector<2x16x128xf32>,
    %c0_27 = arith.constant 0 : index
    %c0_28 = arith.constant 0 : index
    %c0_29 = arith.constant 0 : index
    %65 = tpu.strided_load %arg6[%c0_27, %c0_28, %c0_29] {strides = array<i32: 1, 2, 1>} : memref<2x16x128xf32, #tpu.memory_space<vmem>>, vector<2x2x128xf32>
    %66 = arith.truncf %65 : vector<2x2x128xf32> to vector<2x2x128xbf16>
    %c0_30 = arith.constant 0 : index
    %c0_31 = arith.constant 0 : index
    %c0_32 = arith.constant 0 : index
    %c0_33 = arith.constant 0 : index
    %67 = vector.load %arg4[%c0_30, %c0_31, %c0_32, %c0_33] : memref<1x2x2x128xbf16, #tpu.memory_space<vmem>>, vector<1x2x2x128xbf16>
    %68 = vector.shape_cast %67 : vector<1x2x2x128xbf16> to vector<2x2x128xbf16>
    %69 = vector.shape_cast %66 : vector<2x2x128xbf16> to vector<1x2x2x128xbf16>
    tpu.vector_store %arg4[%c0_30, %c0_31, %c0_32, %c0_33], %69 {strides = array<i32>} : memref<1x2x2x128xbf16, #tpu.memory_space<vmem>>, vector<1x2x2x128xbf16>,
    return
  }
  func.func @transform_0(%arg0: i32) -> (i32, i32, i32, i32) {
    %c0_i32 = arith.constant 0 : i32
    %c0_i32_0 = arith.constant 0 : i32
    %c0_i32_1 = arith.constant 0 : i32
    %c0_i32_2 = arith.constant 0 : i32
    return %arg0, %c0_i32, %c0_i32_0, %c0_i32_1 : i32, i32, i32, i32
  }
  func.func @transform_1(%arg0: i32) -> (i32, i32) {
    %c0_i32 = arith.constant 0 : i32
    %c0_i32_0 = arith.constant 0 : i32
    %c0_i32_1 = arith.constant 0 : i32
    return %c0_i32, %c0_i32_0 : i32, i32
  }
  func.func @transform_2(%arg0: i32) -> (i32, i32) {
    %c0_i32 = arith.constant 0 : i32
    %c0_i32_0 = arith.constant 0 : i32
    %c0_i32_1 = arith.constant 0 : i32
    return %c0_i32, %c0_i32_0 : i32, i32
  }
  func.func @transform_3(%arg0: i32) -> (i32, i32, i32, i32) {
    %c0_i32 = arith.constant 0 : i32
    %c0_i32_0 = arith.constant 0 : i32
    %c0_i32_1 = arith.constant 0 : i32
    %c0_i32_2 = arith.constant 0 : i32
    return %arg0, %c0_i32, %c0_i32_0, %c0_i32_1 : i32, i32, i32, i32
  }
}

module attributes {stable_mosaic.version = 11 : i64} {
  func.func @_avgpool_kernel(%arg0: i32, %arg1: memref<1x4x4x128xbf16, #tpu.memory_space<vmem>>, %arg2: memref<1x2x2x128xbf16, #tpu.memory_space<vmem>>, %arg3: memref<8x16x128xbf16, #tpu.memory_space<vmem>>, %arg4: memref<2x16x128xf32, #tpu.memory_space<vmem>>) attributes {dimension_semantics = [#tpu.dimension_semantics<parallel>], iteration_bounds = array<i64: 2>, scalar_prefetch = 0 : i64, scratch_operands = 2 : i64, tpu.core_type = #tpu.core_type<tc>, window_params = [{transform_indices = @transform_0, window_bounds = array<i64: 1, 4, 4, 128>}, {transform_indices = @transform_1, window_bounds = array<i64: 1, 2, 2, 128>}]} {
    %cst = arith.constant 0.000000e+00 : bf16
    %0 = vector.broadcast %cst : bf16 to vector<8x16x128xbf16>
    %c0 = arith.constant 0 : index
    %c0_0 = arith.constant 0 : index
    %c0_1 = arith.constant 0 : index
    %1 = vector.load %arg3[%c0, %c0_0, %c0_1] : memref<8x16x128xbf16, #tpu.memory_space<vmem>>, vector<8x16x128xbf16>
    tpu.vector_store %arg3[%c0, %c0_0, %c0_1], %0 {strides = array<i32>} : memref<8x16x128xbf16, #tpu.memory_space<vmem>>, vector<8x16x128xbf16>,
    %c0_2 = arith.constant 0 : index
    %c0_3 = arith.constant 0 : index
    %c0_4 = arith.constant 0 : index
    %c0_5 = arith.constant 0 : index
    %2 = vector.load %arg1[%c0_2, %c0_3, %c0_4, %c0_5] : memref<1x4x4x128xbf16, #tpu.memory_space<vmem>>, vector<1x4x4x128xbf16>
    %3 = vector.shape_cast %2 : vector<1x4x4x128xbf16> to vector<4x4x128xbf16>
    %c2 = arith.constant 2 : index
    %c0_6 = arith.constant 0 : index
    %c0_7 = arith.constant 0 : index
    %4 = vector.load %arg3[%c2, %c0_6, %c0_7] : memref<8x16x128xbf16, #tpu.memory_space<vmem>>, vector<4x4x128xbf16>
    tpu.vector_store %arg3[%c2, %c0_6, %c0_7], %3 {strides = array<i32>} : memref<8x16x128xbf16, #tpu.memory_space<vmem>>, vector<4x4x128xbf16>,
    %c0_8 = arith.constant 0 : index
    %c0_9 = arith.constant 0 : index
    %c0_10 = arith.constant 0 : index
    %5 = vector.load %arg3[%c0_8, %c0_9, %c0_10] : memref<8x16x128xbf16, #tpu.memory_space<vmem>>, vector<8x16x128xbf16>
    %6 = vector.shape_cast %5 : vector<8x16x128xbf16> to vector<128x128xbf16>
    %7 = vector.extract_strided_slice %6 {offsets = [0, 0], sizes = [88, 128], strides = [1, 1]} : vector<128x128xbf16> to vector<88x128xbf16>
    %8 = arith.extf %7 : vector<88x128xbf16> to vector<88x128xf32>
    %9 = vector.extract_strided_slice %6 {offsets = [16, 0], sizes = [88, 128], strides = [1, 1]} : vector<128x128xbf16> to vector<88x128xbf16>
    %10 = arith.extf %9 : vector<88x128xbf16> to vector<88x128xf32>
    %11 = arith.addf %8, %10 : vector<88x128xf32>
    %12 = vector.extract_strided_slice %6 {offsets = [32, 0], sizes = [88, 128], strides = [1, 1]} : vector<128x128xbf16> to vector<88x128xbf16>
    %13 = arith.extf %12 : vector<88x128xbf16> to vector<88x128xf32>
    %14 = arith.addf %11, %13 : vector<88x128xf32>
    %15 = vector.extract_strided_slice %14 {offsets = [15, 0], sizes = [64, 128], strides = [1, 1]} : vector<88x128xf32> to vector<64x128xf32>
    %16 = vector.extract_strided_slice %14 {offsets = [16, 0], sizes = [64, 128], strides = [1, 1]} : vector<88x128xf32> to vector<64x128xf32>
    %17 = arith.addf %15, %16 : vector<64x128xf32>
    %18 = vector.extract_strided_slice %14 {offsets = [17, 0], sizes = [64, 128], strides = [1, 1]} : vector<88x128xf32> to vector<64x128xf32>
    %19 = arith.addf %17, %18 : vector<64x128xf32>
    %cst_11 = arith.constant 0.111111112 : f32
    %20 = vector.broadcast %cst_11 : f32 to vector<64x128xf32>
    %21 = arith.mulf %19, %20 : vector<64x128xf32>
    %22 = vector.shape_cast %21 : vector<64x128xf32> to vector<4x16x128xf32>
    %23 = vector.shape_cast %22 : vector<4x16x128xf32> to vector<2x2x16x128xf32>
    %24 = vector.extract_strided_slice %23 {offsets = [0, 0, 0, 0], sizes = [2, 1, 16, 128], strides = [1, 1, 1, 1]} : vector<2x2x16x128xf32> to vector<2x1x16x128xf32>
    %25 = vector.shape_cast %24 : vector<2x1x16x128xf32> to vector<2x16x128xf32>
    %c0_12 = arith.constant 0 : index
    %c0_13 = arith.constant 0 : index
    %c0_14 = arith.constant 0 : index
    %26 = vector.load %arg4[%c0_12, %c0_13, %c0_14] : memref<2x16x128xf32, #tpu.memory_space<vmem>>, vector<2x16x128xf32>
    tpu.vector_store %arg4[%c0_12, %c0_13, %c0_14], %25 {strides = array<i32>} : memref<2x16x128xf32, #tpu.memory_space<vmem>>, vector<2x16x128xf32>,
    %c0_15 = arith.constant 0 : index
    %c0_16 = arith.constant 0 : index
    %c0_17 = arith.constant 0 : index
    %27 = tpu.strided_load %arg4[%c0_15, %c0_16, %c0_17] {strides = array<i32: 1, 2, 1>} : memref<2x16x128xf32, #tpu.memory_space<vmem>>, vector<2x2x128xf32>
    %28 = arith.truncf %27 : vector<2x2x128xf32> to vector<2x2x128xbf16>
    %c0_18 = arith.constant 0 : index
    %c0_19 = arith.constant 0 : index
    %c0_20 = arith.constant 0 : index
    %c0_21 = arith.constant 0 : index
    %29 = vector.load %arg2[%c0_18, %c0_19, %c0_20, %c0_21] : memref<1x2x2x128xbf16, #tpu.memory_space<vmem>>, vector<1x2x2x128xbf16>
    %30 = vector.shape_cast %29 : vector<1x2x2x128xbf16> to vector<2x2x128xbf16>
    %31 = vector.shape_cast %28 : vector<2x2x128xbf16> to vector<1x2x2x128xbf16>
    tpu.vector_store %arg2[%c0_18, %c0_19, %c0_20, %c0_21], %31 {strides = array<i32>} : memref<1x2x2x128xbf16, #tpu.memory_space<vmem>>, vector<1x2x2x128xbf16>,
    return
  }
  func.func @transform_0(%arg0: i32) -> (i32, i32, i32, i32) {
    %c0_i32 = arith.constant 0 : i32
    %c0_i32_0 = arith.constant 0 : i32
    %c0_i32_1 = arith.constant 0 : i32
    %c0_i32_2 = arith.constant 0 : i32
    return %arg0, %c0_i32, %c0_i32_0, %c0_i32_1 : i32, i32, i32, i32
  }
  func.func @transform_1(%arg0: i32) -> (i32, i32, i32, i32) {
    %c0_i32 = arith.constant 0 : i32
    %c0_i32_0 = arith.constant 0 : i32
    %c0_i32_1 = arith.constant 0 : i32
    %c0_i32_2 = arith.constant 0 : i32
    return %arg0, %c0_i32, %c0_i32_0, %c0_i32_1 : i32, i32, i32, i32
  }
}

module attributes {stable_mosaic.version = 11 : i64} {
  func.func @_conv_kernel(%arg0: i32, %arg1: memref<1x2x2x128xbf16, #tpu.memory_space<vmem>>, %arg2: memref<384x384xbf16, #tpu.memory_space<vmem>>, %arg3: memref<1x128xf32, #tpu.memory_space<vmem>>, %arg4: memref<1x2x2x128xbf16, #tpu.memory_space<vmem>>, %arg5: memref<6x16x128xbf16, #tpu.memory_space<vmem>>) attributes {dimension_semantics = [#tpu.dimension_semantics<parallel>], iteration_bounds = array<i64: 2>, scalar_prefetch = 0 : i64, scratch_operands = 1 : i64, tpu.core_type = #tpu.core_type<tc>, window_params = [{transform_indices = @transform_0, window_bounds = array<i64: 1, 2, 2, 128>}, {pipeline_mode = #tpu.pipeline_mode<synchronous>, transform_indices = @transform_1, window_bounds = array<i64: 384, 384>}, {pipeline_mode = #tpu.pipeline_mode<synchronous>, transform_indices = @transform_2, window_bounds = array<i64: 1, 128>}, {transform_indices = @transform_3, window_bounds = array<i64: 1, 2, 2, 128>}]} {
    %cst = arith.constant 0.000000e+00 : bf16
    %0 = vector.broadcast %cst : bf16 to vector<6x16x128xbf16>
    %c0 = arith.constant 0 : index
    %c0_0 = arith.constant 0 : index
    %c0_1 = arith.constant 0 : index
    %1 = vector.load %arg5[%c0, %c0_0, %c0_1] : memref<6x16x128xbf16, #tpu.memory_space<vmem>>, vector<6x16x128xbf16>
    tpu.vector_store %arg5[%c0, %c0_0, %c0_1], %0 {strides = array<i32>} : memref<6x16x128xbf16, #tpu.memory_space<vmem>>, vector<6x16x128xbf16>,
    %c0_2 = arith.constant 0 : index
    %c0_3 = arith.constant 0 : index
    %c0_4 = arith.constant 0 : index
    %c0_5 = arith.constant 0 : index
    %2 = vector.load %arg1[%c0_2, %c0_3, %c0_4, %c0_5] : memref<1x2x2x128xbf16, #tpu.memory_space<vmem>>, vector<1x2x2x128xbf16>
    %3 = vector.shape_cast %2 : vector<1x2x2x128xbf16> to vector<2x2x128xbf16>
    %c2 = arith.constant 2 : index
    %c0_6 = arith.constant 0 : index
    %c0_7 = arith.constant 0 : index
    %4 = vector.load %arg5[%c2, %c0_6, %c0_7] : memref<6x16x128xbf16, #tpu.memory_space<vmem>>, vector<2x2x128xbf16>
    tpu.vector_store %arg5[%c2, %c0_6, %c0_7], %3 {strides = array<i32>} : memref<6x16x128xbf16, #tpu.memory_space<vmem>>, vector<2x2x128xbf16>,
    %c0_8 = arith.constant 0 : index
    %c0_9 = arith.constant 0 : index
    %c0_10 = arith.constant 0 : index
    %5 = vector.load %arg5[%c0_8, %c0_9, %c0_10] : memref<6x16x128xbf16, #tpu.memory_space<vmem>>, vector<6x16x128xbf16>
    %6 = vector.shape_cast %5 : vector<6x16x128xbf16> to vector<96x128xbf16>
    %7 = vector.extract_strided_slice %6 {offsets = [0, 0], sizes = [56, 128], strides = [1, 1]} : vector<96x128xbf16> to vector<56x128xbf16>
    %8 = vector.extract_strided_slice %6 {offsets = [16, 0], sizes = [56, 128], strides = [1, 1]} : vector<96x128xbf16> to vector<56x128xbf16>
    %9 = vector.extract_strided_slice %6 {offsets = [32, 0], sizes = [56, 128], strides = [1, 1]} : vector<96x128xbf16> to vector<56x128xbf16>
    %10 = tpu.concatenate %7, %8, %9 in 1 : vector<56x128xbf16>, vector<56x128xbf16>, vector<56x128xbf16> -> vector<56x384xbf16>
    %c0_11 = arith.constant 0 : index
    %c0_12 = arith.constant 0 : index
    %11 = vector.load %arg2[%c0_11, %c0_12] : memref<384x384xbf16, #tpu.memory_space<vmem>>, vector<384x384xbf16>
    %cst_13 = arith.constant dense<0.000000e+00> : vector<56x384xf32>
    %12 = tpu.matmul %10, %11, %cst_13 {dimension_numbers = #tpu.dot_dimension_numbers<[1], [0], [0], [1], [0, 0, 1, 1], [], []>} : vector<56x384xbf16>, vector<384x384xbf16>, vector<56x384xf32> -> vector<56x384xf32>
    %13 = vector.extract_strided_slice %12 {offsets = [15, 0], sizes = [32, 128], strides = [1, 1]} : vector<56x384xf32> to vector<32x128xf32>
    %14 = vector.extract_strided_slice %12 {offsets = [16, 128], sizes = [32, 128], strides = [1, 1]} : vector<56x384xf32> to vector<32x128xf32>
    %15 = arith.addf %13, %14 : vector<32x128xf32>
    %16 = vector.extract_strided_slice %12 {offsets = [17, 256], sizes = [32, 128], strides = [1, 1]} : vector<56x384xf32> to vector<32x128xf32>
    %17 = arith.addf %15, %16 : vector<32x128xf32>
    %c0_14 = arith.constant 0 : index
    %c0_15 = arith.constant 0 : index
    %18 = vector.load %arg3[%c0_14, %c0_15] : memref<1x128xf32, #tpu.memory_space<vmem>>, vector<1x128xf32>
    %19 = vector.broadcast %18 : vector<1x128xf32> to vector<32x128xf32>
    %20 = arith.addf %17, %19 : vector<32x128xf32>
    %cst_16 = arith.constant 0.000000e+00 : f32
    %21 = vector.broadcast %cst_16 : f32 to vector<32x128xf32>
    %22 = arith.maximumf %20, %21 : vector<32x128xf32>
    %23 = vector.shape_cast %22 : vector<32x128xf32> to vector<2x16x128xf32>
    %24 = vector.extract_strided_slice %23 {offsets = [0, 0, 0], sizes = [2, 2, 128], strides = [1, 1, 1]} : vector<2x16x128xf32> to vector<2x2x128xf32>
    %25 = arith.truncf %24 : vector<2x2x128xf32> to vector<2x2x128xbf16>
    %c0_17 = arith.constant 0 : index
    %c0_18 = arith.constant 0 : index
    %c0_19 = arith.constant 0 : index
    %c0_20 = arith.constant 0 : index
    %26 = vector.load %arg4[%c0_17, %c0_18, %c0_19, %c0_20] : memref<1x2x2x128xbf16, #tpu.memory_space<vmem>>, vector<1x2x2x128xbf16>
    %27 = vector.shape_cast %26 : vector<1x2x2x128xbf16> to vector<2x2x128xbf16>
    %28 = vector.shape_cast %25 : vector<2x2x128xbf16> to vector<1x2x2x128xbf16>
    tpu.vector_store %arg4[%c0_17, %c0_18, %c0_19, %c0_20], %28 {strides = array<i32>} : memref<1x2x2x128xbf16, #tpu.memory_space<vmem>>, vector<1x2x2x128xbf16>,
    return
  }
  func.func @transform_0(%arg0: i32) -> (i32, i32, i32, i32) {
    %c0_i32 = arith.constant 0 : i32
    %c0_i32_0 = arith.constant 0 : i32
    %c0_i32_1 = arith.constant 0 : i32
    %c0_i32_2 = arith.constant 0 : i32
    return %arg0, %c0_i32, %c0_i32_0, %c0_i32_1 : i32, i32, i32, i32
  }
  func.func @transform_1(%arg0: i32) -> (i32, i32) {
    %c0_i32 = arith.constant 0 : i32
    %c0_i32_0 = arith.constant 0 : i32
    %c0_i32_1 = arith.constant 0 : i32
    return %c0_i32, %c0_i32_0 : i32, i32
  }
  func.func @transform_2(%arg0: i32) -> (i32, i32) {
    %c0_i32 = arith.constant 0 : i32
    %c0_i32_0 = arith.constant 0 : i32
    %c0_i32_1 = arith.constant 0 : i32
    return %c0_i32, %c0_i32_0 : i32, i32
  }
  func.func @transform_3(%arg0: i32) -> (i32, i32, i32, i32) {
    %c0_i32 = arith.constant 0 : i32
    %c0_i32_0 = arith.constant 0 : i32
    %c0_i32_1 = arith.constant 0 : i32
    %c0_i32_2 = arith.constant 0 : i32
    return %arg0, %c0_i32, %c0_i32_0, %c0_i32_1 : i32, i32, i32, i32
  }
}

module attributes {stable_mosaic.version = 11 : i64} {
  func.func @_conv_kernel(%arg0: i32, %arg1: memref<1x2x2x128xbf16, #tpu.memory_space<vmem>>, %arg2: memref<128x128xbf16, #tpu.memory_space<vmem>>, %arg3: memref<1x128xf32, #tpu.memory_space<vmem>>, %arg4: memref<1x2x2x128xbf16, #tpu.memory_space<vmem>>, %arg5: memref<2x16x128xbf16, #tpu.memory_space<vmem>>) attributes {dimension_semantics = [#tpu.dimension_semantics<parallel>], iteration_bounds = array<i64: 2>, scalar_prefetch = 0 : i64, scratch_operands = 1 : i64, tpu.core_type = #tpu.core_type<tc>, window_params = [{transform_indices = @transform_0, window_bounds = array<i64: 1, 2, 2, 128>}, {pipeline_mode = #tpu.pipeline_mode<synchronous>, transform_indices = @transform_1, window_bounds = array<i64: 128, 128>}, {pipeline_mode = #tpu.pipeline_mode<synchronous>, transform_indices = @transform_2, window_bounds = array<i64: 1, 128>}, {transform_indices = @transform_3, window_bounds = array<i64: 1, 2, 2, 128>}]} {
    %cst = arith.constant 0.000000e+00 : bf16
    %0 = vector.broadcast %cst : bf16 to vector<2x16x128xbf16>
    %c0 = arith.constant 0 : index
    %c0_0 = arith.constant 0 : index
    %c0_1 = arith.constant 0 : index
    %1 = vector.load %arg5[%c0, %c0_0, %c0_1] : memref<2x16x128xbf16, #tpu.memory_space<vmem>>, vector<2x16x128xbf16>
    tpu.vector_store %arg5[%c0, %c0_0, %c0_1], %0 {strides = array<i32>} : memref<2x16x128xbf16, #tpu.memory_space<vmem>>, vector<2x16x128xbf16>,
    %c0_2 = arith.constant 0 : index
    %c0_3 = arith.constant 0 : index
    %c0_4 = arith.constant 0 : index
    %c0_5 = arith.constant 0 : index
    %2 = vector.load %arg1[%c0_2, %c0_3, %c0_4, %c0_5] : memref<1x2x2x128xbf16, #tpu.memory_space<vmem>>, vector<1x2x2x128xbf16>
    %3 = vector.shape_cast %2 : vector<1x2x2x128xbf16> to vector<2x2x128xbf16>
    %c0_6 = arith.constant 0 : index
    %c0_7 = arith.constant 0 : index
    %c0_8 = arith.constant 0 : index
    %4 = vector.load %arg5[%c0_6, %c0_7, %c0_8] : memref<2x16x128xbf16, #tpu.memory_space<vmem>>, vector<2x2x128xbf16>
    tpu.vector_store %arg5[%c0_6, %c0_7, %c0_8], %3 {strides = array<i32>} : memref<2x16x128xbf16, #tpu.memory_space<vmem>>, vector<2x2x128xbf16>,
    %c0_9 = arith.constant 0 : index
    %c0_10 = arith.constant 0 : index
    %c0_11 = arith.constant 0 : index
    %5 = vector.load %arg5[%c0_9, %c0_10, %c0_11] : memref<2x16x128xbf16, #tpu.memory_space<vmem>>, vector<2x16x128xbf16>
    %6 = vector.shape_cast %5 : vector<2x16x128xbf16> to vector<32x128xbf16>
    %c0_12 = arith.constant 0 : index
    %c0_13 = arith.constant 0 : index
    %7 = vector.load %arg2[%c0_12, %c0_13] : memref<128x128xbf16, #tpu.memory_space<vmem>>, vector<128x128xbf16>
    %cst_14 = arith.constant dense<0.000000e+00> : vector<32x128xf32>
    %8 = tpu.matmul %6, %7, %cst_14 {dimension_numbers = #tpu.dot_dimension_numbers<[1], [0], [0], [1], [0, 0, 1, 1], [], []>} : vector<32x128xbf16>, vector<128x128xbf16>, vector<32x128xf32> -> vector<32x128xf32>
    %c0_15 = arith.constant 0 : index
    %c0_16 = arith.constant 0 : index
    %9 = vector.load %arg3[%c0_15, %c0_16] : memref<1x128xf32, #tpu.memory_space<vmem>>, vector<1x128xf32>
    %10 = vector.broadcast %9 : vector<1x128xf32> to vector<32x128xf32>
    %11 = arith.addf %8, %10 : vector<32x128xf32>
    %cst_17 = arith.constant 0.000000e+00 : f32
    %12 = vector.broadcast %cst_17 : f32 to vector<32x128xf32>
    %13 = arith.maximumf %11, %12 : vector<32x128xf32>
    %14 = vector.shape_cast %13 : vector<32x128xf32> to vector<2x16x128xf32>
    %15 = vector.extract_strided_slice %14 {offsets = [0, 0, 0], sizes = [2, 2, 128], strides = [1, 1, 1]} : vector<2x16x128xf32> to vector<2x2x128xf32>
    %16 = arith.truncf %15 : vector<2x2x128xf32> to vector<2x2x128xbf16>
    %c0_18 = arith.constant 0 : index
    %c0_19 = arith.constant 0 : index
    %c0_20 = arith.constant 0 : index
    %c0_21 = arith.constant 0 : index
    %17 = vector.load %arg4[%c0_18, %c0_19, %c0_20, %c0_21] : memref<1x2x2x128xbf16, #tpu.memory_space<vmem>>, vector<1x2x2x128xbf16>
    %18 = vector.shape_cast %17 : vector<1x2x2x128xbf16> to vector<2x2x128xbf16>
    %19 = vector.shape_cast %16 : vector<2x2x128xbf16> to vector<1x2x2x128xbf16>
    tpu.vector_store %arg4[%c0_18, %c0_19, %c0_20, %c0_21], %19 {strides = array<i32>} : memref<1x2x2x128xbf16, #tpu.memory_space<vmem>>, vector<1x2x2x128xbf16>,
    return
  }
  func.func @transform_0(%arg0: i32) -> (i32, i32, i32, i32) {
    %c0_i32 = arith.constant 0 : i32
    %c0_i32_0 = arith.constant 0 : i32
    %c0_i32_1 = arith.constant 0 : i32
    %c0_i32_2 = arith.constant 0 : i32
    return %arg0, %c0_i32, %c0_i32_0, %c0_i32_1 : i32, i32, i32, i32
  }
  func.func @transform_1(%arg0: i32) -> (i32, i32) {
    %c0_i32 = arith.constant 0 : i32
    %c0_i32_0 = arith.constant 0 : i32
    %c0_i32_1 = arith.constant 0 : i32
    return %c0_i32, %c0_i32_0 : i32, i32
  }
  func.func @transform_2(%arg0: i32) -> (i32, i32) {
    %c0_i32 = arith.constant 0 : i32
    %c0_i32_0 = arith.constant 0 : i32
    %c0_i32_1 = arith.constant 0 : i32
    return %c0_i32, %c0_i32_0 : i32, i32
  }
  func.func @transform_3(%arg0: i32) -> (i32, i32, i32, i32) {
    %c0_i32 = arith.constant 0 : i32
    %c0_i32_0 = arith.constant 0 : i32
    %c0_i32_1 = arith.constant 0 : i32
    %c0_i32_2 = arith.constant 0 : i32
    return %arg0, %c0_i32, %c0_i32_0, %c0_i32_1 : i32, i32, i32, i32
  }
}

</mosaic_0001>

<llo_original>
// kernel: _lambda_.16
$region0: #{_lambda_.16}
  #allocation0 [shape = 'u32[]', space=smem, size = 0x4, offset = 0x4, fixed_abs, tag = 'smem constant byte address 0x4 - core index']
  #allocation1 [shape = 'u32[144,128]{1,0:T(1,128)}', space=vmem, size = 0x12000, scoped, tag = 'internal scratch']
  #allocation2 [shape = 'bf16[8,16,128]{2,1,0:T(16,128)(2,1)}', space=vmem, size = 0x8000, scoped, tag = 'scratch operand']
  #allocation3 [shape = 'f32[2,16,128]{2,1,0:T(8,128)}', space=vmem, size = 0x4000, scoped, tag = 'scratch operand']
  %s0 = inlined_call_operand.vmem [shape: bf16[2,4,4,128], index: 0, kind: input, shape index: {}]
  %s1 = inlined_call_operand.vmem [shape: f32[9,128], index: 1, kind: input, shape index: {}]
  %s2 = inlined_call_operand.vmem [shape: f32[1,128], index: 2, kind: input, shape index: {}]
  %s3 = inlined_call_operand.vmem [shape: bf16[2,2,2,128], index: 3, kind: output, shape index: {}]
  %s4 = sld [smem:[#allocation0]]
  $region45: #{_lambda_.16} parent=0
    _
  %s6 = ssub.s32 1, %s4
  %s7 = scalar_select 0, %s6, %s4
  loop: start=0, step=1, limit=4
  $region2: #{_lambda_.16} parent=0 // loop_pre_header
    _
  $region3: #{_lambda_.16} parent=0 // loop_header
    %s9 = sphi 0, %s13
    %p10 = scmp.ge.s32.totalorder %s9, 4
    %s19 = sphi 0, %s21
    %s22 = sphi 0, %s19
    %s23 = sphi 0, %s22
    %s39 = sphi 0, %s23
    %s43 = sphi 0, %s43
    %s45 = sphi 0, %s43
    %s46 = sphi 0, %s45
    %s60 = sphi 0, %s46
    %s64 = sphi 0, %s64
    %s66 = sphi 0, %s64
    %s67 = sphi 0, %s66
    %s81 = sphi 0, %s67
    %s87 = sphi 0, %s89
    %s90 = sphi 0, %s87
    %s91 = sphi 0, %s90
    %s107 = sphi 0, %s91
  $region4: #{_lambda_.16} parent=0 // loop_header_branch
    %12 = sbr.rel (%p10) target = $region8
  $region5: #{_lambda_.16} parent=0 // loop_body
    %s14 = ssub.s32 %s9, 1
    %s15 = ssub.s32 %s9, 2
    %s16 = sadd.s32 %s9, 1
    %s17 = ssub.s32 %s9, %s16
    %p18 = scmp.eq.s32.totalorder %s17, 0
    %s20 = sadd.s32 %s19, 1
    %s21 = scalar_select %p18, %s19, %s20
    %p24 = pneg %p18
    %p25 = scmp.eq.s32.totalorder %s9, 1
    %p26 = por %p24, %p25
    %p27 = scmp.ne.s32.totalorder %s19, %s22
    %p28 = scmp.eq.s32.totalorder %s9, 0
    %p29 = por %p27, %p28
    %p30 = scmp.ne.s32.totalorder %s19, %s22
    %p31 = scmp.eq.s32.totalorder %s14, 1
    %p32 = por %p30, %p31
    %p33 = scmp.ne.s32.totalorder %s22, %s23
    %p34 = scmp.eq.s32.totalorder %s14, 0
    %p35 = por %p33, %p34
    %p36 = scmp.ne.s32.totalorder %s22, %s23
    %p37 = scmp.eq.s32.totalorder %s15, 1
    %p38 = por %p36, %p37
    %p40 = scmp.ne.s32.totalorder %s23, %s39
    %p41 = scmp.eq.s32.totalorder %s15, 0
    %p42 = por %p40, %p41
    %s44 = sadd.s32 %s43, 1
    %p47 = scmp.eq.s32.totalorder %s9, 1
    %p48 = scmp.ne.s32.totalorder %s43, %s45
    %p49 = scmp.eq.s32.totalorder %s9, 0
    %p50 = por %p48, %p49
    %p51 = scmp.ne.s32.totalorder %s43, %s45
    %p52 = scmp.eq.s32.totalorder %s14, 1
    %p53 = por %p51, %p52
    %p54 = scmp.ne.s32.totalorder %s45, %s46
    %p55 = scmp.eq.s32.totalorder %s14, 0
    %p56 = por %p54, %p55
    %p57 = scmp.ne.s32.totalorder %s45, %s46
    %p58 = scmp.eq.s32.totalorder %s15, 1
    %p59 = por %p57, %p58
    %p61 = scmp.ne.s32.totalorder %s46, %s60
    %p62 = scmp.eq.s32.totalorder %s15, 0
    %p63 = por %p61, %p62
    %s65 = sadd.s32 %s64, 1
    %p68 = scmp.eq.s32.totalorder %s9, 1
    %p69 = scmp.ne.s32.totalorder %s64, %s66
    %p70 = scmp.eq.s32.totalorder %s9, 0
    %p71 = por %p69, %p70
    %p72 = scmp.ne.s32.totalorder %s64, %s66
    %p73 = scmp.eq.s32.totalorder %s14, 1
    %p74 = por %p72, %p73
    %p75 = scmp.ne.s32.totalorder %s66, %s67
    %p76 = scmp.eq.s32.totalorder %s14, 0
    %p77 = por %p75, %p76
    %p78 = scmp.ne.s32.totalorder %s66, %s67
    %p79 = scmp.eq.s32.totalorder %s15, 1
    %p80 = por %p78, %p79
    %p82 = scmp.ne.s32.totalorder %s67, %s81
    %p83 = scmp.eq.s32.totalorder %s15, 0
    %p84 = por %p82, %p83
    %s85 = ssub.s32 %s9, %s16
    %p86 = scmp.eq.s32.totalorder %s85, 0
    %s88 = sadd.s32 %s87, 1
    %s89 = scalar_select %p86, %s87, %s88
    %p92 = pneg %p86
    %p93 = scmp.eq.s32.totalorder %s9, 1
    %p94 = por %p92, %p93
    %p95 = scmp.ne.s32.totalorder %s87, %s90
    %p96 = scmp.eq.s32.totalorder %s9, 0
    %p97 = por %p95, %p96
    %p98 = scmp.ne.s32.totalorder %s87, %s90
    %p99 = scmp.eq.s32.totalorder %s14, 1
    %p100 = por %p98, %p99
    %p101 = scmp.ne.s32.totalorder %s90, %s91
    %p102 = scmp.eq.s32.totalorder %s14, 0
    %p103 = por %p101, %p102
    %p104 = scmp.ne.s32.totalorder %s90, %s91
    %p105 = scmp.eq.s32.totalorder %s15, 1
    %p106 = por %p104, %p105
    %p108 = scmp.ne.s32.totalorder %s91, %s107
    %p109 = scmp.eq.s32.totalorder %s15, 0
    %p110 = por %p108, %p109
    %p111 = scmp.le.s32.totalorder 1, %s9
    %p112 = scmp.lt.s32.totalorder %s9, 3
    %p113 = pnand %p111, %p112
    %p114 = pneg %p113
    // Predicated region
    $region9: #{_lambda_.16} parent=5 // pred_check
      _
    $region10: #{_lambda_.16} parent=5 // pred_check_branch
      %116 = sbr.rel (%p113) target = $region12
    $region11: #{_lambda_.16} parent=5 // pred_region
      %s117 = ssub.s32 %s9, 1
      // Predicated region
      $region13: #{_lambda_.16} parent=11 // pred_check
        %p118 = pneg %p56
      $region14: #{_lambda_.16} parent=11 // pred_check_branch
        %120 = sbr.rel (%p118) target = $region16
      $region15: #{_lambda_.16} parent=11 // pred_region
        _
      $region16: #{_lambda_.16} parent=11 // pred_fallthru
        _
      // Predicated region
      $region17: #{_lambda_.16} parent=11 // pred_check
        %p121 = pneg %p77
      $region18: #{_lambda_.16} parent=11 // pred_check_branch
        %123 = sbr.rel (%p121) target = $region20
      $region19: #{_lambda_.16} parent=11 // pred_region
        _
      $region20: #{_lambda_.16} parent=11 // pred_fallthru
        _
    $region12: #{_lambda_.16} parent=5 // pred_fallthru
      _
    %p124 = scmp.lt.s32.totalorder %s9, 2
    // Predicated region
    $region21: #{_lambda_.16} parent=5 // pred_check
      %p125 = pneg %p124
    $region22: #{_lambda_.16} parent=5 // pred_check_branch
      %127 = sbr.rel (%p125) target = $region24
    $region23: #{_lambda_.16} parent=5 // pred_region
      // Predicated region
      $region25: #{_lambda_.16} parent=23 // pred_check
        %p128 = pneg %p29
      $region26: #{_lambda_.16} parent=23 // pred_check_branch
        %130 = sbr.rel (%p128) target = $region28
      $region27: #{_lambda_.16} parent=23 // pred_region
        %p131 = scmp.lt.s32.totalorder %s9, 1
        %s132 = scalar_select %p131, %s9, 1
        %s133 = smul.addr %s132, 4
        %s134 = smul.addr %s133, 2
        %s135 = scalar_lea.vmem %s0, %s134
      $region28: #{_lambda_.16} parent=23 // pred_fallthru
        _
    $region24: #{_lambda_.16} parent=5 // pred_fallthru
      _
    %p136 = scmp.le.s32.totalorder 1, %s9
    %p137 = scmp.lt.s32.totalorder %s9, 3
    %p138 = pnand %p136, %p137
    %p139 = pneg %p138
    // Predicated region
    $region29: #{_lambda_.16} parent=5 // pred_check
      _
    $region30: #{_lambda_.16} parent=5 // pred_check_branch
      %141 = sbr.rel (%p138) target = $region32
    $region31: #{_lambda_.16} parent=5 // pred_region
      %s142 = ssub.s32 %s9, 1
      %p143 = scmp.lt.s32.totalorder %s14, 1
      %s144 = scalar_select %p143, %s14, 1
      %s145 = smul.addr %s144, 4
      %s146 = smul.addr %s145, 2
      %s147 = scalar_lea.vmem %s0, %s146
      %p148 = pneg %p35
      %p149 = pneg %p32
      %p150 = pneg %p56
      %p151 = pneg %p53
      %p152 = pneg %p77
      %p153 = pneg %p74
      %p154 = pneg %p103
      %p155 = pneg %p100
      %p156 = scmp.lt.s32.totalorder %s14, 1
      %s157 = scalar_select %p156, %s14, 1
      %s158 = smul.addr %s157, 2
      %s159 = scalar_lea.vmem %s3, %s158
      %p160 = scmp.lt.s32.totalorder %s14, 1
      %s161 = scalar_select %p160, %s14, 1
      %s162 = smul.addr %s161, 4
      %s163 = smul.addr %s162, 2
      %s164 = scalar_lea.vmem %s0, %s163
      %p165 = scmp.lt.s32.totalorder %s14, 1
      %s166 = scalar_select %p165, %s14, 1
      %s167 = smul.addr %s166, 2
      %s168 = scalar_lea.vmem %s3, %s167
      %170 = vst [vmem:[#allocation2] sm:$0xff] 0
      %171 = vst [vmem:[#allocation2 + $0x8] sm:$0xff] 0
      %172 = vst [vmem:[#allocation2 + $0x10] sm:$0xff] 0
      %173 = vst [vmem:[#allocation2 + $0x18] sm:$0xff] 0
      %174 = vst [vmem:[#allocation2 + $0x20] sm:$0xff] 0
      %175 = vst [vmem:[#allocation2 + $0x28] sm:$0xff] 0
      %176 = vst [vmem:[#allocation2 + $0x30] sm:$0xff] 0
      %177 = vst [vmem:[#allocation2 + $0x38] sm:$0xff] 0
      %v178 = vld [vmem:[%s164] sm:$0x3]
      %v179 = vld [vmem:[%s164 + $0x2] sm:$0x3]
      %v180 = vld [vmem:[%s164 + $0x4] sm:$0x3]
      %v181 = vld [vmem:[%s164 + $0x6] sm:$0x3]
      %s182 = scalar_lea.vmem [#allocation2], 16
      %183 = vst [vmem:[%s182] sm:$0x3] %v178
      %184 = vst [vmem:[%s182 + $0x8] sm:$0x3] %v179
      %185 = vst [vmem:[%s182 + $0x10] sm:$0x3] %v180
      %186 = vst [vmem:[%s182 + $0x18] sm:$0x3] %v181
      %v187 = vld [vmem:[#allocation2] sm:$0xff]
      %v188 = vld [vmem:[#allocation2 + $0x8] sm:$0xff]
      %v189 = vld [vmem:[#allocation2 + $0x10] sm:$0xff]
      %v190 = vld [vmem:[#allocation2 + $0x18] sm:$0xff]
      %v191 = vld [vmem:[#allocation2 + $0x20] sm:$0xff]
      %v192 = vld [vmem:[#allocation2 + $0x28] sm:$0xff]
      %v193 = vld [vmem:[#allocation2 + $0x30] sm:$0xff]
      %v194 = vld [vmem:[%s1] sm:$0x1]
      %v195 = vunpack.c.h.bf16 %v187
      %v196 = vunpack.c.l.bf16 %v188
      %v197 = vunpack.c.h.bf16 %v188
      %v198 = vunpack.c.l.bf16 %v189
      %v199 = vunpack.c.h.bf16 %v189
      %v200 = vunpack.c.l.bf16 %v190
      %v201 = vunpack.c.h.bf16 %v190
      %v202 = vunpack.c.l.bf16 %v191
      %v203 = vlaneseq
      %v204 = vshrl.u32 %v203, 7
      %v205 = vsub.s32 0, %v204
      %v206 = vrot.slane %v194, %v205
      %v207 = vmul.f32 %v195, %v206
      %v208 = vmul.f32 %v196, %v206
      %v209 = vmul.f32 %v197, %v206
      %v210 = vmul.f32 %v199, %v206
      %v211 = vmul.f32 %v200, %v206
      %v212 = vmul.f32 %v201, %v206
      %v213 = vld [vmem:[%s1 + $0x3] sm:$0x1]
      %v214 = vunpack.c.h.bf16 %v191
      %v215 = vunpack.c.l.bf16 %v192
      %v216 = vlaneseq
      %v217 = vshrl.u32 %v216, 7
      %v218 = vsub.s32 0, %v217
      %v219 = vrot.slane %v213, %v218
      %v220 = vmul.f32 %v197, %v219
      %v221 = vmul.f32 %v198, %v219
      %v222 = vmul.f32 %v199, %v219
      %v223 = vmul.f32 %v201, %v219
      %v224 = vmul.f32 %v202, %v219
      %v225 = vmul.f32 %v214, %v219
      %v226 = vadd.f32 %v207, %v220
      %v227 = vadd.f32 %v208, %v221
      %v228 = vadd.f32 %v209, %v222
      %v229 = vadd.f32 %v210, %v223
      %v230 = vadd.f32 %v211, %v224
      %v231 = vadd.f32 %v212, %v225
      %v232 = vld [vmem:[%s1 + $0x6] sm:$0x1]
      %v233 = vunpack.c.h.bf16 %v192
      %v234 = vunpack.c.l.bf16 %v193
      %v235 = vlaneseq
      %v236 = vshrl.u32 %v235, 7
      %v237 = vsub.s32 0, %v236
      %v238 = vrot.slane %v232, %v237
      %v239 = vmul.f32 %v199, %v238
      %v240 = vmul.f32 %v200, %v238
      %v241 = vmul.f32 %v201, %v238
      %v242 = vmul.f32 %v214, %v238
      %v243 = vmul.f32 %v215, %v238
      %v244 = vmul.f32 %v233, %v238
      %v245 = vadd.f32 %v226, %v239
      %v246 = vadd.f32 %v227, %v240
      %v247 = vadd.f32 %v228, %v241
      %v248 = vadd.f32 %v229, %v242
      %v249 = vadd.f32 %v230, %v243
      %v250 = vadd.f32 %v231, %v244
      %v251 = vld [vmem:[%s1 + $0x1] sm:$0x1]
      %v252 = vlaneseq
      %v253 = vshrl.u32 %v252, 7
      %v254 = vsub.s32 0, %v253
      %v255 = vrot.slane %v251, %v254
      %v256 = vmul.f32 %v196, %v255
      %v257 = vmul.f32 %v197, %v255
      %v258 = vmul.f32 %v198, %v255
      %v259 = vmul.f32 %v199, %v255
      %v260 = vmul.f32 %v200, %v255
      %v261 = vmul.f32 %v201, %v255
      %v262 = vmul.f32 %v202, %v255
      %v263 = vld [vmem:[%s1 + $0x4] sm:$0x1]
      %v264 = vlaneseq
      %v265 = vshrl.u32 %v264, 7
      %v266 = vsub.s32 0, %v265
      %v267 = vrot.slane %v263, %v266
      %v268 = vmul.f32 %v198, %v267
      %v269 = vmul.f32 %v199, %v267
      %v270 = vmul.f32 %v200, %v267
      %v271 = vmul.f32 %v201, %v267
      %v272 = vmul.f32 %v202, %v267
      %v273 = vmul.f32 %v214, %v267
      %v274 = vmul.f32 %v215, %v267
      %v275 = vadd.f32 %v256, %v268
      %v276 = vadd.f32 %v257, %v269
      %v277 = vadd.f32 %v258, %v270
      %v278 = vadd.f32 %v259, %v271
      %v279 = vadd.f32 %v260, %v272
      %v280 = vadd.f32 %v261, %v273
      %v281 = vadd.f32 %v262, %v274
      %v282 = vld [vmem:[%s1 + $0x7] sm:$0x1]
      %v283 = vlaneseq
      %v284 = vshrl.u32 %v283, 7
      %v285 = vsub.s32 0, %v284
      %v286 = vrot.slane %v282, %v285
      %v287 = vmul.f32 %v200, %v286
      %v288 = vmul.f32 %v201, %v286
      %v289 = vmul.f32 %v202, %v286
      %v290 = vmul.f32 %v214, %v286
      %v291 = vmul.f32 %v215, %v286
      %v292 = vmul.f32 %v233, %v286
      %v293 = vmul.f32 %v234, %v286
      %v294 = vadd.f32 %v275, %v287
      %v295 = vadd.f32 %v276, %v288
      %v296 = vadd.f32 %v277, %v289
      %v297 = vadd.f32 %v278, %v290
      %v298 = vadd.f32 %v279, %v291
      %v299 = vadd.f32 %v280, %v292
      %v300 = vadd.f32 %v281, %v293
      %v301 = vld [vmem:[%s1 + $0x2] sm:$0x1]
      %v302 = vlaneseq
      %v303 = vshrl.u32 %v302, 7
      %v304 = vsub.s32 0, %v303
      %v305 = vrot.slane %v301, %v304
      %v306 = vmul.f32 %v196, %v305
      %v307 = vmul.f32 %v197, %v305
      %v308 = vmul.f32 %v198, %v305
      %v309 = vmul.f32 %v199, %v305
      %v310 = vmul.f32 %v200, %v305
      %v311 = vmul.f32 %v201, %v305
      %v312 = vmul.f32 %v202, %v305
      %v313 = vld [vmem:[%s1 + $0x5] sm:$0x1]
      %v314 = vlaneseq
      %v315 = vshrl.u32 %v314, 7
      %v316 = vsub.s32 0, %v315
      %v317 = vrot.slane %v313, %v316
      %v318 = vmul.f32 %v198, %v317
      %v319 = vmul.f32 %v199, %v317
      %v320 = vmul.f32 %v200, %v317
      %v321 = vmul.f32 %v201, %v317
      %v322 = vmul.f32 %v202, %v317
      %v323 = vmul.f32 %v214, %v317
      %v324 = vmul.f32 %v215, %v317
      %v325 = vadd.f32 %v306, %v318
      %v326 = vadd.f32 %v307, %v319
      %v327 = vadd.f32 %v308, %v320
      %v328 = vadd.f32 %v309, %v321
      %v329 = vadd.f32 %v310, %v322
      %v330 = vadd.f32 %v311, %v323
      %v331 = vadd.f32 %v312, %v324
      %v332 = vld [vmem:[%s1 + $0x8] sm:$0x1]
      %v333 = vlaneseq
      %v334 = vshrl.u32 %v333, 7
      %v335 = vsub.s32 0, %v334
      %v336 = vrot.slane %v332, %v335
      %v337 = vmul.f32 %v200, %v336
      %v338 = vmul.f32 %v201, %v336
      %v339 = vmul.f32 %v202, %v336
      %v340 = vmul.f32 %v214, %v336
      %v341 = vmul.f32 %v215, %v336
      %v342 = vmul.f32 %v233, %v336
      %v343 = vmul.f32 %v234, %v336
      %v344 = vadd.f32 %v325, %v337
      %v345 = vadd.f32 %v326, %v338
      %v346 = vadd.f32 %v327, %v339
      %v347 = vadd.f32 %v328, %v340
      %v348 = vadd.f32 %v329, %v341
      %v349 = vadd.f32 %v330, %v342
      %v350 = vadd.f32 %v331, %v343
      %vm358 = vcmask 1046528
      %v359 = vrot.slane %v294, 1
      %v360 = vrot.slane %v295, 1
      %v361 = vsel %vm358, %v359, %v360
      %v362 = vrot.slane %v296, 1
      %v363 = vsel %vm358, %v360, %v362
      %v364 = vrot.slane %v297, 1
      %v365 = vrot.slane %v298, 1
      %v366 = vsel %vm358, %v364, %v365
      %v367 = vrot.slane %v299, 1
      %v368 = vsel %vm358, %v365, %v367
      %v369 = vrot.slane %v300, 1
      %v370 = vsel %vm358, %v367, %v369
      %v377 = vadd.f32 %v245, %v359
      %v378 = vadd.f32 %v246, %v361
      %v379 = vadd.f32 %v247, %v363
      %v380 = vadd.f32 %v248, %v366
      %v381 = vadd.f32 %v249, %v368
      %v382 = vadd.f32 %v250, %v370
      %vm390 = vcmask 1045504
      %v391 = vrot.slane %v344, 2
      %v392 = vrot.slane %v345, 2
      %v393 = vsel %vm390, %v391, %v392
      %v394 = vrot.slane %v346, 2
      %v395 = vsel %vm390, %v392, %v394
      %v396 = vrot.slane %v347, 2
      %v397 = vrot.slane %v348, 2
      %v398 = vsel %vm390, %v396, %v397
      %v399 = vrot.slane %v349, 2
      %v400 = vsel %vm390, %v397, %v399
      %v401 = vrot.slane %v350, 2
      %v402 = vsel %vm390, %v399, %v401
      %v409 = vadd.f32 %v377, %v391
      %v410 = vadd.f32 %v378, %v393
      %v411 = vadd.f32 %v379, %v395
      %v412 = vadd.f32 %v380, %v398
      %v413 = vadd.f32 %v381, %v400
      %v414 = vadd.f32 %v382, %v402
      %v415 = vld [vmem:[%s2] sm:$0x1]
      %v417 = vlaneseq
      %v418 = vshrl.u32 %v417, 7
      %v419 = vsub.s32 0, %v418
      %v420 = vrot.slane %v415, %v419
      %v422 = vadd.f32 %v409, %v420
      %v423 = vadd.f32 %v410, %v420
      %v424 = vadd.f32 %v411, %v420
      %v425 = vadd.f32 %v412, %v420
      %v426 = vadd.f32 %v413, %v420
      %v427 = vadd.f32 %v414, %v420
      %vm434 = vcmask 1040384
      %v435 = vrot.slane %v422, 7
      %v436 = vrot.slane %v423, 7
      %v437 = vsel %vm434, %v435, %v436
      %v438 = vrot.slane %v424, 7
      %v439 = vsel %vm434, %v436, %v438
      %v440 = vrot.slane %v425, 7
      %v441 = vrot.slane %v426, 7
      %v442 = vsel %vm434, %v440, %v441
      %v443 = vrot.slane %v427, 7
      %v444 = vsel %vm434, %v441, %v443
      %449 = vst [vmem:[#allocation3] sm:$0xff] %v437
      %450 = vst [vmem:[#allocation3 + $0x8] sm:$0xff] %v439
      %451 = vst [vmem:[#allocation3 + $0x10] sm:$0xff] %v442
      %452 = vst [vmem:[#allocation3 + $0x18] sm:$0xff] %v444
      %v453 = vld [vmem:[#allocation3] ss:$2 sm:$0x3]
      %s454 = scalar_lea.vmem [#allocation3], 16
      %v455 = vld [vmem:[%s454] ss:$2 sm:$0x3]
      %v456 = vpack.c.bf16 %v453, %v453
      %v457 = vpack.c.bf16 %v455, %v455
      %458 = vst [vmem:[%s168] sm:$0x1] %v456
      %459 = vst [vmem:[%s168 + $0x1] sm:$0x1] %v457
      %p460 = scmp.lt.s32.totalorder %s14, 1
      %s461 = scalar_select %p460, %s14, 1
      %s462 = smul.addr %s461, 2
      %s463 = scalar_lea.vmem %s3, %s462
      // Predicated region
      $region33: #{_lambda_.16} parent=31 // pred_check
        %p464 = pneg %p100
      $region34: #{_lambda_.16} parent=31 // pred_check_branch
        %466 = sbr.rel (%p464) target = $region36
      $region35: #{_lambda_.16} parent=31 // pred_region
        _
      $region36: #{_lambda_.16} parent=31 // pred_fallthru
        _
    $region32: #{_lambda_.16} parent=5 // pred_fallthru
      _
    %p467 = scmp.le.s32.totalorder 2, %s9
    // Predicated region
    $region37: #{_lambda_.16} parent=5 // pred_check
      %p468 = pneg %p467
    $region38: #{_lambda_.16} parent=5 // pred_check_branch
      %470 = sbr.rel (%p468) target = $region40
    $region39: #{_lambda_.16} parent=5 // pred_region
      %s471 = ssub.s32 %s9, 2
      // Predicated region
      $region41: #{_lambda_.16} parent=39 // pred_check
        %p472 = pneg %p106
      $region42: #{_lambda_.16} parent=39 // pred_check_branch
        %474 = sbr.rel (%p472) target = $region44
      $region43: #{_lambda_.16} parent=39 // pred_region
        %p475 = scmp.lt.s32.totalorder %s15, 1
        %s476 = scalar_select %p475, %s15, 1
        %s477 = smul.addr %s476, 2
        %s478 = scalar_lea.vmem %s3, %s477
      $region44: #{_lambda_.16} parent=39 // pred_fallthru
        _
    $region40: #{_lambda_.16} parent=5 // pred_fallthru
      _
  $region6: #{_lambda_.16} parent=0 // loop_footer
    %s13 = sadd.s32 1, %s9
  $region7: #{_lambda_.16} parent=0 // loop_footer_branch
    %8 = sbr.rel target = $region3
  $region8: #{_lambda_.16} parent=0 // loop_exit
    _

// kernel: _lambda_.14
$region0: #{_lambda_.14}
  #allocation0 [shape = 'u32[]', space=smem, size = 0x4, offset = 0x4, fixed_abs, tag = 'smem constant byte address 0x4 - core index']
  #allocation1 [shape = 'u32[144,128]{1,0:T(1,128)}', space=vmem, size = 0x12000, scoped, tag = 'internal scratch']
  #allocation2 [shape = 'bf16[4,16,128]{2,1,0:T(16,128)(2,1)}', space=vmem, size = 0x4000, scoped, tag = 'scratch operand']
  %s0 = inlined_call_operand.vmem [shape: bf16[2,4,4,128], index: 0, kind: input, shape index: {}]
  %s1 = inlined_call_operand.vmem [shape: bf16[128,128], index: 1, kind: input, shape index: {}]
  %s2 = inlined_call_operand.vmem [shape: f32[1,128], index: 2, kind: input, shape index: {}]
  %s3 = inlined_call_operand.vmem [shape: bf16[2,4,4,128], index: 3, kind: output, shape index: {}]
  %s4 = sld [smem:[#allocation0]]
  $region45: #{_lambda_.14} parent=0
    _
  %s6 = ssub.s32 1, %s4
  %s7 = scalar_select 0, %s6, %s4
  loop: start=0, step=1, limit=4
  $region2: #{_lambda_.14} parent=0 // loop_pre_header
    _
  $region3: #{_lambda_.14} parent=0 // loop_header
    %s9 = sphi 0, %s13
    %p10 = scmp.ge.s32.totalorder %s9, 4
    %s19 = sphi 0, %s21
    %s22 = sphi 0, %s19
    %s23 = sphi 0, %s22
    %s39 = sphi 0, %s23
    %s43 = sphi 0, %s43
    %s45 = sphi 0, %s43
    %s46 = sphi 0, %s45
    %s60 = sphi 0, %s46
    %s64 = sphi 0, %s64
    %s66 = sphi 0, %s64
    %s67 = sphi 0, %s66
    %s81 = sphi 0, %s67
    %s87 = sphi 0, %s89
    %s90 = sphi 0, %s87
    %s91 = sphi 0, %s90
    %s107 = sphi 0, %s91
  $region4: #{_lambda_.14} parent=0 // loop_header_branch
    %12 = sbr.rel (%p10) target = $region8
  $region5: #{_lambda_.14} parent=0 // loop_body
    %s14 = ssub.s32 %s9, 1
    %s15 = ssub.s32 %s9, 2
    %s16 = sadd.s32 %s9, 1
    %s17 = ssub.s32 %s9, %s16
    %p18 = scmp.eq.s32.totalorder %s17, 0
    %s20 = sadd.s32 %s19, 1
    %s21 = scalar_select %p18, %s19, %s20
    %p24 = pneg %p18
    %p25 = scmp.eq.s32.totalorder %s9, 1
    %p26 = por %p24, %p25
    %p27 = scmp.ne.s32.totalorder %s19, %s22
    %p28 = scmp.eq.s32.totalorder %s9, 0
    %p29 = por %p27, %p28
    %p30 = scmp.ne.s32.totalorder %s19, %s22
    %p31 = scmp.eq.s32.totalorder %s14, 1
    %p32 = por %p30, %p31
    %p33 = scmp.ne.s32.totalorder %s22, %s23
    %p34 = scmp.eq.s32.totalorder %s14, 0
    %p35 = por %p33, %p34
    %p36 = scmp.ne.s32.totalorder %s22, %s23
    %p37 = scmp.eq.s32.totalorder %s15, 1
    %p38 = por %p36, %p37
    %p40 = scmp.ne.s32.totalorder %s23, %s39
    %p41 = scmp.eq.s32.totalorder %s15, 0
    %p42 = por %p40, %p41
    %s44 = sadd.s32 %s43, 1
    %p47 = scmp.eq.s32.totalorder %s9, 1
    %p48 = scmp.ne.s32.totalorder %s43, %s45
    %p49 = scmp.eq.s32.totalorder %s9, 0
    %p50 = por %p48, %p49
    %p51 = scmp.ne.s32.totalorder %s43, %s45
    %p52 = scmp.eq.s32.totalorder %s14, 1
    %p53 = por %p51, %p52
    %p54 = scmp.ne.s32.totalorder %s45, %s46
    %p55 = scmp.eq.s32.totalorder %s14, 0
    %p56 = por %p54, %p55
    %p57 = scmp.ne.s32.totalorder %s45, %s46
    %p58 = scmp.eq.s32.totalorder %s15, 1
    %p59 = por %p57, %p58
    %p61 = scmp.ne.s32.totalorder %s46, %s60
    %p62 = scmp.eq.s32.totalorder %s15, 0
    %p63 = por %p61, %p62
    %s65 = sadd.s32 %s64, 1
    %p68 = scmp.eq.s32.totalorder %s9, 1
    %p69 = scmp.ne.s32.totalorder %s64, %s66
    %p70 = scmp.eq.s32.totalorder %s9, 0
    %p71 = por %p69, %p70
    %p72 = scmp.ne.s32.totalorder %s64, %s66
    %p73 = scmp.eq.s32.totalorder %s14, 1
    %p74 = por %p72, %p73
    %p75 = scmp.ne.s32.totalorder %s66, %s67
    %p76 = scmp.eq.s32.totalorder %s14, 0
    %p77 = por %p75, %p76
    %p78 = scmp.ne.s32.totalorder %s66, %s67
    %p79 = scmp.eq.s32.totalorder %s15, 1
    %p80 = por %p78, %p79
    %p82 = scmp.ne.s32.totalorder %s67, %s81
    %p83 = scmp.eq.s32.totalorder %s15, 0
    %p84 = por %p82, %p83
    %s85 = ssub.s32 %s9, %s16
    %p86 = scmp.eq.s32.totalorder %s85, 0
    %s88 = sadd.s32 %s87, 1
    %s89 = scalar_select %p86, %s87, %s88
    %p92 = pneg %p86
    %p93 = scmp.eq.s32.totalorder %s9, 1
    %p94 = por %p92, %p93
    %p95 = scmp.ne.s32.totalorder %s87, %s90
    %p96 = scmp.eq.s32.totalorder %s9, 0
    %p97 = por %p95, %p96
    %p98 = scmp.ne.s32.totalorder %s87, %s90
    %p99 = scmp.eq.s32.totalorder %s14, 1
    %p100 = por %p98, %p99
    %p101 = scmp.ne.s32.totalorder %s90, %s91
    %p102 = scmp.eq.s32.totalorder %s14, 0
    %p103 = por %p101, %p102
    %p104 = scmp.ne.s32.totalorder %s90, %s91
    %p105 = scmp.eq.s32.totalorder %s15, 1
    %p106 = por %p104, %p105
    %p108 = scmp.ne.s32.totalorder %s91, %s107
    %p109 = scmp.eq.s32.totalorder %s15, 0
    %p110 = por %p108, %p109
    %p111 = scmp.le.s32.totalorder 1, %s9
    %p112 = scmp.lt.s32.totalorder %s9, 3
    %p113 = pnand %p111, %p112
    %p114 = pneg %p113
    // Predicated region
    $region9: #{_lambda_.14} parent=5 // pred_check
      _
    $region10: #{_lambda_.14} parent=5 // pred_check_branch
      %116 = sbr.rel (%p113) target = $region12
    $region11: #{_lambda_.14} parent=5 // pred_region
      %s117 = ssub.s32 %s9, 1
      // Predicated region
      $region13: #{_lambda_.14} parent=11 // pred_check
        %p118 = pneg %p56
      $region14: #{_lambda_.14} parent=11 // pred_check_branch
        %120 = sbr.rel (%p118) target = $region16
      $region15: #{_lambda_.14} parent=11 // pred_region
        _
      $region16: #{_lambda_.14} parent=11 // pred_fallthru
        _
      // Predicated region
      $region17: #{_lambda_.14} parent=11 // pred_check
        %p121 = pneg %p77
      $region18: #{_lambda_.14} parent=11 // pred_check_branch
        %123 = sbr.rel (%p121) target = $region20
      $region19: #{_lambda_.14} parent=11 // pred_region
        _
      $region20: #{_lambda_.14} parent=11 // pred_fallthru
        _
    $region12: #{_lambda_.14} parent=5 // pred_fallthru
      _
    %p124 = scmp.lt.s32.totalorder %s9, 2
    // Predicated region
    $region21: #{_lambda_.14} parent=5 // pred_check
      %p125 = pneg %p124
    $region22: #{_lambda_.14} parent=5 // pred_check_branch
      %127 = sbr.rel (%p125) target = $region24
    $region23: #{_lambda_.14} parent=5 // pred_region
      // Predicated region
      $region25: #{_lambda_.14} parent=23 // pred_check
        %p128 = pneg %p29
      $region26: #{_lambda_.14} parent=23 // pred_check_branch
        %130 = sbr.rel (%p128) target = $region28
      $region27: #{_lambda_.14} parent=23 // pred_region
        %p131 = scmp.lt.s32.totalorder %s9, 1
        %s132 = scalar_select %p131, %s9, 1
        %s133 = smul.addr %s132, 4
        %s134 = smul.addr %s133, 2
        %s135 = scalar_lea.vmem %s0, %s134
      $region28: #{_lambda_.14} parent=23 // pred_fallthru
        _
    $region24: #{_lambda_.14} parent=5 // pred_fallthru
      _
    %p136 = scmp.le.s32.totalorder 1, %s9
    %p137 = scmp.lt.s32.totalorder %s9, 3
    %p138 = pnand %p136, %p137
    %p139 = pneg %p138
    // Predicated region
    $region29: #{_lambda_.14} parent=5 // pred_check
      _
    $region30: #{_lambda_.14} parent=5 // pred_check_branch
      %141 = sbr.rel (%p138) target = $region32
    $region31: #{_lambda_.14} parent=5 // pred_region
      %s142 = ssub.s32 %s9, 1
      %p143 = scmp.lt.s32.totalorder %s14, 1
      %s144 = scalar_select %p143, %s14, 1
      %s145 = smul.addr %s144, 4
      %s146 = smul.addr %s145, 2
      %s147 = scalar_lea.vmem %s0, %s146
      %p148 = pneg %p35
      %p149 = pneg %p32
      %p150 = pneg %p56
      %p151 = pneg %p53
      %p152 = pneg %p77
      %p153 = pneg %p74
      %p154 = pneg %p103
      %p155 = pneg %p100
      %p156 = scmp.lt.s32.totalorder %s14, 1
      %s157 = scalar_select %p156, %s14, 1
      %s158 = smul.addr %s157, 4
      %s159 = smul.addr %s158, 2
      %s160 = scalar_lea.vmem %s3, %s159
      %p161 = scmp.lt.s32.totalorder %s14, 1
      %s162 = scalar_select %p161, %s14, 1
      %s163 = smul.addr %s162, 4
      %s164 = smul.addr %s163, 2
      %s165 = scalar_lea.vmem %s0, %s164
      %p166 = scmp.lt.s32.totalorder %s14, 1
      %s167 = scalar_select %p166, %s14, 1
      %s168 = smul.addr %s167, 4
      %s169 = smul.addr %s168, 2
      %s170 = scalar_lea.vmem %s3, %s169
      %172 = vst [vmem:[#allocation2] sm:$0xff] 0
      %173 = vst [vmem:[#allocation2 + $0x8] sm:$0xff] 0
      %174 = vst [vmem:[#allocation2 + $0x10] sm:$0xff] 0
      %175 = vst [vmem:[#allocation2 + $0x18] sm:$0xff] 0
      %v176 = vld [vmem:[%s165] sm:$0x3]
      %v177 = vld [vmem:[%s165 + $0x2] sm:$0x3]
      %v178 = vld [vmem:[%s165 + $0x4] sm:$0x3]
      %v179 = vld [vmem:[%s165 + $0x6] sm:$0x3]
      %180 = vst [vmem:[#allocation2] sm:$0x3] %v176
      %181 = vst [vmem:[#allocation2 + $0x8] sm:$0x3] %v177
      %182 = vst [vmem:[#allocation2 + $0x10] sm:$0x3] %v178
      %183 = vst [vmem:[#allocation2 + $0x18] sm:$0x3] %v179
      %v184 = vld [vmem:[#allocation2] sm:$0xff]
      %v185 = vld [vmem:[#allocation2 + $0x8] sm:$0xff]
      %v186 = vld [vmem:[#allocation2 + $0x10] sm:$0xff]
      %v187 = vld [vmem:[#allocation2 + $0x18] sm:$0xff]
      %v188 = vld [vmem:[%s1] sm:$0xf]
      %v189 = vld [vmem:[%s1 + $0x4] sm:$0xf]
      %v190 = vld [vmem:[%s1 + $0x8] sm:$0xf]
      %v191 = vld [vmem:[%s1 + $0xc] sm:$0xf]
      %v192 = vld [vmem:[%s1 + $0x10] sm:$0xf]
      %v193 = vld [vmem:[%s1 + $0x14] sm:$0xf]
      %v194 = vld [vmem:[%s1 + $0x18] sm:$0xf]
      %v195 = vld [vmem:[%s1 + $0x1c] sm:$0xf]
      %v196 = vld [vmem:[%s1 + $0x20] sm:$0xf]
      %v197 = vld [vmem:[%s1 + $0x24] sm:$0xf]
      %v198 = vld [vmem:[%s1 + $0x28] sm:$0xf]
      %v199 = vld [vmem:[%s1 + $0x2c] sm:$0xf]
      %v200 = vld [vmem:[%s1 + $0x30] sm:$0xf]
      %v201 = vld [vmem:[%s1 + $0x34] sm:$0xf]
      %v202 = vld [vmem:[%s1 + $0x38] sm:$0xf]
      %v203 = vld [vmem:[%s1 + $0x3c] sm:$0xf]
      %v204 = vld [vmem:[%s2] sm:$0x1]
      %v206 = vlaneseq
      %v207 = vshrl.u32 %v206, 7
      %v208 = vsub.s32 0, %v207
      %v209 = vrot.slane %v204, %v208
      %v227 = vunpack.c.l.b16 %v188
      %v228 = vunpack.c.l.b16 %v189
      %v229 = vunpack.c.l.b16 %v190
      %v230 = vunpack.c.l.b16 %v191
      %v231 = vunpack.c.l.b16 %v192
      %v232 = vunpack.c.l.b16 %v193
      %v233 = vunpack.c.l.b16 %v194
      %v234 = vunpack.c.l.b16 %v195
      %v235 = vunpack.c.l.b16 %v196
      %v236 = vunpack.c.l.b16 %v197
      %v237 = vunpack.c.l.b16 %v198
      %v238 = vunpack.c.l.b16 %v199
      %v239 = vunpack.c.l.b16 %v200
      %v240 = vunpack.c.l.b16 %v201
      %v241 = vunpack.c.l.b16 %v202
      %v242 = vunpack.c.l.b16 %v203
      %v243 = vpack.c.b16 %v228, %v227
      %v244 = vpack.c.b16 %v230, %v229
      %v245 = vpack.c.b16 %v232, %v231
      %v246 = vpack.c.b16 %v234, %v233
      %v247 = vpack.c.b16 %v236, %v235
      %v248 = vpack.c.b16 %v238, %v237
      %v249 = vpack.c.b16 %v240, %v239
      %v250 = vpack.c.b16 %v242, %v241
      %259 = vmatprep.subr.bf16.mxu0 0
      %260 = vmatpush1.bf16.msra.mxu0 %v243
      %261 = vmatprep.subr.bf16.mxu0 0
      %262 = vmatpush1.bf16.msra.mxu0 %v244
      %263 = vmatprep.subr.bf16.mxu0 0
      %264 = vmatpush1.bf16.msra.mxu0 %v245
      %265 = vmatprep.subr.bf16.mxu0 0
      %266 = vmatpush1.bf16.msra.mxu0 %v246
      %267 = vmatprep.subr.bf16.mxu0 0
      %268 = vmatpush1.bf16.msra.mxu0 %v247
      %269 = vmatprep.subr.bf16.mxu0 0
      %270 = vmatpush1.bf16.msra.mxu0 %v248
      %271 = vmatprep.subr.bf16.mxu0 0
      %272 = vmatpush1.bf16.msra.mxu0 %v249
      %273 = vmatprep.subr.bf16.mxu0 0
      %274 = vmatpush1.bf16.msra.mxu0 %v250
      %275 = vmatprep.subr.bf16.mxu0 0
      %276 = vmatpush1.bf16.msra.mxu0 0
      %277 = vmatprep.subr.bf16.mxu0 0
      %278 = vmatpush1.bf16.msra.mxu0 0
      %279 = vmatprep.subr.bf16.mxu0 0
      %280 = vmatpush1.bf16.msra.mxu0 0
      %281 = vmatprep.subr.bf16.mxu0 0
      %282 = vmatpush1.bf16.msra.mxu0 0
      %283 = vmatprep.subr.bf16.mxu0 0
      %284 = vmatpush1.bf16.msra.mxu0 0
      %285 = vmatprep.subr.bf16.mxu0 0
      %286 = vmatpush1.bf16.msra.mxu0 0
      %287 = vmatprep.subr.bf16.mxu0 0
      %288 = vmatpush1.bf16.msra.mxu0 0
      %289 = vmatprep.subr.bf16.mxu0 0
      %290 = vmatpush1.bf16.msra.mxu0 0
      %291 = vmatprep.mubr.bf16.mxu0 0
      %292 = vmatmul.mubr.bf16.gmra.mrb[0].mxu0 %v184
      %v293 = vpop.f32.mrb[0].mxu0
      %v294 = vadd.f32 %v209, %v293
      %v295 = vpop.f32.mrb[0].mxu0
      %v296 = vpop.f32.mrb[0].mxu0
      %v297 = vpop.f32.mrb[0].mxu0
      %298 = vmatprep.mubr.bf16.mxu0 0
      %299 = vmatmul.mubr.bf16.gmra.mrb[0].mxu0 %v185
      %v300 = vpop.f32.mrb[0].mxu0
      %v301 = vadd.f32 %v209, %v300
      %v302 = vpop.f32.mrb[0].mxu0
      %v303 = vpop.f32.mrb[0].mxu0
      %v304 = vpop.f32.mrb[0].mxu0
      %305 = vmatprep.mubr.bf16.mxu0 0
      %306 = vmatmul.mubr.bf16.gmra.mrb[0].mxu0 %v186
      %v307 = vpop.f32.mrb[0].mxu0
      %v308 = vadd.f32 %v209, %v307
      %v309 = vpop.f32.mrb[0].mxu0
      %v310 = vpop.f32.mrb[0].mxu0
      %v311 = vpop.f32.mrb[0].mxu0
      %312 = vmatprep.mubr.bf16.mxu0 0
      %313 = vmatmul.mubr.bf16.gmra.mrb[0].mxu0 %v187
      %v314 = vpop.f32.mrb[0].mxu0
      %v315 = vadd.f32 %v209, %v314
      %v316 = vpop.f32.mrb[0].mxu0
      %v317 = vpop.f32.mrb[0].mxu0
      %v318 = vpop.f32.mrb[0].mxu0
      %319 = vdwg.mxu0
      %v320 = vmax.f32 %v294, 0.0
      %v321 = vmax.f32 %v301, 0.0
      %v322 = vmax.f32 %v308, 0.0
      %v323 = vmax.f32 %v315, 0.0
      %v324 = vpack.c.bf16 %v320, %v320
      %v325 = vpack.c.bf16 %v321, %v321
      %v326 = vpack.c.bf16 %v322, %v322
      %v327 = vpack.c.bf16 %v323, %v323
      %328 = vst [vmem:[%s170] sm:$0x3] %v324
      %329 = vst [vmem:[%s170 + $0x2] sm:$0x3] %v325
      %330 = vst [vmem:[%s170 + $0x4] sm:$0x3] %v326
      %331 = vst [vmem:[%s170 + $0x6] sm:$0x3] %v327
      %p332 = scmp.lt.s32.totalorder %s14, 1
      %s333 = scalar_select %p332, %s14, 1
      %s334 = smul.addr %s333, 4
      %s335 = smul.addr %s334, 2
      %s336 = scalar_lea.vmem %s3, %s335
      // Predicated region
      $region33: #{_lambda_.14} parent=31 // pred_check
        %p337 = pneg %p100
      $region34: #{_lambda_.14} parent=31 // pred_check_branch
        %339 = sbr.rel (%p337) target = $region36
      $region35: #{_lambda_.14} parent=31 // pred_region
        _
      $region36: #{_lambda_.14} parent=31 // pred_fallthru
        _
    $region32: #{_lambda_.14} parent=5 // pred_fallthru
      _
    %p340 = scmp.le.s32.totalorder 2, %s9
    // Predicated region
    $region37: #{_lambda_.14} parent=5 // pred_check
      %p341 = pneg %p340
    $region38: #{_lambda_.14} parent=5 // pred_check_branch
      %343 = sbr.rel (%p341) target = $region40
    $region39: #{_lambda_.14} parent=5 // pred_region
      %s344 = ssub.s32 %s9, 2
      // Predicated region
      $region41: #{_lambda_.14} parent=39 // pred_check
        %p345 = pneg %p106
      $region42: #{_lambda_.14} parent=39 // pred_check_branch
        %347 = sbr.rel (%p345) target = $region44
      $region43: #{_lambda_.14} parent=39 // pred_region
        %p348 = scmp.lt.s32.totalorder %s15, 1
        %s349 = scalar_select %p348, %s15, 1
        %s350 = smul.addr %s349, 4
        %s351 = smul.addr %s350, 2
        %s352 = scalar_lea.vmem %s3, %s351
      $region44: #{_lambda_.14} parent=39 // pred_fallthru
        _
    $region40: #{_lambda_.14} parent=5 // pred_fallthru
      _
  $region6: #{_lambda_.14} parent=0 // loop_footer
    %s13 = sadd.s32 1, %s9
  $region7: #{_lambda_.14} parent=0 // loop_footer_branch
    %8 = sbr.rel target = $region3
  $region8: #{_lambda_.14} parent=0 // loop_exit
    _

// kernel: _lambda_.13
$region0: #{_lambda_.13}
  #allocation0 [shape = 'u32[]', space=smem, size = 0x4, offset = 0x4, fixed_abs, tag = 'smem constant byte address 0x4 - core index']
  #allocation1 [shape = 'u32[144,128]{1,0:T(1,128)}', space=vmem, size = 0x12000, scoped, tag = 'internal scratch']
  #allocation2 [shape = 'bf16[12,16,128]{2,1,0:T(16,128)(2,1)}', space=vmem, size = 0xc000, scoped, tag = 'scratch operand']
  #allocation3 [shape = 'f32[4,16,128]{2,1,0:T(8,128)}', space=vmem, size = 0x8000, scoped, tag = 'scratch operand']
  %s0 = inlined_call_operand.vmem [shape: bf16[2,8,8,128], index: 0, kind: input, shape index: {}]
  %s1 = inlined_call_operand.vmem [shape: bf16[384,384], index: 1, kind: input, shape index: {}]
  %s2 = inlined_call_operand.vmem [shape: f32[1,128], index: 2, kind: input, shape index: {}]
  %s3 = inlined_call_operand.vmem [shape: bf16[2,4,4,128], index: 3, kind: output, shape index: {}]
  %s4 = sld [smem:[#allocation0]]
  $region45: #{_lambda_.13} parent=0
    _
  %s6 = ssub.s32 1, %s4
  %s7 = scalar_select 0, %s6, %s4
  loop: start=0, step=1, limit=4
  $region2: #{_lambda_.13} parent=0 // loop_pre_header
    _
  $region3: #{_lambda_.13} parent=0 // loop_header
    %s9 = sphi 0, %s13
    %p10 = scmp.ge.s32.totalorder %s9, 4
    %s19 = sphi 0, %s21
    %s22 = sphi 0, %s19
    %s23 = sphi 0, %s22
    %s39 = sphi 0, %s23
    %s43 = sphi 0, %s43
    %s45 = sphi 0, %s43
    %s46 = sphi 0, %s45
    %s60 = sphi 0, %s46
    %s64 = sphi 0, %s64
    %s66 = sphi 0, %s64
    %s67 = sphi 0, %s66
    %s81 = sphi 0, %s67
    %s87 = sphi 0, %s89
    %s90 = sphi 0, %s87
    %s91 = sphi 0, %s90
    %s107 = sphi 0, %s91
  $region4: #{_lambda_.13} parent=0 // loop_header_branch
    %12 = sbr.rel (%p10) target = $region8
  $region5: #{_lambda_.13} parent=0 // loop_body
    %s14 = ssub.s32 %s9, 1
    %s15 = ssub.s32 %s9, 2
    %s16 = sadd.s32 %s9, 1
    %s17 = ssub.s32 %s9, %s16
    %p18 = scmp.eq.s32.totalorder %s17, 0
    %s20 = sadd.s32 %s19, 1
    %s21 = scalar_select %p18, %s19, %s20
    %p24 = pneg %p18
    %p25 = scmp.eq.s32.totalorder %s9, 1
    %p26 = por %p24, %p25
    %p27 = scmp.ne.s32.totalorder %s19, %s22
    %p28 = scmp.eq.s32.totalorder %s9, 0
    %p29 = por %p27, %p28
    %p30 = scmp.ne.s32.totalorder %s19, %s22
    %p31 = scmp.eq.s32.totalorder %s14, 1
    %p32 = por %p30, %p31
    %p33 = scmp.ne.s32.totalorder %s22, %s23
    %p34 = scmp.eq.s32.totalorder %s14, 0
    %p35 = por %p33, %p34
    %p36 = scmp.ne.s32.totalorder %s22, %s23
    %p37 = scmp.eq.s32.totalorder %s15, 1
    %p38 = por %p36, %p37
    %p40 = scmp.ne.s32.totalorder %s23, %s39
    %p41 = scmp.eq.s32.totalorder %s15, 0
    %p42 = por %p40, %p41
    %s44 = sadd.s32 %s43, 1
    %p47 = scmp.eq.s32.totalorder %s9, 1
    %p48 = scmp.ne.s32.totalorder %s43, %s45
    %p49 = scmp.eq.s32.totalorder %s9, 0
    %p50 = por %p48, %p49
    %p51 = scmp.ne.s32.totalorder %s43, %s45
    %p52 = scmp.eq.s32.totalorder %s14, 1
    %p53 = por %p51, %p52
    %p54 = scmp.ne.s32.totalorder %s45, %s46
    %p55 = scmp.eq.s32.totalorder %s14, 0
    %p56 = por %p54, %p55
    %p57 = scmp.ne.s32.totalorder %s45, %s46
    %p58 = scmp.eq.s32.totalorder %s15, 1
    %p59 = por %p57, %p58
    %p61 = scmp.ne.s32.totalorder %s46, %s60
    %p62 = scmp.eq.s32.totalorder %s15, 0
    %p63 = por %p61, %p62
    %s65 = sadd.s32 %s64, 1
    %p68 = scmp.eq.s32.totalorder %s9, 1
    %p69 = scmp.ne.s32.totalorder %s64, %s66
    %p70 = scmp.eq.s32.totalorder %s9, 0
    %p71 = por %p69, %p70
    %p72 = scmp.ne.s32.totalorder %s64, %s66
    %p73 = scmp.eq.s32.totalorder %s14, 1
    %p74 = por %p72, %p73
    %p75 = scmp.ne.s32.totalorder %s66, %s67
    %p76 = scmp.eq.s32.totalorder %s14, 0
    %p77 = por %p75, %p76
    %p78 = scmp.ne.s32.totalorder %s66, %s67
    %p79 = scmp.eq.s32.totalorder %s15, 1
    %p80 = por %p78, %p79
    %p82 = scmp.ne.s32.totalorder %s67, %s81
    %p83 = scmp.eq.s32.totalorder %s15, 0
    %p84 = por %p82, %p83
    %s85 = ssub.s32 %s9, %s16
    %p86 = scmp.eq.s32.totalorder %s85, 0
    %s88 = sadd.s32 %s87, 1
    %s89 = scalar_select %p86, %s87, %s88
    %p92 = pneg %p86
    %p93 = scmp.eq.s32.totalorder %s9, 1
    %p94 = por %p92, %p93
    %p95 = scmp.ne.s32.totalorder %s87, %s90
    %p96 = scmp.eq.s32.totalorder %s9, 0
    %p97 = por %p95, %p96
    %p98 = scmp.ne.s32.totalorder %s87, %s90
    %p99 = scmp.eq.s32.totalorder %s14, 1
    %p100 = por %p98, %p99
    %p101 = scmp.ne.s32.totalorder %s90, %s91
    %p102 = scmp.eq.s32.totalorder %s14, 0
    %p103 = por %p101, %p102
    %p104 = scmp.ne.s32.totalorder %s90, %s91
    %p105 = scmp.eq.s32.totalorder %s15, 1
    %p106 = por %p104, %p105
    %p108 = scmp.ne.s32.totalorder %s91, %s107
    %p109 = scmp.eq.s32.totalorder %s15, 0
    %p110 = por %p108, %p109
    %p111 = scmp.le.s32.totalorder 1, %s9
    %p112 = scmp.lt.s32.totalorder %s9, 3
    %p113 = pnand %p111, %p112
    %p114 = pneg %p113
    // Predicated region
    $region9: #{_lambda_.13} parent=5 // pred_check
      _
    $region10: #{_lambda_.13} parent=5 // pred_check_branch
      %116 = sbr.rel (%p113) target = $region12
    $region11: #{_lambda_.13} parent=5 // pred_region
      %s117 = ssub.s32 %s9, 1
      // Predicated region
      $region13: #{_lambda_.13} parent=11 // pred_check
        %p118 = pneg %p56
      $region14: #{_lambda_.13} parent=11 // pred_check_branch
        %120 = sbr.rel (%p118) target = $region16
      $region15: #{_lambda_.13} parent=11 // pred_region
        _
      $region16: #{_lambda_.13} parent=11 // pred_fallthru
        _
      // Predicated region
      $region17: #{_lambda_.13} parent=11 // pred_check
        %p121 = pneg %p77
      $region18: #{_lambda_.13} parent=11 // pred_check_branch
        %123 = sbr.rel (%p121) target = $region20
      $region19: #{_lambda_.13} parent=11 // pred_region
        _
      $region20: #{_lambda_.13} parent=11 // pred_fallthru
        _
    $region12: #{_lambda_.13} parent=5 // pred_fallthru
      _
    %p124 = scmp.lt.s32.totalorder %s9, 2
    // Predicated region
    $region21: #{_lambda_.13} parent=5 // pred_check
      %p125 = pneg %p124
    $region22: #{_lambda_.13} parent=5 // pred_check_branch
      %127 = sbr.rel (%p125) target = $region24
    $region23: #{_lambda_.13} parent=5 // pred_region
      // Predicated region
      $region25: #{_lambda_.13} parent=23 // pred_check
        %p128 = pneg %p29
      $region26: #{_lambda_.13} parent=23 // pred_check_branch
        %130 = sbr.rel (%p128) target = $region28
      $region27: #{_lambda_.13} parent=23 // pred_region
        %p131 = scmp.lt.s32.totalorder %s9, 1
        %s132 = scalar_select %p131, %s9, 1
        %s133 = smul.addr %s132, 8
        %s134 = smul.addr %s133, 4
        %s135 = scalar_lea.vmem %s0, %s134
      $region28: #{_lambda_.13} parent=23 // pred_fallthru
        _
    $region24: #{_lambda_.13} parent=5 // pred_fallthru
      _
    %p136 = scmp.le.s32.totalorder 1, %s9
    %p137 = scmp.lt.s32.totalorder %s9, 3
    %p138 = pnand %p136, %p137
    %p139 = pneg %p138
    // Predicated region
    $region29: #{_lambda_.13} parent=5 // pred_check
      _
    $region30: #{_lambda_.13} parent=5 // pred_check_branch
      %141 = sbr.rel (%p138) target = $region32
    $region31: #{_lambda_.13} parent=5 // pred_region
      %s142 = ssub.s32 %s9, 1
      %p143 = scmp.lt.s32.totalorder %s14, 1
      %s144 = scalar_select %p143, %s14, 1
      %s145 = smul.addr %s144, 8
      %s146 = smul.addr %s145, 4
      %s147 = scalar_lea.vmem %s0, %s146
      %p148 = pneg %p35
      %p149 = pneg %p32
      %p150 = pneg %p56
      %p151 = pneg %p53
      %p152 = pneg %p77
      %p153 = pneg %p74
      %p154 = pneg %p103
      %p155 = pneg %p100
      %p156 = scmp.lt.s32.totalorder %s14, 1
      %s157 = scalar_select %p156, %s14, 1
      %s158 = smul.addr %s157, 4
      %s159 = smul.addr %s158, 2
      %s160 = scalar_lea.vmem %s3, %s159
      %p161 = scmp.lt.s32.totalorder %s14, 1
      %s162 = scalar_select %p161, %s14, 1
      %s163 = smul.addr %s162, 8
      %s164 = smul.addr %s163, 4
      %s165 = scalar_lea.vmem %s0, %s164
      %p166 = scmp.lt.s32.totalorder %s14, 1
      %s167 = scalar_select %p166, %s14, 1
      %s168 = smul.addr %s167, 4
      %s169 = smul.addr %s168, 2
      %s170 = scalar_lea.vmem %s3, %s169
      %172 = vst [vmem:[#allocation2] sm:$0xff] 0
      %173 = vst [vmem:[#allocation2 + $0x8] sm:$0xff] 0
      %174 = vst [vmem:[#allocation2 + $0x10] sm:$0xff] 0
      %175 = vst [vmem:[#allocation2 + $0x18] sm:$0xff] 0
      %176 = vst [vmem:[#allocation2 + $0x20] sm:$0xff] 0
      %177 = vst [vmem:[#allocation2 + $0x28] sm:$0xff] 0
      %178 = vst [vmem:[#allocation2 + $0x30] sm:$0xff] 0
      %179 = vst [vmem:[#allocation2 + $0x38] sm:$0xff] 0
      %180 = vst [vmem:[#allocation2 + $0x40] sm:$0xff] 0
      %181 = vst [vmem:[#allocation2 + $0x48] sm:$0xff] 0
      %182 = vst [vmem:[#allocation2 + $0x50] sm:$0xff] 0
      %183 = vst [vmem:[#allocation2 + $0x58] sm:$0xff] 0
      %v184 = vld [vmem:[%s165] sm:$0xf]
      %v185 = vld [vmem:[%s165 + $0x4] sm:$0xf]
      %v186 = vld [vmem:[%s165 + $0x8] sm:$0xf]
      %v187 = vld [vmem:[%s165 + $0xc] sm:$0xf]
      %v188 = vld [vmem:[%s165 + $0x10] sm:$0xf]
      %v189 = vld [vmem:[%s165 + $0x14] sm:$0xf]
      %v190 = vld [vmem:[%s165 + $0x18] sm:$0xf]
      %v191 = vld [vmem:[%s165 + $0x1c] sm:$0xf]
      %s192 = scalar_lea.vmem [#allocation2], 16
      %193 = vst [vmem:[%s192] sm:$0xf] %v184
      %194 = vst [vmem:[%s192 + $0x8] sm:$0xf] %v185
      %195 = vst [vmem:[%s192 + $0x10] sm:$0xf] %v186
      %196 = vst [vmem:[%s192 + $0x18] sm:$0xf] %v187
      %197 = vst [vmem:[%s192 + $0x20] sm:$0xf] %v188
      %198 = vst [vmem:[%s192 + $0x28] sm:$0xf] %v189
      %199 = vst [vmem:[%s192 + $0x30] sm:$0xf] %v190
      %200 = vst [vmem:[%s192 + $0x38] sm:$0xf] %v191
      %v201 = vld [vmem:[#allocation2] sm:$0xff]
      %v202 = vld [vmem:[#allocation2 + $0x8] sm:$0xff]
      %v203 = vld [vmem:[#allocation2 + $0x10] sm:$0xff]
      %v204 = vld [vmem:[#allocation2 + $0x18] sm:$0xff]
      %v205 = vld [vmem:[#allocation2 + $0x20] sm:$0xff]
      %v206 = vld [vmem:[#allocation2 + $0x28] sm:$0xff]
      %v207 = vld [vmem:[#allocation2 + $0x30] sm:$0xff]
      %v208 = vld [vmem:[#allocation2 + $0x38] sm:$0xff]
      %v209 = vld [vmem:[#allocation2 + $0x40] sm:$0xff]
      %v210 = vld [vmem:[#allocation2 + $0x48] sm:$0xff]
      %v211 = vld [vmem:[#allocation2 + $0x50] sm:$0xff]
      %v212 = vld [vmem:[#allocation2 + $0x58] sm:$0xff]
      %v213 = vld [vmem:[%s1] sm:$0xff]
      %v214 = vld [vmem:[%s1 + $0x8] sm:$0xf]
      %v215 = vld [vmem:[%s1 + $0xc] sm:$0xff]
      %v216 = vld [vmem:[%s1 + $0x14] sm:$0xf]
      %v217 = vld [vmem:[%s1 + $0x18] sm:$0xff]
      %v218 = vld [vmem:[%s1 + $0x20] sm:$0xf]
      %v219 = vld [vmem:[%s1 + $0x24] sm:$0xff]
      %v220 = vld [vmem:[%s1 + $0x2c] sm:$0xf]
      %v221 = vld [vmem:[%s1 + $0x30] sm:$0xff]
      %v222 = vld [vmem:[%s1 + $0x38] sm:$0xf]
      %v223 = vld [vmem:[%s1 + $0x3c] sm:$0xff]
      %v224 = vld [vmem:[%s1 + $0x44] sm:$0xf]
      %v225 = vld [vmem:[%s1 + $0x48] sm:$0xff]
      %v226 = vld [vmem:[%s1 + $0x50] sm:$0xf]
      %v227 = vld [vmem:[%s1 + $0x54] sm:$0xff]
      %v228 = vld [vmem:[%s1 + $0x5c] sm:$0xf]
      %v229 = vld [vmem:[%s1 + $0x60] sm:$0xff]
      %v230 = vld [vmem:[%s1 + $0x68] sm:$0xf]
      %v231 = vld [vmem:[%s1 + $0x6c] sm:$0xff]
      %v232 = vld [vmem:[%s1 + $0x74] sm:$0xf]
      %v233 = vld [vmem:[%s1 + $0x78] sm:$0xff]
      %v234 = vld [vmem:[%s1 + $0x80] sm:$0xf]
      %v235 = vld [vmem:[%s1 + $0x84] sm:$0xff]
      %v236 = vld [vmem:[%s1 + $0x8c] sm:$0xf]
      %v237 = vld [vmem:[%s1 + $0x90] sm:$0xff]
      %v238 = vld [vmem:[%s1 + $0x98] sm:$0xf]
      %v239 = vld [vmem:[%s1 + $0x9c] sm:$0xff]
      %v240 = vld [vmem:[%s1 + $0xa4] sm:$0xf]
      %v241 = vld [vmem:[%s1 + $0xa8] sm:$0xff]
      %v242 = vld [vmem:[%s1 + $0xb0] sm:$0xf]
      %v243 = vld [vmem:[%s1 + $0xb4] sm:$0xff]
      %v244 = vld [vmem:[%s1 + $0xbc] sm:$0xf]
      %v245 = vld [vmem:[%s1 + $0xc0] sm:$0xff]
      %v246 = vld [vmem:[%s1 + $0xc8] sm:$0xf]
      %v247 = vld [vmem:[%s1 + $0xcc] sm:$0xff]
      %v248 = vld [vmem:[%s1 + $0xd4] sm:$0xf]
      %v249 = vld [vmem:[%s1 + $0xd8] sm:$0xff]
      %v250 = vld [vmem:[%s1 + $0xe0] sm:$0xf]
      %v251 = vld [vmem:[%s1 + $0xe4] sm:$0xff]
      %v252 = vld [vmem:[%s1 + $0xec] sm:$0xf]
      %v253 = vld [vmem:[%s1 + $0xf0] sm:$0xff]
      %v254 = vld [vmem:[%s1 + $0xf8] sm:$0xf]
      %v255 = vld [vmem:[%s1 + $0xfc] sm:$0xff]
      %v256 = vld [vmem:[%s1 + $0x104] sm:$0xf]
      %v257 = vld [vmem:[%s1 + $0x108] sm:$0xff]
      %v258 = vld [vmem:[%s1 + $0x110] sm:$0xf]
      %v259 = vld [vmem:[%s1 + $0x114] sm:$0xff]
      %v260 = vld [vmem:[%s1 + $0x11c] sm:$0xf]
      %v261 = vld [vmem:[%s1 + $0x120] sm:$0xff]
      %v262 = vld [vmem:[%s1 + $0x128] sm:$0xf]
      %v263 = vld [vmem:[%s1 + $0x12c] sm:$0xff]
      %v264 = vld [vmem:[%s1 + $0x134] sm:$0xf]
      %v265 = vld [vmem:[%s1 + $0x138] sm:$0xff]
      %v266 = vld [vmem:[%s1 + $0x140] sm:$0xf]
      %v267 = vld [vmem:[%s1 + $0x144] sm:$0xff]
      %v268 = vld [vmem:[%s1 + $0x14c] sm:$0xf]
      %v269 = vld [vmem:[%s1 + $0x150] sm:$0xff]
      %v270 = vld [vmem:[%s1 + $0x158] sm:$0xf]
      %v271 = vld [vmem:[%s1 + $0x15c] sm:$0xff]
      %v272 = vld [vmem:[%s1 + $0x164] sm:$0xf]
      %v273 = vld [vmem:[%s1 + $0x168] sm:$0xff]
      %v274 = vld [vmem:[%s1 + $0x170] sm:$0xf]
      %v275 = vld [vmem:[%s1 + $0x174] sm:$0xff]
      %v276 = vld [vmem:[%s1 + $0x17c] sm:$0xf]
      %v277 = vld [vmem:[%s1 + $0x180] sm:$0xff]
      %v278 = vld [vmem:[%s1 + $0x188] sm:$0xf]
      %v279 = vld [vmem:[%s1 + $0x18c] sm:$0xff]
      %v280 = vld [vmem:[%s1 + $0x194] sm:$0xf]
      %v281 = vld [vmem:[%s1 + $0x198] sm:$0xff]
      %v282 = vld [vmem:[%s1 + $0x1a0] sm:$0xf]
      %v283 = vld [vmem:[%s1 + $0x1a4] sm:$0xff]
      %v284 = vld [vmem:[%s1 + $0x1ac] sm:$0xf]
      %v285 = vld [vmem:[%s1 + $0x1b0] sm:$0xff]
      %v286 = vld [vmem:[%s1 + $0x1b8] sm:$0xf]
      %v287 = vld [vmem:[%s1 + $0x1bc] sm:$0xff]
      %v288 = vld [vmem:[%s1 + $0x1c4] sm:$0xf]
      %v289 = vld [vmem:[%s1 + $0x1c8] sm:$0xff]
      %v290 = vld [vmem:[%s1 + $0x1d0] sm:$0xf]
      %v291 = vld [vmem:[%s1 + $0x1d4] sm:$0xff]
      %v292 = vld [vmem:[%s1 + $0x1dc] sm:$0xf]
      %v293 = vld [vmem:[%s1 + $0x1e0] sm:$0xff]
      %v294 = vld [vmem:[%s1 + $0x1e8] sm:$0xf]
      %v295 = vld [vmem:[%s1 + $0x1ec] sm:$0xff]
      %v296 = vld [vmem:[%s1 + $0x1f4] sm:$0xf]
      %v297 = vld [vmem:[%s1 + $0x1f8] sm:$0xff]
      %v298 = vld [vmem:[%s1 + $0x200] sm:$0xf]
      %v299 = vld [vmem:[%s1 + $0x204] sm:$0xff]
      %v300 = vld [vmem:[%s1 + $0x20c] sm:$0xf]
      %v301 = vld [vmem:[%s1 + $0x210] sm:$0xff]
      %v302 = vld [vmem:[%s1 + $0x218] sm:$0xf]
      %v303 = vld [vmem:[%s1 + $0x21c] sm:$0xff]
      %v304 = vld [vmem:[%s1 + $0x224] sm:$0xf]
      %v305 = vld [vmem:[%s1 + $0x228] sm:$0xff]
      %v306 = vld [vmem:[%s1 + $0x230] sm:$0xf]
      %v307 = vld [vmem:[%s1 + $0x234] sm:$0xff]
      %v308 = vld [vmem:[%s1 + $0x23c] sm:$0xf]
      %v405 = vunpack.c.l.b16 %v213
      %v406 = vunpack.c.h.b16 %v213
      %v407 = vunpack.c.l.b16 %v214
      %v408 = vunpack.c.l.b16 %v215
      %v409 = vunpack.c.h.b16 %v215
      %v410 = vunpack.c.l.b16 %v216
      %v411 = vunpack.c.l.b16 %v217
      %v412 = vunpack.c.h.b16 %v217
      %v413 = vunpack.c.l.b16 %v218
      %v414 = vunpack.c.l.b16 %v219
      %v415 = vunpack.c.h.b16 %v219
      %v416 = vunpack.c.l.b16 %v220
      %v417 = vunpack.c.l.b16 %v221
      %v418 = vunpack.c.h.b16 %v221
      %v419 = vunpack.c.l.b16 %v222
      %v420 = vunpack.c.l.b16 %v223
      %v421 = vunpack.c.h.b16 %v223
      %v422 = vunpack.c.l.b16 %v224
      %v423 = vunpack.c.l.b16 %v225
      %v424 = vunpack.c.h.b16 %v225
      %v425 = vunpack.c.l.b16 %v226
      %v426 = vunpack.c.l.b16 %v227
      %v427 = vunpack.c.h.b16 %v227
      %v428 = vunpack.c.l.b16 %v228
      %v429 = vunpack.c.l.b16 %v229
      %v430 = vunpack.c.h.b16 %v229
      %v431 = vunpack.c.l.b16 %v230
      %v432 = vunpack.c.l.b16 %v231
      %v433 = vunpack.c.h.b16 %v231
      %v434 = vunpack.c.l.b16 %v232
      %v435 = vunpack.c.l.b16 %v233
      %v436 = vunpack.c.h.b16 %v233
      %v437 = vunpack.c.l.b16 %v234
      %v438 = vunpack.c.l.b16 %v235
      %v439 = vunpack.c.h.b16 %v235
      %v440 = vunpack.c.l.b16 %v236
      %v441 = vunpack.c.l.b16 %v237
      %v442 = vunpack.c.h.b16 %v237
      %v443 = vunpack.c.l.b16 %v238
      %v444 = vunpack.c.l.b16 %v239
      %v445 = vunpack.c.h.b16 %v239
      %v446 = vunpack.c.l.b16 %v240
      %v447 = vunpack.c.l.b16 %v241
      %v448 = vunpack.c.h.b16 %v241
      %v449 = vunpack.c.l.b16 %v242
      %v450 = vunpack.c.l.b16 %v243
      %v451 = vunpack.c.h.b16 %v243
      %v452 = vunpack.c.l.b16 %v244
      %v453 = vunpack.c.l.b16 %v245
      %v454 = vunpack.c.h.b16 %v245
      %v455 = vunpack.c.l.b16 %v246
      %v456 = vunpack.c.l.b16 %v247
      %v457 = vunpack.c.h.b16 %v247
      %v458 = vunpack.c.l.b16 %v248
      %v459 = vunpack.c.l.b16 %v249
      %v460 = vunpack.c.h.b16 %v249
      %v461 = vunpack.c.l.b16 %v250
      %v462 = vunpack.c.l.b16 %v251
      %v463 = vunpack.c.h.b16 %v251
      %v464 = vunpack.c.l.b16 %v252
      %v465 = vunpack.c.l.b16 %v253
      %v466 = vunpack.c.h.b16 %v253
      %v467 = vunpack.c.l.b16 %v254
      %v468 = vunpack.c.l.b16 %v255
      %v469 = vunpack.c.h.b16 %v255
      %v470 = vunpack.c.l.b16 %v256
      %v471 = vunpack.c.l.b16 %v257
      %v472 = vunpack.c.h.b16 %v257
      %v473 = vunpack.c.l.b16 %v258
      %v474 = vunpack.c.l.b16 %v259
      %v475 = vunpack.c.h.b16 %v259
      %v476 = vunpack.c.l.b16 %v260
      %v477 = vunpack.c.l.b16 %v261
      %v478 = vunpack.c.h.b16 %v261
      %v479 = vunpack.c.l.b16 %v262
      %v480 = vunpack.c.l.b16 %v263
      %v481 = vunpack.c.h.b16 %v263
      %v482 = vunpack.c.l.b16 %v264
      %v483 = vunpack.c.l.b16 %v265
      %v484 = vunpack.c.h.b16 %v265
      %v485 = vunpack.c.l.b16 %v266
      %v486 = vunpack.c.l.b16 %v267
      %v487 = vunpack.c.h.b16 %v267
      %v488 = vunpack.c.l.b16 %v268
      %v489 = vunpack.c.l.b16 %v269
      %v490 = vunpack.c.h.b16 %v269
      %v491 = vunpack.c.l.b16 %v270
      %v492 = vunpack.c.l.b16 %v271
      %v493 = vunpack.c.h.b16 %v271
      %v494 = vunpack.c.l.b16 %v272
      %v495 = vunpack.c.l.b16 %v273
      %v496 = vunpack.c.h.b16 %v273
      %v497 = vunpack.c.l.b16 %v274
      %v498 = vunpack.c.l.b16 %v275
      %v499 = vunpack.c.h.b16 %v275
      %v500 = vunpack.c.l.b16 %v276
      %v501 = vunpack.c.l.b16 %v277
      %v502 = vunpack.c.h.b16 %v277
      %v503 = vunpack.c.l.b16 %v278
      %v504 = vunpack.c.l.b16 %v279
      %v505 = vunpack.c.h.b16 %v279
      %v506 = vunpack.c.l.b16 %v280
      %v507 = vunpack.c.l.b16 %v281
      %v508 = vunpack.c.h.b16 %v281
      %v509 = vunpack.c.l.b16 %v282
      %v510 = vunpack.c.l.b16 %v283
      %v511 = vunpack.c.h.b16 %v283
      %v512 = vunpack.c.l.b16 %v284
      %v513 = vunpack.c.l.b16 %v285
      %v514 = vunpack.c.h.b16 %v285
      %v515 = vunpack.c.l.b16 %v286
      %v516 = vunpack.c.l.b16 %v287
      %v517 = vunpack.c.h.b16 %v287
      %v518 = vunpack.c.l.b16 %v288
      %v519 = vunpack.c.l.b16 %v289
      %v520 = vunpack.c.h.b16 %v289
      %v521 = vunpack.c.l.b16 %v290
      %v522 = vunpack.c.l.b16 %v291
      %v523 = vunpack.c.h.b16 %v291
      %v524 = vunpack.c.l.b16 %v292
      %v525 = vunpack.c.l.b16 %v293
      %v526 = vunpack.c.h.b16 %v293
      %v527 = vunpack.c.l.b16 %v294
      %v528 = vunpack.c.l.b16 %v295
      %v529 = vunpack.c.h.b16 %v295
      %v530 = vunpack.c.l.b16 %v296
      %v531 = vunpack.c.l.b16 %v297
      %v532 = vunpack.c.h.b16 %v297
      %v533 = vunpack.c.l.b16 %v298
      %v534 = vunpack.c.l.b16 %v299
      %v535 = vunpack.c.h.b16 %v299
      %v536 = vunpack.c.l.b16 %v300
      %v537 = vunpack.c.l.b16 %v301
      %v538 = vunpack.c.h.b16 %v301
      %v539 = vunpack.c.l.b16 %v302
      %v540 = vunpack.c.l.b16 %v303
      %v541 = vunpack.c.h.b16 %v303
      %v542 = vunpack.c.l.b16 %v304
      %v543 = vunpack.c.l.b16 %v305
      %v544 = vunpack.c.h.b16 %v305
      %v545 = vunpack.c.l.b16 %v306
      %v546 = vunpack.c.l.b16 %v307
      %v547 = vunpack.c.h.b16 %v307
      %v548 = vunpack.c.l.b16 %v308
      %v549 = vpack.c.b16 %v408, %v405
      %v550 = vpack.c.b16 %v409, %v406
      %v551 = vpack.c.b16 %v410, %v407
      %v552 = vpack.c.b16 %v414, %v411
      %v553 = vpack.c.b16 %v415, %v412
      %v554 = vpack.c.b16 %v416, %v413
      %v555 = vpack.c.b16 %v420, %v417
      %v556 = vpack.c.b16 %v421, %v418
      %v557 = vpack.c.b16 %v422, %v419
      %v558 = vpack.c.b16 %v426, %v423
      %v559 = vpack.c.b16 %v427, %v424
      %v560 = vpack.c.b16 %v428, %v425
      %v561 = vpack.c.b16 %v432, %v429
      %v562 = vpack.c.b16 %v433, %v430
      %v563 = vpack.c.b16 %v434, %v431
      %v564 = vpack.c.b16 %v438, %v435
      %v565 = vpack.c.b16 %v439, %v436
      %v566 = vpack.c.b16 %v440, %v437
      %v567 = vpack.c.b16 %v444, %v441
      %v568 = vpack.c.b16 %v445, %v442
      %v569 = vpack.c.b16 %v446, %v443
      %v570 = vpack.c.b16 %v450, %v447
      %v571 = vpack.c.b16 %v451, %v448
      %v572 = vpack.c.b16 %v452, %v449
      %v573 = vpack.c.b16 %v456, %v453
      %v574 = vpack.c.b16 %v457, %v454
      %v575 = vpack.c.b16 %v458, %v455
      %v576 = vpack.c.b16 %v462, %v459
      %v577 = vpack.c.b16 %v463, %v460
      %v578 = vpack.c.b16 %v464, %v461
      %v579 = vpack.c.b16 %v468, %v465
      %v580 = vpack.c.b16 %v469, %v466
      %v581 = vpack.c.b16 %v470, %v467
      %v582 = vpack.c.b16 %v474, %v471
      %v583 = vpack.c.b16 %v475, %v472
      %v584 = vpack.c.b16 %v476, %v473
      %v585 = vpack.c.b16 %v480, %v477
      %v586 = vpack.c.b16 %v481, %v478
      %v587 = vpack.c.b16 %v482, %v479
      %v588 = vpack.c.b16 %v486, %v483
      %v589 = vpack.c.b16 %v487, %v484
      %v590 = vpack.c.b16 %v488, %v485
      %v591 = vpack.c.b16 %v492, %v489
      %v592 = vpack.c.b16 %v493, %v490
      %v593 = vpack.c.b16 %v494, %v491
      %v594 = vpack.c.b16 %v498, %v495
      %v595 = vpack.c.b16 %v499, %v496
      %v596 = vpack.c.b16 %v500, %v497
      %v597 = vpack.c.b16 %v504, %v501
      %v598 = vpack.c.b16 %v505, %v502
      %v599 = vpack.c.b16 %v506, %v503
      %v600 = vpack.c.b16 %v510, %v507
      %v601 = vpack.c.b16 %v511, %v508
      %v602 = vpack.c.b16 %v512, %v509
      %v603 = vpack.c.b16 %v516, %v513
      %v604 = vpack.c.b16 %v517, %v514
      %v605 = vpack.c.b16 %v518, %v515
      %v606 = vpack.c.b16 %v522, %v519
      %v607 = vpack.c.b16 %v523, %v520
      %v608 = vpack.c.b16 %v524, %v521
      %v609 = vpack.c.b16 %v528, %v525
      %v610 = vpack.c.b16 %v529, %v526
      %v611 = vpack.c.b16 %v530, %v527
      %v612 = vpack.c.b16 %v534, %v531
      %v613 = vpack.c.b16 %v535, %v532
      %v614 = vpack.c.b16 %v536, %v533
      %v615 = vpack.c.b16 %v540, %v537
      %v616 = vpack.c.b16 %v541, %v538
      %v617 = vpack.c.b16 %v542, %v539
      %v618 = vpack.c.b16 %v546, %v543
      %v619 = vpack.c.b16 %v547, %v544
      %v620 = vpack.c.b16 %v548, %v545
      %693 = vmatprep.subr.bf16.mxu0 %v550
      %694 = vmatpush1.bf16.msra.mxu0 %v549
      %695 = vmatprep.subr.bf16.mxu0 %v553
      %696 = vmatpush1.bf16.msra.mxu0 %v552
      %697 = vmatprep.subr.bf16.mxu0 %v556
      %698 = vmatpush1.bf16.msra.mxu0 %v555
      %699 = vmatprep.subr.bf16.mxu0 %v559
      %700 = vmatpush1.bf16.msra.mxu0 %v558
      %701 = vmatprep.subr.bf16.mxu0 %v562
      %702 = vmatpush1.bf16.msra.mxu0 %v561
      %703 = vmatprep.subr.bf16.mxu0 %v565
      %704 = vmatpush1.bf16.msra.mxu0 %v564
      %705 = vmatprep.subr.bf16.mxu0 %v568
      %706 = vmatpush1.bf16.msra.mxu0 %v567
      %707 = vmatprep.subr.bf16.mxu0 %v571
      %708 = vmatpush1.bf16.msra.mxu0 %v570
      %709 = vmatprep.subr.bf16.mxu0 %v574
      %710 = vmatpush1.bf16.msra.mxu0 %v573
      %711 = vmatprep.subr.bf16.mxu0 %v577
      %712 = vmatpush1.bf16.msra.mxu0 %v576
      %713 = vmatprep.subr.bf16.mxu0 %v580
      %714 = vmatpush1.bf16.msra.mxu0 %v579
      %715 = vmatprep.subr.bf16.mxu0 %v583
      %716 = vmatpush1.bf16.msra.mxu0 %v582
      %717 = vmatprep.subr.bf16.mxu0 %v586
      %718 = vmatpush1.bf16.msra.mxu0 %v585
      %719 = vmatprep.subr.bf16.mxu0 %v589
      %720 = vmatpush1.bf16.msra.mxu0 %v588
      %721 = vmatprep.subr.bf16.mxu0 %v592
      %722 = vmatpush1.bf16.msra.mxu0 %v591
      %723 = vmatprep.subr.bf16.mxu0 %v595
      %724 = vmatpush1.bf16.msra.mxu0 %v594
      %725 = vmatprep.mubr.bf16.mxu0 %v202
      %726 = vmatmul.mubr.bf16.gmra.mrb[0].mxu0 %v201
      %v727 = vpop.f32.mrb[0].mxu0
      %v728 = vpop.f32.mrb[0].mxu0
      %v729 = vpop.f32.mrb[0].mxu0
      %v730 = vadd.f32 0.0, %v729
      %v731 = vpop.f32.mrb[0].mxu0
      %732 = vmatprep.mubr.bf16.mxu0 %v203
      %733 = vmatmul.mubr.bf16.gmra.mrb[0].mxu0 %v202
      %v734 = vpop.f32.mrb[0].mxu0
      %v735 = vadd.f32 0.0, %v734
      %v736 = vpop.f32.mrb[0].mxu0
      %v737 = vadd.f32 0.0, %v736
      %v738 = vpop.f32.mrb[0].mxu0
      %v739 = vadd.f32 0.0, %v738
      %v740 = vpop.f32.mrb[0].mxu0
      %v741 = vadd.f32 0.0, %v740
      %742 = vmatprep.mubr.bf16.mxu0 %v204
      %743 = vmatmul.mubr.bf16.gmra.mrb[0].mxu0 %v203
      %v744 = vpop.f32.mrb[0].mxu0
      %v745 = vpop.f32.mrb[0].mxu0
      %v746 = vadd.f32 0.0, %v745
      %v747 = vpop.f32.mrb[0].mxu0
      %v748 = vadd.f32 0.0, %v747
      %v749 = vpop.f32.mrb[0].mxu0
      %v750 = vadd.f32 0.0, %v749
      %751 = vmatprep.mubr.bf16.mxu0 %v205
      %752 = vmatmul.mubr.bf16.gmra.mrb[0].mxu0 %v204
      %v753 = vpop.f32.mrb[0].mxu0
      %v754 = vadd.f32 0.0, %v753
      %v755 = vpop.f32.mrb[0].mxu0
      %v756 = vadd.f32 0.0, %v755
      %v757 = vpop.f32.mrb[0].mxu0
      %v758 = vadd.f32 0.0, %v757
      %v759 = vpop.f32.mrb[0].mxu0
      %v760 = vadd.f32 0.0, %v759
      %761 = vmatprep.mubr.bf16.mxu0 %v206
      %762 = vmatmul.mubr.bf16.gmra.mrb[0].mxu0 %v205
      %v763 = vpop.f32.mrb[0].mxu0
      %v764 = vpop.f32.mrb[0].mxu0
      %v765 = vadd.f32 0.0, %v764
      %v766 = vpop.f32.mrb[0].mxu0
      %v767 = vadd.f32 0.0, %v766
      %v768 = vpop.f32.mrb[0].mxu0
      %v769 = vadd.f32 0.0, %v768
      %770 = vmatprep.mubr.bf16.mxu0 %v207
      %771 = vmatmul.mubr.bf16.gmra.mrb[0].mxu0 %v206
      %v772 = vpop.f32.mrb[0].mxu0
      %v773 = vadd.f32 0.0, %v772
      %v774 = vpop.f32.mrb[0].mxu0
      %v775 = vadd.f32 0.0, %v774
      %v776 = vpop.f32.mrb[0].mxu0
      %v777 = vadd.f32 0.0, %v776
      %v778 = vpop.f32.mrb[0].mxu0
      %v779 = vadd.f32 0.0, %v778
      %780 = vmatprep.mubr.bf16.mxu0 %v208
      %781 = vmatmul.mubr.bf16.gmra.mrb[0].mxu0 %v207
      %v782 = vpop.f32.mrb[0].mxu0
      %v783 = vpop.f32.mrb[0].mxu0
      %v784 = vadd.f32 0.0, %v783
      %v785 = vpop.f32.mrb[0].mxu0
      %v786 = vadd.f32 0.0, %v785
      %v787 = vpop.f32.mrb[0].mxu0
      %v788 = vadd.f32 0.0, %v787
      %789 = vmatprep.mubr.bf16.mxu0 %v209
      %790 = vmatmul.mubr.bf16.gmra.mrb[0].mxu0 %v208
      %v791 = vpop.f32.mrb[0].mxu0
      %v792 = vadd.f32 0.0, %v791
      %v793 = vpop.f32.mrb[0].mxu0
      %v794 = vadd.f32 0.0, %v793
      %v795 = vpop.f32.mrb[0].mxu0
      %v796 = vadd.f32 0.0, %v795
      %v797 = vpop.f32.mrb[0].mxu0
      %v798 = vadd.f32 0.0, %v797
      %799 = vmatprep.mubr.bf16.mxu0 %v210
      %800 = vmatmul.mubr.bf16.gmra.mrb[0].mxu0 %v209
      %v801 = vpop.f32.mrb[0].mxu0
      %v802 = vpop.f32.mrb[0].mxu0
      %v803 = vadd.f32 0.0, %v802
      %v804 = vpop.f32.mrb[0].mxu0
      %v805 = vpop.f32.mrb[0].mxu0
      %806 = vmatprep.mubr.bf16.mxu0 %v211
      %807 = vmatmul.mubr.bf16.gmra.mrb[0].mxu0 %v210
      %v808 = vpop.f32.mrb[0].mxu0
      %v809 = vpop.f32.mrb[0].mxu0
      %v810 = vpop.f32.mrb[0].mxu0
      %v811 = vpop.f32.mrb[0].mxu0
      %812 = vdwg.mxu0
      %813 = vmatprep.subr.bf16.mxu0 %v598
      %814 = vmatpush1.bf16.msra.mxu0 %v597
      %815 = vmatprep.subr.bf16.mxu0 %v601
      %816 = vmatpush1.bf16.msra.mxu0 %v600
      %817 = vmatprep.subr.bf16.mxu0 %v604
      %818 = vmatpush1.bf16.msra.mxu0 %v603
      %819 = vmatprep.subr.bf16.mxu0 %v607
      %820 = vmatpush1.bf16.msra.mxu0 %v606
      %821 = vmatprep.subr.bf16.mxu0 %v610
      %822 = vmatpush1.bf16.msra.mxu0 %v609
      %823 = vmatprep.subr.bf16.mxu0 %v613
      %824 = vmatpush1.bf16.msra.mxu0 %v612
      %825 = vmatprep.subr.bf16.mxu0 %v616
      %826 = vmatpush1.bf16.msra.mxu0 %v615
      %827 = vmatprep.subr.bf16.mxu0 %v619
      %828 = vmatpush1.bf16.msra.mxu0 %v618
      %829 = vmatprep.subr.bf16.mxu0 0
      %830 = vmatpush1.bf16.msra.mxu0 0
      %831 = vmatprep.subr.bf16.mxu0 0
      %832 = vmatpush1.bf16.msra.mxu0 0
      %833 = vmatprep.subr.bf16.mxu0 0
      %834 = vmatpush1.bf16.msra.mxu0 0
      %835 = vmatprep.subr.bf16.mxu0 0
      %836 = vmatpush1.bf16.msra.mxu0 0
      %837 = vmatprep.subr.bf16.mxu0 0
      %838 = vmatpush1.bf16.msra.mxu0 0
      %839 = vmatprep.subr.bf16.mxu0 0
      %840 = vmatpush1.bf16.msra.mxu0 0
      %841 = vmatprep.subr.bf16.mxu0 0
      %842 = vmatpush1.bf16.msra.mxu0 0
      %843 = vmatprep.subr.bf16.mxu0 0
      %844 = vmatpush1.bf16.msra.mxu0 0
      %845 = vmatprep.mubr.bf16.mxu0 0
      %846 = vmatmul.mubr.bf16.gmra.mrb[0].mxu0 %v203
      %v847 = vpop.f32.mrb[0].mxu0
      %v848 = vpop.f32.mrb[0].mxu0
      %v849 = vpop.f32.mrb[0].mxu0
      %v850 = vadd.f32 %v730, %v849
      %v851 = vpop.f32.mrb[0].mxu0
      %852 = vmatprep.mubr.bf16.mxu0 0
      %853 = vmatmul.mubr.bf16.gmra.mrb[0].mxu0 %v204
      %v854 = vpop.f32.mrb[0].mxu0
      %v855 = vadd.f32 %v735, %v854
      %v856 = vpop.f32.mrb[0].mxu0
      %v857 = vadd.f32 %v737, %v856
      %v858 = vpop.f32.mrb[0].mxu0
      %v859 = vadd.f32 %v739, %v858
      %v860 = vpop.f32.mrb[0].mxu0
      %v861 = vadd.f32 %v741, %v860
      %862 = vmatprep.mubr.bf16.mxu0 0
      %863 = vmatmul.mubr.bf16.gmra.mrb[0].mxu0 %v205
      %v864 = vpop.f32.mrb[0].mxu0
      %v865 = vpop.f32.mrb[0].mxu0
      %v866 = vadd.f32 %v746, %v865
      %v867 = vpop.f32.mrb[0].mxu0
      %v868 = vadd.f32 %v748, %v867
      %v869 = vpop.f32.mrb[0].mxu0
      %v870 = vadd.f32 %v750, %v869
      %871 = vmatprep.mubr.bf16.mxu0 0
      %872 = vmatmul.mubr.bf16.gmra.mrb[0].mxu0 %v206
      %v873 = vpop.f32.mrb[0].mxu0
      %v874 = vadd.f32 %v754, %v873
      %v875 = vpop.f32.mrb[0].mxu0
      %v876 = vadd.f32 %v756, %v875
      %v877 = vpop.f32.mrb[0].mxu0
      %v878 = vadd.f32 %v758, %v877
      %v879 = vpop.f32.mrb[0].mxu0
      %v880 = vadd.f32 %v760, %v879
      %881 = vmatprep.mubr.bf16.mxu0 0
      %882 = vmatmul.mubr.bf16.gmra.mrb[0].mxu0 %v207
      %v883 = vpop.f32.mrb[0].mxu0
      %v884 = vpop.f32.mrb[0].mxu0
      %v885 = vadd.f32 %v765, %v884
      %v886 = vpop.f32.mrb[0].mxu0
      %v887 = vadd.f32 %v767, %v886
      %v888 = vpop.f32.mrb[0].mxu0
      %v889 = vadd.f32 %v769, %v888
      %890 = vmatprep.mubr.bf16.mxu0 0
      %891 = vmatmul.mubr.bf16.gmra.mrb[0].mxu0 %v208
      %v892 = vpop.f32.mrb[0].mxu0
      %v893 = vadd.f32 %v773, %v892
      %v894 = vpop.f32.mrb[0].mxu0
      %v895 = vadd.f32 %v775, %v894
      %v896 = vpop.f32.mrb[0].mxu0
      %v897 = vadd.f32 %v777, %v896
      %v898 = vpop.f32.mrb[0].mxu0
      %v899 = vadd.f32 %v779, %v898
      %900 = vmatprep.mubr.bf16.mxu0 0
      %901 = vmatmul.mubr.bf16.gmra.mrb[0].mxu0 %v209
      %v902 = vpop.f32.mrb[0].mxu0
      %v903 = vpop.f32.mrb[0].mxu0
      %v904 = vadd.f32 %v784, %v903
      %v905 = vpop.f32.mrb[0].mxu0
      %v906 = vadd.f32 %v786, %v905
      %v907 = vpop.f32.mrb[0].mxu0
      %v908 = vadd.f32 %v788, %v907
      %909 = vmatprep.mubr.bf16.mxu0 0
      %910 = vmatmul.mubr.bf16.gmra.mrb[0].mxu0 %v210
      %v911 = vpop.f32.mrb[0].mxu0
      %v912 = vadd.f32 %v792, %v911
      %v913 = vpop.f32.mrb[0].mxu0
      %v914 = vadd.f32 %v794, %v913
      %v915 = vpop.f32.mrb[0].mxu0
      %v916 = vadd.f32 %v796, %v915
      %v917 = vpop.f32.mrb[0].mxu0
      %v918 = vadd.f32 %v798, %v917
      %919 = vmatprep.mubr.bf16.mxu0 0
      %920 = vmatmul.mubr.bf16.gmra.mrb[0].mxu0 %v211
      %v921 = vpop.f32.mrb[0].mxu0
      %v922 = vpop.f32.mrb[0].mxu0
      %v923 = vadd.f32 %v803, %v922
      %v924 = vpop.f32.mrb[0].mxu0
      %v925 = vpop.f32.mrb[0].mxu0
      %926 = vmatprep.mubr.bf16.mxu0 0
      %927 = vmatmul.mubr.bf16.gmra.mrb[0].mxu0 %v212
      %v928 = vpop.f32.mrb[0].mxu0
      %v929 = vpop.f32.mrb[0].mxu0
      %v930 = vpop.f32.mrb[0].mxu0
      %v931 = vpop.f32.mrb[0].mxu0
      %932 = vdwg.mxu0
      %933 = vmatprep.subr.bf16.mxu0 0
      %934 = vmatpush1.bf16.msra.mxu0 %v551
      %935 = vmatprep.subr.bf16.mxu0 0
      %936 = vmatpush1.bf16.msra.mxu0 %v554
      %937 = vmatprep.subr.bf16.mxu0 0
      %938 = vmatpush1.bf16.msra.mxu0 %v557
      %939 = vmatprep.subr.bf16.mxu0 0
      %940 = vmatpush1.bf16.msra.mxu0 %v560
      %941 = vmatprep.subr.bf16.mxu0 0
      %942 = vmatpush1.bf16.msra.mxu0 %v563
      %943 = vmatprep.subr.bf16.mxu0 0
      %944 = vmatpush1.bf16.msra.mxu0 %v566
      %945 = vmatprep.subr.bf16.mxu0 0
      %946 = vmatpush1.bf16.msra.mxu0 %v569
      %947 = vmatprep.subr.bf16.mxu0 0
      %948 = vmatpush1.bf16.msra.mxu0 %v572
      %949 = vmatprep.subr.bf16.mxu0 0
      %950 = vmatpush1.bf16.msra.mxu0 %v575
      %951 = vmatprep.subr.bf16.mxu0 0
      %952 = vmatpush1.bf16.msra.mxu0 %v578
      %953 = vmatprep.subr.bf16.mxu0 0
      %954 = vmatpush1.bf16.msra.mxu0 %v581
      %955 = vmatprep.subr.bf16.mxu0 0
      %956 = vmatpush1.bf16.msra.mxu0 %v584
      %957 = vmatprep.subr.bf16.mxu0 0
      %958 = vmatpush1.bf16.msra.mxu0 %v587
      %959 = vmatprep.subr.bf16.mxu0 0
      %960 = vmatpush1.bf16.msra.mxu0 %v590
      %961 = vmatprep.subr.bf16.mxu0 0
      %962 = vmatpush1.bf16.msra.mxu0 %v593
      %963 = vmatprep.subr.bf16.mxu0 0
      %964 = vmatpush1.bf16.msra.mxu0 %v596
      %965 = vmatprep.mubr.bf16.mxu0 %v202
      %966 = vmatmul.mubr.bf16.gmra.mrb[0].mxu0 %v201
      %v967 = vpop.f32.mrb[0].mxu0
      %v968 = vpop.f32.mrb[0].mxu0
      %v969 = vpop.f32.mrb[0].mxu0
      %v970 = vpop.f32.mrb[0].mxu0
      %971 = vmatprep.mubr.bf16.mxu0 %v203
      %972 = vmatmul.mubr.bf16.gmra.mrb[0].mxu0 %v202
      %v973 = vpop.f32.mrb[0].mxu0
      %v974 = vadd.f32 0.0, %v973
      %v975 = vpop.f32.mrb[0].mxu0
      %v976 = vpop.f32.mrb[0].mxu0
      %v977 = vadd.f32 0.0, %v976
      %v978 = vpop.f32.mrb[0].mxu0
      %979 = vmatprep.mubr.bf16.mxu0 %v204
      %980 = vmatmul.mubr.bf16.gmra.mrb[0].mxu0 %v203
      %v981 = vpop.f32.mrb[0].mxu0
      %v982 = vadd.f32 0.0, %v981
      %v983 = vpop.f32.mrb[0].mxu0
      %v984 = vpop.f32.mrb[0].mxu0
      %v985 = vadd.f32 0.0, %v984
      %v986 = vpop.f32.mrb[0].mxu0
      %987 = vmatprep.mubr.bf16.mxu0 %v205
      %988 = vmatmul.mubr.bf16.gmra.mrb[0].mxu0 %v204
      %v989 = vpop.f32.mrb[0].mxu0
      %v990 = vadd.f32 0.0, %v989
      %v991 = vpop.f32.mrb[0].mxu0
      %v992 = vpop.f32.mrb[0].mxu0
      %v993 = vadd.f32 0.0, %v992
      %v994 = vpop.f32.mrb[0].mxu0
      %995 = vmatprep.mubr.bf16.mxu0 %v206
      %996 = vmatmul.mubr.bf16.gmra.mrb[0].mxu0 %v205
      %v997 = vpop.f32.mrb[0].mxu0
      %v998 = vadd.f32 0.0, %v997
      %v999 = vpop.f32.mrb[0].mxu0
      %v1000 = vpop.f32.mrb[0].mxu0
      %v1001 = vadd.f32 0.0, %v1000
      %v1002 = vpop.f32.mrb[0].mxu0
      %1003 = vmatprep.mubr.bf16.mxu0 %v207
      %1004 = vmatmul.mubr.bf16.gmra.mrb[0].mxu0 %v206
      %v1005 = vpop.f32.mrb[0].mxu0
      %v1006 = vadd.f32 0.0, %v1005
      %v1007 = vpop.f32.mrb[0].mxu0
      %v1008 = vpop.f32.mrb[0].mxu0
      %v1009 = vadd.f32 0.0, %v1008
      %v1010 = vpop.f32.mrb[0].mxu0
      %1011 = vmatprep.mubr.bf16.mxu0 %v208
      %1012 = vmatmul.mubr.bf16.gmra.mrb[0].mxu0 %v207
      %v1013 = vpop.f32.mrb[0].mxu0
      %v1014 = vadd.f32 0.0, %v1013
      %v1015 = vpop.f32.mrb[0].mxu0
      %v1016 = vpop.f32.mrb[0].mxu0
      %v1017 = vadd.f32 0.0, %v1016
      %v1018 = vpop.f32.mrb[0].mxu0
      %1019 = vmatprep.mubr.bf16.mxu0 %v209
      %1020 = vmatmul.mubr.bf16.gmra.mrb[0].mxu0 %v208
      %v1021 = vpop.f32.mrb[0].mxu0
      %v1022 = vadd.f32 0.0, %v1021
      %v1023 = vpop.f32.mrb[0].mxu0
      %v1024 = vpop.f32.mrb[0].mxu0
      %v1025 = vadd.f32 0.0, %v1024
      %v1026 = vpop.f32.mrb[0].mxu0
      %1027 = vmatprep.mubr.bf16.mxu0 %v210
      %1028 = vmatmul.mubr.bf16.gmra.mrb[0].mxu0 %v209
      %v1029 = vpop.f32.mrb[0].mxu0
      %v1030 = vadd.f32 0.0, %v1029
      %v1031 = vpop.f32.mrb[0].mxu0
      %v1032 = vpop.f32.mrb[0].mxu0
      %v1033 = vpop.f32.mrb[0].mxu0
      %1034 = vmatprep.mubr.bf16.mxu0 %v211
      %1035 = vmatmul.mubr.bf16.gmra.mrb[0].mxu0 %v210
      %v1036 = vpop.f32.mrb[0].mxu0
      %v1037 = vpop.f32.mrb[0].mxu0
      %v1038 = vpop.f32.mrb[0].mxu0
      %v1039 = vpop.f32.mrb[0].mxu0
      %1040 = vdwg.mxu0
      %1041 = vmatprep.subr.bf16.mxu0 0
      %1042 = vmatpush1.bf16.msra.mxu0 %v599
      %1043 = vmatprep.subr.bf16.mxu0 0
      %1044 = vmatpush1.bf16.msra.mxu0 %v602
      %1045 = vmatprep.subr.bf16.mxu0 0
      %1046 = vmatpush1.bf16.msra.mxu0 %v605
      %1047 = vmatprep.subr.bf16.mxu0 0
      %1048 = vmatpush1.bf16.msra.mxu0 %v608
      %1049 = vmatprep.subr.bf16.mxu0 0
      %1050 = vmatpush1.bf16.msra.mxu0 %v611
      %1051 = vmatprep.subr.bf16.mxu0 0
      %1052 = vmatpush1.bf16.msra.mxu0 %v614
      %1053 = vmatprep.subr.bf16.mxu0 0
      %1054 = vmatpush1.bf16.msra.mxu0 %v617
      %1055 = vmatprep.subr.bf16.mxu0 0
      %1056 = vmatpush1.bf16.msra.mxu0 %v620
      %1057 = vmatprep.subr.bf16.mxu0 0
      %1058 = vmatpush1.bf16.msra.mxu0 0
      %1059 = vmatprep.subr.bf16.mxu0 0
      %1060 = vmatpush1.bf16.msra.mxu0 0
      %1061 = vmatprep.subr.bf16.mxu0 0
      %1062 = vmatpush1.bf16.msra.mxu0 0
      %1063 = vmatprep.subr.bf16.mxu0 0
      %1064 = vmatpush1.bf16.msra.mxu0 0
      %1065 = vmatprep.subr.bf16.mxu0 0
      %1066 = vmatpush1.bf16.msra.mxu0 0
      %1067 = vmatprep.subr.bf16.mxu0 0
      %1068 = vmatpush1.bf16.msra.mxu0 0
      %1069 = vmatprep.subr.bf16.mxu0 0
      %1070 = vmatpush1.bf16.msra.mxu0 0
      %1071 = vmatprep.subr.bf16.mxu0 0
      %1072 = vmatpush1.bf16.msra.mxu0 0
      %1073 = vmatprep.mubr.bf16.mxu0 0
      %1074 = vmatmul.mubr.bf16.gmra.mrb[0].mxu0 %v203
      %v1075 = vpop.f32.mrb[0].mxu0
      %v1076 = vpop.f32.mrb[0].mxu0
      %v1077 = vpop.f32.mrb[0].mxu0
      %v1078 = vpop.f32.mrb[0].mxu0
      %1079 = vmatprep.mubr.bf16.mxu0 0
      %1080 = vmatmul.mubr.bf16.gmra.mrb[0].mxu0 %v204
      %v1081 = vpop.f32.mrb[0].mxu0
      %v1082 = vadd.f32 %v974, %v1081
      %v1083 = vpop.f32.mrb[0].mxu0
      %v1084 = vpop.f32.mrb[0].mxu0
      %v1085 = vadd.f32 %v977, %v1084
      %v1086 = vpop.f32.mrb[0].mxu0
      %1087 = vmatprep.mubr.bf16.mxu0 0
      %1088 = vmatmul.mubr.bf16.gmra.mrb[0].mxu0 %v205
      %v1089 = vpop.f32.mrb[0].mxu0
      %v1090 = vadd.f32 %v982, %v1089
      %v1091 = vpop.f32.mrb[0].mxu0
      %v1092 = vpop.f32.mrb[0].mxu0
      %v1093 = vadd.f32 %v985, %v1092
      %v1094 = vpop.f32.mrb[0].mxu0
      %1095 = vmatprep.mubr.bf16.mxu0 0
      %1096 = vmatmul.mubr.bf16.gmra.mrb[0].mxu0 %v206
      %v1097 = vpop.f32.mrb[0].mxu0
      %v1098 = vadd.f32 %v990, %v1097
      %v1099 = vpop.f32.mrb[0].mxu0
      %v1100 = vpop.f32.mrb[0].mxu0
      %v1101 = vadd.f32 %v993, %v1100
      %v1102 = vpop.f32.mrb[0].mxu0
      %1103 = vmatprep.mubr.bf16.mxu0 0
      %1104 = vmatmul.mubr.bf16.gmra.mrb[0].mxu0 %v207
      %v1105 = vpop.f32.mrb[0].mxu0
      %v1106 = vadd.f32 %v998, %v1105
      %v1107 = vpop.f32.mrb[0].mxu0
      %v1108 = vpop.f32.mrb[0].mxu0
      %v1109 = vadd.f32 %v1001, %v1108
      %v1110 = vpop.f32.mrb[0].mxu0
      %1111 = vmatprep.mubr.bf16.mxu0 0
      %1112 = vmatmul.mubr.bf16.gmra.mrb[0].mxu0 %v208
      %v1113 = vpop.f32.mrb[0].mxu0
      %v1114 = vadd.f32 %v1006, %v1113
      %v1115 = vpop.f32.mrb[0].mxu0
      %v1116 = vpop.f32.mrb[0].mxu0
      %v1117 = vadd.f32 %v1009, %v1116
      %v1118 = vpop.f32.mrb[0].mxu0
      %1119 = vmatprep.mubr.bf16.mxu0 0
      %1120 = vmatmul.mubr.bf16.gmra.mrb[0].mxu0 %v209
      %v1121 = vpop.f32.mrb[0].mxu0
      %v1122 = vadd.f32 %v1014, %v1121
      %v1123 = vpop.f32.mrb[0].mxu0
      %v1124 = vpop.f32.mrb[0].mxu0
      %v1125 = vadd.f32 %v1017, %v1124
      %v1126 = vpop.f32.mrb[0].mxu0
      %1127 = vmatprep.mubr.bf16.mxu0 0
      %1128 = vmatmul.mubr.bf16.gmra.mrb[0].mxu0 %v210
      %v1129 = vpop.f32.mrb[0].mxu0
      %v1130 = vadd.f32 %v1022, %v1129
      %v1131 = vpop.f32.mrb[0].mxu0
      %v1132 = vpop.f32.mrb[0].mxu0
      %v1133 = vadd.f32 %v1025, %v1132
      %v1134 = vpop.f32.mrb[0].mxu0
      %1135 = vmatprep.mubr.bf16.mxu0 0
      %1136 = vmatmul.mubr.bf16.gmra.mrb[0].mxu0 %v211
      %v1137 = vpop.f32.mrb[0].mxu0
      %v1138 = vadd.f32 %v1030, %v1137
      %v1139 = vpop.f32.mrb[0].mxu0
      %v1140 = vpop.f32.mrb[0].mxu0
      %v1141 = vpop.f32.mrb[0].mxu0
      %1142 = vmatprep.mubr.bf16.mxu0 0
      %1143 = vmatmul.mubr.bf16.gmra.mrb[0].mxu0 %v212
      %v1144 = vpop.f32.mrb[0].mxu0
      %v1145 = vpop.f32.mrb[0].mxu0
      %v1146 = vpop.f32.mrb[0].mxu0
      %v1147 = vpop.f32.mrb[0].mxu0
      %1148 = vdwg.mxu0
      %vm1164 = vcmask 1046528
      %v1165 = vrot.slane %v857, 1
      %v1166 = vrot.slane %v861, 1
      %v1167 = vsel %vm1164, %v1165, %v1166
      %v1168 = vrot.slane %v866, 1
      %v1169 = vsel %vm1164, %v1166, %v1168
      %v1170 = vrot.slane %v870, 1
      %v1171 = vrot.slane %v876, 1
      %v1172 = vsel %vm1164, %v1170, %v1171
      %v1173 = vrot.slane %v880, 1
      %v1174 = vsel %vm1164, %v1171, %v1173
      %v1175 = vrot.slane %v885, 1
      %v1176 = vsel %vm1164, %v1173, %v1175
      %v1177 = vrot.slane %v889, 1
      %v1178 = vrot.slane %v895, 1
      %v1179 = vsel %vm1164, %v1177, %v1178
      %v1180 = vrot.slane %v899, 1
      %v1181 = vsel %vm1164, %v1178, %v1180
      %v1182 = vrot.slane %v904, 1
      %v1183 = vsel %vm1164, %v1180, %v1182
      %v1184 = vrot.slane %v908, 1
      %v1185 = vrot.slane %v914, 1
      %v1186 = vsel %vm1164, %v1184, %v1185
      %v1187 = vrot.slane %v918, 1
      %v1188 = vsel %vm1164, %v1185, %v1187
      %v1189 = vrot.slane %v923, 1
      %v1190 = vsel %vm1164, %v1187, %v1189
      %v1203 = vadd.f32 %v850, %v1165
      %v1204 = vadd.f32 %v855, %v1167
      %v1205 = vadd.f32 %v859, %v1169
      %v1206 = vadd.f32 %v868, %v1172
      %v1207 = vadd.f32 %v874, %v1174
      %v1208 = vadd.f32 %v878, %v1176
      %v1209 = vadd.f32 %v887, %v1179
      %v1210 = vadd.f32 %v893, %v1181
      %v1211 = vadd.f32 %v897, %v1183
      %v1212 = vadd.f32 %v906, %v1186
      %v1213 = vadd.f32 %v912, %v1188
      %v1214 = vadd.f32 %v916, %v1190
      %vm1230 = vcmask 1045504
      %v1231 = vrot.slane %v1082, 2
      %v1232 = vrot.slane %v1085, 2
      %v1233 = vsel %vm1230, %v1231, %v1232
      %v1234 = vrot.slane %v1090, 2
      %v1235 = vsel %vm1230, %v1232, %v1234
      %v1236 = vrot.slane %v1093, 2
      %v1237 = vrot.slane %v1098, 2
      %v1238 = vsel %vm1230, %v1236, %v1237
      %v1239 = vrot.slane %v1101, 2
      %v1240 = vsel %vm1230, %v1237, %v1239
      %v1241 = vrot.slane %v1106, 2
      %v1242 = vsel %vm1230, %v1239, %v1241
      %v1243 = vrot.slane %v1109, 2
      %v1244 = vrot.slane %v1114, 2
      %v1245 = vsel %vm1230, %v1243, %v1244
      %v1246 = vrot.slane %v1117, 2
      %v1247 = vsel %vm1230, %v1244, %v1246
      %v1248 = vrot.slane %v1122, 2
      %v1249 = vsel %vm1230, %v1246, %v1248
      %v1250 = vrot.slane %v1125, 2
      %v1251 = vrot.slane %v1130, 2
      %v1252 = vsel %vm1230, %v1250, %v1251
      %v1253 = vrot.slane %v1133, 2
      %v1254 = vsel %vm1230, %v1251, %v1253
      %v1255 = vrot.slane %v1138, 2
      %v1256 = vsel %vm1230, %v1253, %v1255
      %v1269 = vadd.f32 %v1203, %v1231
      %v1270 = vadd.f32 %v1204, %v1233
      %v1271 = vadd.f32 %v1205, %v1235
      %v1272 = vadd.f32 %v1206, %v1238
      %v1273 = vadd.f32 %v1207, %v1240
      %v1274 = vadd.f32 %v1208, %v1242
      %v1275 = vadd.f32 %v1209, %v1245
      %v1276 = vadd.f32 %v1210, %v1247
      %v1277 = vadd.f32 %v1211, %v1249
      %v1278 = vadd.f32 %v1212, %v1252
      %v1279 = vadd.f32 %v1213, %v1254
      %v1280 = vadd.f32 %v1214, %v1256
      %v1281 = vld [vmem:[%s2] sm:$0x1]
      %v1283 = vlaneseq
      %v1284 = vshrl.u32 %v1283, 7
      %v1285 = vsub.s32 0, %v1284
      %v1286 = vrot.slane %v1281, %v1285
      %v1288 = vadd.f32 %v1269, %v1286
      %v1289 = vadd.f32 %v1270, %v1286
      %v1290 = vadd.f32 %v1271, %v1286
      %v1291 = vadd.f32 %v1272, %v1286
      %v1292 = vadd.f32 %v1273, %v1286
      %v1293 = vadd.f32 %v1274, %v1286
      %v1294 = vadd.f32 %v1275, %v1286
      %v1295 = vadd.f32 %v1276, %v1286
      %v1296 = vadd.f32 %v1277, %v1286
      %v1297 = vadd.f32 %v1278, %v1286
      %v1298 = vadd.f32 %v1279, %v1286
      %v1299 = vadd.f32 %v1280, %v1286
      %v1300 = vmax.f32 %v1288, 0.0
      %v1301 = vmax.f32 %v1289, 0.0
      %v1302 = vmax.f32 %v1290, 0.0
      %v1303 = vmax.f32 %v1291, 0.0
      %v1304 = vmax.f32 %v1292, 0.0
      %v1305 = vmax.f32 %v1293, 0.0
      %v1306 = vmax.f32 %v1294, 0.0
      %v1307 = vmax.f32 %v1295, 0.0
      %v1308 = vmax.f32 %v1296, 0.0
      %v1309 = vmax.f32 %v1297, 0.0
      %v1310 = vmax.f32 %v1298, 0.0
      %v1311 = vmax.f32 %v1299, 0.0
      %vm1324 = vcmask 1040384
      %v1325 = vrot.slane %v1300, 7
      %v1326 = vrot.slane %v1301, 7
      %v1327 = vsel %vm1324, %v1325, %v1326
      %v1328 = vrot.slane %v1302, 7
      %v1329 = vsel %vm1324, %v1326, %v1328
      %v1330 = vrot.slane %v1303, 7
      %v1331 = vrot.slane %v1304, 7
      %v1332 = vsel %vm1324, %v1330, %v1331
      %v1333 = vrot.slane %v1305, 7
      %v1334 = vsel %vm1324, %v1331, %v1333
      %v1335 = vrot.slane %v1306, 7
      %v1336 = vrot.slane %v1307, 7
      %v1337 = vsel %vm1324, %v1335, %v1336
      %v1338 = vrot.slane %v1308, 7
      %v1339 = vsel %vm1324, %v1336, %v1338
      %v1340 = vrot.slane %v1309, 7
      %v1341 = vrot.slane %v1310, 7
      %v1342 = vsel %vm1324, %v1340, %v1341
      %v1343 = vrot.slane %v1311, 7
      %v1344 = vsel %vm1324, %v1341, %v1343
      %1353 = vst [vmem:[#allocation3] sm:$0xff] %v1327
      %1354 = vst [vmem:[#allocation3 + $0x8] sm:$0xff] %v1329
      %1355 = vst [vmem:[#allocation3 + $0x10] sm:$0xff] %v1332
      %1356 = vst [vmem:[#allocation3 + $0x18] sm:$0xff] %v1334
      %1357 = vst [vmem:[#allocation3 + $0x20] sm:$0xff] %v1337
      %1358 = vst [vmem:[#allocation3 + $0x28] sm:$0xff] %v1339
      %1359 = vst [vmem:[#allocation3 + $0x30] sm:$0xff] %v1342
      %1360 = vst [vmem:[#allocation3 + $0x38] sm:$0xff] %v1344
      %v1361 = vld [vmem:[#allocation3] ss:$2 sm:$0xf]
      %s1362 = scalar_lea.vmem [#allocation3], 16
      %v1363 = vld [vmem:[%s1362] ss:$2 sm:$0xf]
      %s1364 = scalar_lea.vmem [#allocation3], 32
      %v1365 = vld [vmem:[%s1364] ss:$2 sm:$0xf]
      %s1366 = scalar_lea.vmem [#allocation3], 48
      %v1367 = vld [vmem:[%s1366] ss:$2 sm:$0xf]
      %v1368 = vpack.c.bf16 %v1361, %v1361
      %v1369 = vpack.c.bf16 %v1363, %v1363
      %v1370 = vpack.c.bf16 %v1365, %v1365
      %v1371 = vpack.c.bf16 %v1367, %v1367
      %1372 = vst [vmem:[%s170] sm:$0x3] %v1368
      %1373 = vst [vmem:[%s170 + $0x2] sm:$0x3] %v1369
      %1374 = vst [vmem:[%s170 + $0x4] sm:$0x3] %v1370
      %1375 = vst [vmem:[%s170 + $0x6] sm:$0x3] %v1371
      %p1376 = scmp.lt.s32.totalorder %s14, 1
      %s1377 = scalar_select %p1376, %s14, 1
      %s1378 = smul.addr %s1377, 4
      %s1379 = smul.addr %s1378, 2
      %s1380 = scalar_lea.vmem %s3, %s1379
      // Predicated region
      $region33: #{_lambda_.13} parent=31 // pred_check
        %p1381 = pneg %p100
      $region34: #{_lambda_.13} parent=31 // pred_check_branch
        %1383 = sbr.rel (%p1381) target = $region36
      $region35: #{_lambda_.13} parent=31 // pred_region
        _
      $region36: #{_lambda_.13} parent=31 // pred_fallthru
        _
    $region32: #{_lambda_.13} parent=5 // pred_fallthru
      _
    %p1384 = scmp.le.s32.totalorder 2, %s9
    // Predicated region
    $region37: #{_lambda_.13} parent=5 // pred_check
      %p1385 = pneg %p1384
    $region38: #{_lambda_.13} parent=5 // pred_check_branch
      %1387 = sbr.rel (%p1385) target = $region40
    $region39: #{_lambda_.13} parent=5 // pred_region
      %s1388 = ssub.s32 %s9, 2
      // Predicated region
      $region41: #{_lambda_.13} parent=39 // pred_check
        %p1389 = pneg %p106
      $region42: #{_lambda_.13} parent=39 // pred_check_branch
        %1391 = sbr.rel (%p1389) target = $region44
      $region43: #{_lambda_.13} parent=39 // pred_region
        %p1392 = scmp.lt.s32.totalorder %s15, 1
        %s1393 = scalar_select %p1392, %s15, 1
        %s1394 = smul.addr %s1393, 4
        %s1395 = smul.addr %s1394, 2
        %s1396 = scalar_lea.vmem %s3, %s1395
      $region44: #{_lambda_.13} parent=39 // pred_fallthru
        _
    $region40: #{_lambda_.13} parent=5 // pred_fallthru
      _
  $region6: #{_lambda_.13} parent=0 // loop_footer
    %s13 = sadd.s32 1, %s9
  $region7: #{_lambda_.13} parent=0 // loop_footer_branch
    %8 = sbr.rel target = $region3
  $region8: #{_lambda_.13} parent=0 // loop_exit
    _

// kernel: _lambda_.15
$region0: #{_lambda_.15}
  #allocation0 [shape = 'u32[]', space=smem, size = 0x4, offset = 0x4, fixed_abs, tag = 'smem constant byte address 0x4 - core index']
  #allocation1 [shape = 'u32[144,128]{1,0:T(1,128)}', space=vmem, size = 0x12000, scoped, tag = 'internal scratch']
  #allocation2 [shape = 'bf16[8,16,128]{2,1,0:T(16,128)(2,1)}', space=vmem, size = 0x8000, scoped, tag = 'scratch operand']
  #allocation3 [shape = 'f32[2,16,128]{2,1,0:T(8,128)}', space=vmem, size = 0x4000, scoped, tag = 'scratch operand']
  %s0 = inlined_call_operand.vmem [shape: bf16[2,4,4,128], index: 0, kind: input, shape index: {}]
  %s1 = inlined_call_operand.vmem [shape: bf16[2,2,2,128], index: 1, kind: output, shape index: {}]
  %s2 = sld [smem:[#allocation0]]
  $region37: #{_lambda_.15} parent=0
    _
  %s4 = ssub.s32 1, %s2
  %s5 = scalar_select 0, %s4, %s2
  loop: start=0, step=1, limit=4
  $region2: #{_lambda_.15} parent=0 // loop_pre_header
    _
  $region3: #{_lambda_.15} parent=0 // loop_header
    %s7 = sphi 0, %s11
    %p8 = scmp.ge.s32.totalorder %s7, 4
    %s17 = sphi 0, %s19
    %s20 = sphi 0, %s17
    %s21 = sphi 0, %s20
    %s37 = sphi 0, %s21
    %s43 = sphi 0, %s45
    %s46 = sphi 0, %s43
    %s47 = sphi 0, %s46
    %s63 = sphi 0, %s47
  $region4: #{_lambda_.15} parent=0 // loop_header_branch
    %10 = sbr.rel (%p8) target = $region8
  $region5: #{_lambda_.15} parent=0 // loop_body
    %s12 = ssub.s32 %s7, 1
    %s13 = ssub.s32 %s7, 2
    %s14 = sadd.s32 %s7, 1
    %s15 = ssub.s32 %s7, %s14
    %p16 = scmp.eq.s32.totalorder %s15, 0
    %s18 = sadd.s32 %s17, 1
    %s19 = scalar_select %p16, %s17, %s18
    %p22 = pneg %p16
    %p23 = scmp.eq.s32.totalorder %s7, 1
    %p24 = por %p22, %p23
    %p25 = scmp.ne.s32.totalorder %s17, %s20
    %p26 = scmp.eq.s32.totalorder %s7, 0
    %p27 = por %p25, %p26
    %p28 = scmp.ne.s32.totalorder %s17, %s20
    %p29 = scmp.eq.s32.totalorder %s12, 1
    %p30 = por %p28, %p29
    %p31 = scmp.ne.s32.totalorder %s20, %s21
    %p32 = scmp.eq.s32.totalorder %s12, 0
    %p33 = por %p31, %p32
    %p34 = scmp.ne.s32.totalorder %s20, %s21
    %p35 = scmp.eq.s32.totalorder %s13, 1
    %p36 = por %p34, %p35
    %p38 = scmp.ne.s32.totalorder %s21, %s37
    %p39 = scmp.eq.s32.totalorder %s13, 0
    %p40 = por %p38, %p39
    %s41 = ssub.s32 %s7, %s14
    %p42 = scmp.eq.s32.totalorder %s41, 0
    %s44 = sadd.s32 %s43, 1
    %s45 = scalar_select %p42, %s43, %s44
    %p48 = pneg %p42
    %p49 = scmp.eq.s32.totalorder %s7, 1
    %p50 = por %p48, %p49
    %p51 = scmp.ne.s32.totalorder %s43, %s46
    %p52 = scmp.eq.s32.totalorder %s7, 0
    %p53 = por %p51, %p52
    %p54 = scmp.ne.s32.totalorder %s43, %s46
    %p55 = scmp.eq.s32.totalorder %s12, 1
    %p56 = por %p54, %p55
    %p57 = scmp.ne.s32.totalorder %s46, %s47
    %p58 = scmp.eq.s32.totalorder %s12, 0
    %p59 = por %p57, %p58
    %p60 = scmp.ne.s32.totalorder %s46, %s47
    %p61 = scmp.eq.s32.totalorder %s13, 1
    %p62 = por %p60, %p61
    %p64 = scmp.ne.s32.totalorder %s47, %s63
    %p65 = scmp.eq.s32.totalorder %s13, 0
    %p66 = por %p64, %p65
    %p67 = scmp.le.s32.totalorder 1, %s7
    %p68 = scmp.lt.s32.totalorder %s7, 3
    %p69 = pnand %p67, %p68
    %p70 = pneg %p69
    // Predicated region
    $region9: #{_lambda_.15} parent=5 // pred_check
      _
    $region10: #{_lambda_.15} parent=5 // pred_check_branch
      %72 = sbr.rel (%p69) target = $region12
    $region11: #{_lambda_.15} parent=5 // pred_region
      %s73 = ssub.s32 %s7, 1
    $region12: #{_lambda_.15} parent=5 // pred_fallthru
      _
    %p74 = scmp.lt.s32.totalorder %s7, 2
    // Predicated region
    $region13: #{_lambda_.15} parent=5 // pred_check
      %p75 = pneg %p74
    $region14: #{_lambda_.15} parent=5 // pred_check_branch
      %77 = sbr.rel (%p75) target = $region16
    $region15: #{_lambda_.15} parent=5 // pred_region
      // Predicated region
      $region17: #{_lambda_.15} parent=15 // pred_check
        %p78 = pneg %p27
      $region18: #{_lambda_.15} parent=15 // pred_check_branch
        %80 = sbr.rel (%p78) target = $region20
      $region19: #{_lambda_.15} parent=15 // pred_region
        %p81 = scmp.lt.s32.totalorder %s7, 1
        %s82 = scalar_select %p81, %s7, 1
        %s83 = smul.addr %s82, 4
        %s84 = smul.addr %s83, 2
        %s85 = scalar_lea.vmem %s0, %s84
      $region20: #{_lambda_.15} parent=15 // pred_fallthru
        _
    $region16: #{_lambda_.15} parent=5 // pred_fallthru
      _
    %p86 = scmp.le.s32.totalorder 1, %s7
    %p87 = scmp.lt.s32.totalorder %s7, 3
    %p88 = pnand %p86, %p87
    %p89 = pneg %p88
    // Predicated region
    $region21: #{_lambda_.15} parent=5 // pred_check
      _
    $region22: #{_lambda_.15} parent=5 // pred_check_branch
      %91 = sbr.rel (%p88) target = $region24
    $region23: #{_lambda_.15} parent=5 // pred_region
      %s92 = ssub.s32 %s7, 1
      %p93 = scmp.lt.s32.totalorder %s12, 1
      %s94 = scalar_select %p93, %s12, 1
      %s95 = smul.addr %s94, 4
      %s96 = smul.addr %s95, 2
      %s97 = scalar_lea.vmem %s0, %s96
      %p98 = pneg %p33
      %p99 = pneg %p30
      %p100 = pneg %p59
      %p101 = pneg %p56
      %p102 = scmp.lt.s32.totalorder %s12, 1
      %s103 = scalar_select %p102, %s12, 1
      %s104 = smul.addr %s103, 2
      %s105 = scalar_lea.vmem %s1, %s104
      %p106 = scmp.lt.s32.totalorder %s12, 1
      %s107 = scalar_select %p106, %s12, 1
      %s108 = smul.addr %s107, 4
      %s109 = smul.addr %s108, 2
      %s110 = scalar_lea.vmem %s0, %s109
      %p111 = scmp.lt.s32.totalorder %s12, 1
      %s112 = scalar_select %p111, %s12, 1
      %s113 = smul.addr %s112, 2
      %s114 = scalar_lea.vmem %s1, %s113
      %116 = vst [vmem:[#allocation2] sm:$0xff] 0
      %117 = vst [vmem:[#allocation2 + $0x8] sm:$0xff] 0
      %118 = vst [vmem:[#allocation2 + $0x10] sm:$0xff] 0
      %119 = vst [vmem:[#allocation2 + $0x18] sm:$0xff] 0
      %120 = vst [vmem:[#allocation2 + $0x20] sm:$0xff] 0
      %121 = vst [vmem:[#allocation2 + $0x28] sm:$0xff] 0
      %122 = vst [vmem:[#allocation2 + $0x30] sm:$0xff] 0
      %123 = vst [vmem:[#allocation2 + $0x38] sm:$0xff] 0
      %v124 = vld [vmem:[%s110] sm:$0x3]
      %v125 = vld [vmem:[%s110 + $0x2] sm:$0x3]
      %v126 = vld [vmem:[%s110 + $0x4] sm:$0x3]
      %v127 = vld [vmem:[%s110 + $0x6] sm:$0x3]
      %s128 = scalar_lea.vmem [#allocation2], 16
      %129 = vst [vmem:[%s128] sm:$0x3] %v124
      %130 = vst [vmem:[%s128 + $0x8] sm:$0x3] %v125
      %131 = vst [vmem:[%s128 + $0x10] sm:$0x3] %v126
      %132 = vst [vmem:[%s128 + $0x18] sm:$0x3] %v127
      %v133 = vld [vmem:[#allocation2] sm:$0xff]
      %v134 = vld [vmem:[#allocation2 + $0x8] sm:$0xff]
      %v135 = vld [vmem:[#allocation2 + $0x10] sm:$0xff]
      %v136 = vld [vmem:[#allocation2 + $0x18] sm:$0xff]
      %v137 = vld [vmem:[#allocation2 + $0x20] sm:$0xff]
      %v138 = vld [vmem:[#allocation2 + $0x28] sm:$0xff]
      %v139 = vld [vmem:[#allocation2 + $0x30] sm:$0xff]
      %v140 = vunpack.c.h.bf16 %v133
      %v141 = vunpack.c.l.bf16 %v134
      %v142 = vunpack.c.h.bf16 %v134
      %v143 = vunpack.c.l.bf16 %v135
      %v144 = vunpack.c.h.bf16 %v135
      %v145 = vunpack.c.l.bf16 %v136
      %v146 = vunpack.c.h.bf16 %v136
      %v147 = vunpack.c.l.bf16 %v137
      %v148 = vunpack.c.h.bf16 %v137
      %v149 = vunpack.c.l.bf16 %v138
      %v150 = vadd.f32 %v140, %v142
      %v151 = vadd.f32 %v141, %v143
      %v152 = vadd.f32 %v142, %v144
      %v153 = vadd.f32 %v143, %v145
      %v154 = vadd.f32 %v144, %v146
      %v155 = vadd.f32 %v145, %v147
      %v156 = vadd.f32 %v146, %v148
      %v157 = vadd.f32 %v147, %v149
      %v158 = vunpack.c.h.bf16 %v138
      %v159 = vunpack.c.l.bf16 %v139
      %v160 = vadd.f32 %v150, %v144
      %v161 = vadd.f32 %v151, %v145
      %v162 = vadd.f32 %v152, %v146
      %v163 = vadd.f32 %v153, %v147
      %v164 = vadd.f32 %v154, %v148
      %v165 = vadd.f32 %v155, %v149
      %v166 = vadd.f32 %v156, %v158
      %v167 = vadd.f32 %v157, %v159
      %vm175 = vcmask 1046528
      %v176 = vrot.slane %v161, 1
      %v177 = vrot.slane %v162, 1
      %v178 = vsel %vm175, %v176, %v177
      %v179 = vrot.slane %v163, 1
      %v180 = vsel %vm175, %v177, %v179
      %v181 = vrot.slane %v164, 1
      %v182 = vrot.slane %v165, 1
      %v183 = vsel %vm175, %v181, %v182
      %v184 = vrot.slane %v166, 1
      %v185 = vsel %vm175, %v182, %v184
      %v186 = vrot.slane %v167, 1
      %v187 = vsel %vm175, %v184, %v186
      %v194 = vadd.f32 %v160, %v176
      %v195 = vadd.f32 %v161, %v178
      %v196 = vadd.f32 %v162, %v180
      %v197 = vadd.f32 %v164, %v183
      %v198 = vadd.f32 %v165, %v185
      %v199 = vadd.f32 %v166, %v187
      %vm200 = vcmask 1045504
      %v201 = vrot.slane %v161, 2
      %v202 = vrot.slane %v162, 2
      %v203 = vsel %vm200, %v201, %v202
      %v204 = vrot.slane %v163, 2
      %v205 = vsel %vm200, %v202, %v204
      %v206 = vrot.slane %v164, 2
      %v207 = vrot.slane %v165, 2
      %v208 = vsel %vm200, %v206, %v207
      %v209 = vrot.slane %v166, 2
      %v210 = vsel %vm200, %v207, %v209
      %v211 = vrot.slane %v167, 2
      %v212 = vsel %vm200, %v209, %v211
      %v219 = vadd.f32 %v194, %v201
      %v220 = vadd.f32 %v195, %v203
      %v221 = vadd.f32 %v196, %v205
      %v222 = vadd.f32 %v197, %v208
      %v223 = vadd.f32 %v198, %v210
      %v224 = vadd.f32 %v199, %v212
      %v225 = vmul.f32 %v219, 0.11111111
      %v226 = vmul.f32 %v220, 0.11111111
      %v227 = vmul.f32 %v221, 0.11111111
      %v228 = vmul.f32 %v222, 0.11111111
      %v229 = vmul.f32 %v223, 0.11111111
      %v230 = vmul.f32 %v224, 0.11111111
      %vm237 = vcmask 1040384
      %v238 = vrot.slane %v225, 7
      %v239 = vrot.slane %v226, 7
      %v240 = vsel %vm237, %v238, %v239
      %v241 = vrot.slane %v227, 7
      %v242 = vsel %vm237, %v239, %v241
      %v243 = vrot.slane %v228, 7
      %v244 = vrot.slane %v229, 7
      %v245 = vsel %vm237, %v243, %v244
      %v246 = vrot.slane %v230, 7
      %v247 = vsel %vm237, %v244, %v246
      %252 = vst [vmem:[#allocation3] sm:$0xff] %v240
      %253 = vst [vmem:[#allocation3 + $0x8] sm:$0xff] %v242
      %254 = vst [vmem:[#allocation3 + $0x10] sm:$0xff] %v245
      %255 = vst [vmem:[#allocation3 + $0x18] sm:$0xff] %v247
      %v256 = vld [vmem:[#allocation3] ss:$2 sm:$0x3]
      %s257 = scalar_lea.vmem [#allocation3], 16
      %v258 = vld [vmem:[%s257] ss:$2 sm:$0x3]
      %v259 = vpack.c.bf16 %v256, %v256
      %v260 = vpack.c.bf16 %v258, %v258
      %261 = vst [vmem:[%s114] sm:$0x1] %v259
      %262 = vst [vmem:[%s114 + $0x1] sm:$0x1] %v260
      %p263 = scmp.lt.s32.totalorder %s12, 1
      %s264 = scalar_select %p263, %s12, 1
      %s265 = smul.addr %s264, 2
      %s266 = scalar_lea.vmem %s1, %s265
      // Predicated region
      $region25: #{_lambda_.15} parent=23 // pred_check
        %p267 = pneg %p56
      $region26: #{_lambda_.15} parent=23 // pred_check_branch
        %269 = sbr.rel (%p267) target = $region28
      $region27: #{_lambda_.15} parent=23 // pred_region
        _
      $region28: #{_lambda_.15} parent=23 // pred_fallthru
        _
    $region24: #{_lambda_.15} parent=5 // pred_fallthru
      _
    %p270 = scmp.le.s32.totalorder 2, %s7
    // Predicated region
    $region29: #{_lambda_.15} parent=5 // pred_check
      %p271 = pneg %p270
    $region30: #{_lambda_.15} parent=5 // pred_check_branch
      %273 = sbr.rel (%p271) target = $region32
    $region31: #{_lambda_.15} parent=5 // pred_region
      %s274 = ssub.s32 %s7, 2
      // Predicated region
      $region33: #{_lambda_.15} parent=31 // pred_check
        %p275 = pneg %p62
      $region34: #{_lambda_.15} parent=31 // pred_check_branch
        %277 = sbr.rel (%p275) target = $region36
      $region35: #{_lambda_.15} parent=31 // pred_region
        %p278 = scmp.lt.s32.totalorder %s13, 1
        %s279 = scalar_select %p278, %s13, 1
        %s280 = smul.addr %s279, 2
        %s281 = scalar_lea.vmem %s1, %s280
      $region36: #{_lambda_.15} parent=31 // pred_fallthru
        _
    $region32: #{_lambda_.15} parent=5 // pred_fallthru
      _
  $region6: #{_lambda_.15} parent=0 // loop_footer
    %s11 = sadd.s32 1, %s7
  $region7: #{_lambda_.15} parent=0 // loop_footer_branch
    %6 = sbr.rel target = $region3
  $region8: #{_lambda_.15} parent=0 // loop_exit
    _

// kernel: _lambda_.12
$region0: #{_lambda_.12}
  #allocation0 [shape = 'u32[]', space=smem, size = 0x4, offset = 0x4, fixed_abs, tag = 'smem constant byte address 0x4 - core index']
  #allocation1 [shape = 'u32[144,128]{1,0:T(1,128)}', space=vmem, size = 0x12000, scoped, tag = 'internal scratch']
  #allocation2 [shape = 'bf16[20,32,128]{2,1,0:T(16,128)(2,1)}', space=vmem, size = 0x28000, scoped, tag = 'scratch operand']
  #allocation3 [shape = 'f32[8,32,128]{2,1,0:T(8,128)}', space=vmem, size = 0x20000, scoped, tag = 'scratch operand']
  %s0 = inlined_call_operand.vmem [shape: bf16[2,16,16,128], index: 0, kind: input, shape index: {}]
  %s1 = inlined_call_operand.vmem [shape: bf16[384,384], index: 1, kind: input, shape index: {}]
  %s2 = inlined_call_operand.vmem [shape: f32[1,128], index: 2, kind: input, shape index: {}]
  %s3 = inlined_call_operand.vmem [shape: bf16[2,8,8,128], index: 3, kind: output, shape index: {}]
  %s4 = sld [smem:[#allocation0]]
  $region45: #{_lambda_.12} parent=0
    _
  %s6 = ssub.s32 1, %s4
  %s7 = scalar_select 0, %s6, %s4
  loop: start=0, step=1, limit=4
  $region2: #{_lambda_.12} parent=0 // loop_pre_header
    _
  $region3: #{_lambda_.12} parent=0 // loop_header
    %s9 = sphi 0, %s13
    %p10 = scmp.ge.s32.totalorder %s9, 4
    %s19 = sphi 0, %s21
    %s22 = sphi 0, %s19
    %s23 = sphi 0, %s22
    %s39 = sphi 0, %s23
    %s43 = sphi 0, %s43
    %s45 = sphi 0, %s43
    %s46 = sphi 0, %s45
    %s60 = sphi 0, %s46
    %s64 = sphi 0, %s64
    %s66 = sphi 0, %s64
    %s67 = sphi 0, %s66
    %s81 = sphi 0, %s67
    %s87 = sphi 0, %s89
    %s90 = sphi 0, %s87
    %s91 = sphi 0, %s90
    %s107 = sphi 0, %s91
  $region4: #{_lambda_.12} parent=0 // loop_header_branch
    %12 = sbr.rel (%p10) target = $region8
  $region5: #{_lambda_.12} parent=0 // loop_body
    %s14 = ssub.s32 %s9, 1
    %s15 = ssub.s32 %s9, 2
    %s16 = sadd.s32 %s9, 1
    %s17 = ssub.s32 %s9, %s16
    %p18 = scmp.eq.s32.totalorder %s17, 0
    %s20 = sadd.s32 %s19, 1
    %s21 = scalar_select %p18, %s19, %s20
    %p24 = pneg %p18
    %p25 = scmp.eq.s32.totalorder %s9, 1
    %p26 = por %p24, %p25
    %p27 = scmp.ne.s32.totalorder %s19, %s22
    %p28 = scmp.eq.s32.totalorder %s9, 0
    %p29 = por %p27, %p28
    %p30 = scmp.ne.s32.totalorder %s19, %s22
    %p31 = scmp.eq.s32.totalorder %s14, 1
    %p32 = por %p30, %p31
    %p33 = scmp.ne.s32.totalorder %s22, %s23
    %p34 = scmp.eq.s32.totalorder %s14, 0
    %p35 = por %p33, %p34
    %p36 = scmp.ne.s32.totalorder %s22, %s23
    %p37 = scmp.eq.s32.totalorder %s15, 1
    %p38 = por %p36, %p37
    %p40 = scmp.ne.s32.totalorder %s23, %s39
    %p41 = scmp.eq.s32.totalorder %s15, 0
    %p42 = por %p40, %p41
    %s44 = sadd.s32 %s43, 1
    %p47 = scmp.eq.s32.totalorder %s9, 1
    %p48 = scmp.ne.s32.totalorder %s43, %s45
    %p49 = scmp.eq.s32.totalorder %s9, 0
    %p50 = por %p48, %p49
    %p51 = scmp.ne.s32.totalorder %s43, %s45
    %p52 = scmp.eq.s32.totalorder %s14, 1
    %p53 = por %p51, %p52
    %p54 = scmp.ne.s32.totalorder %s45, %s46
    %p55 = scmp.eq.s32.totalorder %s14, 0
    %p56 = por %p54, %p55
    %p57 = scmp.ne.s32.totalorder %s45, %s46
    %p58 = scmp.eq.s32.totalorder %s15, 1
    %p59 = por %p57, %p58
    %p61 = scmp.ne.s32.totalorder %s46, %s60
    %p62 = scmp.eq.s32.totalorder %s15, 0
    %p63 = por %p61, %p62
    %s65 = sadd.s32 %s64, 1
    %p68 = scmp.eq.s32.totalorder %s9, 1
    %p69 = scmp.ne.s32.totalorder %s64, %s66
    %p70 = scmp.eq.s32.totalorder %s9, 0
    %p71 = por %p69, %p70
    %p72 = scmp.ne.s32.totalorder %s64, %s66
    %p73 = scmp.eq.s32.totalorder %s14, 1
    %p74 = por %p72, %p73
    %p75 = scmp.ne.s32.totalorder %s66, %s67
    %p76 = scmp.eq.s32.totalorder %s14, 0
    %p77 = por %p75, %p76
    %p78 = scmp.ne.s32.totalorder %s66, %s67
    %p79 = scmp.eq.s32.totalorder %s15, 1
    %p80 = por %p78, %p79
    %p82 = scmp.ne.s32.totalorder %s67, %s81
    %p83 = scmp.eq.s32.totalorder %s15, 0
    %p84 = por %p82, %p83
    %s85 = ssub.s32 %s9, %s16
    %p86 = scmp.eq.s32.totalorder %s85, 0
    %s88 = sadd.s32 %s87, 1
    %s89 = scalar_select %p86, %s87, %s88
    %p92 = pneg %p86
    %p93 = scmp.eq.s32.totalorder %s9, 1
    %p94 = por %p92, %p93
    %p95 = scmp.ne.s32.totalorder %s87, %s90
    %p96 = scmp.eq.s32.totalorder %s9, 0
    %p97 = por %p95, %p96
    %p98 = scmp.ne.s32.totalorder %s87, %s90
    %p99 = scmp.eq.s32.totalorder %s14, 1
    %p100 = por %p98, %p99
    %p101 = scmp.ne.s32.totalorder %s90, %s91
    %p102 = scmp.eq.s32.totalorder %s14, 0
    %p103 = por %p101, %p102
    %p104 = scmp.ne.s32.totalorder %s90, %s91
    %p105 = scmp.eq.s32.totalorder %s15, 1
    %p106 = por %p104, %p105
    %p108 = scmp.ne.s32.totalorder %s91, %s107
    %p109 = scmp.eq.s32.totalorder %s15, 0
    %p110 = por %p108, %p109
    %p111 = scmp.le.s32.totalorder 1, %s9
    %p112 = scmp.lt.s32.totalorder %s9, 3
    %p113 = pnand %p111, %p112
    %p114 = pneg %p113
    // Predicated region
    $region9: #{_lambda_.12} parent=5 // pred_check
      _
    $region10: #{_lambda_.12} parent=5 // pred_check_branch
      %116 = sbr.rel (%p113) target = $region12
    $region11: #{_lambda_.12} parent=5 // pred_region
      %s117 = ssub.s32 %s9, 1
      // Predicated region
      $region13: #{_lambda_.12} parent=11 // pred_check
        %p118 = pneg %p56
      $region14: #{_lambda_.12} parent=11 // pred_check_branch
        %120 = sbr.rel (%p118) target = $region16
      $region15: #{_lambda_.12} parent=11 // pred_region
        _
      $region16: #{_lambda_.12} parent=11 // pred_fallthru
        _
      // Predicated region
      $region17: #{_lambda_.12} parent=11 // pred_check
        %p121 = pneg %p77
      $region18: #{_lambda_.12} parent=11 // pred_check_branch
        %123 = sbr.rel (%p121) target = $region20
      $region19: #{_lambda_.12} parent=11 // pred_region
        _
      $region20: #{_lambda_.12} parent=11 // pred_fallthru
        _
    $region12: #{_lambda_.12} parent=5 // pred_fallthru
      _
    %p124 = scmp.lt.s32.totalorder %s9, 2
    // Predicated region
    $region21: #{_lambda_.12} parent=5 // pred_check
      %p125 = pneg %p124
    $region22: #{_lambda_.12} parent=5 // pred_check_branch
      %127 = sbr.rel (%p125) target = $region24
    $region23: #{_lambda_.12} parent=5 // pred_region
      // Predicated region
      $region25: #{_lambda_.12} parent=23 // pred_check
        %p128 = pneg %p29
      $region26: #{_lambda_.12} parent=23 // pred_check_branch
        %130 = sbr.rel (%p128) target = $region28
      $region27: #{_lambda_.12} parent=23 // pred_region
        %p131 = scmp.lt.s32.totalorder %s9, 1
        %s132 = scalar_select %p131, %s9, 1
        %s133 = smul.addr %s132, 32
        %s134 = smul.addr %s133, 4
        %s135 = scalar_lea.vmem %s0, %s134
      $region28: #{_lambda_.12} parent=23 // pred_fallthru
        _
    $region24: #{_lambda_.12} parent=5 // pred_fallthru
      _
    %p136 = scmp.le.s32.totalorder 1, %s9
    %p137 = scmp.lt.s32.totalorder %s9, 3
    %p138 = pnand %p136, %p137
    %p139 = pneg %p138
    // Predicated region
    $region29: #{_lambda_.12} parent=5 // pred_check
      _
    $region30: #{_lambda_.12} parent=5 // pred_check_branch
      %141 = sbr.rel (%p138) target = $region32
    $region31: #{_lambda_.12} parent=5 // pred_region
      %s142 = ssub.s32 %s9, 1
      %p143 = scmp.lt.s32.totalorder %s14, 1
      %s144 = scalar_select %p143, %s14, 1
      %s145 = smul.addr %s144, 32
      %s146 = smul.addr %s145, 4
      %s147 = scalar_lea.vmem %s0, %s146
      %p148 = pneg %p35
      %p149 = pneg %p32
      %p150 = pneg %p56
      %p151 = pneg %p53
      %p152 = pneg %p77
      %p153 = pneg %p74
      %p154 = pneg %p103
      %p155 = pneg %p100
      %p156 = scmp.lt.s32.totalorder %s14, 1
      %s157 = scalar_select %p156, %s14, 1
      %s158 = smul.addr %s157, 8
      %s159 = smul.addr %s158, 4
      %s160 = scalar_lea.vmem %s3, %s159
      %p161 = scmp.lt.s32.totalorder %s14, 1
      %s162 = scalar_select %p161, %s14, 1
      %s163 = smul.addr %s162, 32
      %s164 = smul.addr %s163, 4
      %s165 = scalar_lea.vmem %s0, %s164
      %p166 = scmp.lt.s32.totalorder %s14, 1
      %s167 = scalar_select %p166, %s14, 1
      %s168 = smul.addr %s167, 8
      %s169 = smul.addr %s168, 4
      %s170 = scalar_lea.vmem %s3, %s169
      %172 = vst [vmem:[#allocation2] sm:$0xff] 0
      %173 = vst [vmem:[#allocation2 + $0x8] sm:$0xff] 0
      %174 = vst [vmem:[#allocation2 + $0x10] sm:$0xff] 0
      %175 = vst [vmem:[#allocation2 + $0x18] sm:$0xff] 0
      %176 = vst [vmem:[#allocation2 + $0x20] sm:$0xff] 0
      %177 = vst [vmem:[#allocation2 + $0x28] sm:$0xff] 0
      %178 = vst [vmem:[#allocation2 + $0x30] sm:$0xff] 0
      %179 = vst [vmem:[#allocation2 + $0x38] sm:$0xff] 0
      %180 = vst [vmem:[#allocation2 + $0x40] sm:$0xff] 0
      %181 = vst [vmem:[#allocation2 + $0x48] sm:$0xff] 0
      %182 = vst [vmem:[#allocation2 + $0x50] sm:$0xff] 0
      %183 = vst [vmem:[#allocation2 + $0x58] sm:$0xff] 0
      %184 = vst [vmem:[#allocation2 + $0x60] sm:$0xff] 0
      %185 = vst [vmem:[#allocation2 + $0x68] sm:$0xff] 0
      %186 = vst [vmem:[#allocation2 + $0x70] sm:$0xff] 0
      %187 = vst [vmem:[#allocation2 + $0x78] sm:$0xff] 0
      %188 = vst [vmem:[#allocation2 + $0x80] sm:$0xff] 0
      %189 = vst [vmem:[#allocation2 + $0x88] sm:$0xff] 0
      %190 = vst [vmem:[#allocation2 + $0x90] sm:$0xff] 0
      %191 = vst [vmem:[#allocation2 + $0x98] sm:$0xff] 0
      %192 = vst [vmem:[#allocation2 + $0xa0] sm:$0xff] 0
      %193 = vst [vmem:[#allocation2 + $0xa8] sm:$0xff] 0
      %194 = vst [vmem:[#allocation2 + $0xb0] sm:$0xff] 0
      %195 = vst [vmem:[#allocation2 + $0xb8] sm:$0xff] 0
      %196 = vst [vmem:[#allocation2 + $0xc0] sm:$0xff] 0
      %197 = vst [vmem:[#allocation2 + $0xc8] sm:$0xff] 0
      %198 = vst [vmem:[#allocation2 + $0xd0] sm:$0xff] 0
      %199 = vst [vmem:[#allocation2 + $0xd8] sm:$0xff] 0
      %200 = vst [vmem:[#allocation2 + $0xe0] sm:$0xff] 0
      %201 = vst [vmem:[#allocation2 + $0xe8] sm:$0xff] 0
      %202 = vst [vmem:[#allocation2 + $0xf0] sm:$0xff] 0
      %203 = vst [vmem:[#allocation2 + $0xf8] sm:$0xff] 0
      %204 = vst [vmem:[#allocation2 + $0x100] sm:$0xff] 0
      %205 = vst [vmem:[#allocation2 + $0x108] sm:$0xff] 0
      %206 = vst [vmem:[#allocation2 + $0x110] sm:$0xff] 0
      %207 = vst [vmem:[#allocation2 + $0x118] sm:$0xff] 0
      %208 = vst [vmem:[#allocation2 + $0x120] sm:$0xff] 0
      %209 = vst [vmem:[#allocation2 + $0x128] sm:$0xff] 0
      %210 = vst [vmem:[#allocation2 + $0x130] sm:$0xff] 0
      %211 = vst [vmem:[#allocation2 + $0x138] sm:$0xff] 0
      %v212 = vld [vmem:[%s165] sm:$0xf]
      %v213 = vld [vmem:[%s165 + $0x4] sm:$0xf]
      %v214 = vld [vmem:[%s165 + $0x8] sm:$0xf]
      %v215 = vld [vmem:[%s165 + $0xc] sm:$0xf]
      %v216 = vld [vmem:[%s165 + $0x10] sm:$0xf]
      %v217 = vld [vmem:[%s165 + $0x14] sm:$0xf]
      %v218 = vld [vmem:[%s165 + $0x18] sm:$0xf]
      %v219 = vld [vmem:[%s165 + $0x1c] sm:$0xf]
      %v220 = vld [vmem:[%s165 + $0x20] sm:$0xf]
      %v221 = vld [vmem:[%s165 + $0x24] sm:$0xf]
      %v222 = vld [vmem:[%s165 + $0x28] sm:$0xf]
      %v223 = vld [vmem:[%s165 + $0x2c] sm:$0xf]
      %v224 = vld [vmem:[%s165 + $0x30] sm:$0xf]
      %v225 = vld [vmem:[%s165 + $0x34] sm:$0xf]
      %v226 = vld [vmem:[%s165 + $0x38] sm:$0xf]
      %v227 = vld [vmem:[%s165 + $0x3c] sm:$0xf]
      %v228 = vld [vmem:[%s165 + $0x40] sm:$0xf]
      %v229 = vld [vmem:[%s165 + $0x44] sm:$0xf]
      %v230 = vld [vmem:[%s165 + $0x48] sm:$0xf]
      %v231 = vld [vmem:[%s165 + $0x4c] sm:$0xf]
      %v232 = vld [vmem:[%s165 + $0x50] sm:$0xf]
      %v233 = vld [vmem:[%s165 + $0x54] sm:$0xf]
      %v234 = vld [vmem:[%s165 + $0x58] sm:$0xf]
      %v235 = vld [vmem:[%s165 + $0x5c] sm:$0xf]
      %v236 = vld [vmem:[%s165 + $0x60] sm:$0xf]
      %v237 = vld [vmem:[%s165 + $0x64] sm:$0xf]
      %v238 = vld [vmem:[%s165 + $0x68] sm:$0xf]
      %v239 = vld [vmem:[%s165 + $0x6c] sm:$0xf]
      %v240 = vld [vmem:[%s165 + $0x70] sm:$0xf]
      %v241 = vld [vmem:[%s165 + $0x74] sm:$0xf]
      %v242 = vld [vmem:[%s165 + $0x78] sm:$0xf]
      %v243 = vld [vmem:[%s165 + $0x7c] sm:$0xf]
      %v276 = vunpack.c.l.b16 %v212
      %v277 = vunpack.c.l.b16 %v213
      %v278 = vunpack.c.l.b16 %v214
      %v279 = vunpack.c.l.b16 %v215
      %v280 = vunpack.c.l.b16 %v216
      %v281 = vunpack.c.l.b16 %v217
      %v282 = vunpack.c.l.b16 %v218
      %v283 = vunpack.c.l.b16 %v219
      %v284 = vunpack.c.l.b16 %v220
      %v285 = vunpack.c.l.b16 %v221
      %v286 = vunpack.c.l.b16 %v222
      %v287 = vunpack.c.l.b16 %v223
      %v288 = vunpack.c.l.b16 %v224
      %v289 = vunpack.c.l.b16 %v225
      %v290 = vunpack.c.l.b16 %v226
      %v291 = vunpack.c.l.b16 %v227
      %v292 = vunpack.c.l.b16 %v228
      %v293 = vunpack.c.l.b16 %v229
      %v294 = vunpack.c.l.b16 %v230
      %v295 = vunpack.c.l.b16 %v231
      %v296 = vunpack.c.l.b16 %v232
      %v297 = vunpack.c.l.b16 %v233
      %v298 = vunpack.c.l.b16 %v234
      %v299 = vunpack.c.l.b16 %v235
      %v300 = vunpack.c.l.b16 %v236
      %v301 = vunpack.c.l.b16 %v237
      %v302 = vunpack.c.l.b16 %v238
      %v303 = vunpack.c.l.b16 %v239
      %v304 = vunpack.c.l.b16 %v240
      %v305 = vunpack.c.l.b16 %v241
      %v306 = vunpack.c.l.b16 %v242
      %v307 = vunpack.c.l.b16 %v243
      %v308 = vpack.c.b16 %v277, %v276
      %v309 = vpack.c.b16 %v279, %v278
      %v310 = vpack.c.b16 %v281, %v280
      %v311 = vpack.c.b16 %v283, %v282
      %v312 = vpack.c.b16 %v285, %v284
      %v313 = vpack.c.b16 %v287, %v286
      %v314 = vpack.c.b16 %v289, %v288
      %v315 = vpack.c.b16 %v291, %v290
      %v316 = vpack.c.b16 %v293, %v292
      %v317 = vpack.c.b16 %v295, %v294
      %v318 = vpack.c.b16 %v297, %v296
      %v319 = vpack.c.b16 %v299, %v298
      %v320 = vpack.c.b16 %v301, %v300
      %v321 = vpack.c.b16 %v303, %v302
      %v322 = vpack.c.b16 %v305, %v304
      %v323 = vpack.c.b16 %v307, %v306
      %s340 = scalar_lea.vmem [#allocation2], 32
      %341 = vst [vmem:[%s340] sm:$0xff] %v308
      %342 = vst [vmem:[%s340 + $0x10] sm:$0xff] %v309
      %343 = vst [vmem:[%s340 + $0x20] sm:$0xff] %v310
      %344 = vst [vmem:[%s340 + $0x30] sm:$0xff] %v311
      %345 = vst [vmem:[%s340 + $0x40] sm:$0xff] %v312
      %346 = vst [vmem:[%s340 + $0x50] sm:$0xff] %v313
      %347 = vst [vmem:[%s340 + $0x60] sm:$0xff] %v314
      %348 = vst [vmem:[%s340 + $0x70] sm:$0xff] %v315
      %349 = vst [vmem:[%s340 + $0x80] sm:$0xff] %v316
      %350 = vst [vmem:[%s340 + $0x90] sm:$0xff] %v317
      %351 = vst [vmem:[%s340 + $0xa0] sm:$0xff] %v318
      %352 = vst [vmem:[%s340 + $0xb0] sm:$0xff] %v319
      %353 = vst [vmem:[%s340 + $0xc0] sm:$0xff] %v320
      %354 = vst [vmem:[%s340 + $0xd0] sm:$0xff] %v321
      %355 = vst [vmem:[%s340 + $0xe0] sm:$0xff] %v322
      %356 = vst [vmem:[%s340 + $0xf0] sm:$0xff] %v323
      %v357 = vld [vmem:[#allocation2] sm:$0xff]
      %v358 = vld [vmem:[#allocation2 + $0x8] sm:$0xff]
      %v359 = vld [vmem:[#allocation2 + $0x10] sm:$0xff]
      %v360 = vld [vmem:[#allocation2 + $0x18] sm:$0xff]
      %v361 = vld [vmem:[#allocation2 + $0x20] sm:$0xff]
      %v362 = vld [vmem:[#allocation2 + $0x28] sm:$0xff]
      %v363 = vld [vmem:[#allocation2 + $0x30] sm:$0xff]
      %v364 = vld [vmem:[#allocation2 + $0x38] sm:$0xff]
      %v365 = vld [vmem:[#allocation2 + $0x40] sm:$0xff]
      %v366 = vld [vmem:[#allocation2 + $0x48] sm:$0xff]
      %v367 = vld [vmem:[#allocation2 + $0x50] sm:$0xff]
      %v368 = vld [vmem:[#allocation2 + $0x58] sm:$0xff]
      %v369 = vld [vmem:[#allocation2 + $0x60] sm:$0xff]
      %v370 = vld [vmem:[#allocation2 + $0x68] sm:$0xff]
      %v371 = vld [vmem:[#allocation2 + $0x70] sm:$0xff]
      %v372 = vld [vmem:[#allocation2 + $0x78] sm:$0xff]
      %v373 = vld [vmem:[#allocation2 + $0x80] sm:$0xff]
      %v374 = vld [vmem:[#allocation2 + $0x88] sm:$0xff]
      %v375 = vld [vmem:[#allocation2 + $0x90] sm:$0xff]
      %v376 = vld [vmem:[#allocation2 + $0x98] sm:$0xff]
      %v377 = vld [vmem:[#allocation2 + $0xa0] sm:$0xff]
      %v378 = vld [vmem:[#allocation2 + $0xa8] sm:$0xff]
      %v379 = vld [vmem:[#allocation2 + $0xb0] sm:$0xff]
      %v380 = vld [vmem:[#allocation2 + $0xb8] sm:$0xff]
      %v381 = vld [vmem:[#allocation2 + $0xc0] sm:$0xff]
      %v382 = vld [vmem:[#allocation2 + $0xc8] sm:$0xff]
      %v383 = vld [vmem:[#allocation2 + $0xd0] sm:$0xff]
      %v384 = vld [vmem:[#allocation2 + $0xd8] sm:$0xff]
      %v385 = vld [vmem:[#allocation2 + $0xe0] sm:$0xff]
      %v386 = vld [vmem:[#allocation2 + $0xe8] sm:$0xff]
      %v387 = vld [vmem:[#allocation2 + $0xf0] sm:$0xff]
      %v388 = vld [vmem:[#allocation2 + $0xf8] sm:$0xff]
      %v389 = vld [vmem:[#allocation2 + $0x100] sm:$0xff]
      %v390 = vld [vmem:[#allocation2 + $0x108] sm:$0xff]
      %v391 = vld [vmem:[#allocation2 + $0x110] sm:$0xff]
      %v392 = vld [vmem:[#allocation2 + $0x118] sm:$0xff]
      %v393 = vld [vmem:[#allocation2 + $0x120] sm:$0xff]
      %v394 = vld [vmem:[#allocation2 + $0x128] sm:$0xff]
      %v395 = vld [vmem:[#allocation2 + $0x130] sm:$0xff]
      %v396 = vld [vmem:[%s1] sm:$0xff]
      %v397 = vld [vmem:[%s1 + $0x8] sm:$0xf]
      %v398 = vld [vmem:[%s1 + $0xc] sm:$0xff]
      %v399 = vld [vmem:[%s1 + $0x14] sm:$0xf]
      %v400 = vld [vmem:[%s1 + $0x18] sm:$0xff]
      %v401 = vld [vmem:[%s1 + $0x20] sm:$0xf]
      %v402 = vld [vmem:[%s1 + $0x24] sm:$0xff]
      %v403 = vld [vmem:[%s1 + $0x2c] sm:$0xf]
      %v404 = vld [vmem:[%s1 + $0x30] sm:$0xff]
      %v405 = vld [vmem:[%s1 + $0x38] sm:$0xf]
      %v406 = vld [vmem:[%s1 + $0x3c] sm:$0xff]
      %v407 = vld [vmem:[%s1 + $0x44] sm:$0xf]
      %v408 = vld [vmem:[%s1 + $0x48] sm:$0xff]
      %v409 = vld [vmem:[%s1 + $0x50] sm:$0xf]
      %v410 = vld [vmem:[%s1 + $0x54] sm:$0xff]
      %v411 = vld [vmem:[%s1 + $0x5c] sm:$0xf]
      %v412 = vld [vmem:[%s1 + $0x60] sm:$0xff]
      %v413 = vld [vmem:[%s1 + $0x68] sm:$0xf]
      %v414 = vld [vmem:[%s1 + $0x6c] sm:$0xff]
      %v415 = vld [vmem:[%s1 + $0x74] sm:$0xf]
      %v416 = vld [vmem:[%s1 + $0x78] sm:$0xff]
      %v417 = vld [vmem:[%s1 + $0x80] sm:$0xf]
      %v418 = vld [vmem:[%s1 + $0x84] sm:$0xff]
      %v419 = vld [vmem:[%s1 + $0x8c] sm:$0xf]
      %v420 = vld [vmem:[%s1 + $0x90] sm:$0xff]
      %v421 = vld [vmem:[%s1 + $0x98] sm:$0xf]
      %v422 = vld [vmem:[%s1 + $0x9c] sm:$0xff]
      %v423 = vld [vmem:[%s1 + $0xa4] sm:$0xf]
      %v424 = vld [vmem:[%s1 + $0xa8] sm:$0xff]
      %v425 = vld [vmem:[%s1 + $0xb0] sm:$0xf]
      %v426 = vld [vmem:[%s1 + $0xb4] sm:$0xff]
      %v427 = vld [vmem:[%s1 + $0xbc] sm:$0xf]
      %v428 = vld [vmem:[%s1 + $0xc0] sm:$0xff]
      %v429 = vld [vmem:[%s1 + $0xc8] sm:$0xf]
      %v430 = vld [vmem:[%s1 + $0xcc] sm:$0xff]
      %v431 = vld [vmem:[%s1 + $0xd4] sm:$0xf]
      %v432 = vld [vmem:[%s1 + $0xd8] sm:$0xff]
      %v433 = vld [vmem:[%s1 + $0xe0] sm:$0xf]
      %v434 = vld [vmem:[%s1 + $0xe4] sm:$0xff]
      %v435 = vld [vmem:[%s1 + $0xec] sm:$0xf]
      %v436 = vld [vmem:[%s1 + $0xf0] sm:$0xff]
      %v437 = vld [vmem:[%s1 + $0xf8] sm:$0xf]
      %v438 = vld [vmem:[%s1 + $0xfc] sm:$0xff]
      %v439 = vld [vmem:[%s1 + $0x104] sm:$0xf]
      %v440 = vld [vmem:[%s1 + $0x108] sm:$0xff]
      %v441 = vld [vmem:[%s1 + $0x110] sm:$0xf]
      %v442 = vld [vmem:[%s1 + $0x114] sm:$0xff]
      %v443 = vld [vmem:[%s1 + $0x11c] sm:$0xf]
      %v444 = vld [vmem:[%s1 + $0x120] sm:$0xff]
      %v445 = vld [vmem:[%s1 + $0x128] sm:$0xf]
      %v446 = vld [vmem:[%s1 + $0x12c] sm:$0xff]
      %v447 = vld [vmem:[%s1 + $0x134] sm:$0xf]
      %v448 = vld [vmem:[%s1 + $0x138] sm:$0xff]
      %v449 = vld [vmem:[%s1 + $0x140] sm:$0xf]
      %v450 = vld [vmem:[%s1 + $0x144] sm:$0xff]
      %v451 = vld [vmem:[%s1 + $0x14c] sm:$0xf]
      %v452 = vld [vmem:[%s1 + $0x150] sm:$0xff]
      %v453 = vld [vmem:[%s1 + $0x158] sm:$0xf]
      %v454 = vld [vmem:[%s1 + $0x15c] sm:$0xff]
      %v455 = vld [vmem:[%s1 + $0x164] sm:$0xf]
      %v456 = vld [vmem:[%s1 + $0x168] sm:$0xff]
      %v457 = vld [vmem:[%s1 + $0x170] sm:$0xf]
      %v458 = vld [vmem:[%s1 + $0x174] sm:$0xff]
      %v459 = vld [vmem:[%s1 + $0x17c] sm:$0xf]
      %v460 = vld [vmem:[%s1 + $0x180] sm:$0xff]
      %v461 = vld [vmem:[%s1 + $0x188] sm:$0xf]
      %v462 = vld [vmem:[%s1 + $0x18c] sm:$0xff]
      %v463 = vld [vmem:[%s1 + $0x194] sm:$0xf]
      %v464 = vld [vmem:[%s1 + $0x198] sm:$0xff]
      %v465 = vld [vmem:[%s1 + $0x1a0] sm:$0xf]
      %v466 = vld [vmem:[%s1 + $0x1a4] sm:$0xff]
      %v467 = vld [vmem:[%s1 + $0x1ac] sm:$0xf]
      %v468 = vld [vmem:[%s1 + $0x1b0] sm:$0xff]
      %v469 = vld [vmem:[%s1 + $0x1b8] sm:$0xf]
      %v470 = vld [vmem:[%s1 + $0x1bc] sm:$0xff]
      %v471 = vld [vmem:[%s1 + $0x1c4] sm:$0xf]
      %v472 = vld [vmem:[%s1 + $0x1c8] sm:$0xff]
      %v473 = vld [vmem:[%s1 + $0x1d0] sm:$0xf]
      %v474 = vld [vmem:[%s1 + $0x1d4] sm:$0xff]
      %v475 = vld [vmem:[%s1 + $0x1dc] sm:$0xf]
      %v476 = vld [vmem:[%s1 + $0x1e0] sm:$0xff]
      %v477 = vld [vmem:[%s1 + $0x1e8] sm:$0xf]
      %v478 = vld [vmem:[%s1 + $0x1ec] sm:$0xff]
      %v479 = vld [vmem:[%s1 + $0x1f4] sm:$0xf]
      %v480 = vld [vmem:[%s1 + $0x1f8] sm:$0xff]
      %v481 = vld [vmem:[%s1 + $0x200] sm:$0xf]
      %v482 = vld [vmem:[%s1 + $0x204] sm:$0xff]
      %v483 = vld [vmem:[%s1 + $0x20c] sm:$0xf]
      %v484 = vld [vmem:[%s1 + $0x210] sm:$0xff]
      %v485 = vld [vmem:[%s1 + $0x218] sm:$0xf]
      %v486 = vld [vmem:[%s1 + $0x21c] sm:$0xff]
      %v487 = vld [vmem:[%s1 + $0x224] sm:$0xf]
      %v488 = vld [vmem:[%s1 + $0x228] sm:$0xff]
      %v489 = vld [vmem:[%s1 + $0x230] sm:$0xf]
      %v490 = vld [vmem:[%s1 + $0x234] sm:$0xff]
      %v491 = vld [vmem:[%s1 + $0x23c] sm:$0xf]
      %v588 = vunpack.c.l.b16 %v396
      %v589 = vunpack.c.h.b16 %v396
      %v590 = vunpack.c.l.b16 %v397
      %v591 = vunpack.c.l.b16 %v398
      %v592 = vunpack.c.h.b16 %v398
      %v593 = vunpack.c.l.b16 %v399
      %v594 = vunpack.c.l.b16 %v400
      %v595 = vunpack.c.h.b16 %v400
      %v596 = vunpack.c.l.b16 %v401
      %v597 = vunpack.c.l.b16 %v402
      %v598 = vunpack.c.h.b16 %v402
      %v599 = vunpack.c.l.b16 %v403
      %v600 = vunpack.c.l.b16 %v404
      %v601 = vunpack.c.h.b16 %v404
      %v602 = vunpack.c.l.b16 %v405
      %v603 = vunpack.c.l.b16 %v406
      %v604 = vunpack.c.h.b16 %v406
      %v605 = vunpack.c.l.b16 %v407
      %v606 = vunpack.c.l.b16 %v408
      %v607 = vunpack.c.h.b16 %v408
      %v608 = vunpack.c.l.b16 %v409
      %v609 = vunpack.c.l.b16 %v410
      %v610 = vunpack.c.h.b16 %v410
      %v611 = vunpack.c.l.b16 %v411
      %v612 = vunpack.c.l.b16 %v412
      %v613 = vunpack.c.h.b16 %v412
      %v614 = vunpack.c.l.b16 %v413
      %v615 = vunpack.c.l.b16 %v414
      %v616 = vunpack.c.h.b16 %v414
      %v617 = vunpack.c.l.b16 %v415
      %v618 = vunpack.c.l.b16 %v416
      %v619 = vunpack.c.h.b16 %v416
      %v620 = vunpack.c.l.b16 %v417
      %v621 = vunpack.c.l.b16 %v418
      %v622 = vunpack.c.h.b16 %v418
      %v623 = vunpack.c.l.b16 %v419
      %v624 = vunpack.c.l.b16 %v420
      %v625 = vunpack.c.h.b16 %v420
      %v626 = vunpack.c.l.b16 %v421
      %v627 = vunpack.c.l.b16 %v422
      %v628 = vunpack.c.h.b16 %v422
      %v629 = vunpack.c.l.b16 %v423
      %v630 = vunpack.c.l.b16 %v424
      %v631 = vunpack.c.h.b16 %v424
      %v632 = vunpack.c.l.b16 %v425
      %v633 = vunpack.c.l.b16 %v426
      %v634 = vunpack.c.h.b16 %v426
      %v635 = vunpack.c.l.b16 %v427
      %v636 = vunpack.c.l.b16 %v428
      %v637 = vunpack.c.h.b16 %v428
      %v638 = vunpack.c.l.b16 %v429
      %v639 = vunpack.c.l.b16 %v430
      %v640 = vunpack.c.h.b16 %v430
      %v641 = vunpack.c.l.b16 %v431
      %v642 = vunpack.c.l.b16 %v432
      %v643 = vunpack.c.h.b16 %v432
      %v644 = vunpack.c.l.b16 %v433
      %v645 = vunpack.c.l.b16 %v434
      %v646 = vunpack.c.h.b16 %v434
      %v647 = vunpack.c.l.b16 %v435
      %v648 = vunpack.c.l.b16 %v436
      %v649 = vunpack.c.h.b16 %v436
      %v650 = vunpack.c.l.b16 %v437
      %v651 = vunpack.c.l.b16 %v438
      %v652 = vunpack.c.h.b16 %v438
      %v653 = vunpack.c.l.b16 %v439
      %v654 = vunpack.c.l.b16 %v440
      %v655 = vunpack.c.h.b16 %v440
      %v656 = vunpack.c.l.b16 %v441
      %v657 = vunpack.c.l.b16 %v442
      %v658 = vunpack.c.h.b16 %v442
      %v659 = vunpack.c.l.b16 %v443
      %v660 = vunpack.c.l.b16 %v444
      %v661 = vunpack.c.h.b16 %v444
      %v662 = vunpack.c.l.b16 %v445
      %v663 = vunpack.c.l.b16 %v446
      %v664 = vunpack.c.h.b16 %v446
      %v665 = vunpack.c.l.b16 %v447
      %v666 = vunpack.c.l.b16 %v448
      %v667 = vunpack.c.h.b16 %v448
      %v668 = vunpack.c.l.b16 %v449
      %v669 = vunpack.c.l.b16 %v450
      %v670 = vunpack.c.h.b16 %v450
      %v671 = vunpack.c.l.b16 %v451
      %v672 = vunpack.c.l.b16 %v452
      %v673 = vunpack.c.h.b16 %v452
      %v674 = vunpack.c.l.b16 %v453
      %v675 = vunpack.c.l.b16 %v454
      %v676 = vunpack.c.h.b16 %v454
      %v677 = vunpack.c.l.b16 %v455
      %v678 = vunpack.c.l.b16 %v456
      %v679 = vunpack.c.h.b16 %v456
      %v680 = vunpack.c.l.b16 %v457
      %v681 = vunpack.c.l.b16 %v458
      %v682 = vunpack.c.h.b16 %v458
      %v683 = vunpack.c.l.b16 %v459
      %v684 = vunpack.c.l.b16 %v460
      %v685 = vunpack.c.h.b16 %v460
      %v686 = vunpack.c.l.b16 %v461
      %v687 = vunpack.c.l.b16 %v462
      %v688 = vunpack.c.h.b16 %v462
      %v689 = vunpack.c.l.b16 %v463
      %v690 = vunpack.c.l.b16 %v464
      %v691 = vunpack.c.h.b16 %v464
      %v692 = vunpack.c.l.b16 %v465
      %v693 = vunpack.c.l.b16 %v466
      %v694 = vunpack.c.h.b16 %v466
      %v695 = vunpack.c.l.b16 %v467
      %v696 = vunpack.c.l.b16 %v468
      %v697 = vunpack.c.h.b16 %v468
      %v698 = vunpack.c.l.b16 %v469
      %v699 = vunpack.c.l.b16 %v470
      %v700 = vunpack.c.h.b16 %v470
      %v701 = vunpack.c.l.b16 %v471
      %v702 = vunpack.c.l.b16 %v472
      %v703 = vunpack.c.h.b16 %v472
      %v704 = vunpack.c.l.b16 %v473
      %v705 = vunpack.c.l.b16 %v474
      %v706 = vunpack.c.h.b16 %v474
      %v707 = vunpack.c.l.b16 %v475
      %v708 = vunpack.c.l.b16 %v476
      %v709 = vunpack.c.h.b16 %v476
      %v710 = vunpack.c.l.b16 %v477
      %v711 = vunpack.c.l.b16 %v478
      %v712 = vunpack.c.h.b16 %v478
      %v713 = vunpack.c.l.b16 %v479
      %v714 = vunpack.c.l.b16 %v480
      %v715 = vunpack.c.h.b16 %v480
      %v716 = vunpack.c.l.b16 %v481
      %v717 = vunpack.c.l.b16 %v482
      %v718 = vunpack.c.h.b16 %v482
      %v719 = vunpack.c.l.b16 %v483
      %v720 = vunpack.c.l.b16 %v484
      %v721 = vunpack.c.h.b16 %v484
      %v722 = vunpack.c.l.b16 %v485
      %v723 = vunpack.c.l.b16 %v486
      %v724 = vunpack.c.h.b16 %v486
      %v725 = vunpack.c.l.b16 %v487
      %v726 = vunpack.c.l.b16 %v488
      %v727 = vunpack.c.h.b16 %v488
      %v728 = vunpack.c.l.b16 %v489
      %v729 = vunpack.c.l.b16 %v490
      %v730 = vunpack.c.h.b16 %v490
      %v731 = vunpack.c.l.b16 %v491
      %v732 = vpack.c.b16 %v591, %v588
      %v733 = vpack.c.b16 %v592, %v589
      %v734 = vpack.c.b16 %v593, %v590
      %v735 = vpack.c.b16 %v597, %v594
      %v736 = vpack.c.b16 %v598, %v595
      %v737 = vpack.c.b16 %v599, %v596
      %v738 = vpack.c.b16 %v603, %v600
      %v739 = vpack.c.b16 %v604, %v601
      %v740 = vpack.c.b16 %v605, %v602
      %v741 = vpack.c.b16 %v609, %v606
      %v742 = vpack.c.b16 %v610, %v607
      %v743 = vpack.c.b16 %v611, %v608
      %v744 = vpack.c.b16 %v615, %v612
      %v745 = vpack.c.b16 %v616, %v613
      %v746 = vpack.c.b16 %v617, %v614
      %v747 = vpack.c.b16 %v621, %v618
      %v748 = vpack.c.b16 %v622, %v619
      %v749 = vpack.c.b16 %v623, %v620
      %v750 = vpack.c.b16 %v627, %v624
      %v751 = vpack.c.b16 %v628, %v625
      %v752 = vpack.c.b16 %v629, %v626
      %v753 = vpack.c.b16 %v633, %v630
      %v754 = vpack.c.b16 %v634, %v631
      %v755 = vpack.c.b16 %v635, %v632
      %v756 = vpack.c.b16 %v639, %v636
      %v757 = vpack.c.b16 %v640, %v637
      %v758 = vpack.c.b16 %v641, %v638
      %v759 = vpack.c.b16 %v645, %v642
      %v760 = vpack.c.b16 %v646, %v643
      %v761 = vpack.c.b16 %v647, %v644
      %v762 = vpack.c.b16 %v651, %v648
      %v763 = vpack.c.b16 %v652, %v649
      %v764 = vpack.c.b16 %v653, %v650
      %v765 = vpack.c.b16 %v657, %v654
      %v766 = vpack.c.b16 %v658, %v655
      %v767 = vpack.c.b16 %v659, %v656
      %v768 = vpack.c.b16 %v663, %v660
      %v769 = vpack.c.b16 %v664, %v661
      %v770 = vpack.c.b16 %v665, %v662
      %v771 = vpack.c.b16 %v669, %v666
      %v772 = vpack.c.b16 %v670, %v667
      %v773 = vpack.c.b16 %v671, %v668
      %v774 = vpack.c.b16 %v675, %v672
      %v775 = vpack.c.b16 %v676, %v673
      %v776 = vpack.c.b16 %v677, %v674
      %v777 = vpack.c.b16 %v681, %v678
      %v778 = vpack.c.b16 %v682, %v679
      %v779 = vpack.c.b16 %v683, %v680
      %v780 = vpack.c.b16 %v687, %v684
      %v781 = vpack.c.b16 %v688, %v685
      %v782 = vpack.c.b16 %v689, %v686
      %v783 = vpack.c.b16 %v693, %v690
      %v784 = vpack.c.b16 %v694, %v691
      %v785 = vpack.c.b16 %v695, %v692
      %v786 = vpack.c.b16 %v699, %v696
      %v787 = vpack.c.b16 %v700, %v697
      %v788 = vpack.c.b16 %v701, %v698
      %v789 = vpack.c.b16 %v705, %v702
      %v790 = vpack.c.b16 %v706, %v703
      %v791 = vpack.c.b16 %v707, %v704
      %v792 = vpack.c.b16 %v711, %v708
      %v793 = vpack.c.b16 %v712, %v709
      %v794 = vpack.c.b16 %v713, %v710
      %v795 = vpack.c.b16 %v717, %v714
      %v796 = vpack.c.b16 %v718, %v715
      %v797 = vpack.c.b16 %v719, %v716
      %v798 = vpack.c.b16 %v723, %v720
      %v799 = vpack.c.b16 %v724, %v721
      %v800 = vpack.c.b16 %v725, %v722
      %v801 = vpack.c.b16 %v729, %v726
      %v802 = vpack.c.b16 %v730, %v727
      %v803 = vpack.c.b16 %v731, %v728
      %876 = vmatprep.subr.bf16.mxu0 %v733
      %877 = vmatpush1.bf16.msra.mxu0 %v732
      %878 = vmatprep.subr.bf16.mxu0 %v736
      %879 = vmatpush1.bf16.msra.mxu0 %v735
      %880 = vmatprep.subr.bf16.mxu0 %v739
      %881 = vmatpush1.bf16.msra.mxu0 %v738
      %882 = vmatprep.subr.bf16.mxu0 %v742
      %883 = vmatpush1.bf16.msra.mxu0 %v741
      %884 = vmatprep.subr.bf16.mxu0 %v745
      %885 = vmatpush1.bf16.msra.mxu0 %v744
      %886 = vmatprep.subr.bf16.mxu0 %v748
      %887 = vmatpush1.bf16.msra.mxu0 %v747
      %888 = vmatprep.subr.bf16.mxu0 %v751
      %889 = vmatpush1.bf16.msra.mxu0 %v750
      %890 = vmatprep.subr.bf16.mxu0 %v754
      %891 = vmatpush1.bf16.msra.mxu0 %v753
      %892 = vmatprep.subr.bf16.mxu0 %v757
      %893 = vmatpush1.bf16.msra.mxu0 %v756
      %894 = vmatprep.subr.bf16.mxu0 %v760
      %895 = vmatpush1.bf16.msra.mxu0 %v759
      %896 = vmatprep.subr.bf16.mxu0 %v763
      %897 = vmatpush1.bf16.msra.mxu0 %v762
      %898 = vmatprep.subr.bf16.mxu0 %v766
      %899 = vmatpush1.bf16.msra.mxu0 %v765
      %900 = vmatprep.subr.bf16.mxu0 %v769
      %901 = vmatpush1.bf16.msra.mxu0 %v768
      %902 = vmatprep.subr.bf16.mxu0 %v772
      %903 = vmatpush1.bf16.msra.mxu0 %v771
      %904 = vmatprep.subr.bf16.mxu0 %v775
      %905 = vmatpush1.bf16.msra.mxu0 %v774
      %906 = vmatprep.subr.bf16.mxu0 %v778
      %907 = vmatpush1.bf16.msra.mxu0 %v777
      %908 = vmatprep.mubr.bf16.mxu0 %v359
      %909 = vmatmul.mubr.bf16.gmra.mrb[0].mxu0 %v357
      %v910 = vpop.f32.mrb[0].mxu0
      %v911 = vpop.f32.mrb[0].mxu0
      %v912 = vpop.f32.mrb[0].mxu0
      %v913 = vpop.f32.mrb[0].mxu0
      %914 = vmatprep.mubr.bf16.mxu0 %v360
      %915 = vmatmul.mubr.bf16.gmra.mrb[0].mxu0 %v358
      %v916 = vpop.f32.mrb[0].mxu0
      %v917 = vpop.f32.mrb[0].mxu0
      %v918 = vpop.f32.mrb[0].mxu0
      %v919 = vadd.f32 0.0, %v918
      %v920 = vpop.f32.mrb[0].mxu0
      %921 = vmatprep.mubr.bf16.mxu0 %v361
      %922 = vmatmul.mubr.bf16.gmra.mrb[0].mxu0 %v359
      %v923 = vpop.f32.mrb[0].mxu0
      %v924 = vadd.f32 0.0, %v923
      %v925 = vpop.f32.mrb[0].mxu0
      %v926 = vadd.f32 0.0, %v925
      %v927 = vpop.f32.mrb[0].mxu0
      %v928 = vadd.f32 0.0, %v927
      %v929 = vpop.f32.mrb[0].mxu0
      %v930 = vadd.f32 0.0, %v929
      %931 = vmatprep.mubr.bf16.mxu0 %v362
      %932 = vmatmul.mubr.bf16.gmra.mrb[0].mxu0 %v360
      %v933 = vpop.f32.mrb[0].mxu0
      %v934 = vadd.f32 0.0, %v933
      %v935 = vpop.f32.mrb[0].mxu0
      %v936 = vadd.f32 0.0, %v935
      %v937 = vpop.f32.mrb[0].mxu0
      %v938 = vadd.f32 0.0, %v937
      %v939 = vpop.f32.mrb[0].mxu0
      %v940 = vadd.f32 0.0, %v939
      %941 = vmatprep.mubr.bf16.mxu0 %v363
      %942 = vmatmul.mubr.bf16.gmra.mrb[0].mxu0 %v361
      %v943 = vpop.f32.mrb[0].mxu0
      %v944 = vpop.f32.mrb[0].mxu0
      %v945 = vadd.f32 0.0, %v944
      %v946 = vpop.f32.mrb[0].mxu0
      %v947 = vpop.f32.mrb[0].mxu0
      %948 = vmatprep.mubr.bf16.mxu0 %v364
      %949 = vmatmul.mubr.bf16.gmra.mrb[0].mxu0 %v362
      %v950 = vpop.f32.mrb[0].mxu0
      %v951 = vpop.f32.mrb[0].mxu0
      %v952 = vpop.f32.mrb[0].mxu0
      %v953 = vadd.f32 0.0, %v952
      %v954 = vpop.f32.mrb[0].mxu0
      %v955 = vadd.f32 0.0, %v954
      %956 = vmatprep.mubr.bf16.mxu0 %v365
      %957 = vmatmul.mubr.bf16.gmra.mrb[0].mxu0 %v363
      %v958 = vpop.f32.mrb[0].mxu0
      %v959 = vadd.f32 0.0, %v958
      %v960 = vpop.f32.mrb[0].mxu0
      %v961 = vadd.f32 0.0, %v960
      %v962 = vpop.f32.mrb[0].mxu0
      %v963 = vadd.f32 0.0, %v962
      %v964 = vpop.f32.mrb[0].mxu0
      %v965 = vadd.f32 0.0, %v964
      %966 = vmatprep.mubr.bf16.mxu0 %v366
      %967 = vmatmul.mubr.bf16.gmra.mrb[0].mxu0 %v364
      %v968 = vpop.f32.mrb[0].mxu0
      %v969 = vadd.f32 0.0, %v968
      %v970 = vpop.f32.mrb[0].mxu0
      %v971 = vadd.f32 0.0, %v970
      %v972 = vpop.f32.mrb[0].mxu0
      %v973 = vadd.f32 0.0, %v972
      %v974 = vpop.f32.mrb[0].mxu0
      %v975 = vadd.f32 0.0, %v974
      %976 = vmatprep.mubr.bf16.mxu0 %v367
      %977 = vmatmul.mubr.bf16.gmra.mrb[0].mxu0 %v365
      %v978 = vpop.f32.mrb[0].mxu0
      %v979 = vpop.f32.mrb[0].mxu0
      %v980 = vadd.f32 0.0, %v979
      %v981 = vpop.f32.mrb[0].mxu0
      %v982 = vpop.f32.mrb[0].mxu0
      %983 = vmatprep.mubr.bf16.mxu0 %v368
      %984 = vmatmul.mubr.bf16.gmra.mrb[0].mxu0 %v366
      %v985 = vpop.f32.mrb[0].mxu0
      %v986 = vpop.f32.mrb[0].mxu0
      %v987 = vpop.f32.mrb[0].mxu0
      %v988 = vadd.f32 0.0, %v987
      %v989 = vpop.f32.mrb[0].mxu0
      %v990 = vadd.f32 0.0, %v989
      %991 = vmatprep.mubr.bf16.mxu0 %v369
      %992 = vmatmul.mubr.bf16.gmra.mrb[0].mxu0 %v367
      %v993 = vpop.f32.mrb[0].mxu0
      %v994 = vadd.f32 0.0, %v993
      %v995 = vpop.f32.mrb[0].mxu0
      %v996 = vadd.f32 0.0, %v995
      %v997 = vpop.f32.mrb[0].mxu0
      %v998 = vadd.f32 0.0, %v997
      %v999 = vpop.f32.mrb[0].mxu0
      %v1000 = vadd.f32 0.0, %v999
      %1001 = vmatprep.mubr.bf16.mxu0 %v370
      %1002 = vmatmul.mubr.bf16.gmra.mrb[0].mxu0 %v368
      %v1003 = vpop.f32.mrb[0].mxu0
      %v1004 = vadd.f32 0.0, %v1003
      %v1005 = vpop.f32.mrb[0].mxu0
      %v1006 = vadd.f32 0.0, %v1005
      %v1007 = vpop.f32.mrb[0].mxu0
      %v1008 = vadd.f32 0.0, %v1007
      %v1009 = vpop.f32.mrb[0].mxu0
      %v1010 = vadd.f32 0.0, %v1009
      %1011 = vmatprep.mubr.bf16.mxu0 %v371
      %1012 = vmatmul.mubr.bf16.gmra.mrb[0].mxu0 %v369
      %v1013 = vpop.f32.mrb[0].mxu0
      %v1014 = vpop.f32.mrb[0].mxu0
      %v1015 = vadd.f32 0.0, %v1014
      %v1016 = vpop.f32.mrb[0].mxu0
      %v1017 = vpop.f32.mrb[0].mxu0
      %1018 = vmatprep.mubr.bf16.mxu0 %v372
      %1019 = vmatmul.mubr.bf16.gmra.mrb[0].mxu0 %v370
      %v1020 = vpop.f32.mrb[0].mxu0
      %v1021 = vpop.f32.mrb[0].mxu0
      %v1022 = vpop.f32.mrb[0].mxu0
      %v1023 = vadd.f32 0.0, %v1022
      %v1024 = vpop.f32.mrb[0].mxu0
      %v1025 = vadd.f32 0.0, %v1024
      %1026 = vmatprep.mubr.bf16.mxu0 %v373
      %1027 = vmatmul.mubr.bf16.gmra.mrb[0].mxu0 %v371
      %v1028 = vpop.f32.mrb[0].mxu0
      %v1029 = vadd.f32 0.0, %v1028
      %v1030 = vpop.f32.mrb[0].mxu0
      %v1031 = vadd.f32 0.0, %v1030
      %v1032 = vpop.f32.mrb[0].mxu0
      %v1033 = vadd.f32 0.0, %v1032
      %v1034 = vpop.f32.mrb[0].mxu0
      %v1035 = vadd.f32 0.0, %v1034
      %1036 = vmatprep.mubr.bf16.mxu0 %v374
      %1037 = vmatmul.mubr.bf16.gmra.mrb[0].mxu0 %v372
      %v1038 = vpop.f32.mrb[0].mxu0
      %v1039 = vadd.f32 0.0, %v1038
      %v1040 = vpop.f32.mrb[0].mxu0
      %v1041 = vadd.f32 0.0, %v1040
      %v1042 = vpop.f32.mrb[0].mxu0
      %v1043 = vadd.f32 0.0, %v1042
      %v1044 = vpop.f32.mrb[0].mxu0
      %v1045 = vadd.f32 0.0, %v1044
      %1046 = vmatprep.mubr.bf16.mxu0 %v375
      %1047 = vmatmul.mubr.bf16.gmra.mrb[0].mxu0 %v373
      %v1048 = vpop.f32.mrb[0].mxu0
      %v1049 = vpop.f32.mrb[0].mxu0
      %v1050 = vadd.f32 0.0, %v1049
      %v1051 = vpop.f32.mrb[0].mxu0
      %v1052 = vpop.f32.mrb[0].mxu0
      %1053 = vmatprep.mubr.bf16.mxu0 %v376
      %1054 = vmatmul.mubr.bf16.gmra.mrb[0].mxu0 %v374
      %v1055 = vpop.f32.mrb[0].mxu0
      %v1056 = vpop.f32.mrb[0].mxu0
      %v1057 = vpop.f32.mrb[0].mxu0
      %v1058 = vadd.f32 0.0, %v1057
      %v1059 = vpop.f32.mrb[0].mxu0
      %v1060 = vadd.f32 0.0, %v1059
      %1061 = vmatprep.mubr.bf16.mxu0 %v377
      %1062 = vmatmul.mubr.bf16.gmra.mrb[0].mxu0 %v375
      %v1063 = vpop.f32.mrb[0].mxu0
      %v1064 = vadd.f32 0.0, %v1063
      %v1065 = vpop.f32.mrb[0].mxu0
      %v1066 = vadd.f32 0.0, %v1065
      %v1067 = vpop.f32.mrb[0].mxu0
      %v1068 = vadd.f32 0.0, %v1067
      %v1069 = vpop.f32.mrb[0].mxu0
      %v1070 = vadd.f32 0.0, %v1069
      %1071 = vmatprep.mubr.bf16.mxu0 %v378
      %1072 = vmatmul.mubr.bf16.gmra.mrb[0].mxu0 %v376
      %v1073 = vpop.f32.mrb[0].mxu0
      %v1074 = vadd.f32 0.0, %v1073
      %v1075 = vpop.f32.mrb[0].mxu0
      %v1076 = vadd.f32 0.0, %v1075
      %v1077 = vpop.f32.mrb[0].mxu0
      %v1078 = vadd.f32 0.0, %v1077
      %v1079 = vpop.f32.mrb[0].mxu0
      %v1080 = vadd.f32 0.0, %v1079
      %1081 = vmatprep.mubr.bf16.mxu0 %v379
      %1082 = vmatmul.mubr.bf16.gmra.mrb[0].mxu0 %v377
      %v1083 = vpop.f32.mrb[0].mxu0
      %v1084 = vpop.f32.mrb[0].mxu0
      %v1085 = vadd.f32 0.0, %v1084
      %v1086 = vpop.f32.mrb[0].mxu0
      %v1087 = vpop.f32.mrb[0].mxu0
      %1088 = vmatprep.mubr.bf16.mxu0 %v380
      %1089 = vmatmul.mubr.bf16.gmra.mrb[0].mxu0 %v378
      %v1090 = vpop.f32.mrb[0].mxu0
      %v1091 = vpop.f32.mrb[0].mxu0
      %v1092 = vpop.f32.mrb[0].mxu0
      %v1093 = vadd.f32 0.0, %v1092
      %v1094 = vpop.f32.mrb[0].mxu0
      %v1095 = vadd.f32 0.0, %v1094
      %1096 = vmatprep.mubr.bf16.mxu0 %v381
      %1097 = vmatmul.mubr.bf16.gmra.mrb[0].mxu0 %v379
      %v1098 = vpop.f32.mrb[0].mxu0
      %v1099 = vadd.f32 0.0, %v1098
      %v1100 = vpop.f32.mrb[0].mxu0
      %v1101 = vadd.f32 0.0, %v1100
      %v1102 = vpop.f32.mrb[0].mxu0
      %v1103 = vadd.f32 0.0, %v1102
      %v1104 = vpop.f32.mrb[0].mxu0
      %v1105 = vadd.f32 0.0, %v1104
      %1106 = vmatprep.mubr.bf16.mxu0 %v382
      %1107 = vmatmul.mubr.bf16.gmra.mrb[0].mxu0 %v380
      %v1108 = vpop.f32.mrb[0].mxu0
      %v1109 = vadd.f32 0.0, %v1108
      %v1110 = vpop.f32.mrb[0].mxu0
      %v1111 = vadd.f32 0.0, %v1110
      %v1112 = vpop.f32.mrb[0].mxu0
      %v1113 = vadd.f32 0.0, %v1112
      %v1114 = vpop.f32.mrb[0].mxu0
      %v1115 = vadd.f32 0.0, %v1114
      %1116 = vmatprep.mubr.bf16.mxu0 %v383
      %1117 = vmatmul.mubr.bf16.gmra.mrb[0].mxu0 %v381
      %v1118 = vpop.f32.mrb[0].mxu0
      %v1119 = vpop.f32.mrb[0].mxu0
      %v1120 = vadd.f32 0.0, %v1119
      %v1121 = vpop.f32.mrb[0].mxu0
      %v1122 = vpop.f32.mrb[0].mxu0
      %1123 = vmatprep.mubr.bf16.mxu0 %v384
      %1124 = vmatmul.mubr.bf16.gmra.mrb[0].mxu0 %v382
      %v1125 = vpop.f32.mrb[0].mxu0
      %v1126 = vpop.f32.mrb[0].mxu0
      %v1127 = vpop.f32.mrb[0].mxu0
      %v1128 = vadd.f32 0.0, %v1127
      %v1129 = vpop.f32.mrb[0].mxu0
      %v1130 = vadd.f32 0.0, %v1129
      %1131 = vmatprep.mubr.bf16.mxu0 %v385
      %1132 = vmatmul.mubr.bf16.gmra.mrb[0].mxu0 %v383
      %v1133 = vpop.f32.mrb[0].mxu0
      %v1134 = vadd.f32 0.0, %v1133
      %v1135 = vpop.f32.mrb[0].mxu0
      %v1136 = vadd.f32 0.0, %v1135
      %v1137 = vpop.f32.mrb[0].mxu0
      %v1138 = vadd.f32 0.0, %v1137
      %v1139 = vpop.f32.mrb[0].mxu0
      %v1140 = vadd.f32 0.0, %v1139
      %1141 = vmatprep.mubr.bf16.mxu0 %v386
      %1142 = vmatmul.mubr.bf16.gmra.mrb[0].mxu0 %v384
      %v1143 = vpop.f32.mrb[0].mxu0
      %v1144 = vadd.f32 0.0, %v1143
      %v1145 = vpop.f32.mrb[0].mxu0
      %v1146 = vadd.f32 0.0, %v1145
      %v1147 = vpop.f32.mrb[0].mxu0
      %v1148 = vadd.f32 0.0, %v1147
      %v1149 = vpop.f32.mrb[0].mxu0
      %v1150 = vadd.f32 0.0, %v1149
      %1151 = vmatprep.mubr.bf16.mxu0 %v387
      %1152 = vmatmul.mubr.bf16.gmra.mrb[0].mxu0 %v385
      %v1153 = vpop.f32.mrb[0].mxu0
      %v1154 = vpop.f32.mrb[0].mxu0
      %v1155 = vadd.f32 0.0, %v1154
      %v1156 = vpop.f32.mrb[0].mxu0
      %v1157 = vpop.f32.mrb[0].mxu0
      %1158 = vmatprep.mubr.bf16.mxu0 %v388
      %1159 = vmatmul.mubr.bf16.gmra.mrb[0].mxu0 %v386
      %v1160 = vpop.f32.mrb[0].mxu0
      %v1161 = vpop.f32.mrb[0].mxu0
      %v1162 = vpop.f32.mrb[0].mxu0
      %v1163 = vadd.f32 0.0, %v1162
      %v1164 = vpop.f32.mrb[0].mxu0
      %v1165 = vadd.f32 0.0, %v1164
      %1166 = vmatprep.mubr.bf16.mxu0 %v389
      %1167 = vmatmul.mubr.bf16.gmra.mrb[0].mxu0 %v387
      %v1168 = vpop.f32.mrb[0].mxu0
      %v1169 = vadd.f32 0.0, %v1168
      %v1170 = vpop.f32.mrb[0].mxu0
      %v1171 = vadd.f32 0.0, %v1170
      %v1172 = vpop.f32.mrb[0].mxu0
      %v1173 = vadd.f32 0.0, %v1172
      %v1174 = vpop.f32.mrb[0].mxu0
      %v1175 = vadd.f32 0.0, %v1174
      %1176 = vmatprep.mubr.bf16.mxu0 %v390
      %1177 = vmatmul.mubr.bf16.gmra.mrb[0].mxu0 %v388
      %v1178 = vpop.f32.mrb[0].mxu0
      %v1179 = vadd.f32 0.0, %v1178
      %v1180 = vpop.f32.mrb[0].mxu0
      %v1181 = vadd.f32 0.0, %v1180
      %v1182 = vpop.f32.mrb[0].mxu0
      %v1183 = vadd.f32 0.0, %v1182
      %v1184 = vpop.f32.mrb[0].mxu0
      %v1185 = vadd.f32 0.0, %v1184
      %1186 = vmatprep.mubr.bf16.mxu0 %v391
      %1187 = vmatmul.mubr.bf16.gmra.mrb[0].mxu0 %v389
      %v1188 = vpop.f32.mrb[0].mxu0
      %v1189 = vpop.f32.mrb[0].mxu0
      %v1190 = vadd.f32 0.0, %v1189
      %v1191 = vpop.f32.mrb[0].mxu0
      %v1192 = vpop.f32.mrb[0].mxu0
      %1193 = vmatprep.mubr.bf16.mxu0 %v392
      %1194 = vmatmul.mubr.bf16.gmra.mrb[0].mxu0 %v390
      %v1195 = vpop.f32.mrb[0].mxu0
      %v1196 = vpop.f32.mrb[0].mxu0
      %v1197 = vpop.f32.mrb[0].mxu0
      %v1198 = vpop.f32.mrb[0].mxu0
      %1199 = vmatprep.mubr.bf16.mxu0 %v393
      %1200 = vmatmul.mubr.bf16.gmra.mrb[0].mxu0 %v391
      %v1201 = vpop.f32.mrb[0].mxu0
      %v1202 = vpop.f32.mrb[0].mxu0
      %v1203 = vpop.f32.mrb[0].mxu0
      %v1204 = vpop.f32.mrb[0].mxu0
      %1205 = vdwg.mxu0
      %1206 = vmatprep.subr.bf16.mxu0 %v781
      %1207 = vmatpush1.bf16.msra.mxu0 %v780
      %1208 = vmatprep.subr.bf16.mxu0 %v784
      %1209 = vmatpush1.bf16.msra.mxu0 %v783
      %1210 = vmatprep.subr.bf16.mxu0 %v787
      %1211 = vmatpush1.bf16.msra.mxu0 %v786
      %1212 = vmatprep.subr.bf16.mxu0 %v790
      %1213 = vmatpush1.bf16.msra.mxu0 %v789
      %1214 = vmatprep.subr.bf16.mxu0 %v793
      %1215 = vmatpush1.bf16.msra.mxu0 %v792
      %1216 = vmatprep.subr.bf16.mxu0 %v796
      %1217 = vmatpush1.bf16.msra.mxu0 %v795
      %1218 = vmatprep.subr.bf16.mxu0 %v799
      %1219 = vmatpush1.bf16.msra.mxu0 %v798
      %1220 = vmatprep.subr.bf16.mxu0 %v802
      %1221 = vmatpush1.bf16.msra.mxu0 %v801
      %1222 = vmatprep.subr.bf16.mxu0 0
      %1223 = vmatpush1.bf16.msra.mxu0 0
      %1224 = vmatprep.subr.bf16.mxu0 0
      %1225 = vmatpush1.bf16.msra.mxu0 0
      %1226 = vmatprep.subr.bf16.mxu0 0
      %1227 = vmatpush1.bf16.msra.mxu0 0
      %1228 = vmatprep.subr.bf16.mxu0 0
      %1229 = vmatpush1.bf16.msra.mxu0 0
      %1230 = vmatprep.subr.bf16.mxu0 0
      %1231 = vmatpush1.bf16.msra.mxu0 0
      %1232 = vmatprep.subr.bf16.mxu0 0
      %1233 = vmatpush1.bf16.msra.mxu0 0
      %1234 = vmatprep.subr.bf16.mxu0 0
      %1235 = vmatpush1.bf16.msra.mxu0 0
      %1236 = vmatprep.subr.bf16.mxu0 0
      %1237 = vmatpush1.bf16.msra.mxu0 0
      %1238 = vmatprep.mubr.bf16.mxu0 0
      %1239 = vmatmul.mubr.bf16.gmra.mrb[0].mxu0 %v361
      %v1240 = vpop.f32.mrb[0].mxu0
      %v1241 = vpop.f32.mrb[0].mxu0
      %v1242 = vpop.f32.mrb[0].mxu0
      %v1243 = vpop.f32.mrb[0].mxu0
      %1244 = vmatprep.mubr.bf16.mxu0 0
      %1245 = vmatmul.mubr.bf16.gmra.mrb[0].mxu0 %v362
      %v1246 = vpop.f32.mrb[0].mxu0
      %v1247 = vpop.f32.mrb[0].mxu0
      %v1248 = vpop.f32.mrb[0].mxu0
      %v1249 = vadd.f32 %v919, %v1248
      %v1250 = vpop.f32.mrb[0].mxu0
      %1251 = vmatprep.mubr.bf16.mxu0 0
      %1252 = vmatmul.mubr.bf16.gmra.mrb[0].mxu0 %v363
      %v1253 = vpop.f32.mrb[0].mxu0
      %v1254 = vadd.f32 %v924, %v1253
      %v1255 = vpop.f32.mrb[0].mxu0
      %v1256 = vadd.f32 %v926, %v1255
      %v1257 = vpop.f32.mrb[0].mxu0
      %v1258 = vadd.f32 %v928, %v1257
      %v1259 = vpop.f32.mrb[0].mxu0
      %v1260 = vadd.f32 %v930, %v1259
      %1261 = vmatprep.mubr.bf16.mxu0 0
      %1262 = vmatmul.mubr.bf16.gmra.mrb[0].mxu0 %v364
      %v1263 = vpop.f32.mrb[0].mxu0
      %v1264 = vadd.f32 %v934, %v1263
      %v1265 = vpop.f32.mrb[0].mxu0
      %v1266 = vadd.f32 %v936, %v1265
      %v1267 = vpop.f32.mrb[0].mxu0
      %v1268 = vadd.f32 %v938, %v1267
      %v1269 = vpop.f32.mrb[0].mxu0
      %v1270 = vadd.f32 %v940, %v1269
      %1271 = vmatprep.mubr.bf16.mxu0 0
      %1272 = vmatmul.mubr.bf16.gmra.mrb[0].mxu0 %v365
      %v1273 = vpop.f32.mrb[0].mxu0
      %v1274 = vpop.f32.mrb[0].mxu0
      %v1275 = vadd.f32 %v945, %v1274
      %v1276 = vpop.f32.mrb[0].mxu0
      %v1277 = vpop.f32.mrb[0].mxu0
      %1278 = vmatprep.mubr.bf16.mxu0 0
      %1279 = vmatmul.mubr.bf16.gmra.mrb[0].mxu0 %v366
      %v1280 = vpop.f32.mrb[0].mxu0
      %v1281 = vpop.f32.mrb[0].mxu0
      %v1282 = vpop.f32.mrb[0].mxu0
      %v1283 = vadd.f32 %v953, %v1282
      %v1284 = vpop.f32.mrb[0].mxu0
      %v1285 = vadd.f32 %v955, %v1284
      %1286 = vmatprep.mubr.bf16.mxu0 0
      %1287 = vmatmul.mubr.bf16.gmra.mrb[0].mxu0 %v367
      %v1288 = vpop.f32.mrb[0].mxu0
      %v1289 = vadd.f32 %v959, %v1288
      %v1290 = vpop.f32.mrb[0].mxu0
      %v1291 = vadd.f32 %v961, %v1290
      %v1292 = vpop.f32.mrb[0].mxu0
      %v1293 = vadd.f32 %v963, %v1292
      %v1294 = vpop.f32.mrb[0].mxu0
      %v1295 = vadd.f32 %v965, %v1294
      %1296 = vmatprep.mubr.bf16.mxu0 0
      %1297 = vmatmul.mubr.bf16.gmra.mrb[0].mxu0 %v368
      %v1298 = vpop.f32.mrb[0].mxu0
      %v1299 = vadd.f32 %v969, %v1298
      %v1300 = vpop.f32.mrb[0].mxu0
      %v1301 = vadd.f32 %v971, %v1300
      %v1302 = vpop.f32.mrb[0].mxu0
      %v1303 = vadd.f32 %v973, %v1302
      %v1304 = vpop.f32.mrb[0].mxu0
      %v1305 = vadd.f32 %v975, %v1304
      %1306 = vmatprep.mubr.bf16.mxu0 0
      %1307 = vmatmul.mubr.bf16.gmra.mrb[0].mxu0 %v369
      %v1308 = vpop.f32.mrb[0].mxu0
      %v1309 = vpop.f32.mrb[0].mxu0
      %v1310 = vadd.f32 %v980, %v1309
      %v1311 = vpop.f32.mrb[0].mxu0
      %v1312 = vpop.f32.mrb[0].mxu0
      %1313 = vmatprep.mubr.bf16.mxu0 0
      %1314 = vmatmul.mubr.bf16.gmra.mrb[0].mxu0 %v370
      %v1315 = vpop.f32.mrb[0].mxu0
      %v1316 = vpop.f32.mrb[0].mxu0
      %v1317 = vpop.f32.mrb[0].mxu0
      %v1318 = vadd.f32 %v988, %v1317
      %v1319 = vpop.f32.mrb[0].mxu0
      %v1320 = vadd.f32 %v990, %v1319
      %1321 = vmatprep.mubr.bf16.mxu0 0
      %1322 = vmatmul.mubr.bf16.gmra.mrb[0].mxu0 %v371
      %v1323 = vpop.f32.mrb[0].mxu0
      %v1324 = vadd.f32 %v994, %v1323
      %v1325 = vpop.f32.mrb[0].mxu0
      %v1326 = vadd.f32 %v996, %v1325
      %v1327 = vpop.f32.mrb[0].mxu0
      %v1328 = vadd.f32 %v998, %v1327
      %v1329 = vpop.f32.mrb[0].mxu0
      %v1330 = vadd.f32 %v1000, %v1329
      %1331 = vmatprep.mubr.bf16.mxu0 0
      %1332 = vmatmul.mubr.bf16.gmra.mrb[0].mxu0 %v372
      %v1333 = vpop.f32.mrb[0].mxu0
      %v1334 = vadd.f32 %v1004, %v1333
      %v1335 = vpop.f32.mrb[0].mxu0
      %v1336 = vadd.f32 %v1006, %v1335
      %v1337 = vpop.f32.mrb[0].mxu0
      %v1338 = vadd.f32 %v1008, %v1337
      %v1339 = vpop.f32.mrb[0].mxu0
      %v1340 = vadd.f32 %v1010, %v1339
      %1341 = vmatprep.mubr.bf16.mxu0 0
      %1342 = vmatmul.mubr.bf16.gmra.mrb[0].mxu0 %v373
      %v1343 = vpop.f32.mrb[0].mxu0
      %v1344 = vpop.f32.mrb[0].mxu0
      %v1345 = vadd.f32 %v1015, %v1344
      %v1346 = vpop.f32.mrb[0].mxu0
      %v1347 = vpop.f32.mrb[0].mxu0
      %1348 = vmatprep.mubr.bf16.mxu0 0
      %1349 = vmatmul.mubr.bf16.gmra.mrb[0].mxu0 %v374
      %v1350 = vpop.f32.mrb[0].mxu0
      %v1351 = vpop.f32.mrb[0].mxu0
      %v1352 = vpop.f32.mrb[0].mxu0
      %v1353 = vadd.f32 %v1023, %v1352
      %v1354 = vpop.f32.mrb[0].mxu0
      %v1355 = vadd.f32 %v1025, %v1354
      %1356 = vmatprep.mubr.bf16.mxu0 0
      %1357 = vmatmul.mubr.bf16.gmra.mrb[0].mxu0 %v375
      %v1358 = vpop.f32.mrb[0].mxu0
      %v1359 = vadd.f32 %v1029, %v1358
      %v1360 = vpop.f32.mrb[0].mxu0
      %v1361 = vadd.f32 %v1031, %v1360
      %v1362 = vpop.f32.mrb[0].mxu0
      %v1363 = vadd.f32 %v1033, %v1362
      %v1364 = vpop.f32.mrb[0].mxu0
      %v1365 = vadd.f32 %v1035, %v1364
      %1366 = vmatprep.mubr.bf16.mxu0 0
      %1367 = vmatmul.mubr.bf16.gmra.mrb[0].mxu0 %v376
      %v1368 = vpop.f32.mrb[0].mxu0
      %v1369 = vadd.f32 %v1039, %v1368
      %v1370 = vpop.f32.mrb[0].mxu0
      %v1371 = vadd.f32 %v1041, %v1370
      %v1372 = vpop.f32.mrb[0].mxu0
      %v1373 = vadd.f32 %v1043, %v1372
      %v1374 = vpop.f32.mrb[0].mxu0
      %v1375 = vadd.f32 %v1045, %v1374
      %1376 = vmatprep.mubr.bf16.mxu0 0
      %1377 = vmatmul.mubr.bf16.gmra.mrb[0].mxu0 %v377
      %v1378 = vpop.f32.mrb[0].mxu0
      %v1379 = vpop.f32.mrb[0].mxu0
      %v1380 = vadd.f32 %v1050, %v1379
      %v1381 = vpop.f32.mrb[0].mxu0
      %v1382 = vpop.f32.mrb[0].mxu0
      %1383 = vmatprep.mubr.bf16.mxu0 0
      %1384 = vmatmul.mubr.bf16.gmra.mrb[0].mxu0 %v378
      %v1385 = vpop.f32.mrb[0].mxu0
      %v1386 = vpop.f32.mrb[0].mxu0
      %v1387 = vpop.f32.mrb[0].mxu0
      %v1388 = vadd.f32 %v1058, %v1387
      %v1389 = vpop.f32.mrb[0].mxu0
      %v1390 = vadd.f32 %v1060, %v1389
      %1391 = vmatprep.mubr.bf16.mxu0 0
      %1392 = vmatmul.mubr.bf16.gmra.mrb[0].mxu0 %v379
      %v1393 = vpop.f32.mrb[0].mxu0
      %v1394 = vadd.f32 %v1064, %v1393
      %v1395 = vpop.f32.mrb[0].mxu0
      %v1396 = vadd.f32 %v1066, %v1395
      %v1397 = vpop.f32.mrb[0].mxu0
      %v1398 = vadd.f32 %v1068, %v1397
      %v1399 = vpop.f32.mrb[0].mxu0
      %v1400 = vadd.f32 %v1070, %v1399
      %1401 = vmatprep.mubr.bf16.mxu0 0
      %1402 = vmatmul.mubr.bf16.gmra.mrb[0].mxu0 %v380
      %v1403 = vpop.f32.mrb[0].mxu0
      %v1404 = vadd.f32 %v1074, %v1403
      %v1405 = vpop.f32.mrb[0].mxu0
      %v1406 = vadd.f32 %v1076, %v1405
      %v1407 = vpop.f32.mrb[0].mxu0
      %v1408 = vadd.f32 %v1078, %v1407
      %v1409 = vpop.f32.mrb[0].mxu0
      %v1410 = vadd.f32 %v1080, %v1409
      %1411 = vmatprep.mubr.bf16.mxu0 0
      %1412 = vmatmul.mubr.bf16.gmra.mrb[0].mxu0 %v381
      %v1413 = vpop.f32.mrb[0].mxu0
      %v1414 = vpop.f32.mrb[0].mxu0
      %v1415 = vadd.f32 %v1085, %v1414
      %v1416 = vpop.f32.mrb[0].mxu0
      %v1417 = vpop.f32.mrb[0].mxu0
      %1418 = vmatprep.mubr.bf16.mxu0 0
      %1419 = vmatmul.mubr.bf16.gmra.mrb[0].mxu0 %v382
      %v1420 = vpop.f32.mrb[0].mxu0
      %v1421 = vpop.f32.mrb[0].mxu0
      %v1422 = vpop.f32.mrb[0].mxu0
      %v1423 = vadd.f32 %v1093, %v1422
      %v1424 = vpop.f32.mrb[0].mxu0
      %v1425 = vadd.f32 %v1095, %v1424
      %1426 = vmatprep.mubr.bf16.mxu0 0
      %1427 = vmatmul.mubr.bf16.gmra.mrb[0].mxu0 %v383
      %v1428 = vpop.f32.mrb[0].mxu0
      %v1429 = vadd.f32 %v1099, %v1428
      %v1430 = vpop.f32.mrb[0].mxu0
      %v1431 = vadd.f32 %v1101, %v1430
      %v1432 = vpop.f32.mrb[0].mxu0
      %v1433 = vadd.f32 %v1103, %v1432
      %v1434 = vpop.f32.mrb[0].mxu0
      %v1435 = vadd.f32 %v1105, %v1434
      %1436 = vmatprep.mubr.bf16.mxu0 0
      %1437 = vmatmul.mubr.bf16.gmra.mrb[0].mxu0 %v384
      %v1438 = vpop.f32.mrb[0].mxu0
      %v1439 = vadd.f32 %v1109, %v1438
      %v1440 = vpop.f32.mrb[0].mxu0
      %v1441 = vadd.f32 %v1111, %v1440
      %v1442 = vpop.f32.mrb[0].mxu0
      %v1443 = vadd.f32 %v1113, %v1442
      %v1444 = vpop.f32.mrb[0].mxu0
      %v1445 = vadd.f32 %v1115, %v1444
      %1446 = vmatprep.mubr.bf16.mxu0 0
      %1447 = vmatmul.mubr.bf16.gmra.mrb[0].mxu0 %v385
      %v1448 = vpop.f32.mrb[0].mxu0
      %v1449 = vpop.f32.mrb[0].mxu0
      %v1450 = vadd.f32 %v1120, %v1449
      %v1451 = vpop.f32.mrb[0].mxu0
      %v1452 = vpop.f32.mrb[0].mxu0
      %1453 = vmatprep.mubr.bf16.mxu0 0
      %1454 = vmatmul.mubr.bf16.gmra.mrb[0].mxu0 %v386
      %v1455 = vpop.f32.mrb[0].mxu0
      %v1456 = vpop.f32.mrb[0].mxu0
      %v1457 = vpop.f32.mrb[0].mxu0
      %v1458 = vadd.f32 %v1128, %v1457
      %v1459 = vpop.f32.mrb[0].mxu0
      %v1460 = vadd.f32 %v1130, %v1459
      %1461 = vmatprep.mubr.bf16.mxu0 0
      %1462 = vmatmul.mubr.bf16.gmra.mrb[0].mxu0 %v387
      %v1463 = vpop.f32.mrb[0].mxu0
      %v1464 = vadd.f32 %v1134, %v1463
      %v1465 = vpop.f32.mrb[0].mxu0
      %v1466 = vadd.f32 %v1136, %v1465
      %v1467 = vpop.f32.mrb[0].mxu0
      %v1468 = vadd.f32 %v1138, %v1467
      %v1469 = vpop.f32.mrb[0].mxu0
      %v1470 = vadd.f32 %v1140, %v1469
      %1471 = vmatprep.mubr.bf16.mxu0 0
      %1472 = vmatmul.mubr.bf16.gmra.mrb[0].mxu0 %v388
      %v1473 = vpop.f32.mrb[0].mxu0
      %v1474 = vadd.f32 %v1144, %v1473
      %v1475 = vpop.f32.mrb[0].mxu0
      %v1476 = vadd.f32 %v1146, %v1475
      %v1477 = vpop.f32.mrb[0].mxu0
      %v1478 = vadd.f32 %v1148, %v1477
      %v1479 = vpop.f32.mrb[0].mxu0
      %v1480 = vadd.f32 %v1150, %v1479
      %1481 = vmatprep.mubr.bf16.mxu0 0
      %1482 = vmatmul.mubr.bf16.gmra.mrb[0].mxu0 %v389
      %v1483 = vpop.f32.mrb[0].mxu0
      %v1484 = vpop.f32.mrb[0].mxu0
      %v1485 = vadd.f32 %v1155, %v1484
      %v1486 = vpop.f32.mrb[0].mxu0
      %v1487 = vpop.f32.mrb[0].mxu0
      %1488 = vmatprep.mubr.bf16.mxu0 0
      %1489 = vmatmul.mubr.bf16.gmra.mrb[0].mxu0 %v390
      %v1490 = vpop.f32.mrb[0].mxu0
      %v1491 = vpop.f32.mrb[0].mxu0
      %v1492 = vpop.f32.mrb[0].mxu0
      %v1493 = vadd.f32 %v1163, %v1492
      %v1494 = vpop.f32.mrb[0].mxu0
      %v1495 = vadd.f32 %v1165, %v1494
      %1496 = vmatprep.mubr.bf16.mxu0 0
      %1497 = vmatmul.mubr.bf16.gmra.mrb[0].mxu0 %v391
      %v1498 = vpop.f32.mrb[0].mxu0
      %v1499 = vadd.f32 %v1169, %v1498
      %v1500 = vpop.f32.mrb[0].mxu0
      %v1501 = vadd.f32 %v1171, %v1500
      %v1502 = vpop.f32.mrb[0].mxu0
      %v1503 = vadd.f32 %v1173, %v1502
      %v1504 = vpop.f32.mrb[0].mxu0
      %v1505 = vadd.f32 %v1175, %v1504
      %1506 = vmatprep.mubr.bf16.mxu0 0
      %1507 = vmatmul.mubr.bf16.gmra.mrb[0].mxu0 %v392
      %v1508 = vpop.f32.mrb[0].mxu0
      %v1509 = vadd.f32 %v1179, %v1508
      %v1510 = vpop.f32.mrb[0].mxu0
      %v1511 = vadd.f32 %v1181, %v1510
      %v1512 = vpop.f32.mrb[0].mxu0
      %v1513 = vadd.f32 %v1183, %v1512
      %v1514 = vpop.f32.mrb[0].mxu0
      %v1515 = vadd.f32 %v1185, %v1514
      %1516 = vmatprep.mubr.bf16.mxu0 0
      %1517 = vmatmul.mubr.bf16.gmra.mrb[0].mxu0 %v393
      %v1518 = vpop.f32.mrb[0].mxu0
      %v1519 = vpop.f32.mrb[0].mxu0
      %v1520 = vadd.f32 %v1190, %v1519
      %v1521 = vpop.f32.mrb[0].mxu0
      %v1522 = vpop.f32.mrb[0].mxu0
      %1523 = vmatprep.mubr.bf16.mxu0 0
      %1524 = vmatmul.mubr.bf16.gmra.mrb[0].mxu0 %v394
      %v1525 = vpop.f32.mrb[0].mxu0
      %v1526 = vpop.f32.mrb[0].mxu0
      %v1527 = vpop.f32.mrb[0].mxu0
      %v1528 = vpop.f32.mrb[0].mxu0
      %1529 = vmatprep.mubr.bf16.mxu0 0
      %1530 = vmatmul.mubr.bf16.gmra.mrb[0].mxu0 %v395
      %v1531 = vpop.f32.mrb[0].mxu0
      %v1532 = vpop.f32.mrb[0].mxu0
      %v1533 = vpop.f32.mrb[0].mxu0
      %v1534 = vpop.f32.mrb[0].mxu0
      %1535 = vdwg.mxu0
      %1536 = vmatprep.subr.bf16.mxu0 0
      %1537 = vmatpush1.bf16.msra.mxu0 %v734
      %1538 = vmatprep.subr.bf16.mxu0 0
      %1539 = vmatpush1.bf16.msra.mxu0 %v737
      %1540 = vmatprep.subr.bf16.mxu0 0
      %1541 = vmatpush1.bf16.msra.mxu0 %v740
      %1542 = vmatprep.subr.bf16.mxu0 0
      %1543 = vmatpush1.bf16.msra.mxu0 %v743
      %1544 = vmatprep.subr.bf16.mxu0 0
      %1545 = vmatpush1.bf16.msra.mxu0 %v746
      %1546 = vmatprep.subr.bf16.mxu0 0
      %1547 = vmatpush1.bf16.msra.mxu0 %v749
      %1548 = vmatprep.subr.bf16.mxu0 0
      %1549 = vmatpush1.bf16.msra.mxu0 %v752
      %1550 = vmatprep.subr.bf16.mxu0 0
      %1551 = vmatpush1.bf16.msra.mxu0 %v755
      %1552 = vmatprep.subr.bf16.mxu0 0
      %1553 = vmatpush1.bf16.msra.mxu0 %v758
      %1554 = vmatprep.subr.bf16.mxu0 0
      %1555 = vmatpush1.bf16.msra.mxu0 %v761
      %1556 = vmatprep.subr.bf16.mxu0 0
      %1557 = vmatpush1.bf16.msra.mxu0 %v764
      %1558 = vmatprep.subr.bf16.mxu0 0
      %1559 = vmatpush1.bf16.msra.mxu0 %v767
      %1560 = vmatprep.subr.bf16.mxu0 0
      %1561 = vmatpush1.bf16.msra.mxu0 %v770
      %1562 = vmatprep.subr.bf16.mxu0 0
      %1563 = vmatpush1.bf16.msra.mxu0 %v773
      %1564 = vmatprep.subr.bf16.mxu0 0
      %1565 = vmatpush1.bf16.msra.mxu0 %v776
      %1566 = vmatprep.subr.bf16.mxu0 0
      %1567 = vmatpush1.bf16.msra.mxu0 %v779
      %1568 = vmatprep.mubr.bf16.mxu0 %v359
      %1569 = vmatmul.mubr.bf16.gmra.mrb[0].mxu0 %v357
      %v1570 = vpop.f32.mrb[0].mxu0
      %v1571 = vpop.f32.mrb[0].mxu0
      %v1572 = vpop.f32.mrb[0].mxu0
      %v1573 = vpop.f32.mrb[0].mxu0
      %1574 = vmatprep.mubr.bf16.mxu0 %v360
      %1575 = vmatmul.mubr.bf16.gmra.mrb[0].mxu0 %v358
      %v1576 = vpop.f32.mrb[0].mxu0
      %v1577 = vpop.f32.mrb[0].mxu0
      %v1578 = vpop.f32.mrb[0].mxu0
      %v1579 = vpop.f32.mrb[0].mxu0
      %1580 = vmatprep.mubr.bf16.mxu0 %v361
      %1581 = vmatmul.mubr.bf16.gmra.mrb[0].mxu0 %v359
      %v1582 = vpop.f32.mrb[0].mxu0
      %v1583 = vadd.f32 0.0, %v1582
      %v1584 = vpop.f32.mrb[0].mxu0
      %v1585 = vpop.f32.mrb[0].mxu0
      %v1586 = vadd.f32 0.0, %v1585
      %v1587 = vpop.f32.mrb[0].mxu0
      %1588 = vmatprep.mubr.bf16.mxu0 %v362
      %1589 = vmatmul.mubr.bf16.gmra.mrb[0].mxu0 %v360
      %v1590 = vpop.f32.mrb[0].mxu0
      %v1591 = vadd.f32 0.0, %v1590
      %v1592 = vpop.f32.mrb[0].mxu0
      %v1593 = vpop.f32.mrb[0].mxu0
      %v1594 = vadd.f32 0.0, %v1593
      %v1595 = vpop.f32.mrb[0].mxu0
      %1596 = vmatprep.mubr.bf16.mxu0 %v363
      %1597 = vmatmul.mubr.bf16.gmra.mrb[0].mxu0 %v361
      %v1598 = vpop.f32.mrb[0].mxu0
      %v1599 = vadd.f32 0.0, %v1598
      %v1600 = vpop.f32.mrb[0].mxu0
      %v1601 = vpop.f32.mrb[0].mxu0
      %v1602 = vpop.f32.mrb[0].mxu0
      %1603 = vmatprep.mubr.bf16.mxu0 %v364
      %1604 = vmatmul.mubr.bf16.gmra.mrb[0].mxu0 %v362
      %v1605 = vpop.f32.mrb[0].mxu0
      %v1606 = vpop.f32.mrb[0].mxu0
      %v1607 = vpop.f32.mrb[0].mxu0
      %v1608 = vadd.f32 0.0, %v1607
      %v1609 = vpop.f32.mrb[0].mxu0
      %1610 = vmatprep.mubr.bf16.mxu0 %v365
      %1611 = vmatmul.mubr.bf16.gmra.mrb[0].mxu0 %v363
      %v1612 = vpop.f32.mrb[0].mxu0
      %v1613 = vadd.f32 0.0, %v1612
      %v1614 = vpop.f32.mrb[0].mxu0
      %v1615 = vpop.f32.mrb[0].mxu0
      %v1616 = vadd.f32 0.0, %v1615
      %v1617 = vpop.f32.mrb[0].mxu0
      %1618 = vmatprep.mubr.bf16.mxu0 %v366
      %1619 = vmatmul.mubr.bf16.gmra.mrb[0].mxu0 %v364
      %v1620 = vpop.f32.mrb[0].mxu0
      %v1621 = vadd.f32 0.0, %v1620
      %v1622 = vpop.f32.mrb[0].mxu0
      %v1623 = vpop.f32.mrb[0].mxu0
      %v1624 = vadd.f32 0.0, %v1623
      %v1625 = vpop.f32.mrb[0].mxu0
      %1626 = vmatprep.mubr.bf16.mxu0 %v367
      %1627 = vmatmul.mubr.bf16.gmra.mrb[0].mxu0 %v365
      %v1628 = vpop.f32.mrb[0].mxu0
      %v1629 = vadd.f32 0.0, %v1628
      %v1630 = vpop.f32.mrb[0].mxu0
      %v1631 = vpop.f32.mrb[0].mxu0
      %v1632 = vpop.f32.mrb[0].mxu0
      %1633 = vmatprep.mubr.bf16.mxu0 %v368
      %1634 = vmatmul.mubr.bf16.gmra.mrb[0].mxu0 %v366
      %v1635 = vpop.f32.mrb[0].mxu0
      %v1636 = vpop.f32.mrb[0].mxu0
      %v1637 = vpop.f32.mrb[0].mxu0
      %v1638 = vadd.f32 0.0, %v1637
      %v1639 = vpop.f32.mrb[0].mxu0
      %1640 = vmatprep.mubr.bf16.mxu0 %v369
      %1641 = vmatmul.mubr.bf16.gmra.mrb[0].mxu0 %v367
      %v1642 = vpop.f32.mrb[0].mxu0
      %v1643 = vadd.f32 0.0, %v1642
      %v1644 = vpop.f32.mrb[0].mxu0
      %v1645 = vpop.f32.mrb[0].mxu0
      %v1646 = vadd.f32 0.0, %v1645
      %v1647 = vpop.f32.mrb[0].mxu0
      %1648 = vmatprep.mubr.bf16.mxu0 %v370
      %1649 = vmatmul.mubr.bf16.gmra.mrb[0].mxu0 %v368
      %v1650 = vpop.f32.mrb[0].mxu0
      %v1651 = vadd.f32 0.0, %v1650
      %v1652 = vpop.f32.mrb[0].mxu0
      %v1653 = vpop.f32.mrb[0].mxu0
      %v1654 = vadd.f32 0.0, %v1653
      %v1655 = vpop.f32.mrb[0].mxu0
      %1656 = vmatprep.mubr.bf16.mxu0 %v371
      %1657 = vmatmul.mubr.bf16.gmra.mrb[0].mxu0 %v369
      %v1658 = vpop.f32.mrb[0].mxu0
      %v1659 = vadd.f32 0.0, %v1658
      %v1660 = vpop.f32.mrb[0].mxu0
      %v1661 = vpop.f32.mrb[0].mxu0
      %v1662 = vpop.f32.mrb[0].mxu0
      %1663 = vmatprep.mubr.bf16.mxu0 %v372
      %1664 = vmatmul.mubr.bf16.gmra.mrb[0].mxu0 %v370
      %v1665 = vpop.f32.mrb[0].mxu0
      %v1666 = vpop.f32.mrb[0].mxu0
      %v1667 = vpop.f32.mrb[0].mxu0
      %v1668 = vadd.f32 0.0, %v1667
      %v1669 = vpop.f32.mrb[0].mxu0
      %1670 = vmatprep.mubr.bf16.mxu0 %v373
      %1671 = vmatmul.mubr.bf16.gmra.mrb[0].mxu0 %v371
      %v1672 = vpop.f32.mrb[0].mxu0
      %v1673 = vadd.f32 0.0, %v1672
      %v1674 = vpop.f32.mrb[0].mxu0
      %v1675 = vpop.f32.mrb[0].mxu0
      %v1676 = vadd.f32 0.0, %v1675
      %v1677 = vpop.f32.mrb[0].mxu0
      %1678 = vmatprep.mubr.bf16.mxu0 %v374
      %1679 = vmatmul.mubr.bf16.gmra.mrb[0].mxu0 %v372
      %v1680 = vpop.f32.mrb[0].mxu0
      %v1681 = vadd.f32 0.0, %v1680
      %v1682 = vpop.f32.mrb[0].mxu0
      %v1683 = vpop.f32.mrb[0].mxu0
      %v1684 = vadd.f32 0.0, %v1683
      %v1685 = vpop.f32.mrb[0].mxu0
      %1686 = vmatprep.mubr.bf16.mxu0 %v375
      %1687 = vmatmul.mubr.bf16.gmra.mrb[0].mxu0 %v373
      %v1688 = vpop.f32.mrb[0].mxu0
      %v1689 = vadd.f32 0.0, %v1688
      %v1690 = vpop.f32.mrb[0].mxu0
      %v1691 = vpop.f32.mrb[0].mxu0
      %v1692 = vpop.f32.mrb[0].mxu0
      %1693 = vmatprep.mubr.bf16.mxu0 %v376
      %1694 = vmatmul.mubr.bf16.gmra.mrb[0].mxu0 %v374
      %v1695 = vpop.f32.mrb[0].mxu0
      %v1696 = vpop.f32.mrb[0].mxu0
      %v1697 = vpop.f32.mrb[0].mxu0
      %v1698 = vadd.f32 0.0, %v1697
      %v1699 = vpop.f32.mrb[0].mxu0
      %1700 = vmatprep.mubr.bf16.mxu0 %v377
      %1701 = vmatmul.mubr.bf16.gmra.mrb[0].mxu0 %v375
      %v1702 = vpop.f32.mrb[0].mxu0
      %v1703 = vadd.f32 0.0, %v1702
      %v1704 = vpop.f32.mrb[0].mxu0
      %v1705 = vpop.f32.mrb[0].mxu0
      %v1706 = vadd.f32 0.0, %v1705
      %v1707 = vpop.f32.mrb[0].mxu0
      %1708 = vmatprep.mubr.bf16.mxu0 %v378
      %1709 = vmatmul.mubr.bf16.gmra.mrb[0].mxu0 %v376
      %v1710 = vpop.f32.mrb[0].mxu0
      %v1711 = vadd.f32 0.0, %v1710
      %v1712 = vpop.f32.mrb[0].mxu0
      %v1713 = vpop.f32.mrb[0].mxu0
      %v1714 = vadd.f32 0.0, %v1713
      %v1715 = vpop.f32.mrb[0].mxu0
      %1716 = vmatprep.mubr.bf16.mxu0 %v379
      %1717 = vmatmul.mubr.bf16.gmra.mrb[0].mxu0 %v377
      %v1718 = vpop.f32.mrb[0].mxu0
      %v1719 = vadd.f32 0.0, %v1718
      %v1720 = vpop.f32.mrb[0].mxu0
      %v1721 = vpop.f32.mrb[0].mxu0
      %v1722 = vpop.f32.mrb[0].mxu0
      %1723 = vmatprep.mubr.bf16.mxu0 %v380
      %1724 = vmatmul.mubr.bf16.gmra.mrb[0].mxu0 %v378
      %v1725 = vpop.f32.mrb[0].mxu0
      %v1726 = vpop.f32.mrb[0].mxu0
      %v1727 = vpop.f32.mrb[0].mxu0
      %v1728 = vadd.f32 0.0, %v1727
      %v1729 = vpop.f32.mrb[0].mxu0
      %1730 = vmatprep.mubr.bf16.mxu0 %v381
      %1731 = vmatmul.mubr.bf16.gmra.mrb[0].mxu0 %v379
      %v1732 = vpop.f32.mrb[0].mxu0
      %v1733 = vadd.f32 0.0, %v1732
      %v1734 = vpop.f32.mrb[0].mxu0
      %v1735 = vpop.f32.mrb[0].mxu0
      %v1736 = vadd.f32 0.0, %v1735
      %v1737 = vpop.f32.mrb[0].mxu0
      %1738 = vmatprep.mubr.bf16.mxu0 %v382
      %1739 = vmatmul.mubr.bf16.gmra.mrb[0].mxu0 %v380
      %v1740 = vpop.f32.mrb[0].mxu0
      %v1741 = vadd.f32 0.0, %v1740
      %v1742 = vpop.f32.mrb[0].mxu0
      %v1743 = vpop.f32.mrb[0].mxu0
      %v1744 = vadd.f32 0.0, %v1743
      %v1745 = vpop.f32.mrb[0].mxu0
      %1746 = vmatprep.mubr.bf16.mxu0 %v383
      %1747 = vmatmul.mubr.bf16.gmra.mrb[0].mxu0 %v381
      %v1748 = vpop.f32.mrb[0].mxu0
      %v1749 = vadd.f32 0.0, %v1748
      %v1750 = vpop.f32.mrb[0].mxu0
      %v1751 = vpop.f32.mrb[0].mxu0
      %v1752 = vpop.f32.mrb[0].mxu0
      %1753 = vmatprep.mubr.bf16.mxu0 %v384
      %1754 = vmatmul.mubr.bf16.gmra.mrb[0].mxu0 %v382
      %v1755 = vpop.f32.mrb[0].mxu0
      %v1756 = vpop.f32.mrb[0].mxu0
      %v1757 = vpop.f32.mrb[0].mxu0
      %v1758 = vadd.f32 0.0, %v1757
      %v1759 = vpop.f32.mrb[0].mxu0
      %1760 = vmatprep.mubr.bf16.mxu0 %v385
      %1761 = vmatmul.mubr.bf16.gmra.mrb[0].mxu0 %v383
      %v1762 = vpop.f32.mrb[0].mxu0
      %v1763 = vadd.f32 0.0, %v1762
      %v1764 = vpop.f32.mrb[0].mxu0
      %v1765 = vpop.f32.mrb[0].mxu0
      %v1766 = vadd.f32 0.0, %v1765
      %v1767 = vpop.f32.mrb[0].mxu0
      %1768 = vmatprep.mubr.bf16.mxu0 %v386
      %1769 = vmatmul.mubr.bf16.gmra.mrb[0].mxu0 %v384
      %v1770 = vpop.f32.mrb[0].mxu0
      %v1771 = vadd.f32 0.0, %v1770
      %v1772 = vpop.f32.mrb[0].mxu0
      %v1773 = vpop.f32.mrb[0].mxu0
      %v1774 = vadd.f32 0.0, %v1773
      %v1775 = vpop.f32.mrb[0].mxu0
      %1776 = vmatprep.mubr.bf16.mxu0 %v387
      %1777 = vmatmul.mubr.bf16.gmra.mrb[0].mxu0 %v385
      %v1778 = vpop.f32.mrb[0].mxu0
      %v1779 = vadd.f32 0.0, %v1778
      %v1780 = vpop.f32.mrb[0].mxu0
      %v1781 = vpop.f32.mrb[0].mxu0
      %v1782 = vpop.f32.mrb[0].mxu0
      %1783 = vmatprep.mubr.bf16.mxu0 %v388
      %1784 = vmatmul.mubr.bf16.gmra.mrb[0].mxu0 %v386
      %v1785 = vpop.f32.mrb[0].mxu0
      %v1786 = vpop.f32.mrb[0].mxu0
      %v1787 = vpop.f32.mrb[0].mxu0
      %v1788 = vadd.f32 0.0, %v1787
      %v1789 = vpop.f32.mrb[0].mxu0
      %1790 = vmatprep.mubr.bf16.mxu0 %v389
      %1791 = vmatmul.mubr.bf16.gmra.mrb[0].mxu0 %v387
      %v1792 = vpop.f32.mrb[0].mxu0
      %v1793 = vadd.f32 0.0, %v1792
      %v1794 = vpop.f32.mrb[0].mxu0
      %v1795 = vpop.f32.mrb[0].mxu0
      %v1796 = vadd.f32 0.0, %v1795
      %v1797 = vpop.f32.mrb[0].mxu0
      %1798 = vmatprep.mubr.bf16.mxu0 %v390
      %1799 = vmatmul.mubr.bf16.gmra.mrb[0].mxu0 %v388
      %v1800 = vpop.f32.mrb[0].mxu0
      %v1801 = vadd.f32 0.0, %v1800
      %v1802 = vpop.f32.mrb[0].mxu0
      %v1803 = vpop.f32.mrb[0].mxu0
      %v1804 = vadd.f32 0.0, %v1803
      %v1805 = vpop.f32.mrb[0].mxu0
      %1806 = vmatprep.mubr.bf16.mxu0 %v391
      %1807 = vmatmul.mubr.bf16.gmra.mrb[0].mxu0 %v389
      %v1808 = vpop.f32.mrb[0].mxu0
      %v1809 = vadd.f32 0.0, %v1808
      %v1810 = vpop.f32.mrb[0].mxu0
      %v1811 = vpop.f32.mrb[0].mxu0
      %v1812 = vpop.f32.mrb[0].mxu0
      %1813 = vmatprep.mubr.bf16.mxu0 %v392
      %1814 = vmatmul.mubr.bf16.gmra.mrb[0].mxu0 %v390
      %v1815 = vpop.f32.mrb[0].mxu0
      %v1816 = vpop.f32.mrb[0].mxu0
      %v1817 = vpop.f32.mrb[0].mxu0
      %v1818 = vpop.f32.mrb[0].mxu0
      %1819 = vmatprep.mubr.bf16.mxu0 %v393
      %1820 = vmatmul.mubr.bf16.gmra.mrb[0].mxu0 %v391
      %v1821 = vpop.f32.mrb[0].mxu0
      %v1822 = vpop.f32.mrb[0].mxu0
      %v1823 = vpop.f32.mrb[0].mxu0
      %v1824 = vpop.f32.mrb[0].mxu0
      %1825 = vdwg.mxu0
      %1826 = vmatprep.subr.bf16.mxu0 0
      %1827 = vmatpush1.bf16.msra.mxu0 %v782
      %1828 = vmatprep.subr.bf16.mxu0 0
      %1829 = vmatpush1.bf16.msra.mxu0 %v785
      %1830 = vmatprep.subr.bf16.mxu0 0
      %1831 = vmatpush1.bf16.msra.mxu0 %v788
      %1832 = vmatprep.subr.bf16.mxu0 0
      %1833 = vmatpush1.bf16.msra.mxu0 %v791
      %1834 = vmatprep.subr.bf16.mxu0 0
      %1835 = vmatpush1.bf16.msra.mxu0 %v794
      %1836 = vmatprep.subr.bf16.mxu0 0
      %1837 = vmatpush1.bf16.msra.mxu0 %v797
      %1838 = vmatprep.subr.bf16.mxu0 0
      %1839 = vmatpush1.bf16.msra.mxu0 %v800
      %1840 = vmatprep.subr.bf16.mxu0 0
      %1841 = vmatpush1.bf16.msra.mxu0 %v803
      %1842 = vmatprep.subr.bf16.mxu0 0
      %1843 = vmatpush1.bf16.msra.mxu0 0
      %1844 = vmatprep.subr.bf16.mxu0 0
      %1845 = vmatpush1.bf16.msra.mxu0 0
      %1846 = vmatprep.subr.bf16.mxu0 0
      %1847 = vmatpush1.bf16.msra.mxu0 0
      %1848 = vmatprep.subr.bf16.mxu0 0
      %1849 = vmatpush1.bf16.msra.mxu0 0
      %1850 = vmatprep.subr.bf16.mxu0 0
      %1851 = vmatpush1.bf16.msra.mxu0 0
      %1852 = vmatprep.subr.bf16.mxu0 0
      %1853 = vmatpush1.bf16.msra.mxu0 0
      %1854 = vmatprep.subr.bf16.mxu0 0
      %1855 = vmatpush1.bf16.msra.mxu0 0
      %1856 = vmatprep.subr.bf16.mxu0 0
      %1857 = vmatpush1.bf16.msra.mxu0 0
      %1858 = vmatprep.mubr.bf16.mxu0 0
      %1859 = vmatmul.mubr.bf16.gmra.mrb[0].mxu0 %v361
      %v1860 = vpop.f32.mrb[0].mxu0
      %v1861 = vpop.f32.mrb[0].mxu0
      %v1862 = vpop.f32.mrb[0].mxu0
      %v1863 = vpop.f32.mrb[0].mxu0
      %1864 = vmatprep.mubr.bf16.mxu0 0
      %1865 = vmatmul.mubr.bf16.gmra.mrb[0].mxu0 %v362
      %v1866 = vpop.f32.mrb[0].mxu0
      %v1867 = vpop.f32.mrb[0].mxu0
      %v1868 = vpop.f32.mrb[0].mxu0
      %v1869 = vpop.f32.mrb[0].mxu0
      %1870 = vmatprep.mubr.bf16.mxu0 0
      %1871 = vmatmul.mubr.bf16.gmra.mrb[0].mxu0 %v363
      %v1872 = vpop.f32.mrb[0].mxu0
      %v1873 = vadd.f32 %v1583, %v1872
      %v1874 = vpop.f32.mrb[0].mxu0
      %v1875 = vpop.f32.mrb[0].mxu0
      %v1876 = vadd.f32 %v1586, %v1875
      %v1877 = vpop.f32.mrb[0].mxu0
      %1878 = vmatprep.mubr.bf16.mxu0 0
      %1879 = vmatmul.mubr.bf16.gmra.mrb[0].mxu0 %v364
      %v1880 = vpop.f32.mrb[0].mxu0
      %v1881 = vadd.f32 %v1591, %v1880
      %v1882 = vpop.f32.mrb[0].mxu0
      %v1883 = vpop.f32.mrb[0].mxu0
      %v1884 = vadd.f32 %v1594, %v1883
      %v1885 = vpop.f32.mrb[0].mxu0
      %1886 = vmatprep.mubr.bf16.mxu0 0
      %1887 = vmatmul.mubr.bf16.gmra.mrb[0].mxu0 %v365
      %v1888 = vpop.f32.mrb[0].mxu0
      %v1889 = vadd.f32 %v1599, %v1888
      %v1890 = vpop.f32.mrb[0].mxu0
      %v1891 = vpop.f32.mrb[0].mxu0
      %v1892 = vpop.f32.mrb[0].mxu0
      %1893 = vmatprep.mubr.bf16.mxu0 0
      %1894 = vmatmul.mubr.bf16.gmra.mrb[0].mxu0 %v366
      %v1895 = vpop.f32.mrb[0].mxu0
      %v1896 = vpop.f32.mrb[0].mxu0
      %v1897 = vpop.f32.mrb[0].mxu0
      %v1898 = vadd.f32 %v1608, %v1897
      %v1899 = vpop.f32.mrb[0].mxu0
      %1900 = vmatprep.mubr.bf16.mxu0 0
      %1901 = vmatmul.mubr.bf16.gmra.mrb[0].mxu0 %v367
      %v1902 = vpop.f32.mrb[0].mxu0
      %v1903 = vadd.f32 %v1613, %v1902
      %v1904 = vpop.f32.mrb[0].mxu0
      %v1905 = vpop.f32.mrb[0].mxu0
      %v1906 = vadd.f32 %v1616, %v1905
      %v1907 = vpop.f32.mrb[0].mxu0
      %1908 = vmatprep.mubr.bf16.mxu0 0
      %1909 = vmatmul.mubr.bf16.gmra.mrb[0].mxu0 %v368
      %v1910 = vpop.f32.mrb[0].mxu0
      %v1911 = vadd.f32 %v1621, %v1910
      %v1912 = vpop.f32.mrb[0].mxu0
      %v1913 = vpop.f32.mrb[0].mxu0
      %v1914 = vadd.f32 %v1624, %v1913
      %v1915 = vpop.f32.mrb[0].mxu0
      %1916 = vmatprep.mubr.bf16.mxu0 0
      %1917 = vmatmul.mubr.bf16.gmra.mrb[0].mxu0 %v369
      %v1918 = vpop.f32.mrb[0].mxu0
      %v1919 = vadd.f32 %v1629, %v1918
      %v1920 = vpop.f32.mrb[0].mxu0
      %v1921 = vpop.f32.mrb[0].mxu0
      %v1922 = vpop.f32.mrb[0].mxu0
      %1923 = vmatprep.mubr.bf16.mxu0 0
      %1924 = vmatmul.mubr.bf16.gmra.mrb[0].mxu0 %v370
      %v1925 = vpop.f32.mrb[0].mxu0
      %v1926 = vpop.f32.mrb[0].mxu0
      %v1927 = vpop.f32.mrb[0].mxu0
      %v1928 = vadd.f32 %v1638, %v1927
      %v1929 = vpop.f32.mrb[0].mxu0
      %1930 = vmatprep.mubr.bf16.mxu0 0
      %1931 = vmatmul.mubr.bf16.gmra.mrb[0].mxu0 %v371
      %v1932 = vpop.f32.mrb[0].mxu0
      %v1933 = vadd.f32 %v1643, %v1932
      %v1934 = vpop.f32.mrb[0].mxu0
      %v1935 = vpop.f32.mrb[0].mxu0
      %v1936 = vadd.f32 %v1646, %v1935
      %v1937 = vpop.f32.mrb[0].mxu0
      %1938 = vmatprep.mubr.bf16.mxu0 0
      %1939 = vmatmul.mubr.bf16.gmra.mrb[0].mxu0 %v372
      %v1940 = vpop.f32.mrb[0].mxu0
      %v1941 = vadd.f32 %v1651, %v1940
      %v1942 = vpop.f32.mrb[0].mxu0
      %v1943 = vpop.f32.mrb[0].mxu0
      %v1944 = vadd.f32 %v1654, %v1943
      %v1945 = vpop.f32.mrb[0].mxu0
      %1946 = vmatprep.mubr.bf16.mxu0 0
      %1947 = vmatmul.mubr.bf16.gmra.mrb[0].mxu0 %v373
      %v1948 = vpop.f32.mrb[0].mxu0
      %v1949 = vadd.f32 %v1659, %v1948
      %v1950 = vpop.f32.mrb[0].mxu0
      %v1951 = vpop.f32.mrb[0].mxu0
      %v1952 = vpop.f32.mrb[0].mxu0
      %1953 = vmatprep.mubr.bf16.mxu0 0
      %1954 = vmatmul.mubr.bf16.gmra.mrb[0].mxu0 %v374
      %v1955 = vpop.f32.mrb[0].mxu0
      %v1956 = vpop.f32.mrb[0].mxu0
      %v1957 = vpop.f32.mrb[0].mxu0
      %v1958 = vadd.f32 %v1668, %v1957
      %v1959 = vpop.f32.mrb[0].mxu0
      %1960 = vmatprep.mubr.bf16.mxu0 0
      %1961 = vmatmul.mubr.bf16.gmra.mrb[0].mxu0 %v375
      %v1962 = vpop.f32.mrb[0].mxu0
      %v1963 = vadd.f32 %v1673, %v1962
      %v1964 = vpop.f32.mrb[0].mxu0
      %v1965 = vpop.f32.mrb[0].mxu0
      %v1966 = vadd.f32 %v1676, %v1965
      %v1967 = vpop.f32.mrb[0].mxu0
      %1968 = vmatprep.mubr.bf16.mxu0 0
      %1969 = vmatmul.mubr.bf16.gmra.mrb[0].mxu0 %v376
      %v1970 = vpop.f32.mrb[0].mxu0
      %v1971 = vadd.f32 %v1681, %v1970
      %v1972 = vpop.f32.mrb[0].mxu0
      %v1973 = vpop.f32.mrb[0].mxu0
      %v1974 = vadd.f32 %v1684, %v1973
      %v1975 = vpop.f32.mrb[0].mxu0
      %1976 = vmatprep.mubr.bf16.mxu0 0
      %1977 = vmatmul.mubr.bf16.gmra.mrb[0].mxu0 %v377
      %v1978 = vpop.f32.mrb[0].mxu0
      %v1979 = vadd.f32 %v1689, %v1978
      %v1980 = vpop.f32.mrb[0].mxu0
      %v1981 = vpop.f32.mrb[0].mxu0
      %v1982 = vpop.f32.mrb[0].mxu0
      %1983 = vmatprep.mubr.bf16.mxu0 0
      %1984 = vmatmul.mubr.bf16.gmra.mrb[0].mxu0 %v378
      %v1985 = vpop.f32.mrb[0].mxu0
      %v1986 = vpop.f32.mrb[0].mxu0
      %v1987 = vpop.f32.mrb[0].mxu0
      %v1988 = vadd.f32 %v1698, %v1987
      %v1989 = vpop.f32.mrb[0].mxu0
      %1990 = vmatprep.mubr.bf16.mxu0 0
      %1991 = vmatmul.mubr.bf16.gmra.mrb[0].mxu0 %v379
      %v1992 = vpop.f32.mrb[0].mxu0
      %v1993 = vadd.f32 %v1703, %v1992
      %v1994 = vpop.f32.mrb[0].mxu0
      %v1995 = vpop.f32.mrb[0].mxu0
      %v1996 = vadd.f32 %v1706, %v1995
      %v1997 = vpop.f32.mrb[0].mxu0
      %1998 = vmatprep.mubr.bf16.mxu0 0
      %1999 = vmatmul.mubr.bf16.gmra.mrb[0].mxu0 %v380
      %v2000 = vpop.f32.mrb[0].mxu0
      %v2001 = vadd.f32 %v1711, %v2000
      %v2002 = vpop.f32.mrb[0].mxu0
      %v2003 = vpop.f32.mrb[0].mxu0
      %v2004 = vadd.f32 %v1714, %v2003
      %v2005 = vpop.f32.mrb[0].mxu0
      %2006 = vmatprep.mubr.bf16.mxu0 0
      %2007 = vmatmul.mubr.bf16.gmra.mrb[0].mxu0 %v381
      %v2008 = vpop.f32.mrb[0].mxu0
      %v2009 = vadd.f32 %v1719, %v2008
      %v2010 = vpop.f32.mrb[0].mxu0
      %v2011 = vpop.f32.mrb[0].mxu0
      %v2012 = vpop.f32.mrb[0].mxu0
      %2013 = vmatprep.mubr.bf16.mxu0 0
      %2014 = vmatmul.mubr.bf16.gmra.mrb[0].mxu0 %v382
      %v2015 = vpop.f32.mrb[0].mxu0
      %v2016 = vpop.f32.mrb[0].mxu0
      %v2017 = vpop.f32.mrb[0].mxu0
      %v2018 = vadd.f32 %v1728, %v2017
      %v2019 = vpop.f32.mrb[0].mxu0
      %2020 = vmatprep.mubr.bf16.mxu0 0
      %2021 = vmatmul.mubr.bf16.gmra.mrb[0].mxu0 %v383
      %v2022 = vpop.f32.mrb[0].mxu0
      %v2023 = vadd.f32 %v1733, %v2022
      %v2024 = vpop.f32.mrb[0].mxu0
      %v2025 = vpop.f32.mrb[0].mxu0
      %v2026 = vadd.f32 %v1736, %v2025
      %v2027 = vpop.f32.mrb[0].mxu0
      %2028 = vmatprep.mubr.bf16.mxu0 0
      %2029 = vmatmul.mubr.bf16.gmra.mrb[0].mxu0 %v384
      %v2030 = vpop.f32.mrb[0].mxu0
      %v2031 = vadd.f32 %v1741, %v2030
      %v2032 = vpop.f32.mrb[0].mxu0
      %v2033 = vpop.f32.mrb[0].mxu0
      %v2034 = vadd.f32 %v1744, %v2033
      %v2035 = vpop.f32.mrb[0].mxu0
      %2036 = vmatprep.mubr.bf16.mxu0 0
      %2037 = vmatmul.mubr.bf16.gmra.mrb[0].mxu0 %v385
      %v2038 = vpop.f32.mrb[0].mxu0
      %v2039 = vadd.f32 %v1749, %v2038
      %v2040 = vpop.f32.mrb[0].mxu0
      %v2041 = vpop.f32.mrb[0].mxu0
      %v2042 = vpop.f32.mrb[0].mxu0
      %2043 = vmatprep.mubr.bf16.mxu0 0
      %2044 = vmatmul.mubr.bf16.gmra.mrb[0].mxu0 %v386
      %v2045 = vpop.f32.mrb[0].mxu0
      %v2046 = vpop.f32.mrb[0].mxu0
      %v2047 = vpop.f32.mrb[0].mxu0
      %v2048 = vadd.f32 %v1758, %v2047
      %v2049 = vpop.f32.mrb[0].mxu0
      %2050 = vmatprep.mubr.bf16.mxu0 0
      %2051 = vmatmul.mubr.bf16.gmra.mrb[0].mxu0 %v387
      %v2052 = vpop.f32.mrb[0].mxu0
      %v2053 = vadd.f32 %v1763, %v2052
      %v2054 = vpop.f32.mrb[0].mxu0
      %v2055 = vpop.f32.mrb[0].mxu0
      %v2056 = vadd.f32 %v1766, %v2055
      %v2057 = vpop.f32.mrb[0].mxu0
      %2058 = vmatprep.mubr.bf16.mxu0 0
      %2059 = vmatmul.mubr.bf16.gmra.mrb[0].mxu0 %v388
      %v2060 = vpop.f32.mrb[0].mxu0
      %v2061 = vadd.f32 %v1771, %v2060
      %v2062 = vpop.f32.mrb[0].mxu0
      %v2063 = vpop.f32.mrb[0].mxu0
      %v2064 = vadd.f32 %v1774, %v2063
      %v2065 = vpop.f32.mrb[0].mxu0
      %2066 = vmatprep.mubr.bf16.mxu0 0
      %2067 = vmatmul.mubr.bf16.gmra.mrb[0].mxu0 %v389
      %v2068 = vpop.f32.mrb[0].mxu0
      %v2069 = vadd.f32 %v1779, %v2068
      %v2070 = vpop.f32.mrb[0].mxu0
      %v2071 = vpop.f32.mrb[0].mxu0
      %v2072 = vpop.f32.mrb[0].mxu0
      %2073 = vmatprep.mubr.bf16.mxu0 0
      %2074 = vmatmul.mubr.bf16.gmra.mrb[0].mxu0 %v390
      %v2075 = vpop.f32.mrb[0].mxu0
      %v2076 = vpop.f32.mrb[0].mxu0
      %v2077 = vpop.f32.mrb[0].mxu0
      %v2078 = vadd.f32 %v1788, %v2077
      %v2079 = vpop.f32.mrb[0].mxu0
      %2080 = vmatprep.mubr.bf16.mxu0 0
      %2081 = vmatmul.mubr.bf16.gmra.mrb[0].mxu0 %v391
      %v2082 = vpop.f32.mrb[0].mxu0
      %v2083 = vadd.f32 %v1793, %v2082
      %v2084 = vpop.f32.mrb[0].mxu0
      %v2085 = vpop.f32.mrb[0].mxu0
      %v2086 = vadd.f32 %v1796, %v2085
      %v2087 = vpop.f32.mrb[0].mxu0
      %2088 = vmatprep.mubr.bf16.mxu0 0
      %2089 = vmatmul.mubr.bf16.gmra.mrb[0].mxu0 %v392
      %v2090 = vpop.f32.mrb[0].mxu0
      %v2091 = vadd.f32 %v1801, %v2090
      %v2092 = vpop.f32.mrb[0].mxu0
      %v2093 = vpop.f32.mrb[0].mxu0
      %v2094 = vadd.f32 %v1804, %v2093
      %v2095 = vpop.f32.mrb[0].mxu0
      %2096 = vmatprep.mubr.bf16.mxu0 0
      %2097 = vmatmul.mubr.bf16.gmra.mrb[0].mxu0 %v393
      %v2098 = vpop.f32.mrb[0].mxu0
      %v2099 = vadd.f32 %v1809, %v2098
      %v2100 = vpop.f32.mrb[0].mxu0
      %v2101 = vpop.f32.mrb[0].mxu0
      %v2102 = vpop.f32.mrb[0].mxu0
      %2103 = vmatprep.mubr.bf16.mxu0 0
      %2104 = vmatmul.mubr.bf16.gmra.mrb[0].mxu0 %v394
      %v2105 = vpop.f32.mrb[0].mxu0
      %v2106 = vpop.f32.mrb[0].mxu0
      %v2107 = vpop.f32.mrb[0].mxu0
      %v2108 = vpop.f32.mrb[0].mxu0
      %2109 = vmatprep.mubr.bf16.mxu0 0
      %2110 = vmatmul.mubr.bf16.gmra.mrb[0].mxu0 %v395
      %v2111 = vpop.f32.mrb[0].mxu0
      %v2112 = vpop.f32.mrb[0].mxu0
      %v2113 = vpop.f32.mrb[0].mxu0
      %v2114 = vpop.f32.mrb[0].mxu0
      %2115 = vdwg.mxu0
      %vm2163 = vcmask 1046528
      %v2164 = vrot.slane %v1256, 1
      %v2165 = vrot.slane %v1260, 1
      %v2166 = vsel %vm2163, %v2164, %v2165
      %v2167 = vrot.slane %v1266, 1
      %v2168 = vsel %vm2163, %v2165, %v2167
      %v2169 = vrot.slane %v1270, 1
      %v2170 = vsel %vm2163, %v2167, %v2169
      %v2171 = vrot.slane %v1275, 1
      %v2172 = vsel %vm2163, %v2169, %v2171
      %v2173 = vrot.slane %v1285, 1
      %v2174 = vrot.slane %v1291, 1
      %v2175 = vsel %vm2163, %v2173, %v2174
      %v2176 = vrot.slane %v1295, 1
      %v2177 = vsel %vm2163, %v2174, %v2176
      %v2178 = vrot.slane %v1301, 1
      %v2179 = vsel %vm2163, %v2176, %v2178
      %v2180 = vrot.slane %v1305, 1
      %v2181 = vsel %vm2163, %v2178, %v2180
      %v2182 = vrot.slane %v1310, 1
      %v2183 = vsel %vm2163, %v2180, %v2182
      %v2184 = vrot.slane %v1320, 1
      %v2185 = vrot.slane %v1326, 1
      %v2186 = vsel %vm2163, %v2184, %v2185
      %v2187 = vrot.slane %v1330, 1
      %v2188 = vsel %vm2163, %v2185, %v2187
      %v2189 = vrot.slane %v1336, 1
      %v2190 = vsel %vm2163, %v2187, %v2189
      %v2191 = vrot.slane %v1340, 1
      %v2192 = vsel %vm2163, %v2189, %v2191
      %v2193 = vrot.slane %v1345, 1
      %v2194 = vsel %vm2163, %v2191, %v2193
      %v2195 = vrot.slane %v1355, 1
      %v2196 = vrot.slane %v1361, 1
      %v2197 = vsel %vm2163, %v2195, %v2196
      %v2198 = vrot.slane %v1365, 1
      %v2199 = vsel %vm2163, %v2196, %v2198
      %v2200 = vrot.slane %v1371, 1
      %v2201 = vsel %vm2163, %v2198, %v2200
      %v2202 = vrot.slane %v1375, 1
      %v2203 = vsel %vm2163, %v2200, %v2202
      %v2204 = vrot.slane %v1380, 1
      %v2205 = vsel %vm2163, %v2202, %v2204
      %v2206 = vrot.slane %v1390, 1
      %v2207 = vrot.slane %v1396, 1
      %v2208 = vsel %vm2163, %v2206, %v2207
      %v2209 = vrot.slane %v1400, 1
      %v2210 = vsel %vm2163, %v2207, %v2209
      %v2211 = vrot.slane %v1406, 1
      %v2212 = vsel %vm2163, %v2209, %v2211
      %v2213 = vrot.slane %v1410, 1
      %v2214 = vsel %vm2163, %v2211, %v2213
      %v2215 = vrot.slane %v1415, 1
      %v2216 = vsel %vm2163, %v2213, %v2215
      %v2217 = vrot.slane %v1425, 1
      %v2218 = vrot.slane %v1431, 1
      %v2219 = vsel %vm2163, %v2217, %v2218
      %v2220 = vrot.slane %v1435, 1
      %v2221 = vsel %vm2163, %v2218, %v2220
      %v2222 = vrot.slane %v1441, 1
      %v2223 = vsel %vm2163, %v2220, %v2222
      %v2224 = vrot.slane %v1445, 1
      %v2225 = vsel %vm2163, %v2222, %v2224
      %v2226 = vrot.slane %v1450, 1
      %v2227 = vsel %vm2163, %v2224, %v2226
      %v2228 = vrot.slane %v1460, 1
      %v2229 = vrot.slane %v1466, 1
      %v2230 = vsel %vm2163, %v2228, %v2229
      %v2231 = vrot.slane %v1470, 1
      %v2232 = vsel %vm2163, %v2229, %v2231
      %v2233 = vrot.slane %v1476, 1
      %v2234 = vsel %vm2163, %v2231, %v2233
      %v2235 = vrot.slane %v1480, 1
      %v2236 = vsel %vm2163, %v2233, %v2235
      %v2237 = vrot.slane %v1485, 1
      %v2238 = vsel %vm2163, %v2235, %v2237
      %v2239 = vrot.slane %v1495, 1
      %v2240 = vrot.slane %v1501, 1
      %v2241 = vsel %vm2163, %v2239, %v2240
      %v2242 = vrot.slane %v1505, 1
      %v2243 = vsel %vm2163, %v2240, %v2242
      %v2244 = vrot.slane %v1511, 1
      %v2245 = vsel %vm2163, %v2242, %v2244
      %v2246 = vrot.slane %v1515, 1
      %v2247 = vsel %vm2163, %v2244, %v2246
      %v2248 = vrot.slane %v1520, 1
      %v2249 = vsel %vm2163, %v2246, %v2248
      %v2290 = vadd.f32 %v1249, %v2164
      %v2291 = vadd.f32 %v1254, %v2166
      %v2292 = vadd.f32 %v1258, %v2168
      %v2293 = vadd.f32 %v1264, %v2170
      %v2294 = vadd.f32 %v1268, %v2172
      %v2295 = vadd.f32 %v1283, %v2175
      %v2296 = vadd.f32 %v1289, %v2177
      %v2297 = vadd.f32 %v1293, %v2179
      %v2298 = vadd.f32 %v1299, %v2181
      %v2299 = vadd.f32 %v1303, %v2183
      %v2300 = vadd.f32 %v1318, %v2186
      %v2301 = vadd.f32 %v1324, %v2188
      %v2302 = vadd.f32 %v1328, %v2190
      %v2303 = vadd.f32 %v1334, %v2192
      %v2304 = vadd.f32 %v1338, %v2194
      %v2305 = vadd.f32 %v1353, %v2197
      %v2306 = vadd.f32 %v1359, %v2199
      %v2307 = vadd.f32 %v1363, %v2201
      %v2308 = vadd.f32 %v1369, %v2203
      %v2309 = vadd.f32 %v1373, %v2205
      %v2310 = vadd.f32 %v1388, %v2208
      %v2311 = vadd.f32 %v1394, %v2210
      %v2312 = vadd.f32 %v1398, %v2212
      %v2313 = vadd.f32 %v1404, %v2214
      %v2314 = vadd.f32 %v1408, %v2216
      %v2315 = vadd.f32 %v1423, %v2219
      %v2316 = vadd.f32 %v1429, %v2221
      %v2317 = vadd.f32 %v1433, %v2223
      %v2318 = vadd.f32 %v1439, %v2225
      %v2319 = vadd.f32 %v1443, %v2227
      %v2320 = vadd.f32 %v1458, %v2230
      %v2321 = vadd.f32 %v1464, %v2232
      %v2322 = vadd.f32 %v1468, %v2234
      %v2323 = vadd.f32 %v1474, %v2236
      %v2324 = vadd.f32 %v1478, %v2238
      %v2325 = vadd.f32 %v1493, %v2241
      %v2326 = vadd.f32 %v1499, %v2243
      %v2327 = vadd.f32 %v1503, %v2245
      %v2328 = vadd.f32 %v1509, %v2247
      %v2329 = vadd.f32 %v1513, %v2249
      %vm2377 = vcmask 1045504
      %v2378 = vrot.slane %v1873, 2
      %v2379 = vrot.slane %v1876, 2
      %v2380 = vsel %vm2377, %v2378, %v2379
      %v2381 = vrot.slane %v1881, 2
      %v2382 = vsel %vm2377, %v2379, %v2381
      %v2383 = vrot.slane %v1884, 2
      %v2384 = vsel %vm2377, %v2381, %v2383
      %v2385 = vrot.slane %v1889, 2
      %v2386 = vsel %vm2377, %v2383, %v2385
      %v2387 = vrot.slane %v1898, 2
      %v2388 = vrot.slane %v1903, 2
      %v2389 = vsel %vm2377, %v2387, %v2388
      %v2390 = vrot.slane %v1906, 2
      %v2391 = vsel %vm2377, %v2388, %v2390
      %v2392 = vrot.slane %v1911, 2
      %v2393 = vsel %vm2377, %v2390, %v2392
      %v2394 = vrot.slane %v1914, 2
      %v2395 = vsel %vm2377, %v2392, %v2394
      %v2396 = vrot.slane %v1919, 2
      %v2397 = vsel %vm2377, %v2394, %v2396
      %v2398 = vrot.slane %v1928, 2
      %v2399 = vrot.slane %v1933, 2
      %v2400 = vsel %vm2377, %v2398, %v2399
      %v2401 = vrot.slane %v1936, 2
      %v2402 = vsel %vm2377, %v2399, %v2401
      %v2403 = vrot.slane %v1941, 2
      %v2404 = vsel %vm2377, %v2401, %v2403
      %v2405 = vrot.slane %v1944, 2
      %v2406 = vsel %vm2377, %v2403, %v2405
      %v2407 = vrot.slane %v1949, 2
      %v2408 = vsel %vm2377, %v2405, %v2407
      %v2409 = vrot.slane %v1958, 2
      %v2410 = vrot.slane %v1963, 2
      %v2411 = vsel %vm2377, %v2409, %v2410
      %v2412 = vrot.slane %v1966, 2
      %v2413 = vsel %vm2377, %v2410, %v2412
      %v2414 = vrot.slane %v1971, 2
      %v2415 = vsel %vm2377, %v2412, %v2414
      %v2416 = vrot.slane %v1974, 2
      %v2417 = vsel %vm2377, %v2414, %v2416
      %v2418 = vrot.slane %v1979, 2
      %v2419 = vsel %vm2377, %v2416, %v2418
      %v2420 = vrot.slane %v1988, 2
      %v2421 = vrot.slane %v1993, 2
      %v2422 = vsel %vm2377, %v2420, %v2421
      %v2423 = vrot.slane %v1996, 2
      %v2424 = vsel %vm2377, %v2421, %v2423
      %v2425 = vrot.slane %v2001, 2
      %v2426 = vsel %vm2377, %v2423, %v2425
      %v2427 = vrot.slane %v2004, 2
      %v2428 = vsel %vm2377, %v2425, %v2427
      %v2429 = vrot.slane %v2009, 2
      %v2430 = vsel %vm2377, %v2427, %v2429
      %v2431 = vrot.slane %v2018, 2
      %v2432 = vrot.slane %v2023, 2
      %v2433 = vsel %vm2377, %v2431, %v2432
      %v2434 = vrot.slane %v2026, 2
      %v2435 = vsel %vm2377, %v2432, %v2434
      %v2436 = vrot.slane %v2031, 2
      %v2437 = vsel %vm2377, %v2434, %v2436
      %v2438 = vrot.slane %v2034, 2
      %v2439 = vsel %vm2377, %v2436, %v2438
      %v2440 = vrot.slane %v2039, 2
      %v2441 = vsel %vm2377, %v2438, %v2440
      %v2442 = vrot.slane %v2048, 2
      %v2443 = vrot.slane %v2053, 2
      %v2444 = vsel %vm2377, %v2442, %v2443
      %v2445 = vrot.slane %v2056, 2
      %v2446 = vsel %vm2377, %v2443, %v2445
      %v2447 = vrot.slane %v2061, 2
      %v2448 = vsel %vm2377, %v2445, %v2447
      %v2449 = vrot.slane %v2064, 2
      %v2450 = vsel %vm2377, %v2447, %v2449
      %v2451 = vrot.slane %v2069, 2
      %v2452 = vsel %vm2377, %v2449, %v2451
      %v2453 = vrot.slane %v2078, 2
      %v2454 = vrot.slane %v2083, 2
      %v2455 = vsel %vm2377, %v2453, %v2454
      %v2456 = vrot.slane %v2086, 2
      %v2457 = vsel %vm2377, %v2454, %v2456
      %v2458 = vrot.slane %v2091, 2
      %v2459 = vsel %vm2377, %v2456, %v2458
      %v2460 = vrot.slane %v2094, 2
      %v2461 = vsel %vm2377, %v2458, %v2460
      %v2462 = vrot.slane %v2099, 2
      %v2463 = vsel %vm2377, %v2460, %v2462
      %v2504 = vadd.f32 %v2290, %v2378
      %v2505 = vadd.f32 %v2291, %v2380
      %v2506 = vadd.f32 %v2292, %v2382
      %v2507 = vadd.f32 %v2293, %v2384
      %v2508 = vadd.f32 %v2294, %v2386
      %v2509 = vadd.f32 %v2295, %v2389
      %v2510 = vadd.f32 %v2296, %v2391
      %v2511 = vadd.f32 %v2297, %v2393
      %v2512 = vadd.f32 %v2298, %v2395
      %v2513 = vadd.f32 %v2299, %v2397
      %v2514 = vadd.f32 %v2300, %v2400
      %v2515 = vadd.f32 %v2301, %v2402
      %v2516 = vadd.f32 %v2302, %v2404
      %v2517 = vadd.f32 %v2303, %v2406
      %v2518 = vadd.f32 %v2304, %v2408
      %v2519 = vadd.f32 %v2305, %v2411
      %v2520 = vadd.f32 %v2306, %v2413
      %v2521 = vadd.f32 %v2307, %v2415
      %v2522 = vadd.f32 %v2308, %v2417
      %v2523 = vadd.f32 %v2309, %v2419
      %v2524 = vadd.f32 %v2310, %v2422
      %v2525 = vadd.f32 %v2311, %v2424
      %v2526 = vadd.f32 %v2312, %v2426
      %v2527 = vadd.f32 %v2313, %v2428
      %v2528 = vadd.f32 %v2314, %v2430
      %v2529 = vadd.f32 %v2315, %v2433
      %v2530 = vadd.f32 %v2316, %v2435
      %v2531 = vadd.f32 %v2317, %v2437
      %v2532 = vadd.f32 %v2318, %v2439
      %v2533 = vadd.f32 %v2319, %v2441
      %v2534 = vadd.f32 %v2320, %v2444
      %v2535 = vadd.f32 %v2321, %v2446
      %v2536 = vadd.f32 %v2322, %v2448
      %v2537 = vadd.f32 %v2323, %v2450
      %v2538 = vadd.f32 %v2324, %v2452
      %v2539 = vadd.f32 %v2325, %v2455
      %v2540 = vadd.f32 %v2326, %v2457
      %v2541 = vadd.f32 %v2327, %v2459
      %v2542 = vadd.f32 %v2328, %v2461
      %v2543 = vadd.f32 %v2329, %v2463
      %v2544 = vld [vmem:[%s2] sm:$0x1]
      %v2546 = vlaneseq
      %v2547 = vshrl.u32 %v2546, 7
      %v2548 = vsub.s32 0, %v2547
      %v2549 = vrot.slane %v2544, %v2548
      %v2551 = vadd.f32 %v2504, %v2549
      %v2552 = vadd.f32 %v2505, %v2549
      %v2553 = vadd.f32 %v2506, %v2549
      %v2554 = vadd.f32 %v2507, %v2549
      %v2555 = vadd.f32 %v2508, %v2549
      %v2556 = vadd.f32 %v2509, %v2549
      %v2557 = vadd.f32 %v2510, %v2549
      %v2558 = vadd.f32 %v2511, %v2549
      %v2559 = vadd.f32 %v2512, %v2549
      %v2560 = vadd.f32 %v2513, %v2549
      %v2561 = vadd.f32 %v2514, %v2549
      %v2562 = vadd.f32 %v2515, %v2549
      %v2563 = vadd.f32 %v2516, %v2549
      %v2564 = vadd.f32 %v2517, %v2549
      %v2565 = vadd.f32 %v2518, %v2549
      %v2566 = vadd.f32 %v2519, %v2549
      %v2567 = vadd.f32 %v2520, %v2549
      %v2568 = vadd.f32 %v2521, %v2549
      %v2569 = vadd.f32 %v2522, %v2549
      %v2570 = vadd.f32 %v2523, %v2549
      %v2571 = vadd.f32 %v2524, %v2549
      %v2572 = vadd.f32 %v2525, %v2549
      %v2573 = vadd.f32 %v2526, %v2549
      %v2574 = vadd.f32 %v2527, %v2549
      %v2575 = vadd.f32 %v2528, %v2549
      %v2576 = vadd.f32 %v2529, %v2549
      %v2577 = vadd.f32 %v2530, %v2549
      %v2578 = vadd.f32 %v2531, %v2549
      %v2579 = vadd.f32 %v2532, %v2549
      %v2580 = vadd.f32 %v2533, %v2549
      %v2581 = vadd.f32 %v2534, %v2549
      %v2582 = vadd.f32 %v2535, %v2549
      %v2583 = vadd.f32 %v2536, %v2549
      %v2584 = vadd.f32 %v2537, %v2549
      %v2585 = vadd.f32 %v2538, %v2549
      %v2586 = vadd.f32 %v2539, %v2549
      %v2587 = vadd.f32 %v2540, %v2549
      %v2588 = vadd.f32 %v2541, %v2549
      %v2589 = vadd.f32 %v2542, %v2549
      %v2590 = vadd.f32 %v2543, %v2549
      %v2591 = vmax.f32 %v2551, 0.0
      %v2592 = vmax.f32 %v2552, 0.0
      %v2593 = vmax.f32 %v2553, 0.0
      %v2594 = vmax.f32 %v2554, 0.0
      %v2595 = vmax.f32 %v2555, 0.0
      %v2596 = vmax.f32 %v2556, 0.0
      %v2597 = vmax.f32 %v2557, 0.0
      %v2598 = vmax.f32 %v2558, 0.0
      %v2599 = vmax.f32 %v2559, 0.0
      %v2600 = vmax.f32 %v2560, 0.0
      %v2601 = vmax.f32 %v2561, 0.0
      %v2602 = vmax.f32 %v2562, 0.0
      %v2603 = vmax.f32 %v2563, 0.0
      %v2604 = vmax.f32 %v2564, 0.0
      %v2605 = vmax.f32 %v2565, 0.0
      %v2606 = vmax.f32 %v2566, 0.0
      %v2607 = vmax.f32 %v2567, 0.0
      %v2608 = vmax.f32 %v2568, 0.0
      %v2609 = vmax.f32 %v2569, 0.0
      %v2610 = vmax.f32 %v2570, 0.0
      %v2611 = vmax.f32 %v2571, 0.0
      %v2612 = vmax.f32 %v2572, 0.0
      %v2613 = vmax.f32 %v2573, 0.0
      %v2614 = vmax.f32 %v2574, 0.0
      %v2615 = vmax.f32 %v2575, 0.0
      %v2616 = vmax.f32 %v2576, 0.0
      %v2617 = vmax.f32 %v2577, 0.0
      %v2618 = vmax.f32 %v2578, 0.0
      %v2619 = vmax.f32 %v2579, 0.0
      %v2620 = vmax.f32 %v2580, 0.0
      %v2621 = vmax.f32 %v2581, 0.0
      %v2622 = vmax.f32 %v2582, 0.0
      %v2623 = vmax.f32 %v2583, 0.0
      %v2624 = vmax.f32 %v2584, 0.0
      %v2625 = vmax.f32 %v2585, 0.0
      %v2626 = vmax.f32 %v2586, 0.0
      %v2627 = vmax.f32 %v2587, 0.0
      %v2628 = vmax.f32 %v2588, 0.0
      %v2629 = vmax.f32 %v2589, 0.0
      %v2630 = vmax.f32 %v2590, 0.0
      %vm2671 = vcmask 1040384
      %v2672 = vrot.slane %v2591, 7
      %v2673 = vrot.slane %v2592, 7
      %v2674 = vsel %vm2671, %v2672, %v2673
      %v2675 = vrot.slane %v2593, 7
      %v2676 = vsel %vm2671, %v2673, %v2675
      %v2677 = vrot.slane %v2594, 7
      %v2678 = vsel %vm2671, %v2675, %v2677
      %v2679 = vrot.slane %v2595, 7
      %v2680 = vsel %vm2671, %v2677, %v2679
      %v2681 = vrot.slane %v2596, 7
      %v2682 = vrot.slane %v2597, 7
      %v2683 = vsel %vm2671, %v2681, %v2682
      %v2684 = vrot.slane %v2598, 7
      %v2685 = vsel %vm2671, %v2682, %v2684
      %v2686 = vrot.slane %v2599, 7
      %v2687 = vsel %vm2671, %v2684, %v2686
      %v2688 = vrot.slane %v2600, 7
      %v2689 = vsel %vm2671, %v2686, %v2688
      %v2690 = vrot.slane %v2601, 7
      %v2691 = vrot.slane %v2602, 7
      %v2692 = vsel %vm2671, %v2690, %v2691
      %v2693 = vrot.slane %v2603, 7
      %v2694 = vsel %vm2671, %v2691, %v2693
      %v2695 = vrot.slane %v2604, 7
      %v2696 = vsel %vm2671, %v2693, %v2695
      %v2697 = vrot.slane %v2605, 7
      %v2698 = vsel %vm2671, %v2695, %v2697
      %v2699 = vrot.slane %v2606, 7
      %v2700 = vrot.slane %v2607, 7
      %v2701 = vsel %vm2671, %v2699, %v2700
      %v2702 = vrot.slane %v2608, 7
      %v2703 = vsel %vm2671, %v2700, %v2702
      %v2704 = vrot.slane %v2609, 7
      %v2705 = vsel %vm2671, %v2702, %v2704
      %v2706 = vrot.slane %v2610, 7
      %v2707 = vsel %vm2671, %v2704, %v2706
      %v2708 = vrot.slane %v2611, 7
      %v2709 = vrot.slane %v2612, 7
      %v2710 = vsel %vm2671, %v2708, %v2709
      %v2711 = vrot.slane %v2613, 7
      %v2712 = vsel %vm2671, %v2709, %v2711
      %v2713 = vrot.slane %v2614, 7
      %v2714 = vsel %vm2671, %v2711, %v2713
      %v2715 = vrot.slane %v2615, 7
      %v2716 = vsel %vm2671, %v2713, %v2715
      %v2717 = vrot.slane %v2616, 7
      %v2718 = vrot.slane %v2617, 7
      %v2719 = vsel %vm2671, %v2717, %v2718
      %v2720 = vrot.slane %v2618, 7
      %v2721 = vsel %vm2671, %v2718, %v2720
      %v2722 = vrot.slane %v2619, 7
      %v2723 = vsel %vm2671, %v2720, %v2722
      %v2724 = vrot.slane %v2620, 7
      %v2725 = vsel %vm2671, %v2722, %v2724
      %v2726 = vrot.slane %v2621, 7
      %v2727 = vrot.slane %v2622, 7
      %v2728 = vsel %vm2671, %v2726, %v2727
      %v2729 = vrot.slane %v2623, 7
      %v2730 = vsel %vm2671, %v2727, %v2729
      %v2731 = vrot.slane %v2624, 7
      %v2732 = vsel %vm2671, %v2729, %v2731
      %v2733 = vrot.slane %v2625, 7
      %v2734 = vsel %vm2671, %v2731, %v2733
      %v2735 = vrot.slane %v2626, 7
      %v2736 = vrot.slane %v2627, 7
      %v2737 = vsel %vm2671, %v2735, %v2736
      %v2738 = vrot.slane %v2628, 7
      %v2739 = vsel %vm2671, %v2736, %v2738
      %v2740 = vrot.slane %v2629, 7
      %v2741 = vsel %vm2671, %v2738, %v2740
      %v2742 = vrot.slane %v2630, 7
      %v2743 = vsel %vm2671, %v2740, %v2742
      %2776 = vst [vmem:[#allocation3] sm:$0xff] %v2674
      %2777 = vst [vmem:[#allocation3 + $0x8] sm:$0xff] %v2676
      %2778 = vst [vmem:[#allocation3 + $0x10] sm:$0xff] %v2678
      %2779 = vst [vmem:[#allocation3 + $0x18] sm:$0xff] %v2680
      %2780 = vst [vmem:[#allocation3 + $0x20] sm:$0xff] %v2683
      %2781 = vst [vmem:[#allocation3 + $0x28] sm:$0xff] %v2685
      %2782 = vst [vmem:[#allocation3 + $0x30] sm:$0xff] %v2687
      %2783 = vst [vmem:[#allocation3 + $0x38] sm:$0xff] %v2689
      %2784 = vst [vmem:[#allocation3 + $0x40] sm:$0xff] %v2692
      %2785 = vst [vmem:[#allocation3 + $0x48] sm:$0xff] %v2694
      %2786 = vst [vmem:[#allocation3 + $0x50] sm:$0xff] %v2696
      %2787 = vst [vmem:[#allocation3 + $0x58] sm:$0xff] %v2698
      %2788 = vst [vmem:[#allocation3 + $0x60] sm:$0xff] %v2701
      %2789 = vst [vmem:[#allocation3 + $0x68] sm:$0xff] %v2703
      %2790 = vst [vmem:[#allocation3 + $0x70] sm:$0xff] %v2705
      %2791 = vst [vmem:[#allocation3 + $0x78] sm:$0xff] %v2707
      %2792 = vst [vmem:[#allocation3 + $0x80] sm:$0xff] %v2710
      %2793 = vst [vmem:[#allocation3 + $0x88] sm:$0xff] %v2712
      %2794 = vst [vmem:[#allocation3 + $0x90] sm:$0xff] %v2714
      %2795 = vst [vmem:[#allocation3 + $0x98] sm:$0xff] %v2716
      %2796 = vst [vmem:[#allocation3 + $0xa0] sm:$0xff] %v2719
      %2797 = vst [vmem:[#allocation3 + $0xa8] sm:$0xff] %v2721
      %2798 = vst [vmem:[#allocation3 + $0xb0] sm:$0xff] %v2723
      %2799 = vst [vmem:[#allocation3 + $0xb8] sm:$0xff] %v2725
      %2800 = vst [vmem:[#allocation3 + $0xc0] sm:$0xff] %v2728
      %2801 = vst [vmem:[#allocation3 + $0xc8] sm:$0xff] %v2730
      %2802 = vst [vmem:[#allocation3 + $0xd0] sm:$0xff] %v2732
      %2803 = vst [vmem:[#allocation3 + $0xd8] sm:$0xff] %v2734
      %2804 = vst [vmem:[#allocation3 + $0xe0] sm:$0xff] %v2737
      %2805 = vst [vmem:[#allocation3 + $0xe8] sm:$0xff] %v2739
      %2806 = vst [vmem:[#allocation3 + $0xf0] sm:$0xff] %v2741
      %2807 = vst [vmem:[#allocation3 + $0xf8] sm:$0xff] %v2743
      %v2808 = vld [vmem:[#allocation3] ss:$2 sm:$0xff]
      %s2809 = scalar_lea.vmem [#allocation3], 32
      %v2810 = vld [vmem:[%s2809] ss:$2 sm:$0xff]
      %s2811 = scalar_lea.vmem [#allocation3], 64
      %v2812 = vld [vmem:[%s2811] ss:$2 sm:$0xff]
      %s2813 = scalar_lea.vmem [#allocation3], 96
      %v2814 = vld [vmem:[%s2813] ss:$2 sm:$0xff]
      %s2815 = scalar_lea.vmem [#allocation3], 128
      %v2816 = vld [vmem:[%s2815] ss:$2 sm:$0xff]
      %s2817 = scalar_lea.vmem [#allocation3], 160
      %v2818 = vld [vmem:[%s2817] ss:$2 sm:$0xff]
      %s2819 = scalar_lea.vmem [#allocation3], 192
      %v2820 = vld [vmem:[%s2819] ss:$2 sm:$0xff]
      %s2821 = scalar_lea.vmem [#allocation3], 224
      %v2822 = vld [vmem:[%s2821] ss:$2 sm:$0xff]
      %v2823 = vpack.c.bf16 %v2808, %v2808
      %v2824 = vpack.c.bf16 %v2810, %v2810
      %v2825 = vpack.c.bf16 %v2812, %v2812
      %v2826 = vpack.c.bf16 %v2814, %v2814
      %v2827 = vpack.c.bf16 %v2816, %v2816
      %v2828 = vpack.c.bf16 %v2818, %v2818
      %v2829 = vpack.c.bf16 %v2820, %v2820
      %v2830 = vpack.c.bf16 %v2822, %v2822
      %2831 = vst [vmem:[%s170] sm:$0xf] %v2823
      %2832 = vst [vmem:[%s170 + $0x4] sm:$0xf] %v2824
      %2833 = vst [vmem:[%s170 + $0x8] sm:$0xf] %v2825
      %2834 = vst [vmem:[%s170 + $0xc] sm:$0xf] %v2826
      %2835 = vst [vmem:[%s170 + $0x10] sm:$0xf] %v2827
      %2836 = vst [vmem:[%s170 + $0x14] sm:$0xf] %v2828
      %2837 = vst [vmem:[%s170 + $0x18] sm:$0xf] %v2829
      %2838 = vst [vmem:[%s170 + $0x1c] sm:$0xf] %v2830
      %p2839 = scmp.lt.s32.totalorder %s14, 1
      %s2840 = scalar_select %p2839, %s14, 1
      %s2841 = smul.addr %s2840, 8
      %s2842 = smul.addr %s2841, 4
      %s2843 = scalar_lea.vmem %s3, %s2842
      // Predicated region
      $region33: #{_lambda_.12} parent=31 // pred_check
        %p2844 = pneg %p100
      $region34: #{_lambda_.12} parent=31 // pred_check_branch
        %2846 = sbr.rel (%p2844) target = $region36
      $region35: #{_lambda_.12} parent=31 // pred_region
        _
      $region36: #{_lambda_.12} parent=31 // pred_fallthru
        _
    $region32: #{_lambda_.12} parent=5 // pred_fallthru
      _
    %p2847 = scmp.le.s32.totalorder 2, %s9
    // Predicated region
    $region37: #{_lambda_.12} parent=5 // pred_check
      %p2848 = pneg %p2847
    $region38: #{_lambda_.12} parent=5 // pred_check_branch
      %2850 = sbr.rel (%p2848) target = $region40
    $region39: #{_lambda_.12} parent=5 // pred_region
      %s2851 = ssub.s32 %s9, 2
      // Predicated region
      $region41: #{_lambda_.12} parent=39 // pred_check
        %p2852 = pneg %p106
      $region42: #{_lambda_.12} parent=39 // pred_check_branch
        %2854 = sbr.rel (%p2852) target = $region44
      $region43: #{_lambda_.12} parent=39 // pred_region
        %p2855 = scmp.lt.s32.totalorder %s15, 1
        %s2856 = scalar_select %p2855, %s15, 1
        %s2857 = smul.addr %s2856, 8
        %s2858 = smul.addr %s2857, 4
        %s2859 = scalar_lea.vmem %s3, %s2858
      $region44: #{_lambda_.12} parent=39 // pred_fallthru
        _
    $region40: #{_lambda_.12} parent=5 // pred_fallthru
      _
  $region6: #{_lambda_.12} parent=0 // loop_footer
    %s13 = sadd.s32 1, %s9
  $region7: #{_lambda_.12} parent=0 // loop_footer_branch
    %8 = sbr.rel target = $region3
  $region8: #{_lambda_.12} parent=0 // loop_exit
    _

// kernel: _lambda_.20
$region0: #{_lambda_.20}
  #allocation0 [shape = 'u32[]', space=smem, size = 0x4, offset = 0x4, fixed_abs, tag = 'smem constant byte address 0x4 - core index']
  #allocation1 [shape = 'u32[144,128]{1,0:T(1,128)}', space=vmem, size = 0x12000, scoped, tag = 'internal scratch']
  #allocation2 [shape = 'bf16[2,16,128]{2,1,0:T(16,128)(2,1)}', space=vmem, size = 0x2000, scoped, tag = 'scratch operand']
  %s0 = inlined_call_operand.vmem [shape: bf16[2,2,2,128], index: 0, kind: input, shape index: {}]
  %s1 = inlined_call_operand.vmem [shape: bf16[128,128], index: 1, kind: input, shape index: {}]
  %s2 = inlined_call_operand.vmem [shape: f32[1,128], index: 2, kind: input, shape index: {}]
  %s3 = inlined_call_operand.vmem [shape: bf16[2,2,2,128], index: 3, kind: output, shape index: {}]
  %s4 = sld [smem:[#allocation0]]
  $region45: #{_lambda_.20} parent=0
    _
  %s6 = ssub.s32 1, %s4
  %s7 = scalar_select 0, %s6, %s4
  loop: start=0, step=1, limit=4
  $region2: #{_lambda_.20} parent=0 // loop_pre_header
    _
  $region3: #{_lambda_.20} parent=0 // loop_header
    %s9 = sphi 0, %s13
    %p10 = scmp.ge.s32.totalorder %s9, 4
    %s19 = sphi 0, %s21
    %s22 = sphi 0, %s19
    %s23 = sphi 0, %s22
    %s39 = sphi 0, %s23
    %s43 = sphi 0, %s43
    %s45 = sphi 0, %s43
    %s46 = sphi 0, %s45
    %s60 = sphi 0, %s46
    %s64 = sphi 0, %s64
    %s66 = sphi 0, %s64
    %s67 = sphi 0, %s66
    %s81 = sphi 0, %s67
    %s87 = sphi 0, %s89
    %s90 = sphi 0, %s87
    %s91 = sphi 0, %s90
    %s107 = sphi 0, %s91
  $region4: #{_lambda_.20} parent=0 // loop_header_branch
    %12 = sbr.rel (%p10) target = $region8
  $region5: #{_lambda_.20} parent=0 // loop_body
    %s14 = ssub.s32 %s9, 1
    %s15 = ssub.s32 %s9, 2
    %s16 = sadd.s32 %s9, 1
    %s17 = ssub.s32 %s9, %s16
    %p18 = scmp.eq.s32.totalorder %s17, 0
    %s20 = sadd.s32 %s19, 1
    %s21 = scalar_select %p18, %s19, %s20
    %p24 = pneg %p18
    %p25 = scmp.eq.s32.totalorder %s9, 1
    %p26 = por %p24, %p25
    %p27 = scmp.ne.s32.totalorder %s19, %s22
    %p28 = scmp.eq.s32.totalorder %s9, 0
    %p29 = por %p27, %p28
    %p30 = scmp.ne.s32.totalorder %s19, %s22
    %p31 = scmp.eq.s32.totalorder %s14, 1
    %p32 = por %p30, %p31
    %p33 = scmp.ne.s32.totalorder %s22, %s23
    %p34 = scmp.eq.s32.totalorder %s14, 0
    %p35 = por %p33, %p34
    %p36 = scmp.ne.s32.totalorder %s22, %s23
    %p37 = scmp.eq.s32.totalorder %s15, 1
    %p38 = por %p36, %p37
    %p40 = scmp.ne.s32.totalorder %s23, %s39
    %p41 = scmp.eq.s32.totalorder %s15, 0
    %p42 = por %p40, %p41
    %s44 = sadd.s32 %s43, 1
    %p47 = scmp.eq.s32.totalorder %s9, 1
    %p48 = scmp.ne.s32.totalorder %s43, %s45
    %p49 = scmp.eq.s32.totalorder %s9, 0
    %p50 = por %p48, %p49
    %p51 = scmp.ne.s32.totalorder %s43, %s45
    %p52 = scmp.eq.s32.totalorder %s14, 1
    %p53 = por %p51, %p52
    %p54 = scmp.ne.s32.totalorder %s45, %s46
    %p55 = scmp.eq.s32.totalorder %s14, 0
    %p56 = por %p54, %p55
    %p57 = scmp.ne.s32.totalorder %s45, %s46
    %p58 = scmp.eq.s32.totalorder %s15, 1
    %p59 = por %p57, %p58
    %p61 = scmp.ne.s32.totalorder %s46, %s60
    %p62 = scmp.eq.s32.totalorder %s15, 0
    %p63 = por %p61, %p62
    %s65 = sadd.s32 %s64, 1
    %p68 = scmp.eq.s32.totalorder %s9, 1
    %p69 = scmp.ne.s32.totalorder %s64, %s66
    %p70 = scmp.eq.s32.totalorder %s9, 0
    %p71 = por %p69, %p70
    %p72 = scmp.ne.s32.totalorder %s64, %s66
    %p73 = scmp.eq.s32.totalorder %s14, 1
    %p74 = por %p72, %p73
    %p75 = scmp.ne.s32.totalorder %s66, %s67
    %p76 = scmp.eq.s32.totalorder %s14, 0
    %p77 = por %p75, %p76
    %p78 = scmp.ne.s32.totalorder %s66, %s67
    %p79 = scmp.eq.s32.totalorder %s15, 1
    %p80 = por %p78, %p79
    %p82 = scmp.ne.s32.totalorder %s67, %s81
    %p83 = scmp.eq.s32.totalorder %s15, 0
    %p84 = por %p82, %p83
    %s85 = ssub.s32 %s9, %s16
    %p86 = scmp.eq.s32.totalorder %s85, 0
    %s88 = sadd.s32 %s87, 1
    %s89 = scalar_select %p86, %s87, %s88
    %p92 = pneg %p86
    %p93 = scmp.eq.s32.totalorder %s9, 1
    %p94 = por %p92, %p93
    %p95 = scmp.ne.s32.totalorder %s87, %s90
    %p96 = scmp.eq.s32.totalorder %s9, 0
    %p97 = por %p95, %p96
    %p98 = scmp.ne.s32.totalorder %s87, %s90
    %p99 = scmp.eq.s32.totalorder %s14, 1
    %p100 = por %p98, %p99
    %p101 = scmp.ne.s32.totalorder %s90, %s91
    %p102 = scmp.eq.s32.totalorder %s14, 0
    %p103 = por %p101, %p102
    %p104 = scmp.ne.s32.totalorder %s90, %s91
    %p105 = scmp.eq.s32.totalorder %s15, 1
    %p106 = por %p104, %p105
    %p108 = scmp.ne.s32.totalorder %s91, %s107
    %p109 = scmp.eq.s32.totalorder %s15, 0
    %p110 = por %p108, %p109
    %p111 = scmp.le.s32.totalorder 1, %s9
    %p112 = scmp.lt.s32.totalorder %s9, 3
    %p113 = pnand %p111, %p112
    %p114 = pneg %p113
    // Predicated region
    $region9: #{_lambda_.20} parent=5 // pred_check
      _
    $region10: #{_lambda_.20} parent=5 // pred_check_branch
      %116 = sbr.rel (%p113) target = $region12
    $region11: #{_lambda_.20} parent=5 // pred_region
      %s117 = ssub.s32 %s9, 1
      // Predicated region
      $region13: #{_lambda_.20} parent=11 // pred_check
        %p118 = pneg %p56
      $region14: #{_lambda_.20} parent=11 // pred_check_branch
        %120 = sbr.rel (%p118) target = $region16
      $region15: #{_lambda_.20} parent=11 // pred_region
        _
      $region16: #{_lambda_.20} parent=11 // pred_fallthru
        _
      // Predicated region
      $region17: #{_lambda_.20} parent=11 // pred_check
        %p121 = pneg %p77
      $region18: #{_lambda_.20} parent=11 // pred_check_branch
        %123 = sbr.rel (%p121) target = $region20
      $region19: #{_lambda_.20} parent=11 // pred_region
        _
      $region20: #{_lambda_.20} parent=11 // pred_fallthru
        _
    $region12: #{_lambda_.20} parent=5 // pred_fallthru
      _
    %p124 = scmp.lt.s32.totalorder %s9, 2
    // Predicated region
    $region21: #{_lambda_.20} parent=5 // pred_check
      %p125 = pneg %p124
    $region22: #{_lambda_.20} parent=5 // pred_check_branch
      %127 = sbr.rel (%p125) target = $region24
    $region23: #{_lambda_.20} parent=5 // pred_region
      // Predicated region
      $region25: #{_lambda_.20} parent=23 // pred_check
        %p128 = pneg %p29
      $region26: #{_lambda_.20} parent=23 // pred_check_branch
        %130 = sbr.rel (%p128) target = $region28
      $region27: #{_lambda_.20} parent=23 // pred_region
        %p131 = scmp.lt.s32.totalorder %s9, 1
        %s132 = scalar_select %p131, %s9, 1
        %s133 = smul.addr %s132, 2
        %s134 = scalar_lea.vmem %s0, %s133
      $region28: #{_lambda_.20} parent=23 // pred_fallthru
        _
    $region24: #{_lambda_.20} parent=5 // pred_fallthru
      _
    %p135 = scmp.le.s32.totalorder 1, %s9
    %p136 = scmp.lt.s32.totalorder %s9, 3
    %p137 = pnand %p135, %p136
    %p138 = pneg %p137
    // Predicated region
    $region29: #{_lambda_.20} parent=5 // pred_check
      _
    $region30: #{_lambda_.20} parent=5 // pred_check_branch
      %140 = sbr.rel (%p137) target = $region32
    $region31: #{_lambda_.20} parent=5 // pred_region
      %s141 = ssub.s32 %s9, 1
      %p142 = scmp.lt.s32.totalorder %s14, 1
      %s143 = scalar_select %p142, %s14, 1
      %s144 = smul.addr %s143, 2
      %s145 = scalar_lea.vmem %s0, %s144
      %p146 = pneg %p35
      %p147 = pneg %p32
      %p148 = pneg %p56
      %p149 = pneg %p53
      %p150 = pneg %p77
      %p151 = pneg %p74
      %p152 = pneg %p103
      %p153 = pneg %p100
      %p154 = scmp.lt.s32.totalorder %s14, 1
      %s155 = scalar_select %p154, %s14, 1
      %s156 = smul.addr %s155, 2
      %s157 = scalar_lea.vmem %s3, %s156
      %p158 = scmp.lt.s32.totalorder %s14, 1
      %s159 = scalar_select %p158, %s14, 1
      %s160 = smul.addr %s159, 2
      %s161 = scalar_lea.vmem %s0, %s160
      %p162 = scmp.lt.s32.totalorder %s14, 1
      %s163 = scalar_select %p162, %s14, 1
      %s164 = smul.addr %s163, 2
      %s165 = scalar_lea.vmem %s3, %s164
      %167 = vst [vmem:[#allocation2] sm:$0xff] 0
      %168 = vst [vmem:[#allocation2 + $0x8] sm:$0xff] 0
      %v169 = vld [vmem:[%s161] sm:$0x1]
      %v170 = vld [vmem:[%s161 + $0x1] sm:$0x1]
      %171 = vst [vmem:[#allocation2] sm:$0x1] %v169
      %172 = vst [vmem:[#allocation2 + $0x8] sm:$0x1] %v170
      %v173 = vld [vmem:[#allocation2] sm:$0xff]
      %v174 = vld [vmem:[#allocation2 + $0x8] sm:$0xff]
      %v175 = vld [vmem:[%s1] sm:$0xf]
      %v176 = vld [vmem:[%s1 + $0x4] sm:$0xf]
      %v177 = vld [vmem:[%s1 + $0x8] sm:$0xf]
      %v178 = vld [vmem:[%s1 + $0xc] sm:$0xf]
      %v179 = vld [vmem:[%s1 + $0x10] sm:$0xf]
      %v180 = vld [vmem:[%s1 + $0x14] sm:$0xf]
      %v181 = vld [vmem:[%s1 + $0x18] sm:$0xf]
      %v182 = vld [vmem:[%s1 + $0x1c] sm:$0xf]
      %v183 = vld [vmem:[%s1 + $0x20] sm:$0xf]
      %v184 = vld [vmem:[%s1 + $0x24] sm:$0xf]
      %v185 = vld [vmem:[%s1 + $0x28] sm:$0xf]
      %v186 = vld [vmem:[%s1 + $0x2c] sm:$0xf]
      %v187 = vld [vmem:[%s1 + $0x30] sm:$0xf]
      %v188 = vld [vmem:[%s1 + $0x34] sm:$0xf]
      %v189 = vld [vmem:[%s1 + $0x38] sm:$0xf]
      %v190 = vld [vmem:[%s1 + $0x3c] sm:$0xf]
      %v191 = vld [vmem:[%s2] sm:$0x1]
      %v193 = vlaneseq
      %v194 = vshrl.u32 %v193, 7
      %v195 = vsub.s32 0, %v194
      %v196 = vrot.slane %v191, %v195
      %v214 = vunpack.c.l.b16 %v175
      %v215 = vunpack.c.l.b16 %v176
      %v216 = vunpack.c.l.b16 %v177
      %v217 = vunpack.c.l.b16 %v178
      %v218 = vunpack.c.l.b16 %v179
      %v219 = vunpack.c.l.b16 %v180
      %v220 = vunpack.c.l.b16 %v181
      %v221 = vunpack.c.l.b16 %v182
      %v222 = vunpack.c.l.b16 %v183
      %v223 = vunpack.c.l.b16 %v184
      %v224 = vunpack.c.l.b16 %v185
      %v225 = vunpack.c.l.b16 %v186
      %v226 = vunpack.c.l.b16 %v187
      %v227 = vunpack.c.l.b16 %v188
      %v228 = vunpack.c.l.b16 %v189
      %v229 = vunpack.c.l.b16 %v190
      %v230 = vpack.c.b16 %v215, %v214
      %v231 = vpack.c.b16 %v217, %v216
      %v232 = vpack.c.b16 %v219, %v218
      %v233 = vpack.c.b16 %v221, %v220
      %v234 = vpack.c.b16 %v223, %v222
      %v235 = vpack.c.b16 %v225, %v224
      %v236 = vpack.c.b16 %v227, %v226
      %v237 = vpack.c.b16 %v229, %v228
      %246 = vmatprep.subr.bf16.mxu0 0
      %247 = vmatpush1.bf16.msra.mxu0 %v230
      %248 = vmatprep.subr.bf16.mxu0 0
      %249 = vmatpush1.bf16.msra.mxu0 %v231
      %250 = vmatprep.subr.bf16.mxu0 0
      %251 = vmatpush1.bf16.msra.mxu0 %v232
      %252 = vmatprep.subr.bf16.mxu0 0
      %253 = vmatpush1.bf16.msra.mxu0 %v233
      %254 = vmatprep.subr.bf16.mxu0 0
      %255 = vmatpush1.bf16.msra.mxu0 %v234
      %256 = vmatprep.subr.bf16.mxu0 0
      %257 = vmatpush1.bf16.msra.mxu0 %v235
      %258 = vmatprep.subr.bf16.mxu0 0
      %259 = vmatpush1.bf16.msra.mxu0 %v236
      %260 = vmatprep.subr.bf16.mxu0 0
      %261 = vmatpush1.bf16.msra.mxu0 %v237
      %262 = vmatprep.subr.bf16.mxu0 0
      %263 = vmatpush1.bf16.msra.mxu0 0
      %264 = vmatprep.subr.bf16.mxu0 0
      %265 = vmatpush1.bf16.msra.mxu0 0
      %266 = vmatprep.subr.bf16.mxu0 0
      %267 = vmatpush1.bf16.msra.mxu0 0
      %268 = vmatprep.subr.bf16.mxu0 0
      %269 = vmatpush1.bf16.msra.mxu0 0
      %270 = vmatprep.subr.bf16.mxu0 0
      %271 = vmatpush1.bf16.msra.mxu0 0
      %272 = vmatprep.subr.bf16.mxu0 0
      %273 = vmatpush1.bf16.msra.mxu0 0
      %274 = vmatprep.subr.bf16.mxu0 0
      %275 = vmatpush1.bf16.msra.mxu0 0
      %276 = vmatprep.subr.bf16.mxu0 0
      %277 = vmatpush1.bf16.msra.mxu0 0
      %278 = vmatprep.mubr.bf16.mxu0 0
      %279 = vmatmul.mubr.bf16.gmra.mrb[0].mxu0 %v173
      %v280 = vpop.f32.mrb[0].mxu0
      %v281 = vadd.f32 %v196, %v280
      %v282 = vpop.f32.mrb[0].mxu0
      %v283 = vpop.f32.mrb[0].mxu0
      %v284 = vpop.f32.mrb[0].mxu0
      %285 = vmatprep.mubr.bf16.mxu0 0
      %286 = vmatmul.mubr.bf16.gmra.mrb[0].mxu0 %v174
      %v287 = vpop.f32.mrb[0].mxu0
      %v288 = vadd.f32 %v196, %v287
      %v289 = vpop.f32.mrb[0].mxu0
      %v290 = vpop.f32.mrb[0].mxu0
      %v291 = vpop.f32.mrb[0].mxu0
      %292 = vdwg.mxu0
      %v293 = vmax.f32 %v281, 0.0
      %v294 = vmax.f32 %v288, 0.0
      %v295 = vpack.c.bf16 %v293, %v293
      %v296 = vpack.c.bf16 %v294, %v294
      %297 = vst [vmem:[%s165] sm:$0x1] %v295
      %298 = vst [vmem:[%s165 + $0x1] sm:$0x1] %v296
      %p299 = scmp.lt.s32.totalorder %s14, 1
      %s300 = scalar_select %p299, %s14, 1
      %s301 = smul.addr %s300, 2
      %s302 = scalar_lea.vmem %s3, %s301
      // Predicated region
      $region33: #{_lambda_.20} parent=31 // pred_check
        %p303 = pneg %p100
      $region34: #{_lambda_.20} parent=31 // pred_check_branch
        %305 = sbr.rel (%p303) target = $region36
      $region35: #{_lambda_.20} parent=31 // pred_region
        _
      $region36: #{_lambda_.20} parent=31 // pred_fallthru
        _
    $region32: #{_lambda_.20} parent=5 // pred_fallthru
      _
    %p306 = scmp.le.s32.totalorder 2, %s9
    // Predicated region
    $region37: #{_lambda_.20} parent=5 // pred_check
      %p307 = pneg %p306
    $region38: #{_lambda_.20} parent=5 // pred_check_branch
      %309 = sbr.rel (%p307) target = $region40
    $region39: #{_lambda_.20} parent=5 // pred_region
      %s310 = ssub.s32 %s9, 2
      // Predicated region
      $region41: #{_lambda_.20} parent=39 // pred_check
        %p311 = pneg %p106
      $region42: #{_lambda_.20} parent=39 // pred_check_branch
        %313 = sbr.rel (%p311) target = $region44
      $region43: #{_lambda_.20} parent=39 // pred_region
        %p314 = scmp.lt.s32.totalorder %s15, 1
        %s315 = scalar_select %p314, %s15, 1
        %s316 = smul.addr %s315, 2
        %s317 = scalar_lea.vmem %s3, %s316
      $region44: #{_lambda_.20} parent=39 // pred_fallthru
        _
    $region40: #{_lambda_.20} parent=5 // pred_fallthru
      _
  $region6: #{_lambda_.20} parent=0 // loop_footer
    %s13 = sadd.s32 1, %s9
  $region7: #{_lambda_.20} parent=0 // loop_footer_branch
    %8 = sbr.rel target = $region3
  $region8: #{_lambda_.20} parent=0 // loop_exit
    _

// kernel: _lambda_.17
$region0: #{_lambda_.17}
  #allocation0 [shape = 'u32[]', space=smem, size = 0x4, offset = 0x4, fixed_abs, tag = 'smem constant byte address 0x4 - core index']
  #allocation1 [shape = 'u32[144,128]{1,0:T(1,128)}', space=vmem, size = 0x12000, scoped, tag = 'internal scratch']
  #allocation2 [shape = 'bf16[6,16,128]{2,1,0:T(16,128)(2,1)}', space=vmem, size = 0x6000, scoped, tag = 'scratch operand']
  %s0 = inlined_call_operand.vmem [shape: bf16[2,2,2,128], index: 0, kind: input, shape index: {}]
  %s1 = inlined_call_operand.vmem [shape: bf16[384,384], index: 1, kind: input, shape index: {}]
  %s2 = inlined_call_operand.vmem [shape: f32[1,128], index: 2, kind: input, shape index: {}]
  %s3 = inlined_call_operand.vmem [shape: bf16[2,2,2,128], index: 3, kind: output, shape index: {}]
  %s4 = sld [smem:[#allocation0]]
  $region45: #{_lambda_.17} parent=0
    _
  %s6 = ssub.s32 1, %s4
  %s7 = scalar_select 0, %s6, %s4
  loop: start=0, step=1, limit=4
  $region2: #{_lambda_.17} parent=0 // loop_pre_header
    _
  $region3: #{_lambda_.17} parent=0 // loop_header
    %s9 = sphi 0, %s13
    %p10 = scmp.ge.s32.totalorder %s9, 4
    %s19 = sphi 0, %s21
    %s22 = sphi 0, %s19
    %s23 = sphi 0, %s22
    %s39 = sphi 0, %s23
    %s43 = sphi 0, %s43
    %s45 = sphi 0, %s43
    %s46 = sphi 0, %s45
    %s60 = sphi 0, %s46
    %s64 = sphi 0, %s64
    %s66 = sphi 0, %s64
    %s67 = sphi 0, %s66
    %s81 = sphi 0, %s67
    %s87 = sphi 0, %s89
    %s90 = sphi 0, %s87
    %s91 = sphi 0, %s90
    %s107 = sphi 0, %s91
  $region4: #{_lambda_.17} parent=0 // loop_header_branch
    %12 = sbr.rel (%p10) target = $region8
  $region5: #{_lambda_.17} parent=0 // loop_body
    %s14 = ssub.s32 %s9, 1
    %s15 = ssub.s32 %s9, 2
    %s16 = sadd.s32 %s9, 1
    %s17 = ssub.s32 %s9, %s16
    %p18 = scmp.eq.s32.totalorder %s17, 0
    %s20 = sadd.s32 %s19, 1
    %s21 = scalar_select %p18, %s19, %s20
    %p24 = pneg %p18
    %p25 = scmp.eq.s32.totalorder %s9, 1
    %p26 = por %p24, %p25
    %p27 = scmp.ne.s32.totalorder %s19, %s22
    %p28 = scmp.eq.s32.totalorder %s9, 0
    %p29 = por %p27, %p28
    %p30 = scmp.ne.s32.totalorder %s19, %s22
    %p31 = scmp.eq.s32.totalorder %s14, 1
    %p32 = por %p30, %p31
    %p33 = scmp.ne.s32.totalorder %s22, %s23
    %p34 = scmp.eq.s32.totalorder %s14, 0
    %p35 = por %p33, %p34
    %p36 = scmp.ne.s32.totalorder %s22, %s23
    %p37 = scmp.eq.s32.totalorder %s15, 1
    %p38 = por %p36, %p37
    %p40 = scmp.ne.s32.totalorder %s23, %s39
    %p41 = scmp.eq.s32.totalorder %s15, 0
    %p42 = por %p40, %p41
    %s44 = sadd.s32 %s43, 1
    %p47 = scmp.eq.s32.totalorder %s9, 1
    %p48 = scmp.ne.s32.totalorder %s43, %s45
    %p49 = scmp.eq.s32.totalorder %s9, 0
    %p50 = por %p48, %p49
    %p51 = scmp.ne.s32.totalorder %s43, %s45
    %p52 = scmp.eq.s32.totalorder %s14, 1
    %p53 = por %p51, %p52
    %p54 = scmp.ne.s32.totalorder %s45, %s46
    %p55 = scmp.eq.s32.totalorder %s14, 0
    %p56 = por %p54, %p55
    %p57 = scmp.ne.s32.totalorder %s45, %s46
    %p58 = scmp.eq.s32.totalorder %s15, 1
    %p59 = por %p57, %p58
    %p61 = scmp.ne.s32.totalorder %s46, %s60
    %p62 = scmp.eq.s32.totalorder %s15, 0
    %p63 = por %p61, %p62
    %s65 = sadd.s32 %s64, 1
    %p68 = scmp.eq.s32.totalorder %s9, 1
    %p69 = scmp.ne.s32.totalorder %s64, %s66
    %p70 = scmp.eq.s32.totalorder %s9, 0
    %p71 = por %p69, %p70
    %p72 = scmp.ne.s32.totalorder %s64, %s66
    %p73 = scmp.eq.s32.totalorder %s14, 1
    %p74 = por %p72, %p73
    %p75 = scmp.ne.s32.totalorder %s66, %s67
    %p76 = scmp.eq.s32.totalorder %s14, 0
    %p77 = por %p75, %p76
    %p78 = scmp.ne.s32.totalorder %s66, %s67
    %p79 = scmp.eq.s32.totalorder %s15, 1
    %p80 = por %p78, %p79
    %p82 = scmp.ne.s32.totalorder %s67, %s81
    %p83 = scmp.eq.s32.totalorder %s15, 0
    %p84 = por %p82, %p83
    %s85 = ssub.s32 %s9, %s16
    %p86 = scmp.eq.s32.totalorder %s85, 0
    %s88 = sadd.s32 %s87, 1
    %s89 = scalar_select %p86, %s87, %s88
    %p92 = pneg %p86
    %p93 = scmp.eq.s32.totalorder %s9, 1
    %p94 = por %p92, %p93
    %p95 = scmp.ne.s32.totalorder %s87, %s90
    %p96 = scmp.eq.s32.totalorder %s9, 0
    %p97 = por %p95, %p96
    %p98 = scmp.ne.s32.totalorder %s87, %s90
    %p99 = scmp.eq.s32.totalorder %s14, 1
    %p100 = por %p98, %p99
    %p101 = scmp.ne.s32.totalorder %s90, %s91
    %p102 = scmp.eq.s32.totalorder %s14, 0
    %p103 = por %p101, %p102
    %p104 = scmp.ne.s32.totalorder %s90, %s91
    %p105 = scmp.eq.s32.totalorder %s15, 1
    %p106 = por %p104, %p105
    %p108 = scmp.ne.s32.totalorder %s91, %s107
    %p109 = scmp.eq.s32.totalorder %s15, 0
    %p110 = por %p108, %p109
    %p111 = scmp.le.s32.totalorder 1, %s9
    %p112 = scmp.lt.s32.totalorder %s9, 3
    %p113 = pnand %p111, %p112
    %p114 = pneg %p113
    // Predicated region
    $region9: #{_lambda_.17} parent=5 // pred_check
      _
    $region10: #{_lambda_.17} parent=5 // pred_check_branch
      %116 = sbr.rel (%p113) target = $region12
    $region11: #{_lambda_.17} parent=5 // pred_region
      %s117 = ssub.s32 %s9, 1
      // Predicated region
      $region13: #{_lambda_.17} parent=11 // pred_check
        %p118 = pneg %p56
      $region14: #{_lambda_.17} parent=11 // pred_check_branch
        %120 = sbr.rel (%p118) target = $region16
      $region15: #{_lambda_.17} parent=11 // pred_region
        _
      $region16: #{_lambda_.17} parent=11 // pred_fallthru
        _
      // Predicated region
      $region17: #{_lambda_.17} parent=11 // pred_check
        %p121 = pneg %p77
      $region18: #{_lambda_.17} parent=11 // pred_check_branch
        %123 = sbr.rel (%p121) target = $region20
      $region19: #{_lambda_.17} parent=11 // pred_region
        _
      $region20: #{_lambda_.17} parent=11 // pred_fallthru
        _
    $region12: #{_lambda_.17} parent=5 // pred_fallthru
      _
    %p124 = scmp.lt.s32.totalorder %s9, 2
    // Predicated region
    $region21: #{_lambda_.17} parent=5 // pred_check
      %p125 = pneg %p124
    $region22: #{_lambda_.17} parent=5 // pred_check_branch
      %127 = sbr.rel (%p125) target = $region24
    $region23: #{_lambda_.17} parent=5 // pred_region
      // Predicated region
      $region25: #{_lambda_.17} parent=23 // pred_check
        %p128 = pneg %p29
      $region26: #{_lambda_.17} parent=23 // pred_check_branch
        %130 = sbr.rel (%p128) target = $region28
      $region27: #{_lambda_.17} parent=23 // pred_region
        %p131 = scmp.lt.s32.totalorder %s9, 1
        %s132 = scalar_select %p131, %s9, 1
        %s133 = smul.addr %s132, 2
        %s134 = scalar_lea.vmem %s0, %s133
      $region28: #{_lambda_.17} parent=23 // pred_fallthru
        _
    $region24: #{_lambda_.17} parent=5 // pred_fallthru
      _
    %p135 = scmp.le.s32.totalorder 1, %s9
    %p136 = scmp.lt.s32.totalorder %s9, 3
    %p137 = pnand %p135, %p136
    %p138 = pneg %p137
    // Predicated region
    $region29: #{_lambda_.17} parent=5 // pred_check
      _
    $region30: #{_lambda_.17} parent=5 // pred_check_branch
      %140 = sbr.rel (%p137) target = $region32
    $region31: #{_lambda_.17} parent=5 // pred_region
      %s141 = ssub.s32 %s9, 1
      %p142 = scmp.lt.s32.totalorder %s14, 1
      %s143 = scalar_select %p142, %s14, 1
      %s144 = smul.addr %s143, 2
      %s145 = scalar_lea.vmem %s0, %s144
      %p146 = pneg %p35
      %p147 = pneg %p32
      %p148 = pneg %p56
      %p149 = pneg %p53
      %p150 = pneg %p77
      %p151 = pneg %p74
      %p152 = pneg %p103
      %p153 = pneg %p100
      %p154 = scmp.lt.s32.totalorder %s14, 1
      %s155 = scalar_select %p154, %s14, 1
      %s156 = smul.addr %s155, 2
      %s157 = scalar_lea.vmem %s3, %s156
      %p158 = scmp.lt.s32.totalorder %s14, 1
      %s159 = scalar_select %p158, %s14, 1
      %s160 = smul.addr %s159, 2
      %s161 = scalar_lea.vmem %s0, %s160
      %p162 = scmp.lt.s32.totalorder %s14, 1
      %s163 = scalar_select %p162, %s14, 1
      %s164 = smul.addr %s163, 2
      %s165 = scalar_lea.vmem %s3, %s164
      %167 = vst [vmem:[#allocation2] sm:$0xff] 0
      %168 = vst [vmem:[#allocation2 + $0x8] sm:$0xff] 0
      %169 = vst [vmem:[#allocation2 + $0x10] sm:$0xff] 0
      %170 = vst [vmem:[#allocation2 + $0x18] sm:$0xff] 0
      %171 = vst [vmem:[#allocation2 + $0x20] sm:$0xff] 0
      %172 = vst [vmem:[#allocation2 + $0x28] sm:$0xff] 0
      %v173 = vld [vmem:[%s161] sm:$0x1]
      %v174 = vld [vmem:[%s161 + $0x1] sm:$0x1]
      %s175 = scalar_lea.vmem [#allocation2], 16
      %176 = vst [vmem:[%s175] sm:$0x1] %v173
      %177 = vst [vmem:[%s175 + $0x8] sm:$0x1] %v174
      %v178 = vld [vmem:[#allocation2] sm:$0xff]
      %v179 = vld [vmem:[#allocation2 + $0x8] sm:$0xff]
      %v180 = vld [vmem:[#allocation2 + $0x10] sm:$0xff]
      %v181 = vld [vmem:[#allocation2 + $0x18] sm:$0xff]
      %v182 = vld [vmem:[#allocation2 + $0x20] sm:$0xff]
      %v183 = vld [vmem:[#allocation2 + $0x28] sm:$0xff]
      %v184 = vld [vmem:[%s1] sm:$0xff]
      %v185 = vld [vmem:[%s1 + $0x8] sm:$0xf]
      %v186 = vld [vmem:[%s1 + $0xc] sm:$0xff]
      %v187 = vld [vmem:[%s1 + $0x14] sm:$0xf]
      %v188 = vld [vmem:[%s1 + $0x18] sm:$0xff]
      %v189 = vld [vmem:[%s1 + $0x20] sm:$0xf]
      %v190 = vld [vmem:[%s1 + $0x24] sm:$0xff]
      %v191 = vld [vmem:[%s1 + $0x2c] sm:$0xf]
      %v192 = vld [vmem:[%s1 + $0x30] sm:$0xff]
      %v193 = vld [vmem:[%s1 + $0x38] sm:$0xf]
      %v194 = vld [vmem:[%s1 + $0x3c] sm:$0xff]
      %v195 = vld [vmem:[%s1 + $0x44] sm:$0xf]
      %v196 = vld [vmem:[%s1 + $0x48] sm:$0xff]
      %v197 = vld [vmem:[%s1 + $0x50] sm:$0xf]
      %v198 = vld [vmem:[%s1 + $0x54] sm:$0xff]
      %v199 = vld [vmem:[%s1 + $0x5c] sm:$0xf]
      %v200 = vld [vmem:[%s1 + $0x60] sm:$0xff]
      %v201 = vld [vmem:[%s1 + $0x68] sm:$0xf]
      %v202 = vld [vmem:[%s1 + $0x6c] sm:$0xff]
      %v203 = vld [vmem:[%s1 + $0x74] sm:$0xf]
      %v204 = vld [vmem:[%s1 + $0x78] sm:$0xff]
      %v205 = vld [vmem:[%s1 + $0x80] sm:$0xf]
      %v206 = vld [vmem:[%s1 + $0x84] sm:$0xff]
      %v207 = vld [vmem:[%s1 + $0x8c] sm:$0xf]
      %v208 = vld [vmem:[%s1 + $0x90] sm:$0xff]
      %v209 = vld [vmem:[%s1 + $0x98] sm:$0xf]
      %v210 = vld [vmem:[%s1 + $0x9c] sm:$0xff]
      %v211 = vld [vmem:[%s1 + $0xa4] sm:$0xf]
      %v212 = vld [vmem:[%s1 + $0xa8] sm:$0xff]
      %v213 = vld [vmem:[%s1 + $0xb0] sm:$0xf]
      %v214 = vld [vmem:[%s1 + $0xb4] sm:$0xff]
      %v215 = vld [vmem:[%s1 + $0xbc] sm:$0xf]
      %v216 = vld [vmem:[%s1 + $0xc0] sm:$0xff]
      %v217 = vld [vmem:[%s1 + $0xc8] sm:$0xf]
      %v218 = vld [vmem:[%s1 + $0xcc] sm:$0xff]
      %v219 = vld [vmem:[%s1 + $0xd4] sm:$0xf]
      %v220 = vld [vmem:[%s1 + $0xd8] sm:$0xff]
      %v221 = vld [vmem:[%s1 + $0xe0] sm:$0xf]
      %v222 = vld [vmem:[%s1 + $0xe4] sm:$0xff]
      %v223 = vld [vmem:[%s1 + $0xec] sm:$0xf]
      %v224 = vld [vmem:[%s1 + $0xf0] sm:$0xff]
      %v225 = vld [vmem:[%s1 + $0xf8] sm:$0xf]
      %v226 = vld [vmem:[%s1 + $0xfc] sm:$0xff]
      %v227 = vld [vmem:[%s1 + $0x104] sm:$0xf]
      %v228 = vld [vmem:[%s1 + $0x108] sm:$0xff]
      %v229 = vld [vmem:[%s1 + $0x110] sm:$0xf]
      %v230 = vld [vmem:[%s1 + $0x114] sm:$0xff]
      %v231 = vld [vmem:[%s1 + $0x11c] sm:$0xf]
      %v232 = vld [vmem:[%s1 + $0x120] sm:$0xff]
      %v233 = vld [vmem:[%s1 + $0x128] sm:$0xf]
      %v234 = vld [vmem:[%s1 + $0x12c] sm:$0xff]
      %v235 = vld [vmem:[%s1 + $0x134] sm:$0xf]
      %v236 = vld [vmem:[%s1 + $0x138] sm:$0xff]
      %v237 = vld [vmem:[%s1 + $0x140] sm:$0xf]
      %v238 = vld [vmem:[%s1 + $0x144] sm:$0xff]
      %v239 = vld [vmem:[%s1 + $0x14c] sm:$0xf]
      %v240 = vld [vmem:[%s1 + $0x150] sm:$0xff]
      %v241 = vld [vmem:[%s1 + $0x158] sm:$0xf]
      %v242 = vld [vmem:[%s1 + $0x15c] sm:$0xff]
      %v243 = vld [vmem:[%s1 + $0x164] sm:$0xf]
      %v244 = vld [vmem:[%s1 + $0x168] sm:$0xff]
      %v245 = vld [vmem:[%s1 + $0x170] sm:$0xf]
      %v246 = vld [vmem:[%s1 + $0x174] sm:$0xff]
      %v247 = vld [vmem:[%s1 + $0x17c] sm:$0xf]
      %v248 = vld [vmem:[%s1 + $0x180] sm:$0xff]
      %v249 = vld [vmem:[%s1 + $0x188] sm:$0xf]
      %v250 = vld [vmem:[%s1 + $0x18c] sm:$0xff]
      %v251 = vld [vmem:[%s1 + $0x194] sm:$0xf]
      %v252 = vld [vmem:[%s1 + $0x198] sm:$0xff]
      %v253 = vld [vmem:[%s1 + $0x1a0] sm:$0xf]
      %v254 = vld [vmem:[%s1 + $0x1a4] sm:$0xff]
      %v255 = vld [vmem:[%s1 + $0x1ac] sm:$0xf]
      %v256 = vld [vmem:[%s1 + $0x1b0] sm:$0xff]
      %v257 = vld [vmem:[%s1 + $0x1b8] sm:$0xf]
      %v258 = vld [vmem:[%s1 + $0x1bc] sm:$0xff]
      %v259 = vld [vmem:[%s1 + $0x1c4] sm:$0xf]
      %v260 = vld [vmem:[%s1 + $0x1c8] sm:$0xff]
      %v261 = vld [vmem:[%s1 + $0x1d0] sm:$0xf]
      %v262 = vld [vmem:[%s1 + $0x1d4] sm:$0xff]
      %v263 = vld [vmem:[%s1 + $0x1dc] sm:$0xf]
      %v264 = vld [vmem:[%s1 + $0x1e0] sm:$0xff]
      %v265 = vld [vmem:[%s1 + $0x1e8] sm:$0xf]
      %v266 = vld [vmem:[%s1 + $0x1ec] sm:$0xff]
      %v267 = vld [vmem:[%s1 + $0x1f4] sm:$0xf]
      %v268 = vld [vmem:[%s1 + $0x1f8] sm:$0xff]
      %v269 = vld [vmem:[%s1 + $0x200] sm:$0xf]
      %v270 = vld [vmem:[%s1 + $0x204] sm:$0xff]
      %v271 = vld [vmem:[%s1 + $0x20c] sm:$0xf]
      %v272 = vld [vmem:[%s1 + $0x210] sm:$0xff]
      %v273 = vld [vmem:[%s1 + $0x218] sm:$0xf]
      %v274 = vld [vmem:[%s1 + $0x21c] sm:$0xff]
      %v275 = vld [vmem:[%s1 + $0x224] sm:$0xf]
      %v276 = vld [vmem:[%s1 + $0x228] sm:$0xff]
      %v277 = vld [vmem:[%s1 + $0x230] sm:$0xf]
      %v278 = vld [vmem:[%s1 + $0x234] sm:$0xff]
      %v279 = vld [vmem:[%s1 + $0x23c] sm:$0xf]
      %v376 = vunpack.c.l.b16 %v184
      %v377 = vunpack.c.h.b16 %v184
      %v378 = vunpack.c.l.b16 %v185
      %v379 = vunpack.c.l.b16 %v186
      %v380 = vunpack.c.h.b16 %v186
      %v381 = vunpack.c.l.b16 %v187
      %v382 = vunpack.c.l.b16 %v188
      %v383 = vunpack.c.h.b16 %v188
      %v384 = vunpack.c.l.b16 %v189
      %v385 = vunpack.c.l.b16 %v190
      %v386 = vunpack.c.h.b16 %v190
      %v387 = vunpack.c.l.b16 %v191
      %v388 = vunpack.c.l.b16 %v192
      %v389 = vunpack.c.h.b16 %v192
      %v390 = vunpack.c.l.b16 %v193
      %v391 = vunpack.c.l.b16 %v194
      %v392 = vunpack.c.h.b16 %v194
      %v393 = vunpack.c.l.b16 %v195
      %v394 = vunpack.c.l.b16 %v196
      %v395 = vunpack.c.h.b16 %v196
      %v396 = vunpack.c.l.b16 %v197
      %v397 = vunpack.c.l.b16 %v198
      %v398 = vunpack.c.h.b16 %v198
      %v399 = vunpack.c.l.b16 %v199
      %v400 = vunpack.c.l.b16 %v200
      %v401 = vunpack.c.h.b16 %v200
      %v402 = vunpack.c.l.b16 %v201
      %v403 = vunpack.c.l.b16 %v202
      %v404 = vunpack.c.h.b16 %v202
      %v405 = vunpack.c.l.b16 %v203
      %v406 = vunpack.c.l.b16 %v204
      %v407 = vunpack.c.h.b16 %v204
      %v408 = vunpack.c.l.b16 %v205
      %v409 = vunpack.c.l.b16 %v206
      %v410 = vunpack.c.h.b16 %v206
      %v411 = vunpack.c.l.b16 %v207
      %v412 = vunpack.c.l.b16 %v208
      %v413 = vunpack.c.h.b16 %v208
      %v414 = vunpack.c.l.b16 %v209
      %v415 = vunpack.c.l.b16 %v210
      %v416 = vunpack.c.h.b16 %v210
      %v417 = vunpack.c.l.b16 %v211
      %v418 = vunpack.c.l.b16 %v212
      %v419 = vunpack.c.h.b16 %v212
      %v420 = vunpack.c.l.b16 %v213
      %v421 = vunpack.c.l.b16 %v214
      %v422 = vunpack.c.h.b16 %v214
      %v423 = vunpack.c.l.b16 %v215
      %v424 = vunpack.c.l.b16 %v216
      %v425 = vunpack.c.h.b16 %v216
      %v426 = vunpack.c.l.b16 %v217
      %v427 = vunpack.c.l.b16 %v218
      %v428 = vunpack.c.h.b16 %v218
      %v429 = vunpack.c.l.b16 %v219
      %v430 = vunpack.c.l.b16 %v220
      %v431 = vunpack.c.h.b16 %v220
      %v432 = vunpack.c.l.b16 %v221
      %v433 = vunpack.c.l.b16 %v222
      %v434 = vunpack.c.h.b16 %v222
      %v435 = vunpack.c.l.b16 %v223
      %v436 = vunpack.c.l.b16 %v224
      %v437 = vunpack.c.h.b16 %v224
      %v438 = vunpack.c.l.b16 %v225
      %v439 = vunpack.c.l.b16 %v226
      %v440 = vunpack.c.h.b16 %v226
      %v441 = vunpack.c.l.b16 %v227
      %v442 = vunpack.c.l.b16 %v228
      %v443 = vunpack.c.h.b16 %v228
      %v444 = vunpack.c.l.b16 %v229
      %v445 = vunpack.c.l.b16 %v230
      %v446 = vunpack.c.h.b16 %v230
      %v447 = vunpack.c.l.b16 %v231
      %v448 = vunpack.c.l.b16 %v232
      %v449 = vunpack.c.h.b16 %v232
      %v450 = vunpack.c.l.b16 %v233
      %v451 = vunpack.c.l.b16 %v234
      %v452 = vunpack.c.h.b16 %v234
      %v453 = vunpack.c.l.b16 %v235
      %v454 = vunpack.c.l.b16 %v236
      %v455 = vunpack.c.h.b16 %v236
      %v456 = vunpack.c.l.b16 %v237
      %v457 = vunpack.c.l.b16 %v238
      %v458 = vunpack.c.h.b16 %v238
      %v459 = vunpack.c.l.b16 %v239
      %v460 = vunpack.c.l.b16 %v240
      %v461 = vunpack.c.h.b16 %v240
      %v462 = vunpack.c.l.b16 %v241
      %v463 = vunpack.c.l.b16 %v242
      %v464 = vunpack.c.h.b16 %v242
      %v465 = vunpack.c.l.b16 %v243
      %v466 = vunpack.c.l.b16 %v244
      %v467 = vunpack.c.h.b16 %v244
      %v468 = vunpack.c.l.b16 %v245
      %v469 = vunpack.c.l.b16 %v246
      %v470 = vunpack.c.h.b16 %v246
      %v471 = vunpack.c.l.b16 %v247
      %v472 = vunpack.c.l.b16 %v248
      %v473 = vunpack.c.h.b16 %v248
      %v474 = vunpack.c.l.b16 %v249
      %v475 = vunpack.c.l.b16 %v250
      %v476 = vunpack.c.h.b16 %v250
      %v477 = vunpack.c.l.b16 %v251
      %v478 = vunpack.c.l.b16 %v252
      %v479 = vunpack.c.h.b16 %v252
      %v480 = vunpack.c.l.b16 %v253
      %v481 = vunpack.c.l.b16 %v254
      %v482 = vunpack.c.h.b16 %v254
      %v483 = vunpack.c.l.b16 %v255
      %v484 = vunpack.c.l.b16 %v256
      %v485 = vunpack.c.h.b16 %v256
      %v486 = vunpack.c.l.b16 %v257
      %v487 = vunpack.c.l.b16 %v258
      %v488 = vunpack.c.h.b16 %v258
      %v489 = vunpack.c.l.b16 %v259
      %v490 = vunpack.c.l.b16 %v260
      %v491 = vunpack.c.h.b16 %v260
      %v492 = vunpack.c.l.b16 %v261
      %v493 = vunpack.c.l.b16 %v262
      %v494 = vunpack.c.h.b16 %v262
      %v495 = vunpack.c.l.b16 %v263
      %v496 = vunpack.c.l.b16 %v264
      %v497 = vunpack.c.h.b16 %v264
      %v498 = vunpack.c.l.b16 %v265
      %v499 = vunpack.c.l.b16 %v266
      %v500 = vunpack.c.h.b16 %v266
      %v501 = vunpack.c.l.b16 %v267
      %v502 = vunpack.c.l.b16 %v268
      %v503 = vunpack.c.h.b16 %v268
      %v504 = vunpack.c.l.b16 %v269
      %v505 = vunpack.c.l.b16 %v270
      %v506 = vunpack.c.h.b16 %v270
      %v507 = vunpack.c.l.b16 %v271
      %v508 = vunpack.c.l.b16 %v272
      %v509 = vunpack.c.h.b16 %v272
      %v510 = vunpack.c.l.b16 %v273
      %v511 = vunpack.c.l.b16 %v274
      %v512 = vunpack.c.h.b16 %v274
      %v513 = vunpack.c.l.b16 %v275
      %v514 = vunpack.c.l.b16 %v276
      %v515 = vunpack.c.h.b16 %v276
      %v516 = vunpack.c.l.b16 %v277
      %v517 = vunpack.c.l.b16 %v278
      %v518 = vunpack.c.h.b16 %v278
      %v519 = vunpack.c.l.b16 %v279
      %v520 = vpack.c.b16 %v379, %v376
      %v521 = vpack.c.b16 %v380, %v377
      %v522 = vpack.c.b16 %v381, %v378
      %v523 = vpack.c.b16 %v385, %v382
      %v524 = vpack.c.b16 %v386, %v383
      %v525 = vpack.c.b16 %v387, %v384
      %v526 = vpack.c.b16 %v391, %v388
      %v527 = vpack.c.b16 %v392, %v389
      %v528 = vpack.c.b16 %v393, %v390
      %v529 = vpack.c.b16 %v397, %v394
      %v530 = vpack.c.b16 %v398, %v395
      %v531 = vpack.c.b16 %v399, %v396
      %v532 = vpack.c.b16 %v403, %v400
      %v533 = vpack.c.b16 %v404, %v401
      %v534 = vpack.c.b16 %v405, %v402
      %v535 = vpack.c.b16 %v409, %v406
      %v536 = vpack.c.b16 %v410, %v407
      %v537 = vpack.c.b16 %v411, %v408
      %v538 = vpack.c.b16 %v415, %v412
      %v539 = vpack.c.b16 %v416, %v413
      %v540 = vpack.c.b16 %v417, %v414
      %v541 = vpack.c.b16 %v421, %v418
      %v542 = vpack.c.b16 %v422, %v419
      %v543 = vpack.c.b16 %v423, %v420
      %v544 = vpack.c.b16 %v427, %v424
      %v545 = vpack.c.b16 %v428, %v425
      %v546 = vpack.c.b16 %v429, %v426
      %v547 = vpack.c.b16 %v433, %v430
      %v548 = vpack.c.b16 %v434, %v431
      %v549 = vpack.c.b16 %v435, %v432
      %v550 = vpack.c.b16 %v439, %v436
      %v551 = vpack.c.b16 %v440, %v437
      %v552 = vpack.c.b16 %v441, %v438
      %v553 = vpack.c.b16 %v445, %v442
      %v554 = vpack.c.b16 %v446, %v443
      %v555 = vpack.c.b16 %v447, %v444
      %v556 = vpack.c.b16 %v451, %v448
      %v557 = vpack.c.b16 %v452, %v449
      %v558 = vpack.c.b16 %v453, %v450
      %v559 = vpack.c.b16 %v457, %v454
      %v560 = vpack.c.b16 %v458, %v455
      %v561 = vpack.c.b16 %v459, %v456
      %v562 = vpack.c.b16 %v463, %v460
      %v563 = vpack.c.b16 %v464, %v461
      %v564 = vpack.c.b16 %v465, %v462
      %v565 = vpack.c.b16 %v469, %v466
      %v566 = vpack.c.b16 %v470, %v467
      %v567 = vpack.c.b16 %v471, %v468
      %v568 = vpack.c.b16 %v475, %v472
      %v569 = vpack.c.b16 %v476, %v473
      %v570 = vpack.c.b16 %v477, %v474
      %v571 = vpack.c.b16 %v481, %v478
      %v572 = vpack.c.b16 %v482, %v479
      %v573 = vpack.c.b16 %v483, %v480
      %v574 = vpack.c.b16 %v487, %v484
      %v575 = vpack.c.b16 %v488, %v485
      %v576 = vpack.c.b16 %v489, %v486
      %v577 = vpack.c.b16 %v493, %v490
      %v578 = vpack.c.b16 %v494, %v491
      %v579 = vpack.c.b16 %v495, %v492
      %v580 = vpack.c.b16 %v499, %v496
      %v581 = vpack.c.b16 %v500, %v497
      %v582 = vpack.c.b16 %v501, %v498
      %v583 = vpack.c.b16 %v505, %v502
      %v584 = vpack.c.b16 %v506, %v503
      %v585 = vpack.c.b16 %v507, %v504
      %v586 = vpack.c.b16 %v511, %v508
      %v587 = vpack.c.b16 %v512, %v509
      %v588 = vpack.c.b16 %v513, %v510
      %v589 = vpack.c.b16 %v517, %v514
      %v590 = vpack.c.b16 %v518, %v515
      %v591 = vpack.c.b16 %v519, %v516
      %664 = vmatprep.subr.bf16.mxu0 %v521
      %665 = vmatpush1.bf16.msra.mxu0 %v520
      %666 = vmatprep.subr.bf16.mxu0 %v524
      %667 = vmatpush1.bf16.msra.mxu0 %v523
      %668 = vmatprep.subr.bf16.mxu0 %v527
      %669 = vmatpush1.bf16.msra.mxu0 %v526
      %670 = vmatprep.subr.bf16.mxu0 %v530
      %671 = vmatpush1.bf16.msra.mxu0 %v529
      %672 = vmatprep.subr.bf16.mxu0 %v533
      %673 = vmatpush1.bf16.msra.mxu0 %v532
      %674 = vmatprep.subr.bf16.mxu0 %v536
      %675 = vmatpush1.bf16.msra.mxu0 %v535
      %676 = vmatprep.subr.bf16.mxu0 %v539
      %677 = vmatpush1.bf16.msra.mxu0 %v538
      %678 = vmatprep.subr.bf16.mxu0 %v542
      %679 = vmatpush1.bf16.msra.mxu0 %v541
      %680 = vmatprep.subr.bf16.mxu0 %v545
      %681 = vmatpush1.bf16.msra.mxu0 %v544
      %682 = vmatprep.subr.bf16.mxu0 %v548
      %683 = vmatpush1.bf16.msra.mxu0 %v547
      %684 = vmatprep.subr.bf16.mxu0 %v551
      %685 = vmatpush1.bf16.msra.mxu0 %v550
      %686 = vmatprep.subr.bf16.mxu0 %v554
      %687 = vmatpush1.bf16.msra.mxu0 %v553
      %688 = vmatprep.subr.bf16.mxu0 %v557
      %689 = vmatpush1.bf16.msra.mxu0 %v556
      %690 = vmatprep.subr.bf16.mxu0 %v560
      %691 = vmatpush1.bf16.msra.mxu0 %v559
      %692 = vmatprep.subr.bf16.mxu0 %v563
      %693 = vmatpush1.bf16.msra.mxu0 %v562
      %694 = vmatprep.subr.bf16.mxu0 %v566
      %695 = vmatpush1.bf16.msra.mxu0 %v565
      %696 = vmatprep.mubr.bf16.mxu0 %v179
      %697 = vmatmul.mubr.bf16.gmra.mrb[0].mxu0 %v178
      %v698 = vpop.f32.mrb[0].mxu0
      %v699 = vpop.f32.mrb[0].mxu0
      %v700 = vpop.f32.mrb[0].mxu0
      %v701 = vadd.f32 0.0, %v700
      %v702 = vpop.f32.mrb[0].mxu0
      %703 = vmatprep.mubr.bf16.mxu0 %v180
      %704 = vmatmul.mubr.bf16.gmra.mrb[0].mxu0 %v179
      %v705 = vpop.f32.mrb[0].mxu0
      %v706 = vadd.f32 0.0, %v705
      %v707 = vpop.f32.mrb[0].mxu0
      %v708 = vadd.f32 0.0, %v707
      %v709 = vpop.f32.mrb[0].mxu0
      %v710 = vadd.f32 0.0, %v709
      %v711 = vpop.f32.mrb[0].mxu0
      %v712 = vadd.f32 0.0, %v711
      %713 = vmatprep.mubr.bf16.mxu0 %v181
      %714 = vmatmul.mubr.bf16.gmra.mrb[0].mxu0 %v180
      %v715 = vpop.f32.mrb[0].mxu0
      %v716 = vadd.f32 0.0, %v715
      %v717 = vpop.f32.mrb[0].mxu0
      %v718 = vadd.f32 0.0, %v717
      %v719 = vpop.f32.mrb[0].mxu0
      %v720 = vpop.f32.mrb[0].mxu0
      %v721 = vadd.f32 0.0, %v720
      %722 = vmatprep.mubr.bf16.mxu0 %v182
      %723 = vmatmul.mubr.bf16.gmra.mrb[0].mxu0 %v181
      %v724 = vpop.f32.mrb[0].mxu0
      %v725 = vpop.f32.mrb[0].mxu0
      %v726 = vpop.f32.mrb[0].mxu0
      %v727 = vpop.f32.mrb[0].mxu0
      %728 = vdwg.mxu0
      %729 = vmatprep.subr.bf16.mxu0 %v569
      %730 = vmatpush1.bf16.msra.mxu0 %v568
      %731 = vmatprep.subr.bf16.mxu0 %v572
      %732 = vmatpush1.bf16.msra.mxu0 %v571
      %733 = vmatprep.subr.bf16.mxu0 %v575
      %734 = vmatpush1.bf16.msra.mxu0 %v574
      %735 = vmatprep.subr.bf16.mxu0 %v578
      %736 = vmatpush1.bf16.msra.mxu0 %v577
      %737 = vmatprep.subr.bf16.mxu0 %v581
      %738 = vmatpush1.bf16.msra.mxu0 %v580
      %739 = vmatprep.subr.bf16.mxu0 %v584
      %740 = vmatpush1.bf16.msra.mxu0 %v583
      %741 = vmatprep.subr.bf16.mxu0 %v587
      %742 = vmatpush1.bf16.msra.mxu0 %v586
      %743 = vmatprep.subr.bf16.mxu0 %v590
      %744 = vmatpush1.bf16.msra.mxu0 %v589
      %745 = vmatprep.subr.bf16.mxu0 0
      %746 = vmatpush1.bf16.msra.mxu0 0
      %747 = vmatprep.subr.bf16.mxu0 0
      %748 = vmatpush1.bf16.msra.mxu0 0
      %749 = vmatprep.subr.bf16.mxu0 0
      %750 = vmatpush1.bf16.msra.mxu0 0
      %751 = vmatprep.subr.bf16.mxu0 0
      %752 = vmatpush1.bf16.msra.mxu0 0
      %753 = vmatprep.subr.bf16.mxu0 0
      %754 = vmatpush1.bf16.msra.mxu0 0
      %755 = vmatprep.subr.bf16.mxu0 0
      %756 = vmatpush1.bf16.msra.mxu0 0
      %757 = vmatprep.subr.bf16.mxu0 0
      %758 = vmatpush1.bf16.msra.mxu0 0
      %759 = vmatprep.subr.bf16.mxu0 0
      %760 = vmatpush1.bf16.msra.mxu0 0
      %761 = vmatprep.mubr.bf16.mxu0 0
      %762 = vmatmul.mubr.bf16.gmra.mrb[0].mxu0 %v180
      %v763 = vpop.f32.mrb[0].mxu0
      %v764 = vpop.f32.mrb[0].mxu0
      %v765 = vpop.f32.mrb[0].mxu0
      %v766 = vadd.f32 %v701, %v765
      %v767 = vpop.f32.mrb[0].mxu0
      %768 = vmatprep.mubr.bf16.mxu0 0
      %769 = vmatmul.mubr.bf16.gmra.mrb[0].mxu0 %v181
      %v770 = vpop.f32.mrb[0].mxu0
      %v771 = vadd.f32 %v706, %v770
      %v772 = vpop.f32.mrb[0].mxu0
      %v773 = vadd.f32 %v708, %v772
      %v774 = vpop.f32.mrb[0].mxu0
      %v775 = vadd.f32 %v710, %v774
      %v776 = vpop.f32.mrb[0].mxu0
      %v777 = vadd.f32 %v712, %v776
      %778 = vmatprep.mubr.bf16.mxu0 0
      %779 = vmatmul.mubr.bf16.gmra.mrb[0].mxu0 %v182
      %v780 = vpop.f32.mrb[0].mxu0
      %v781 = vadd.f32 %v716, %v780
      %v782 = vpop.f32.mrb[0].mxu0
      %v783 = vadd.f32 %v718, %v782
      %v784 = vpop.f32.mrb[0].mxu0
      %v785 = vpop.f32.mrb[0].mxu0
      %v786 = vadd.f32 %v721, %v785
      %787 = vmatprep.mubr.bf16.mxu0 0
      %788 = vmatmul.mubr.bf16.gmra.mrb[0].mxu0 %v183
      %v789 = vpop.f32.mrb[0].mxu0
      %v790 = vpop.f32.mrb[0].mxu0
      %v791 = vpop.f32.mrb[0].mxu0
      %v792 = vpop.f32.mrb[0].mxu0
      %793 = vdwg.mxu0
      %794 = vmatprep.subr.bf16.mxu0 0
      %795 = vmatpush1.bf16.msra.mxu0 %v522
      %796 = vmatprep.subr.bf16.mxu0 0
      %797 = vmatpush1.bf16.msra.mxu0 %v525
      %798 = vmatprep.subr.bf16.mxu0 0
      %799 = vmatpush1.bf16.msra.mxu0 %v528
      %800 = vmatprep.subr.bf16.mxu0 0
      %801 = vmatpush1.bf16.msra.mxu0 %v531
      %802 = vmatprep.subr.bf16.mxu0 0
      %803 = vmatpush1.bf16.msra.mxu0 %v534
      %804 = vmatprep.subr.bf16.mxu0 0
      %805 = vmatpush1.bf16.msra.mxu0 %v537
      %806 = vmatprep.subr.bf16.mxu0 0
      %807 = vmatpush1.bf16.msra.mxu0 %v540
      %808 = vmatprep.subr.bf16.mxu0 0
      %809 = vmatpush1.bf16.msra.mxu0 %v543
      %810 = vmatprep.subr.bf16.mxu0 0
      %811 = vmatpush1.bf16.msra.mxu0 %v546
      %812 = vmatprep.subr.bf16.mxu0 0
      %813 = vmatpush1.bf16.msra.mxu0 %v549
      %814 = vmatprep.subr.bf16.mxu0 0
      %815 = vmatpush1.bf16.msra.mxu0 %v552
      %816 = vmatprep.subr.bf16.mxu0 0
      %817 = vmatpush1.bf16.msra.mxu0 %v555
      %818 = vmatprep.subr.bf16.mxu0 0
      %819 = vmatpush1.bf16.msra.mxu0 %v558
      %820 = vmatprep.subr.bf16.mxu0 0
      %821 = vmatpush1.bf16.msra.mxu0 %v561
      %822 = vmatprep.subr.bf16.mxu0 0
      %823 = vmatpush1.bf16.msra.mxu0 %v564
      %824 = vmatprep.subr.bf16.mxu0 0
      %825 = vmatpush1.bf16.msra.mxu0 %v567
      %826 = vmatprep.mubr.bf16.mxu0 %v179
      %827 = vmatmul.mubr.bf16.gmra.mrb[0].mxu0 %v178
      %v828 = vpop.f32.mrb[0].mxu0
      %v829 = vpop.f32.mrb[0].mxu0
      %v830 = vpop.f32.mrb[0].mxu0
      %v831 = vpop.f32.mrb[0].mxu0
      %832 = vmatprep.mubr.bf16.mxu0 %v180
      %833 = vmatmul.mubr.bf16.gmra.mrb[0].mxu0 %v179
      %v834 = vpop.f32.mrb[0].mxu0
      %v835 = vadd.f32 0.0, %v834
      %v836 = vpop.f32.mrb[0].mxu0
      %v837 = vpop.f32.mrb[0].mxu0
      %v838 = vadd.f32 0.0, %v837
      %v839 = vpop.f32.mrb[0].mxu0
      %840 = vmatprep.mubr.bf16.mxu0 %v181
      %841 = vmatmul.mubr.bf16.gmra.mrb[0].mxu0 %v180
      %v842 = vpop.f32.mrb[0].mxu0
      %v843 = vadd.f32 0.0, %v842
      %v844 = vpop.f32.mrb[0].mxu0
      %v845 = vpop.f32.mrb[0].mxu0
      %v846 = vadd.f32 0.0, %v845
      %v847 = vpop.f32.mrb[0].mxu0
      %848 = vmatprep.mubr.bf16.mxu0 %v182
      %849 = vmatmul.mubr.bf16.gmra.mrb[0].mxu0 %v181
      %v850 = vpop.f32.mrb[0].mxu0
      %v851 = vpop.f32.mrb[0].mxu0
      %v852 = vpop.f32.mrb[0].mxu0
      %v853 = vpop.f32.mrb[0].mxu0
      %854 = vdwg.mxu0
      %855 = vmatprep.subr.bf16.mxu0 0
      %856 = vmatpush1.bf16.msra.mxu0 %v570
      %857 = vmatprep.subr.bf16.mxu0 0
      %858 = vmatpush1.bf16.msra.mxu0 %v573
      %859 = vmatprep.subr.bf16.mxu0 0
      %860 = vmatpush1.bf16.msra.mxu0 %v576
      %861 = vmatprep.subr.bf16.mxu0 0
      %862 = vmatpush1.bf16.msra.mxu0 %v579
      %863 = vmatprep.subr.bf16.mxu0 0
      %864 = vmatpush1.bf16.msra.mxu0 %v582
      %865 = vmatprep.subr.bf16.mxu0 0
      %866 = vmatpush1.bf16.msra.mxu0 %v585
      %867 = vmatprep.subr.bf16.mxu0 0
      %868 = vmatpush1.bf16.msra.mxu0 %v588
      %869 = vmatprep.subr.bf16.mxu0 0
      %870 = vmatpush1.bf16.msra.mxu0 %v591
      %871 = vmatprep.subr.bf16.mxu0 0
      %872 = vmatpush1.bf16.msra.mxu0 0
      %873 = vmatprep.subr.bf16.mxu0 0
      %874 = vmatpush1.bf16.msra.mxu0 0
      %875 = vmatprep.subr.bf16.mxu0 0
      %876 = vmatpush1.bf16.msra.mxu0 0
      %877 = vmatprep.subr.bf16.mxu0 0
      %878 = vmatpush1.bf16.msra.mxu0 0
      %879 = vmatprep.subr.bf16.mxu0 0
      %880 = vmatpush1.bf16.msra.mxu0 0
      %881 = vmatprep.subr.bf16.mxu0 0
      %882 = vmatpush1.bf16.msra.mxu0 0
      %883 = vmatprep.subr.bf16.mxu0 0
      %884 = vmatpush1.bf16.msra.mxu0 0
      %885 = vmatprep.subr.bf16.mxu0 0
      %886 = vmatpush1.bf16.msra.mxu0 0
      %887 = vmatprep.mubr.bf16.mxu0 0
      %888 = vmatmul.mubr.bf16.gmra.mrb[0].mxu0 %v180
      %v889 = vpop.f32.mrb[0].mxu0
      %v890 = vpop.f32.mrb[0].mxu0
      %v891 = vpop.f32.mrb[0].mxu0
      %v892 = vpop.f32.mrb[0].mxu0
      %893 = vmatprep.mubr.bf16.mxu0 0
      %894 = vmatmul.mubr.bf16.gmra.mrb[0].mxu0 %v181
      %v895 = vpop.f32.mrb[0].mxu0
      %v896 = vadd.f32 %v835, %v895
      %v897 = vpop.f32.mrb[0].mxu0
      %v898 = vpop.f32.mrb[0].mxu0
      %v899 = vadd.f32 %v838, %v898
      %v900 = vpop.f32.mrb[0].mxu0
      %901 = vmatprep.mubr.bf16.mxu0 0
      %902 = vmatmul.mubr.bf16.gmra.mrb[0].mxu0 %v182
      %v903 = vpop.f32.mrb[0].mxu0
      %v904 = vadd.f32 %v843, %v903
      %v905 = vpop.f32.mrb[0].mxu0
      %v906 = vpop.f32.mrb[0].mxu0
      %v907 = vadd.f32 %v846, %v906
      %v908 = vpop.f32.mrb[0].mxu0
      %909 = vmatprep.mubr.bf16.mxu0 0
      %910 = vmatmul.mubr.bf16.gmra.mrb[0].mxu0 %v183
      %v911 = vpop.f32.mrb[0].mxu0
      %v912 = vpop.f32.mrb[0].mxu0
      %v913 = vpop.f32.mrb[0].mxu0
      %v914 = vpop.f32.mrb[0].mxu0
      %915 = vdwg.mxu0
      %vm920 = vcmask 1046528
      %v921 = vrot.slane %v773, 1
      %v922 = vrot.slane %v777, 1
      %v923 = vsel %vm920, %v921, %v922
      %v924 = vrot.slane %v783, 1
      %v925 = vsel %vm920, %v922, %v924
      %v926 = vrot.slane %v786, 1
      %v927 = vsel %vm920, %v924, %v926
      %v932 = vadd.f32 %v766, %v921
      %v933 = vadd.f32 %v771, %v923
      %v934 = vadd.f32 %v775, %v925
      %v935 = vadd.f32 %v781, %v927
      %vm940 = vcmask 1045504
      %v941 = vrot.slane %v896, 2
      %v942 = vrot.slane %v899, 2
      %v943 = vsel %vm940, %v941, %v942
      %v944 = vrot.slane %v904, 2
      %v945 = vsel %vm940, %v942, %v944
      %v946 = vrot.slane %v907, 2
      %v947 = vsel %vm940, %v944, %v946
      %v952 = vadd.f32 %v932, %v941
      %v953 = vadd.f32 %v933, %v943
      %v954 = vadd.f32 %v934, %v945
      %v955 = vadd.f32 %v935, %v947
      %v956 = vld [vmem:[%s2] sm:$0x1]
      %v958 = vlaneseq
      %v959 = vshrl.u32 %v958, 7
      %v960 = vsub.s32 0, %v959
      %v961 = vrot.slane %v956, %v960
      %v963 = vadd.f32 %v952, %v961
      %v964 = vadd.f32 %v953, %v961
      %v965 = vadd.f32 %v954, %v961
      %v966 = vadd.f32 %v955, %v961
      %v967 = vmax.f32 %v963, 0.0
      %v968 = vmax.f32 %v964, 0.0
      %v969 = vmax.f32 %v965, 0.0
      %v970 = vmax.f32 %v966, 0.0
      %vm975 = vcmask 1040384
      %v976 = vrot.slane %v967, 7
      %v977 = vrot.slane %v968, 7
      %v978 = vsel %vm975, %v976, %v977
      %v979 = vrot.slane %v969, 7
      %v980 = vrot.slane %v970, 7
      %v981 = vsel %vm975, %v979, %v980
      %v984 = vpack.c.bf16 %v978, %v978
      %v985 = vpack.c.bf16 %v981, %v981
      %986 = vst [vmem:[%s165] sm:$0x1] %v984
      %987 = vst [vmem:[%s165 + $0x1] sm:$0x1] %v985
      %p988 = scmp.lt.s32.totalorder %s14, 1
      %s989 = scalar_select %p988, %s14, 1
      %s990 = smul.addr %s989, 2
      %s991 = scalar_lea.vmem %s3, %s990
      // Predicated region
      $region33: #{_lambda_.17} parent=31 // pred_check
        %p992 = pneg %p100
      $region34: #{_lambda_.17} parent=31 // pred_check_branch
        %994 = sbr.rel (%p992) target = $region36
      $region35: #{_lambda_.17} parent=31 // pred_region
        _
      $region36: #{_lambda_.17} parent=31 // pred_fallthru
        _
    $region32: #{_lambda_.17} parent=5 // pred_fallthru
      _
    %p995 = scmp.le.s32.totalorder 2, %s9
    // Predicated region
    $region37: #{_lambda_.17} parent=5 // pred_check
      %p996 = pneg %p995
    $region38: #{_lambda_.17} parent=5 // pred_check_branch
      %998 = sbr.rel (%p996) target = $region40
    $region39: #{_lambda_.17} parent=5 // pred_region
      %s999 = ssub.s32 %s9, 2
      // Predicated region
      $region41: #{_lambda_.17} parent=39 // pred_check
        %p1000 = pneg %p106
      $region42: #{_lambda_.17} parent=39 // pred_check_branch
        %1002 = sbr.rel (%p1000) target = $region44
      $region43: #{_lambda_.17} parent=39 // pred_region
        %p1003 = scmp.lt.s32.totalorder %s15, 1
        %s1004 = scalar_select %p1003, %s15, 1
        %s1005 = smul.addr %s1004, 2
        %s1006 = scalar_lea.vmem %s3, %s1005
      $region44: #{_lambda_.17} parent=39 // pred_fallthru
        _
    $region40: #{_lambda_.17} parent=5 // pred_fallthru
      _
  $region6: #{_lambda_.17} parent=0 // loop_footer
    %s13 = sadd.s32 1, %s9
  $region7: #{_lambda_.17} parent=0 // loop_footer_branch
    %8 = sbr.rel target = $region3
  $region8: #{_lambda_.17} parent=0 // loop_exit
    _

</llo_original>
